<compile_context>
chip_gen: v7x
topology: tpu7x:2x2x1
jax: 0.10.0
libtpu: 0.0.40
codegen_flags: <defaults>
</compile_context>

<pallas_src>
import jax
import jax.numpy as jnp
from jax.experimental import pallas as pl
from jax.experimental.pallas import tpu as pltpu


# ----------------------------- Pallas kernels --------------------------------

def _conv_pool_kernel(a0_ref, a1_ref, a2_ref, a3_ref, w_ref, b_ref, o_ref):
    """Fused valid 3x3 conv (as matmul) + bias + ReLU + 2x2/stride-2 max pool.

    a{p}_ref holds the im2col patches of the conv-output pixels whose (row,col)
    parity is one of (0,0),(0,1),(1,0),(1,1) -- the four corners of every 2x2
    pooling window -- with rows ordered (ph, pw).  The elementwise max of the
    four corner matmuls equals the max-pooled conv output.
    """
    w = w_ref[...]                                   # (K, Cout) bf16
    b = b_ref[...]                                   # (1, Cout) f32

    def corner(a_ref):
        return jnp.dot(a_ref[0], w, preferred_element_type=jnp.float32)

    z = jnp.maximum(jnp.maximum(corner(a0_ref), corner(a1_ref)),
                    jnp.maximum(corner(a2_ref), corner(a3_ref)))
    z = jnp.maximum(z + b, 0.0)                      # bias + ReLU (relu∘max == max∘relu)
    o_ref[0] = z.astype(o_ref.dtype)


def _fc_fused_kernel(x_ref, w1_ref, b1_ref, w2_ref, b2_ref, o_ref):
    """Fused fc1 + ReLU + fc2; all operands resident in VMEM (single block)."""
    h = jnp.dot(x_ref[...], w1_ref[...], preferred_element_type=jnp.float32)
    h = jnp.maximum(h + b1_ref[...], 0.0)            # (B, 128) f32
    y = jnp.dot(h.astype(w2_ref.dtype), w2_ref[...],
                preferred_element_type=jnp.float32) + b2_ref[...]
    o_ref[...] = y.astype(o_ref.dtype)


# ------------------------------- wrappers -------------------------------------

def conv3x3_relu_pool(x, w, b):
    """relu(conv3x3_valid(x) + b) followed by 2x2/stride-2 max pool (fused).

    x: (B, H, W, Cin) NHWC bf16, w: (9*Cin, Cout) bf16, b: (Cout,) f32.
    Returns (B, PH, PW, Cout) bf16 with PH=(H-2)//2, PW=(W-2)//2.
    """
    B, H, W, Cin = x.shape
    PH, PW = (H - 2) // 2, (W - 2) // 2
    Cout = w.shape[1]
    K = 9 * Cin

    # One patch matrix per pooling-window corner parity (p, q).  These are
    # small strided slices at *pooled* resolution; total bytes equal a single
    # ordinary im2col, and no pre-pool activation is ever materialized.
    def patches(p, q):
        taps = [x[:, p + i: p + i + 2 * PH - 1: 2,
                   q + j: q + j + 2 * PW - 1: 2, :]
                for i in range(3) for j in range(3)]
        return jnp.concatenate(taps, axis=-1).reshape(B, PH * PW, K)

    a = [patches(p, q) for p in (0, 1) for q in (0, 1)]
    bias = b.reshape(1, Cout).astype(jnp.float32)

    a_spec = pl.BlockSpec((1, PH * PW, K), lambda i: (i, 0, 0))
    out = pl.pallas_call(
        _conv_pool_kernel,
        out_shape=jax.ShapeDtypeStruct((B, PH * PW, Cout), x.dtype),
        grid_spec=pltpu.PrefetchScalarGridSpec(
            num_scalar_prefetch=0,
            grid=(B,),                                # 2 parallel blocks (megacore)
            in_specs=[a_spec, a_spec, a_spec, a_spec,
                      pl.BlockSpec((K, Cout), lambda i: (0, 0)),
                      pl.BlockSpec((1, Cout), lambda i: (0, 0))],
            out_specs=pl.BlockSpec((1, PH * PW, Cout), lambda i: (i, 0, 0)),
        ),
        compiler_params=pltpu.CompilerParams(dimension_semantics=("parallel",)),
    )(*a, w, bias)
    return out.reshape(B, PH, PW, Cout)


def fc_relu_fc(x, w1, b1, w2, b2):
    """relu(x @ w1 + b1) @ w2 + b2 in one kernel (weights fully VMEM-resident).

    x: (B, K) bf16, w1: (K, Hd) bf16, w2: (Hd, N) bf16, biases f32.  Out f32.
    """
    B = x.shape[0]
    N = w2.shape[1]
    return pl.pallas_call(
        _fc_fused_kernel,
        out_shape=jax.ShapeDtypeStruct((B, N), jnp.float32),
    )(x, w1, b1.reshape(1, -1).astype(jnp.float32),
      w2, b2.reshape(1, -1).astype(jnp.float32))


# ------------------------------- forward --------------------------------------

def lnsnet_forward(x_nchw, kp):
    x = jnp.transpose(x_nchw, (0, 2, 3, 1)).astype(jnp.bfloat16)   # NCHW -> NHWC

    y = conv3x3_relu_pool(x, kp["conv1_w"], kp["conv1_b"])         # (B, 26, 26, 32)
    y = conv3x3_relu_pool(y, kp["conv2_w"], kp["conv2_b"])         # (B, 12, 12, 64)

    # PyTorch flattens NCHW (channel-major); transpose the tiny (B,12,12,64)
    # activation back before flattening so fc1's weight layout matches.
    B = y.shape[0]
    y = jnp.transpose(y, (0, 3, 1, 2)).reshape(B, -1)              # (B, 9216) bf16

    return fc_relu_fc(y, kp["fc1_w"], kp["fc1_b"],
                      kp["fc2_w"], kp["fc2_b"])                    # (B, 10) f32


def init_params(key):
    ks = jax.random.split(key, 4)

    def he(k, shape, fan_in):
        return (jax.random.normal(k, shape, jnp.float32)
                * jnp.sqrt(2.0 / fan_in)).astype(jnp.float32)

    return {
        "conv1_w": he(ks[0], (3, 3, 1, 32), 9),                 # HWIO
        "conv1_b": jnp.zeros((32,), jnp.float32),
        "conv2_w": he(ks[1], (3, 3, 32, 64), 9 * 32),           # HWIO
        "conv2_b": jnp.zeros((64,), jnp.float32),
        "fc1_w": he(ks[2], (64 * 12 * 12, 128), 64 * 12 * 12),  # (in, out)
        "fc1_b": jnp.zeros((128,), jnp.float32),
        "fc2_w": he(ks[3], (128, 10), 128),                     # (in, out)
        "fc2_b": jnp.zeros((10,), jnp.float32),
    }


def prepare_params(p):
    """One-time weight prep (outside the per-call path): flatten conv HWIO
    weights to im2col matrices and cast matmul operands to bf16; biases stay
    f32 and all accumulation inside the kernels is f32."""
    return {
        "conv1_w": p["conv1_w"].reshape(-1, 32).astype(jnp.bfloat16),
        "conv1_b": p["conv1_b"].astype(jnp.float32),
        "conv2_w": p["conv2_w"].reshape(-1, 64).astype(jnp.bfloat16),
        "conv2_b": p["conv2_b"].astype(jnp.float32),
        "fc1_w": p["fc1_w"].astype(jnp.bfloat16),
        "fc1_b": p["fc1_b"].astype(jnp.float32),
        "fc2_w": p["fc2_w"].astype(jnp.bfloat16),
        "fc2_b": p["fc2_b"].astype(jnp.float32),
    }


if __name__ == "__main__":
    key = jax.random.PRNGKey(0)
    k_x, k_p = jax.random.split(key)
    # Input 54x54x1, batch 2: the module's fc1 in-features (64*12*12) imply a
    # 54x54 input for k=3/s=1/p=0 convs with two 2x2 max-pools:
    # 54 -conv-> 52 -pool-> 26 -conv-> 24 -pool-> 12.
    x = jax.random.normal(k_x, (2, 1, 54, 54), jnp.float32)
    kparams = prepare_params(init_params(k_p))

    forward = jax.jit(lnsnet_forward)
    out = jax.block_until_ready(forward(x, kparams))
    assert out.shape == (2, 10), out.shape
    assert out.dtype == jnp.float32, out.dtype
    print("KERNEL_OK")
</pallas_src>

<mosaic_0001>
module attributes {stable_mosaic.version = 11 : i64} {
  func.func @_conv_pool_kernel(%arg0: i32, %arg1: memref<1x676x9xbf16, #tpu.memory_space<vmem>>, %arg2: memref<1x676x9xbf16, #tpu.memory_space<vmem>>, %arg3: memref<1x676x9xbf16, #tpu.memory_space<vmem>>, %arg4: memref<1x676x9xbf16, #tpu.memory_space<vmem>>, %arg5: memref<9x32xbf16, #tpu.memory_space<vmem>>, %arg6: memref<1x32xf32, #tpu.memory_space<vmem>>, %arg7: memref<1x676x32xbf16, #tpu.memory_space<vmem>>) attributes {dimension_semantics = [#tpu.dimension_semantics<parallel>], iteration_bounds = array<i64: 2>, scalar_prefetch = 0 : i64, scratch_operands = 0 : i64, tpu.core_type = #tpu.core_type<tc>, window_params = [{transform_indices = @transform_0, window_bounds = array<i64: 1, 676, 9>}, {transform_indices = @transform_1, window_bounds = array<i64: 1, 676, 9>}, {transform_indices = @transform_2, window_bounds = array<i64: 1, 676, 9>}, {transform_indices = @transform_3, window_bounds = array<i64: 1, 676, 9>}, {pipeline_mode = #tpu.pipeline_mode<synchronous>, transform_indices = @transform_4, window_bounds = array<i64: 9, 32>}, {pipeline_mode = #tpu.pipeline_mode<synchronous>, transform_indices = @transform_5, window_bounds = array<i64: 1, 32>}, {transform_indices = @transform_6, window_bounds = array<i64: 1, 676, 32>}]} {
    %c0 = arith.constant 0 : index
    %c0_0 = arith.constant 0 : index
    %0 = vector.load %arg5[%c0, %c0_0] : memref<9x32xbf16, #tpu.memory_space<vmem>>, vector<9x32xbf16>
    %c0_1 = arith.constant 0 : index
    %c0_2 = arith.constant 0 : index
    %1 = vector.load %arg6[%c0_1, %c0_2] : memref<1x32xf32, #tpu.memory_space<vmem>>, vector<1x32xf32>
    %c0_3 = arith.constant 0 : index
    %c0_4 = arith.constant 0 : index
    %c0_5 = arith.constant 0 : index
    %2 = vector.load %arg1[%c0_3, %c0_4, %c0_5] : memref<1x676x9xbf16, #tpu.memory_space<vmem>>, vector<1x676x9xbf16>
    %3 = vector.shape_cast %2 : vector<1x676x9xbf16> to vector<676x9xbf16>
    %cst = arith.constant dense<0.000000e+00> : vector<676x32xf32>
    %4 = tpu.matmul %3, %0, %cst {dimension_numbers = #tpu.dot_dimension_numbers<[1], [0], [0], [1], [0, 0, 1, 1], [], []>} : vector<676x9xbf16>, vector<9x32xbf16>, vector<676x32xf32> -> vector<676x32xf32>
    %c0_6 = arith.constant 0 : index
    %c0_7 = arith.constant 0 : index
    %c0_8 = arith.constant 0 : index
    %5 = vector.load %arg2[%c0_6, %c0_7, %c0_8] : memref<1x676x9xbf16, #tpu.memory_space<vmem>>, vector<1x676x9xbf16>
    %6 = vector.shape_cast %5 : vector<1x676x9xbf16> to vector<676x9xbf16>
    %cst_9 = arith.constant dense<0.000000e+00> : vector<676x32xf32>
    %7 = tpu.matmul %6, %0, %cst_9 {dimension_numbers = #tpu.dot_dimension_numbers<[1], [0], [0], [1], [0, 0, 1, 1], [], []>} : vector<676x9xbf16>, vector<9x32xbf16>, vector<676x32xf32> -> vector<676x32xf32>
    %8 = arith.maximumf %4, %7 : vector<676x32xf32>
    %c0_10 = arith.constant 0 : index
    %c0_11 = arith.constant 0 : index
    %c0_12 = arith.constant 0 : index
    %9 = vector.load %arg3[%c0_10, %c0_11, %c0_12] : memref<1x676x9xbf16, #tpu.memory_space<vmem>>, vector<1x676x9xbf16>
    %10 = vector.shape_cast %9 : vector<1x676x9xbf16> to vector<676x9xbf16>
    %cst_13 = arith.constant dense<0.000000e+00> : vector<676x32xf32>
    %11 = tpu.matmul %10, %0, %cst_13 {dimension_numbers = #tpu.dot_dimension_numbers<[1], [0], [0], [1], [0, 0, 1, 1], [], []>} : vector<676x9xbf16>, vector<9x32xbf16>, vector<676x32xf32> -> vector<676x32xf32>
    %c0_14 = arith.constant 0 : index
    %c0_15 = arith.constant 0 : index
    %c0_16 = arith.constant 0 : index
    %12 = vector.load %arg4[%c0_14, %c0_15, %c0_16] : memref<1x676x9xbf16, #tpu.memory_space<vmem>>, vector<1x676x9xbf16>
    %13 = vector.shape_cast %12 : vector<1x676x9xbf16> to vector<676x9xbf16>
    %cst_17 = arith.constant dense<0.000000e+00> : vector<676x32xf32>
    %14 = tpu.matmul %13, %0, %cst_17 {dimension_numbers = #tpu.dot_dimension_numbers<[1], [0], [0], [1], [0, 0, 1, 1], [], []>} : vector<676x9xbf16>, vector<9x32xbf16>, vector<676x32xf32> -> vector<676x32xf32>
    %15 = arith.maximumf %11, %14 : vector<676x32xf32>
    %16 = arith.maximumf %8, %15 : vector<676x32xf32>
    %17 = vector.broadcast %1 : vector<1x32xf32> to vector<676x32xf32>
    %18 = arith.addf %16, %17 : vector<676x32xf32>
    %cst_18 = arith.constant 0.000000e+00 : f32
    %19 = vector.broadcast %cst_18 : f32 to vector<676x32xf32>
    %20 = arith.maximumf %18, %19 : vector<676x32xf32>
    %21 = arith.truncf %20 : vector<676x32xf32> to vector<676x32xbf16>
    %c0_19 = arith.constant 0 : index
    %c0_20 = arith.constant 0 : index
    %c0_21 = arith.constant 0 : index
    %22 = vector.load %arg7[%c0_19, %c0_20, %c0_21] : memref<1x676x32xbf16, #tpu.memory_space<vmem>>, vector<1x676x32xbf16>
    %23 = vector.shape_cast %22 : vector<1x676x32xbf16> to vector<676x32xbf16>
    %24 = vector.shape_cast %21 : vector<676x32xbf16> to vector<1x676x32xbf16>
    tpu.vector_store %arg7[%c0_19, %c0_20, %c0_21], %24 {strides = array<i32>} : memref<1x676x32xbf16, #tpu.memory_space<vmem>>, vector<1x676x32xbf16>,
    return
  }
  func.func @transform_0(%arg0: i32) -> (i32, i32, i32) {
    %c0_i32 = arith.constant 0 : i32
    %c0_i32_0 = arith.constant 0 : i32
    %c0_i32_1 = arith.constant 0 : i32
    return %arg0, %c0_i32, %c0_i32_0 : i32, i32, i32
  }
  func.func @transform_1(%arg0: i32) -> (i32, i32, i32) {
    %c0_i32 = arith.constant 0 : i32
    %c0_i32_0 = arith.constant 0 : i32
    %c0_i32_1 = arith.constant 0 : i32
    return %arg0, %c0_i32, %c0_i32_0 : i32, i32, i32
  }
  func.func @transform_2(%arg0: i32) -> (i32, i32, i32) {
    %c0_i32 = arith.constant 0 : i32
    %c0_i32_0 = arith.constant 0 : i32
    %c0_i32_1 = arith.constant 0 : i32
    return %arg0, %c0_i32, %c0_i32_0 : i32, i32, i32
  }
  func.func @transform_3(%arg0: i32) -> (i32, i32, i32) {
    %c0_i32 = arith.constant 0 : i32
    %c0_i32_0 = arith.constant 0 : i32
    %c0_i32_1 = arith.constant 0 : i32
    return %arg0, %c0_i32, %c0_i32_0 : i32, i32, i32
  }
  func.func @transform_4(%arg0: i32) -> (i32, i32) {
    %c0_i32 = arith.constant 0 : i32
    %c0_i32_0 = arith.constant 0 : i32
    %c0_i32_1 = arith.constant 0 : i32
    return %c0_i32, %c0_i32_0 : i32, i32
  }
  func.func @transform_5(%arg0: i32) -> (i32, i32) {
    %c0_i32 = arith.constant 0 : i32
    %c0_i32_0 = arith.constant 0 : i32
    %c0_i32_1 = arith.constant 0 : i32
    return %c0_i32, %c0_i32_0 : i32, i32
  }
  func.func @transform_6(%arg0: i32) -> (i32, i32, i32) {
    %c0_i32 = arith.constant 0 : i32
    %c0_i32_0 = arith.constant 0 : i32
    %c0_i32_1 = arith.constant 0 : i32
    return %arg0, %c0_i32, %c0_i32_0 : i32, i32, i32
  }
}

module attributes {stable_mosaic.version = 11 : i64} {
  func.func @_conv_pool_kernel(%arg0: i32, %arg1: memref<1x144x288xbf16, #tpu.memory_space<vmem>>, %arg2: memref<1x144x288xbf16, #tpu.memory_space<vmem>>, %arg3: memref<1x144x288xbf16, #tpu.memory_space<vmem>>, %arg4: memref<1x144x288xbf16, #tpu.memory_space<vmem>>, %arg5: memref<288x64xbf16, #tpu.memory_space<vmem>>, %arg6: memref<1x64xf32, #tpu.memory_space<vmem>>, %arg7: memref<1x144x64xbf16, #tpu.memory_space<vmem>>) attributes {dimension_semantics = [#tpu.dimension_semantics<parallel>], iteration_bounds = array<i64: 2>, scalar_prefetch = 0 : i64, scratch_operands = 0 : i64, tpu.core_type = #tpu.core_type<tc>, window_params = [{transform_indices = @transform_0, window_bounds = array<i64: 1, 144, 288>}, {transform_indices = @transform_1, window_bounds = array<i64: 1, 144, 288>}, {transform_indices = @transform_2, window_bounds = array<i64: 1, 144, 288>}, {transform_indices = @transform_3, window_bounds = array<i64: 1, 144, 288>}, {pipeline_mode = #tpu.pipeline_mode<synchronous>, transform_indices = @transform_4, window_bounds = array<i64: 288, 64>}, {pipeline_mode = #tpu.pipeline_mode<synchronous>, transform_indices = @transform_5, window_bounds = array<i64: 1, 64>}, {transform_indices = @transform_6, window_bounds = array<i64: 1, 144, 64>}]} {
    %c0 = arith.constant 0 : index
    %c0_0 = arith.constant 0 : index
    %0 = vector.load %arg5[%c0, %c0_0] : memref<288x64xbf16, #tpu.memory_space<vmem>>, vector<288x64xbf16>
    %c0_1 = arith.constant 0 : index
    %c0_2 = arith.constant 0 : index
    %1 = vector.load %arg6[%c0_1, %c0_2] : memref<1x64xf32, #tpu.memory_space<vmem>>, vector<1x64xf32>
    %c0_3 = arith.constant 0 : index
    %c0_4 = arith.constant 0 : index
    %c0_5 = arith.constant 0 : index
    %2 = vector.load %arg1[%c0_3, %c0_4, %c0_5] : memref<1x144x288xbf16, #tpu.memory_space<vmem>>, vector<1x144x288xbf16>
    %3 = vector.shape_cast %2 : vector<1x144x288xbf16> to vector<144x288xbf16>
    %cst = arith.constant dense<0.000000e+00> : vector<144x64xf32>
    %4 = tpu.matmul %3, %0, %cst {dimension_numbers = #tpu.dot_dimension_numbers<[1], [0], [0], [1], [0, 0, 1, 1], [], []>} : vector<144x288xbf16>, vector<288x64xbf16>, vector<144x64xf32> -> vector<144x64xf32>
    %c0_6 = arith.constant 0 : index
    %c0_7 = arith.constant 0 : index
    %c0_8 = arith.constant 0 : index
    %5 = vector.load %arg2[%c0_6, %c0_7, %c0_8] : memref<1x144x288xbf16, #tpu.memory_space<vmem>>, vector<1x144x288xbf16>
    %6 = vector.shape_cast %5 : vector<1x144x288xbf16> to vector<144x288xbf16>
    %cst_9 = arith.constant dense<0.000000e+00> : vector<144x64xf32>
    %7 = tpu.matmul %6, %0, %cst_9 {dimension_numbers = #tpu.dot_dimension_numbers<[1], [0], [0], [1], [0, 0, 1, 1], [], []>} : vector<144x288xbf16>, vector<288x64xbf16>, vector<144x64xf32> -> vector<144x64xf32>
    %8 = arith.maximumf %4, %7 : vector<144x64xf32>
    %c0_10 = arith.constant 0 : index
    %c0_11 = arith.constant 0 : index
    %c0_12 = arith.constant 0 : index
    %9 = vector.load %arg3[%c0_10, %c0_11, %c0_12] : memref<1x144x288xbf16, #tpu.memory_space<vmem>>, vector<1x144x288xbf16>
    %10 = vector.shape_cast %9 : vector<1x144x288xbf16> to vector<144x288xbf16>
    %cst_13 = arith.constant dense<0.000000e+00> : vector<144x64xf32>
    %11 = tpu.matmul %10, %0, %cst_13 {dimension_numbers = #tpu.dot_dimension_numbers<[1], [0], [0], [1], [0, 0, 1, 1], [], []>} : vector<144x288xbf16>, vector<288x64xbf16>, vector<144x64xf32> -> vector<144x64xf32>
    %c0_14 = arith.constant 0 : index
    %c0_15 = arith.constant 0 : index
    %c0_16 = arith.constant 0 : index
    %12 = vector.load %arg4[%c0_14, %c0_15, %c0_16] : memref<1x144x288xbf16, #tpu.memory_space<vmem>>, vector<1x144x288xbf16>
    %13 = vector.shape_cast %12 : vector<1x144x288xbf16> to vector<144x288xbf16>
    %cst_17 = arith.constant dense<0.000000e+00> : vector<144x64xf32>
    %14 = tpu.matmul %13, %0, %cst_17 {dimension_numbers = #tpu.dot_dimension_numbers<[1], [0], [0], [1], [0, 0, 1, 1], [], []>} : vector<144x288xbf16>, vector<288x64xbf16>, vector<144x64xf32> -> vector<144x64xf32>
    %15 = arith.maximumf %11, %14 : vector<144x64xf32>
    %16 = arith.maximumf %8, %15 : vector<144x64xf32>
    %17 = vector.broadcast %1 : vector<1x64xf32> to vector<144x64xf32>
    %18 = arith.addf %16, %17 : vector<144x64xf32>
    %cst_18 = arith.constant 0.000000e+00 : f32
    %19 = vector.broadcast %cst_18 : f32 to vector<144x64xf32>
    %20 = arith.maximumf %18, %19 : vector<144x64xf32>
    %21 = arith.truncf %20 : vector<144x64xf32> to vector<144x64xbf16>
    %c0_19 = arith.constant 0 : index
    %c0_20 = arith.constant 0 : index
    %c0_21 = arith.constant 0 : index
    %22 = vector.load %arg7[%c0_19, %c0_20, %c0_21] : memref<1x144x64xbf16, #tpu.memory_space<vmem>>, vector<1x144x64xbf16>
    %23 = vector.shape_cast %22 : vector<1x144x64xbf16> to vector<144x64xbf16>
    %24 = vector.shape_cast %21 : vector<144x64xbf16> to vector<1x144x64xbf16>
    tpu.vector_store %arg7[%c0_19, %c0_20, %c0_21], %24 {strides = array<i32>} : memref<1x144x64xbf16, #tpu.memory_space<vmem>>, vector<1x144x64xbf16>,
    return
  }
  func.func @transform_0(%arg0: i32) -> (i32, i32, i32) {
    %c0_i32 = arith.constant 0 : i32
    %c0_i32_0 = arith.constant 0 : i32
    %c0_i32_1 = arith.constant 0 : i32
    return %arg0, %c0_i32, %c0_i32_0 : i32, i32, i32
  }
  func.func @transform_1(%arg0: i32) -> (i32, i32, i32) {
    %c0_i32 = arith.constant 0 : i32
    %c0_i32_0 = arith.constant 0 : i32
    %c0_i32_1 = arith.constant 0 : i32
    return %arg0, %c0_i32, %c0_i32_0 : i32, i32, i32
  }
  func.func @transform_2(%arg0: i32) -> (i32, i32, i32) {
    %c0_i32 = arith.constant 0 : i32
    %c0_i32_0 = arith.constant 0 : i32
    %c0_i32_1 = arith.constant 0 : i32
    return %arg0, %c0_i32, %c0_i32_0 : i32, i32, i32
  }
  func.func @transform_3(%arg0: i32) -> (i32, i32, i32) {
    %c0_i32 = arith.constant 0 : i32
    %c0_i32_0 = arith.constant 0 : i32
    %c0_i32_1 = arith.constant 0 : i32
    return %arg0, %c0_i32, %c0_i32_0 : i32, i32, i32
  }
  func.func @transform_4(%arg0: i32) -> (i32, i32) {
    %c0_i32 = arith.constant 0 : i32
    %c0_i32_0 = arith.constant 0 : i32
    %c0_i32_1 = arith.constant 0 : i32
    return %c0_i32, %c0_i32_0 : i32, i32
  }
  func.func @transform_5(%arg0: i32) -> (i32, i32) {
    %c0_i32 = arith.constant 0 : i32
    %c0_i32_0 = arith.constant 0 : i32
    %c0_i32_1 = arith.constant 0 : i32
    return %c0_i32, %c0_i32_0 : i32, i32
  }
  func.func @transform_6(%arg0: i32) -> (i32, i32, i32) {
    %c0_i32 = arith.constant 0 : i32
    %c0_i32_0 = arith.constant 0 : i32
    %c0_i32_1 = arith.constant 0 : i32
    return %arg0, %c0_i32, %c0_i32_0 : i32, i32, i32
  }
}

module attributes {stable_mosaic.version = 11 : i64} {
  func.func @_fc_fused_kernel(%arg0: memref<2x9216xbf16, #tpu.memory_space<vmem>>, %arg1: memref<9216x128xbf16, #tpu.memory_space<vmem>>, %arg2: memref<1x128xf32, #tpu.memory_space<vmem>>, %arg3: memref<128x10xbf16, #tpu.memory_space<vmem>>, %arg4: memref<1x10xf32, #tpu.memory_space<vmem>>, %arg5: memref<2x10xf32, #tpu.memory_space<vmem>>) attributes {dimension_semantics = [], scalar_prefetch = 0 : i64, scratch_operands = 0 : i64, tpu.core_type = #tpu.core_type<tc>} {
    %c0 = arith.constant 0 : index
    %c0_0 = arith.constant 0 : index
    %0 = vector.load %arg0[%c0, %c0_0] : memref<2x9216xbf16, #tpu.memory_space<vmem>>, vector<2x9216xbf16>
    %c0_1 = arith.constant 0 : index
    %c0_2 = arith.constant 0 : index
    %1 = vector.load %arg1[%c0_1, %c0_2] : memref<9216x128xbf16, #tpu.memory_space<vmem>>, vector<9216x128xbf16>
    %cst = arith.constant dense<0.000000e+00> : vector<2x128xf32>
    %2 = tpu.matmul %0, %1, %cst {dimension_numbers = #tpu.dot_dimension_numbers<[1], [0], [0], [1], [0, 0, 1, 1], [], []>} : vector<2x9216xbf16>, vector<9216x128xbf16>, vector<2x128xf32> -> vector<2x128xf32>
    %c0_3 = arith.constant 0 : index
    %c0_4 = arith.constant 0 : index
    %3 = vector.load %arg2[%c0_3, %c0_4] : memref<1x128xf32, #tpu.memory_space<vmem>>, vector<1x128xf32>
    %4 = vector.broadcast %3 : vector<1x128xf32> to vector<2x128xf32>
    %5 = arith.addf %2, %4 : vector<2x128xf32>
    %cst_5 = arith.constant 0.000000e+00 : f32
    %6 = vector.broadcast %cst_5 : f32 to vector<2x128xf32>
    %7 = arith.maximumf %5, %6 : vector<2x128xf32>
    %8 = arith.truncf %7 : vector<2x128xf32> to vector<2x128xbf16>
    %c0_6 = arith.constant 0 : index
    %c0_7 = arith.constant 0 : index
    %9 = vector.load %arg3[%c0_6, %c0_7] : memref<128x10xbf16, #tpu.memory_space<vmem>>, vector<128x10xbf16>
    %cst_8 = arith.constant dense<0.000000e+00> : vector<2x10xf32>
    %10 = tpu.matmul %8, %9, %cst_8 {dimension_numbers = #tpu.dot_dimension_numbers<[1], [0], [0], [1], [0, 0, 1, 1], [], []>} : vector<2x128xbf16>, vector<128x10xbf16>, vector<2x10xf32> -> vector<2x10xf32>
    %c0_9 = arith.constant 0 : index
    %c0_10 = arith.constant 0 : index
    %11 = vector.load %arg4[%c0_9, %c0_10] : memref<1x10xf32, #tpu.memory_space<vmem>>, vector<1x10xf32>
    %12 = vector.broadcast %11 : vector<1x10xf32> to vector<2x10xf32>
    %13 = arith.addf %10, %12 : vector<2x10xf32>
    %c0_11 = arith.constant 0 : index
    %c0_12 = arith.constant 0 : index
    %14 = vector.load %arg5[%c0_11, %c0_12] : memref<2x10xf32, #tpu.memory_space<vmem>>, vector<2x10xf32>
    tpu.vector_store %arg5[%c0_11, %c0_12], %13 {strides = array<i32>} : memref<2x10xf32, #tpu.memory_space<vmem>>, vector<2x10xf32>,
    return
  }
}

</mosaic_0001>

<llo_original>
// kernel: lnsnet_forward.3
$region0: #{lnsnet_forward.3}
  #allocation0 [shape = 'u32[]', space=smem, size = 0x4, offset = 0x4, fixed_abs, tag = 'smem constant byte address 0x4 - core index']
  #allocation1 [shape = 'u32[144,128]{1,0:T(1,128)}', space=vmem, size = 0x12000, scoped, tag = 'internal scratch']
  %s0 = inlined_call_operand.vmem [shape: bf16[2,676,9], index: 0, kind: input, shape index: {}]
  %s1 = inlined_call_operand.vmem [shape: bf16[2,676,9], index: 1, kind: input, shape index: {}]
  %s2 = inlined_call_operand.vmem [shape: bf16[2,676,9], index: 2, kind: input, shape index: {}]
  %s3 = inlined_call_operand.vmem [shape: bf16[2,676,9], index: 3, kind: input, shape index: {}]
  %s4 = inlined_call_operand.vmem [shape: bf16[9,32], index: 4, kind: input, shape index: {}]
  %s5 = inlined_call_operand.vmem [shape: f32[1,32], index: 5, kind: input, shape index: {}]
  %s6 = inlined_call_operand.vmem [shape: bf16[2,676,32], index: 6, kind: output, shape index: {}]
  %s7 = sld [smem:[#allocation0]]
  $region57: #{lnsnet_forward.3} parent=0
    _
  %s9 = ssub.s32 1, %s7
  %s10 = scalar_select 0, %s9, %s7
  loop: start=0, step=1, limit=4
  $region2: #{lnsnet_forward.3} parent=0 // loop_pre_header
    _
  $region3: #{lnsnet_forward.3} parent=0 // loop_header
    %s12 = sphi 0, %s16
    %p13 = scmp.ge.s32.totalorder %s12, 4
    %s22 = sphi 0, %s24
    %s25 = sphi 0, %s22
    %s26 = sphi 0, %s25
    %s42 = sphi 0, %s26
    %s48 = sphi 0, %s50
    %s51 = sphi 0, %s48
    %s52 = sphi 0, %s51
    %s68 = sphi 0, %s52
    %s74 = sphi 0, %s76
    %s77 = sphi 0, %s74
    %s78 = sphi 0, %s77
    %s94 = sphi 0, %s78
    %s100 = sphi 0, %s102
    %s103 = sphi 0, %s100
    %s104 = sphi 0, %s103
    %s120 = sphi 0, %s104
    %s124 = sphi 0, %s124
    %s126 = sphi 0, %s124
    %s127 = sphi 0, %s126
    %s141 = sphi 0, %s127
    %s145 = sphi 0, %s145
    %s147 = sphi 0, %s145
    %s148 = sphi 0, %s147
    %s162 = sphi 0, %s148
    %s168 = sphi 0, %s170
    %s171 = sphi 0, %s168
    %s172 = sphi 0, %s171
    %s188 = sphi 0, %s172
  $region4: #{lnsnet_forward.3} parent=0 // loop_header_branch
    %15 = sbr.rel (%p13) target = $region8
  $region5: #{lnsnet_forward.3} parent=0 // loop_body
    %s17 = ssub.s32 %s12, 1
    %s18 = ssub.s32 %s12, 2
    %s19 = sadd.s32 %s12, 1
    %s20 = ssub.s32 %s12, %s19
    %p21 = scmp.eq.s32.totalorder %s20, 0
    %s23 = sadd.s32 %s22, 1
    %s24 = scalar_select %p21, %s22, %s23
    %p27 = pneg %p21
    %p28 = scmp.eq.s32.totalorder %s12, 1
    %p29 = por %p27, %p28
    %p30 = scmp.ne.s32.totalorder %s22, %s25
    %p31 = scmp.eq.s32.totalorder %s12, 0
    %p32 = por %p30, %p31
    %p33 = scmp.ne.s32.totalorder %s22, %s25
    %p34 = scmp.eq.s32.totalorder %s17, 1
    %p35 = por %p33, %p34
    %p36 = scmp.ne.s32.totalorder %s25, %s26
    %p37 = scmp.eq.s32.totalorder %s17, 0
    %p38 = por %p36, %p37
    %p39 = scmp.ne.s32.totalorder %s25, %s26
    %p40 = scmp.eq.s32.totalorder %s18, 1
    %p41 = por %p39, %p40
    %p43 = scmp.ne.s32.totalorder %s26, %s42
    %p44 = scmp.eq.s32.totalorder %s18, 0
    %p45 = por %p43, %p44
    %s46 = ssub.s32 %s12, %s19
    %p47 = scmp.eq.s32.totalorder %s46, 0
    %s49 = sadd.s32 %s48, 1
    %s50 = scalar_select %p47, %s48, %s49
    %p53 = pneg %p47
    %p54 = scmp.eq.s32.totalorder %s12, 1
    %p55 = por %p53, %p54
    %p56 = scmp.ne.s32.totalorder %s48, %s51
    %p57 = scmp.eq.s32.totalorder %s12, 0
    %p58 = por %p56, %p57
    %p59 = scmp.ne.s32.totalorder %s48, %s51
    %p60 = scmp.eq.s32.totalorder %s17, 1
    %p61 = por %p59, %p60
    %p62 = scmp.ne.s32.totalorder %s51, %s52
    %p63 = scmp.eq.s32.totalorder %s17, 0
    %p64 = por %p62, %p63
    %p65 = scmp.ne.s32.totalorder %s51, %s52
    %p66 = scmp.eq.s32.totalorder %s18, 1
    %p67 = por %p65, %p66
    %p69 = scmp.ne.s32.totalorder %s52, %s68
    %p70 = scmp.eq.s32.totalorder %s18, 0
    %p71 = por %p69, %p70
    %s72 = ssub.s32 %s12, %s19
    %p73 = scmp.eq.s32.totalorder %s72, 0
    %s75 = sadd.s32 %s74, 1
    %s76 = scalar_select %p73, %s74, %s75
    %p79 = pneg %p73
    %p80 = scmp.eq.s32.totalorder %s12, 1
    %p81 = por %p79, %p80
    %p82 = scmp.ne.s32.totalorder %s74, %s77
    %p83 = scmp.eq.s32.totalorder %s12, 0
    %p84 = por %p82, %p83
    %p85 = scmp.ne.s32.totalorder %s74, %s77
    %p86 = scmp.eq.s32.totalorder %s17, 1
    %p87 = por %p85, %p86
    %p88 = scmp.ne.s32.totalorder %s77, %s78
    %p89 = scmp.eq.s32.totalorder %s17, 0
    %p90 = por %p88, %p89
    %p91 = scmp.ne.s32.totalorder %s77, %s78
    %p92 = scmp.eq.s32.totalorder %s18, 1
    %p93 = por %p91, %p92
    %p95 = scmp.ne.s32.totalorder %s78, %s94
    %p96 = scmp.eq.s32.totalorder %s18, 0
    %p97 = por %p95, %p96
    %s98 = ssub.s32 %s12, %s19
    %p99 = scmp.eq.s32.totalorder %s98, 0
    %s101 = sadd.s32 %s100, 1
    %s102 = scalar_select %p99, %s100, %s101
    %p105 = pneg %p99
    %p106 = scmp.eq.s32.totalorder %s12, 1
    %p107 = por %p105, %p106
    %p108 = scmp.ne.s32.totalorder %s100, %s103
    %p109 = scmp.eq.s32.totalorder %s12, 0
    %p110 = por %p108, %p109
    %p111 = scmp.ne.s32.totalorder %s100, %s103
    %p112 = scmp.eq.s32.totalorder %s17, 1
    %p113 = por %p111, %p112
    %p114 = scmp.ne.s32.totalorder %s103, %s104
    %p115 = scmp.eq.s32.totalorder %s17, 0
    %p116 = por %p114, %p115
    %p117 = scmp.ne.s32.totalorder %s103, %s104
    %p118 = scmp.eq.s32.totalorder %s18, 1
    %p119 = por %p117, %p118
    %p121 = scmp.ne.s32.totalorder %s104, %s120
    %p122 = scmp.eq.s32.totalorder %s18, 0
    %p123 = por %p121, %p122
    %s125 = sadd.s32 %s124, 1
    %p128 = scmp.eq.s32.totalorder %s12, 1
    %p129 = scmp.ne.s32.totalorder %s124, %s126
    %p130 = scmp.eq.s32.totalorder %s12, 0
    %p131 = por %p129, %p130
    %p132 = scmp.ne.s32.totalorder %s124, %s126
    %p133 = scmp.eq.s32.totalorder %s17, 1
    %p134 = por %p132, %p133
    %p135 = scmp.ne.s32.totalorder %s126, %s127
    %p136 = scmp.eq.s32.totalorder %s17, 0
    %p137 = por %p135, %p136
    %p138 = scmp.ne.s32.totalorder %s126, %s127
    %p139 = scmp.eq.s32.totalorder %s18, 1
    %p140 = por %p138, %p139
    %p142 = scmp.ne.s32.totalorder %s127, %s141
    %p143 = scmp.eq.s32.totalorder %s18, 0
    %p144 = por %p142, %p143
    %s146 = sadd.s32 %s145, 1
    %p149 = scmp.eq.s32.totalorder %s12, 1
    %p150 = scmp.ne.s32.totalorder %s145, %s147
    %p151 = scmp.eq.s32.totalorder %s12, 0
    %p152 = por %p150, %p151
    %p153 = scmp.ne.s32.totalorder %s145, %s147
    %p154 = scmp.eq.s32.totalorder %s17, 1
    %p155 = por %p153, %p154
    %p156 = scmp.ne.s32.totalorder %s147, %s148
    %p157 = scmp.eq.s32.totalorder %s17, 0
    %p158 = por %p156, %p157
    %p159 = scmp.ne.s32.totalorder %s147, %s148
    %p160 = scmp.eq.s32.totalorder %s18, 1
    %p161 = por %p159, %p160
    %p163 = scmp.ne.s32.totalorder %s148, %s162
    %p164 = scmp.eq.s32.totalorder %s18, 0
    %p165 = por %p163, %p164
    %s166 = ssub.s32 %s12, %s19
    %p167 = scmp.eq.s32.totalorder %s166, 0
    %s169 = sadd.s32 %s168, 1
    %s170 = scalar_select %p167, %s168, %s169
    %p173 = pneg %p167
    %p174 = scmp.eq.s32.totalorder %s12, 1
    %p175 = por %p173, %p174
    %p176 = scmp.ne.s32.totalorder %s168, %s171
    %p177 = scmp.eq.s32.totalorder %s12, 0
    %p178 = por %p176, %p177
    %p179 = scmp.ne.s32.totalorder %s168, %s171
    %p180 = scmp.eq.s32.totalorder %s17, 1
    %p181 = por %p179, %p180
    %p182 = scmp.ne.s32.totalorder %s171, %s172
    %p183 = scmp.eq.s32.totalorder %s17, 0
    %p184 = por %p182, %p183
    %p185 = scmp.ne.s32.totalorder %s171, %s172
    %p186 = scmp.eq.s32.totalorder %s18, 1
    %p187 = por %p185, %p186
    %p189 = scmp.ne.s32.totalorder %s172, %s188
    %p190 = scmp.eq.s32.totalorder %s18, 0
    %p191 = por %p189, %p190
    %p192 = scmp.le.s32.totalorder 1, %s12
    %p193 = scmp.lt.s32.totalorder %s12, 3
    %p194 = pnand %p192, %p193
    %p195 = pneg %p194
    // Predicated region
    $region9: #{lnsnet_forward.3} parent=5 // pred_check
      _
    $region10: #{lnsnet_forward.3} parent=5 // pred_check_branch
      %197 = sbr.rel (%p194) target = $region12
    $region11: #{lnsnet_forward.3} parent=5 // pred_region
      %s198 = ssub.s32 %s12, 1
      // Predicated region
      $region13: #{lnsnet_forward.3} parent=11 // pred_check
        %p199 = pneg %p137
      $region14: #{lnsnet_forward.3} parent=11 // pred_check_branch
        %201 = sbr.rel (%p199) target = $region16
      $region15: #{lnsnet_forward.3} parent=11 // pred_region
        _
      $region16: #{lnsnet_forward.3} parent=11 // pred_fallthru
        _
      // Predicated region
      $region17: #{lnsnet_forward.3} parent=11 // pred_check
        %p202 = pneg %p158
      $region18: #{lnsnet_forward.3} parent=11 // pred_check_branch
        %204 = sbr.rel (%p202) target = $region20
      $region19: #{lnsnet_forward.3} parent=11 // pred_region
        _
      $region20: #{lnsnet_forward.3} parent=11 // pred_fallthru
        _
    $region12: #{lnsnet_forward.3} parent=5 // pred_fallthru
      _
    %p205 = scmp.lt.s32.totalorder %s12, 2
    // Predicated region
    $region21: #{lnsnet_forward.3} parent=5 // pred_check
      %p206 = pneg %p205
    $region22: #{lnsnet_forward.3} parent=5 // pred_check_branch
      %208 = sbr.rel (%p206) target = $region24
    $region23: #{lnsnet_forward.3} parent=5 // pred_region
      // Predicated region
      $region25: #{lnsnet_forward.3} parent=23 // pred_check
        %p209 = pneg %p32
      $region26: #{lnsnet_forward.3} parent=23 // pred_check_branch
        %211 = sbr.rel (%p209) target = $region28
      $region27: #{lnsnet_forward.3} parent=23 // pred_region
        %p212 = scmp.lt.s32.totalorder %s12, 1
        %s213 = scalar_select %p212, %s12, 1
        %s214 = smul.addr %s213, 85
        %s215 = smul.addr %s214, 4
        %s216 = scalar_lea.vmem %s0, %s215
      $region28: #{lnsnet_forward.3} parent=23 // pred_fallthru
        _
      // Predicated region
      $region29: #{lnsnet_forward.3} parent=23 // pred_check
        %p217 = pneg %p58
      $region30: #{lnsnet_forward.3} parent=23 // pred_check_branch
        %219 = sbr.rel (%p217) target = $region32
      $region31: #{lnsnet_forward.3} parent=23 // pred_region
        %p220 = scmp.lt.s32.totalorder %s12, 1
        %s221 = scalar_select %p220, %s12, 1
        %s222 = smul.addr %s221, 85
        %s223 = smul.addr %s222, 4
        %s224 = scalar_lea.vmem %s1, %s223
      $region32: #{lnsnet_forward.3} parent=23 // pred_fallthru
        _
      // Predicated region
      $region33: #{lnsnet_forward.3} parent=23 // pred_check
        %p225 = pneg %p84
      $region34: #{lnsnet_forward.3} parent=23 // pred_check_branch
        %227 = sbr.rel (%p225) target = $region36
      $region35: #{lnsnet_forward.3} parent=23 // pred_region
        %p228 = scmp.lt.s32.totalorder %s12, 1
        %s229 = scalar_select %p228, %s12, 1
        %s230 = smul.addr %s229, 85
        %s231 = smul.addr %s230, 4
        %s232 = scalar_lea.vmem %s2, %s231
      $region36: #{lnsnet_forward.3} parent=23 // pred_fallthru
        _
      // Predicated region
      $region37: #{lnsnet_forward.3} parent=23 // pred_check
        %p233 = pneg %p110
      $region38: #{lnsnet_forward.3} parent=23 // pred_check_branch
        %235 = sbr.rel (%p233) target = $region40
      $region39: #{lnsnet_forward.3} parent=23 // pred_region
        %p236 = scmp.lt.s32.totalorder %s12, 1
        %s237 = scalar_select %p236, %s12, 1
        %s238 = smul.addr %s237, 85
        %s239 = smul.addr %s238, 4
        %s240 = scalar_lea.vmem %s3, %s239
      $region40: #{lnsnet_forward.3} parent=23 // pred_fallthru
        _
    $region24: #{lnsnet_forward.3} parent=5 // pred_fallthru
      _
    %p241 = scmp.le.s32.totalorder 1, %s12
    %p242 = scmp.lt.s32.totalorder %s12, 3
    %p243 = pnand %p241, %p242
    %p244 = pneg %p243
    // Predicated region
    $region41: #{lnsnet_forward.3} parent=5 // pred_check
      _
    $region42: #{lnsnet_forward.3} parent=5 // pred_check_branch
      %246 = sbr.rel (%p243) target = $region44
    $region43: #{lnsnet_forward.3} parent=5 // pred_region
      %s247 = ssub.s32 %s12, 1
      %p248 = scmp.lt.s32.totalorder %s17, 1
      %s249 = scalar_select %p248, %s17, 1
      %s250 = smul.addr %s249, 85
      %s251 = smul.addr %s250, 4
      %s252 = scalar_lea.vmem %s0, %s251
      %p253 = pneg %p38
      %p254 = pneg %p35
      %p255 = scmp.lt.s32.totalorder %s17, 1
      %s256 = scalar_select %p255, %s17, 1
      %s257 = smul.addr %s256, 85
      %s258 = smul.addr %s257, 4
      %s259 = scalar_lea.vmem %s1, %s258
      %p260 = pneg %p64
      %p261 = pneg %p61
      %p262 = scmp.lt.s32.totalorder %s17, 1
      %s263 = scalar_select %p262, %s17, 1
      %s264 = smul.addr %s263, 85
      %s265 = smul.addr %s264, 4
      %s266 = scalar_lea.vmem %s2, %s265
      %p267 = pneg %p90
      %p268 = pneg %p87
      %p269 = scmp.lt.s32.totalorder %s17, 1
      %s270 = scalar_select %p269, %s17, 1
      %s271 = smul.addr %s270, 85
      %s272 = smul.addr %s271, 4
      %s273 = scalar_lea.vmem %s3, %s272
      %p274 = pneg %p116
      %p275 = pneg %p113
      %p276 = pneg %p137
      %p277 = pneg %p134
      %p278 = pneg %p158
      %p279 = pneg %p155
      %p280 = pneg %p184
      %p281 = pneg %p181
      %p282 = scmp.lt.s32.totalorder %s17, 1
      %s283 = scalar_select %p282, %s17, 1
      %s284 = smul.addr %s283, 85
      %s285 = smul.addr %s284, 4
      %s286 = scalar_lea.vmem %s6, %s285
      %p287 = scmp.lt.s32.totalorder %s17, 1
      %s288 = scalar_select %p287, %s17, 1
      %s289 = smul.addr %s288, 85
      %s290 = smul.addr %s289, 4
      %s291 = scalar_lea.vmem %s0, %s290
      %p292 = scmp.lt.s32.totalorder %s17, 1
      %s293 = scalar_select %p292, %s17, 1
      %s294 = smul.addr %s293, 85
      %s295 = smul.addr %s294, 4
      %s296 = scalar_lea.vmem %s1, %s295
      %p297 = scmp.lt.s32.totalorder %s17, 1
      %s298 = scalar_select %p297, %s17, 1
      %s299 = smul.addr %s298, 85
      %s300 = smul.addr %s299, 4
      %s301 = scalar_lea.vmem %s2, %s300
      %p302 = scmp.lt.s32.totalorder %s17, 1
      %s303 = scalar_select %p302, %s17, 1
      %s304 = smul.addr %s303, 85
      %s305 = smul.addr %s304, 4
      %s306 = scalar_lea.vmem %s3, %s305
      %p307 = scmp.lt.s32.totalorder %s17, 1
      %s308 = scalar_select %p307, %s17, 1
      %s309 = smul.addr %s308, 85
      %s310 = smul.addr %s309, 4
      %s311 = scalar_lea.vmem %s6, %s310
      %v313 = vld [vmem:[%s4] sm:$0xf]
      %v314 = vld [vmem:[%s4 + $0x4] sm:$0x1]
      %v315 = vld [vmem:[%s5] sm:$0x1]
      %v316 = vld [vmem:[%s291] sm:$0xf]
      %v317 = vld [vmem:[%s291 + $0x4] sm:$0xf]
      %v318 = vld [vmem:[%s291 + $0x8] sm:$0xf]
      %v319 = vld [vmem:[%s291 + $0xc] sm:$0xf]
      %v320 = vld [vmem:[%s291 + $0x10] sm:$0xf]
      %v321 = vld [vmem:[%s291 + $0x14] sm:$0xf]
      %v322 = vld [vmem:[%s291 + $0x18] sm:$0xf]
      %v323 = vld [vmem:[%s291 + $0x1c] sm:$0xf]
      %v324 = vld [vmem:[%s291 + $0x20] sm:$0xf]
      %v325 = vld [vmem:[%s291 + $0x24] sm:$0xf]
      %v326 = vld [vmem:[%s291 + $0x28] sm:$0xf]
      %v327 = vld [vmem:[%s291 + $0x2c] sm:$0xf]
      %v328 = vld [vmem:[%s291 + $0x30] sm:$0xf]
      %v329 = vld [vmem:[%s291 + $0x34] sm:$0xf]
      %v330 = vld [vmem:[%s291 + $0x38] sm:$0xf]
      %v331 = vld [vmem:[%s291 + $0x3c] sm:$0xf]
      %v332 = vld [vmem:[%s291 + $0x40] sm:$0xf]
      %v333 = vld [vmem:[%s291 + $0x44] sm:$0xf]
      %v334 = vld [vmem:[%s291 + $0x48] sm:$0xf]
      %v335 = vld [vmem:[%s291 + $0x4c] sm:$0xf]
      %v336 = vld [vmem:[%s291 + $0x50] sm:$0xf]
      %v337 = vld [vmem:[%s291 + $0x54] sm:$0xf]
      %v338 = vld [vmem:[%s291 + $0x58] sm:$0xf]
      %v339 = vld [vmem:[%s291 + $0x5c] sm:$0xf]
      %v340 = vld [vmem:[%s291 + $0x60] sm:$0xf]
      %v341 = vld [vmem:[%s291 + $0x64] sm:$0xf]
      %v342 = vld [vmem:[%s291 + $0x68] sm:$0xf]
      %v343 = vld [vmem:[%s291 + $0x6c] sm:$0xf]
      %v344 = vld [vmem:[%s291 + $0x70] sm:$0xf]
      %v345 = vld [vmem:[%s291 + $0x74] sm:$0xf]
      %v346 = vld [vmem:[%s291 + $0x78] sm:$0xf]
      %v347 = vld [vmem:[%s291 + $0x7c] sm:$0xf]
      %v348 = vld [vmem:[%s291 + $0x80] sm:$0xf]
      %v349 = vld [vmem:[%s291 + $0x84] sm:$0xf]
      %v350 = vld [vmem:[%s291 + $0x88] sm:$0xf]
      %v351 = vld [vmem:[%s291 + $0x8c] sm:$0xf]
      %v352 = vld [vmem:[%s291 + $0x90] sm:$0xf]
      %v353 = vld [vmem:[%s291 + $0x94] sm:$0xf]
      %v354 = vld [vmem:[%s291 + $0x98] sm:$0xf]
      %v355 = vld [vmem:[%s291 + $0x9c] sm:$0xf]
      %v356 = vld [vmem:[%s291 + $0xa0] sm:$0xf]
      %v357 = vld [vmem:[%s291 + $0xa4] sm:$0xf]
      %v358 = vld [vmem:[%s291 + $0xa8] sm:$0xf]
      %v359 = vld [vmem:[%s291 + $0xac] sm:$0xf]
      %v360 = vld [vmem:[%s291 + $0xb0] sm:$0xf]
      %v361 = vld [vmem:[%s291 + $0xb4] sm:$0xf]
      %v362 = vld [vmem:[%s291 + $0xb8] sm:$0xf]
      %v363 = vld [vmem:[%s291 + $0xbc] sm:$0xf]
      %v364 = vld [vmem:[%s291 + $0xc0] sm:$0xf]
      %v365 = vld [vmem:[%s291 + $0xc4] sm:$0xf]
      %v366 = vld [vmem:[%s291 + $0xc8] sm:$0xf]
      %v367 = vld [vmem:[%s291 + $0xcc] sm:$0xf]
      %v368 = vld [vmem:[%s291 + $0xd0] sm:$0xf]
      %v369 = vld [vmem:[%s291 + $0xd4] sm:$0xf]
      %v370 = vld [vmem:[%s291 + $0xd8] sm:$0xf]
      %v371 = vld [vmem:[%s291 + $0xdc] sm:$0xf]
      %v372 = vld [vmem:[%s291 + $0xe0] sm:$0xf]
      %v373 = vld [vmem:[%s291 + $0xe4] sm:$0xf]
      %v374 = vld [vmem:[%s291 + $0xe8] sm:$0xf]
      %v375 = vld [vmem:[%s291 + $0xec] sm:$0xf]
      %v376 = vld [vmem:[%s291 + $0xf0] sm:$0xf]
      %v377 = vld [vmem:[%s291 + $0xf4] sm:$0xf]
      %v378 = vld [vmem:[%s291 + $0xf8] sm:$0xf]
      %v379 = vld [vmem:[%s291 + $0xfc] sm:$0xf]
      %v380 = vld [vmem:[%s291 + $0x100] sm:$0xf]
      %v381 = vld [vmem:[%s291 + $0x104] sm:$0xf]
      %v382 = vld [vmem:[%s291 + $0x108] sm:$0xf]
      %v383 = vld [vmem:[%s291 + $0x10c] sm:$0xf]
      %v384 = vld [vmem:[%s291 + $0x110] sm:$0xf]
      %v385 = vld [vmem:[%s291 + $0x114] sm:$0xf]
      %v386 = vld [vmem:[%s291 + $0x118] sm:$0xf]
      %v387 = vld [vmem:[%s291 + $0x11c] sm:$0xf]
      %v388 = vld [vmem:[%s291 + $0x120] sm:$0xf]
      %v389 = vld [vmem:[%s291 + $0x124] sm:$0xf]
      %v390 = vld [vmem:[%s291 + $0x128] sm:$0xf]
      %v391 = vld [vmem:[%s291 + $0x12c] sm:$0xf]
      %v392 = vld [vmem:[%s291 + $0x130] sm:$0xf]
      %v393 = vld [vmem:[%s291 + $0x134] sm:$0xf]
      %v394 = vld [vmem:[%s291 + $0x138] sm:$0xf]
      %v395 = vld [vmem:[%s291 + $0x13c] sm:$0xf]
      %v396 = vld [vmem:[%s291 + $0x140] sm:$0xf]
      %v397 = vld [vmem:[%s291 + $0x144] sm:$0xf]
      %v398 = vld [vmem:[%s291 + $0x148] sm:$0xf]
      %v399 = vld [vmem:[%s291 + $0x14c] sm:$0xf]
      %v400 = vld [vmem:[%s291 + $0x150] sm:$0x3]
      %v486 = vunpack.c.l.b16 %v316
      %v487 = vunpack.c.l.b16 %v317
      %v488 = vunpack.c.l.b16 %v318
      %v489 = vunpack.c.l.b16 %v319
      %v490 = vunpack.c.l.b16 %v320
      %v491 = vunpack.c.l.b16 %v321
      %v492 = vunpack.c.l.b16 %v322
      %v493 = vunpack.c.l.b16 %v323
      %v494 = vunpack.c.l.b16 %v324
      %v495 = vunpack.c.l.b16 %v325
      %v496 = vunpack.c.l.b16 %v326
      %v497 = vunpack.c.l.b16 %v327
      %v498 = vunpack.c.l.b16 %v328
      %v499 = vunpack.c.l.b16 %v329
      %v500 = vunpack.c.l.b16 %v330
      %v501 = vunpack.c.l.b16 %v331
      %v502 = vunpack.c.l.b16 %v332
      %v503 = vunpack.c.l.b16 %v333
      %v504 = vunpack.c.l.b16 %v334
      %v505 = vunpack.c.l.b16 %v335
      %v506 = vunpack.c.l.b16 %v336
      %v507 = vunpack.c.l.b16 %v337
      %v508 = vunpack.c.l.b16 %v338
      %v509 = vunpack.c.l.b16 %v339
      %v510 = vunpack.c.l.b16 %v340
      %v511 = vunpack.c.l.b16 %v341
      %v512 = vunpack.c.l.b16 %v342
      %v513 = vunpack.c.l.b16 %v343
      %v514 = vunpack.c.l.b16 %v344
      %v515 = vunpack.c.l.b16 %v345
      %v516 = vunpack.c.l.b16 %v346
      %v517 = vunpack.c.l.b16 %v347
      %v518 = vunpack.c.l.b16 %v348
      %v519 = vunpack.c.l.b16 %v349
      %v520 = vunpack.c.l.b16 %v350
      %v521 = vunpack.c.l.b16 %v351
      %v522 = vunpack.c.l.b16 %v352
      %v523 = vunpack.c.l.b16 %v353
      %v524 = vunpack.c.l.b16 %v354
      %v525 = vunpack.c.l.b16 %v355
      %v526 = vunpack.c.l.b16 %v356
      %v527 = vunpack.c.l.b16 %v357
      %v528 = vunpack.c.l.b16 %v358
      %v529 = vunpack.c.l.b16 %v359
      %v530 = vunpack.c.l.b16 %v360
      %v531 = vunpack.c.l.b16 %v361
      %v532 = vunpack.c.l.b16 %v362
      %v533 = vunpack.c.l.b16 %v363
      %v534 = vunpack.c.l.b16 %v364
      %v535 = vunpack.c.l.b16 %v365
      %v536 = vunpack.c.l.b16 %v366
      %v537 = vunpack.c.l.b16 %v367
      %v538 = vunpack.c.l.b16 %v368
      %v539 = vunpack.c.l.b16 %v369
      %v540 = vunpack.c.l.b16 %v370
      %v541 = vunpack.c.l.b16 %v371
      %v542 = vunpack.c.l.b16 %v372
      %v543 = vunpack.c.l.b16 %v373
      %v544 = vunpack.c.l.b16 %v374
      %v545 = vunpack.c.l.b16 %v375
      %v546 = vunpack.c.l.b16 %v376
      %v547 = vunpack.c.l.b16 %v377
      %v548 = vunpack.c.l.b16 %v378
      %v549 = vunpack.c.l.b16 %v379
      %v550 = vunpack.c.l.b16 %v380
      %v551 = vunpack.c.l.b16 %v381
      %v552 = vunpack.c.l.b16 %v382
      %v553 = vunpack.c.l.b16 %v383
      %v554 = vunpack.c.l.b16 %v384
      %v555 = vunpack.c.l.b16 %v385
      %v556 = vunpack.c.l.b16 %v386
      %v557 = vunpack.c.l.b16 %v387
      %v558 = vunpack.c.l.b16 %v388
      %v559 = vunpack.c.l.b16 %v389
      %v560 = vunpack.c.l.b16 %v390
      %v561 = vunpack.c.l.b16 %v391
      %v562 = vunpack.c.l.b16 %v392
      %v563 = vunpack.c.l.b16 %v393
      %v564 = vunpack.c.l.b16 %v394
      %v565 = vunpack.c.l.b16 %v395
      %v566 = vunpack.c.l.b16 %v396
      %v567 = vunpack.c.l.b16 %v397
      %v568 = vunpack.c.l.b16 %v398
      %v569 = vunpack.c.l.b16 %v399
      %v570 = vunpack.c.l.b16 %v400
      %v571 = vpack.c.b16 %v487, %v486
      %v572 = vpack.c.b16 %v489, %v488
      %v573 = vpack.c.b16 %v491, %v490
      %v574 = vpack.c.b16 %v493, %v492
      %v575 = vpack.c.b16 %v495, %v494
      %v576 = vpack.c.b16 %v497, %v496
      %v577 = vpack.c.b16 %v499, %v498
      %v578 = vpack.c.b16 %v501, %v500
      %v579 = vpack.c.b16 %v503, %v502
      %v580 = vpack.c.b16 %v505, %v504
      %v581 = vpack.c.b16 %v507, %v506
      %v582 = vpack.c.b16 %v509, %v508
      %v583 = vpack.c.b16 %v511, %v510
      %v584 = vpack.c.b16 %v513, %v512
      %v585 = vpack.c.b16 %v515, %v514
      %v586 = vpack.c.b16 %v517, %v516
      %v587 = vpack.c.b16 %v519, %v518
      %v588 = vpack.c.b16 %v521, %v520
      %v589 = vpack.c.b16 %v523, %v522
      %v590 = vpack.c.b16 %v525, %v524
      %v591 = vpack.c.b16 %v527, %v526
      %v592 = vpack.c.b16 %v529, %v528
      %v593 = vpack.c.b16 %v531, %v530
      %v594 = vpack.c.b16 %v533, %v532
      %v595 = vpack.c.b16 %v535, %v534
      %v596 = vpack.c.b16 %v537, %v536
      %v597 = vpack.c.b16 %v539, %v538
      %v598 = vpack.c.b16 %v541, %v540
      %v599 = vpack.c.b16 %v543, %v542
      %v600 = vpack.c.b16 %v545, %v544
      %v601 = vpack.c.b16 %v547, %v546
      %v602 = vpack.c.b16 %v549, %v548
      %v603 = vpack.c.b16 %v551, %v550
      %v604 = vpack.c.b16 %v553, %v552
      %v605 = vpack.c.b16 %v555, %v554
      %v606 = vpack.c.b16 %v557, %v556
      %v607 = vpack.c.b16 %v559, %v558
      %v608 = vpack.c.b16 %v561, %v560
      %v609 = vpack.c.b16 %v563, %v562
      %v610 = vpack.c.b16 %v565, %v564
      %v611 = vpack.c.b16 %v567, %v566
      %v612 = vpack.c.b16 %v569, %v568
      %v613 = vpack.c.b16 %v570, %v570
      %v616 = vunpack.c.l.b16 %v313
      %v617 = vunpack.c.l.b16 %v314
      %v618 = vpack.c.b16 %v617, %v616
      %vm619 = vcmask 72704
      %v621 = vsel %vm619, %v571, 0
      %v624 = vsel %vm619, %v572, 0
      %v627 = vsel %vm619, %v573, 0
      %v630 = vsel %vm619, %v574, 0
      %v633 = vsel %vm619, %v575, 0
      %v636 = vsel %vm619, %v576, 0
      %v639 = vsel %vm619, %v577, 0
      %v642 = vsel %vm619, %v578, 0
      %v645 = vsel %vm619, %v579, 0
      %v648 = vsel %vm619, %v580, 0
      %v651 = vsel %vm619, %v581, 0
      %v654 = vsel %vm619, %v582, 0
      %v657 = vsel %vm619, %v583, 0
      %v660 = vsel %vm619, %v584, 0
      %v663 = vsel %vm619, %v585, 0
      %v666 = vsel %vm619, %v586, 0
      %v669 = vsel %vm619, %v587, 0
      %v672 = vsel %vm619, %v588, 0
      %v675 = vsel %vm619, %v589, 0
      %v678 = vsel %vm619, %v590, 0
      %v681 = vsel %vm619, %v591, 0
      %v684 = vsel %vm619, %v592, 0
      %v687 = vsel %vm619, %v593, 0
      %v690 = vsel %vm619, %v594, 0
      %v693 = vsel %vm619, %v595, 0
      %v696 = vsel %vm619, %v596, 0
      %v699 = vsel %vm619, %v597, 0
      %v702 = vsel %vm619, %v598, 0
      %v705 = vsel %vm619, %v599, 0
      %v708 = vsel %vm619, %v600, 0
      %v711 = vsel %vm619, %v601, 0
      %v714 = vsel %vm619, %v602, 0
      %v717 = vsel %vm619, %v603, 0
      %v720 = vsel %vm619, %v604, 0
      %v723 = vsel %vm619, %v605, 0
      %v726 = vsel %vm619, %v606, 0
      %v729 = vsel %vm619, %v607, 0
      %v732 = vsel %vm619, %v608, 0
      %v735 = vsel %vm619, %v609, 0
      %v738 = vsel %vm619, %v610, 0
      %v741 = vsel %vm619, %v611, 0
      %v744 = vsel %vm619, %v612, 0
      %v747 = vsel %vm619, %v613, 0
      %vm749 = vcmask 1043456
      %vm750 = vcmask 1044480
      %v751 = vsel %vm749, 4294967295, 65535
      %v752 = vsel %vm750, %v751, 0
      %v754 = vand.u32 %v618, %v752
      %756 = vmatprep.subr.bf16.mxu0 0
      %757 = vmatpush1.bf16.msra.mxu0 %v754
      %758 = vmatprep.subr.bf16.mxu0 0
      %759 = vmatpush1.bf16.msra.mxu0 0
      %760 = vmatprep.subr.bf16.mxu0 0
      %761 = vmatpush1.bf16.msra.mxu0 0
      %762 = vmatprep.subr.bf16.mxu0 0
      %763 = vmatpush1.bf16.msra.mxu0 0
      %764 = vmatprep.subr.bf16.mxu0 0
      %765 = vmatpush1.bf16.msra.mxu0 0
      %766 = vmatprep.subr.bf16.mxu0 0
      %767 = vmatpush1.bf16.msra.mxu0 0
      %768 = vmatprep.subr.bf16.mxu0 0
      %769 = vmatpush1.bf16.msra.mxu0 0
      %770 = vmatprep.subr.bf16.mxu0 0
      %771 = vmatpush1.bf16.msra.mxu0 0
      %772 = vmatprep.subr.bf16.mxu0 0
      %773 = vmatpush1.bf16.msra.mxu0 0
      %774 = vmatprep.subr.bf16.mxu0 0
      %775 = vmatpush1.bf16.msra.mxu0 0
      %776 = vmatprep.subr.bf16.mxu0 0
      %777 = vmatpush1.bf16.msra.mxu0 0
      %778 = vmatprep.subr.bf16.mxu0 0
      %779 = vmatpush1.bf16.msra.mxu0 0
      %780 = vmatprep.subr.bf16.mxu0 0
      %781 = vmatpush1.bf16.msra.mxu0 0
      %782 = vmatprep.subr.bf16.mxu0 0
      %783 = vmatpush1.bf16.msra.mxu0 0
      %784 = vmatprep.subr.bf16.mxu0 0
      %785 = vmatpush1.bf16.msra.mxu0 0
      %786 = vmatprep.subr.bf16.mxu0 0
      %787 = vmatpush1.bf16.msra.mxu0 0
      %788 = vmatprep.mubr.bf16.mxu0 0
      %789 = vmatmul.mubr.bf16.gmra.mrb[0].mxu0 %v621
      %v790 = vpop.f32.mrb[0].mxu0
      %v791 = vadd.f32 0.0, %v790
      %v792 = vpop.f32.mrb[0].mxu0
      %v793 = vpop.f32.mrb[0].mxu0
      %v794 = vadd.f32 0.0, %v793
      %v795 = vpop.f32.mrb[0].mxu0
      %796 = vmatprep.mubr.bf16.mxu0 0
      %797 = vmatmul.mubr.bf16.gmra.mrb[0].mxu0 %v624
      %v798 = vpop.f32.mrb[0].mxu0
      %v799 = vadd.f32 0.0, %v798
      %v800 = vpop.f32.mrb[0].mxu0
      %v801 = vpop.f32.mrb[0].mxu0
      %v802 = vadd.f32 0.0, %v801
      %v803 = vpop.f32.mrb[0].mxu0
      %804 = vmatprep.mubr.bf16.mxu0 0
      %805 = vmatmul.mubr.bf16.gmra.mrb[0].mxu0 %v627
      %v806 = vpop.f32.mrb[0].mxu0
      %v807 = vadd.f32 0.0, %v806
      %v808 = vpop.f32.mrb[0].mxu0
      %v809 = vpop.f32.mrb[0].mxu0
      %v810 = vadd.f32 0.0, %v809
      %v811 = vpop.f32.mrb[0].mxu0
      %812 = vmatprep.mubr.bf16.mxu0 0
      %813 = vmatmul.mubr.bf16.gmra.mrb[0].mxu0 %v630
      %v814 = vpop.f32.mrb[0].mxu0
      %v815 = vadd.f32 0.0, %v814
      %v816 = vpop.f32.mrb[0].mxu0
      %v817 = vpop.f32.mrb[0].mxu0
      %v818 = vadd.f32 0.0, %v817
      %v819 = vpop.f32.mrb[0].mxu0
      %820 = vmatprep.mubr.bf16.mxu0 0
      %821 = vmatmul.mubr.bf16.gmra.mrb[0].mxu0 %v633
      %v822 = vpop.f32.mrb[0].mxu0
      %v823 = vadd.f32 0.0, %v822
      %v824 = vpop.f32.mrb[0].mxu0
      %v825 = vpop.f32.mrb[0].mxu0
      %v826 = vadd.f32 0.0, %v825
      %v827 = vpop.f32.mrb[0].mxu0
      %828 = vmatprep.mubr.bf16.mxu0 0
      %829 = vmatmul.mubr.bf16.gmra.mrb[0].mxu0 %v636
      %v830 = vpop.f32.mrb[0].mxu0
      %v831 = vadd.f32 0.0, %v830
      %v832 = vpop.f32.mrb[0].mxu0
      %v833 = vpop.f32.mrb[0].mxu0
      %v834 = vadd.f32 0.0, %v833
      %v835 = vpop.f32.mrb[0].mxu0
      %836 = vmatprep.mubr.bf16.mxu0 0
      %837 = vmatmul.mubr.bf16.gmra.mrb[0].mxu0 %v639
      %v838 = vpop.f32.mrb[0].mxu0
      %v839 = vadd.f32 0.0, %v838
      %v840 = vpop.f32.mrb[0].mxu0
      %v841 = vpop.f32.mrb[0].mxu0
      %v842 = vadd.f32 0.0, %v841
      %v843 = vpop.f32.mrb[0].mxu0
      %844 = vmatprep.mubr.bf16.mxu0 0
      %845 = vmatmul.mubr.bf16.gmra.mrb[0].mxu0 %v642
      %v846 = vpop.f32.mrb[0].mxu0
      %v847 = vadd.f32 0.0, %v846
      %v848 = vpop.f32.mrb[0].mxu0
      %v849 = vpop.f32.mrb[0].mxu0
      %v850 = vadd.f32 0.0, %v849
      %v851 = vpop.f32.mrb[0].mxu0
      %852 = vmatprep.mubr.bf16.mxu0 0
      %853 = vmatmul.mubr.bf16.gmra.mrb[0].mxu0 %v645
      %v854 = vpop.f32.mrb[0].mxu0
      %v855 = vadd.f32 0.0, %v854
      %v856 = vpop.f32.mrb[0].mxu0
      %v857 = vpop.f32.mrb[0].mxu0
      %v858 = vadd.f32 0.0, %v857
      %v859 = vpop.f32.mrb[0].mxu0
      %860 = vmatprep.mubr.bf16.mxu0 0
      %861 = vmatmul.mubr.bf16.gmra.mrb[0].mxu0 %v648
      %v862 = vpop.f32.mrb[0].mxu0
      %v863 = vadd.f32 0.0, %v862
      %v864 = vpop.f32.mrb[0].mxu0
      %v865 = vpop.f32.mrb[0].mxu0
      %v866 = vadd.f32 0.0, %v865
      %v867 = vpop.f32.mrb[0].mxu0
      %868 = vmatprep.mubr.bf16.mxu0 0
      %869 = vmatmul.mubr.bf16.gmra.mrb[0].mxu0 %v651
      %v870 = vpop.f32.mrb[0].mxu0
      %v871 = vadd.f32 0.0, %v870
      %v872 = vpop.f32.mrb[0].mxu0
      %v873 = vpop.f32.mrb[0].mxu0
      %v874 = vadd.f32 0.0, %v873
      %v875 = vpop.f32.mrb[0].mxu0
      %876 = vmatprep.mubr.bf16.mxu0 0
      %877 = vmatmul.mubr.bf16.gmra.mrb[0].mxu0 %v654
      %v878 = vpop.f32.mrb[0].mxu0
      %v879 = vadd.f32 0.0, %v878
      %v880 = vpop.f32.mrb[0].mxu0
      %v881 = vpop.f32.mrb[0].mxu0
      %v882 = vadd.f32 0.0, %v881
      %v883 = vpop.f32.mrb[0].mxu0
      %884 = vmatprep.mubr.bf16.mxu0 0
      %885 = vmatmul.mubr.bf16.gmra.mrb[0].mxu0 %v657
      %v886 = vpop.f32.mrb[0].mxu0
      %v887 = vadd.f32 0.0, %v886
      %v888 = vpop.f32.mrb[0].mxu0
      %v889 = vpop.f32.mrb[0].mxu0
      %v890 = vadd.f32 0.0, %v889
      %v891 = vpop.f32.mrb[0].mxu0
      %892 = vmatprep.mubr.bf16.mxu0 0
      %893 = vmatmul.mubr.bf16.gmra.mrb[0].mxu0 %v660
      %v894 = vpop.f32.mrb[0].mxu0
      %v895 = vadd.f32 0.0, %v894
      %v896 = vpop.f32.mrb[0].mxu0
      %v897 = vpop.f32.mrb[0].mxu0
      %v898 = vadd.f32 0.0, %v897
      %v899 = vpop.f32.mrb[0].mxu0
      %900 = vmatprep.mubr.bf16.mxu0 0
      %901 = vmatmul.mubr.bf16.gmra.mrb[0].mxu0 %v663
      %v902 = vpop.f32.mrb[0].mxu0
      %v903 = vadd.f32 0.0, %v902
      %v904 = vpop.f32.mrb[0].mxu0
      %v905 = vpop.f32.mrb[0].mxu0
      %v906 = vadd.f32 0.0, %v905
      %v907 = vpop.f32.mrb[0].mxu0
      %908 = vmatprep.mubr.bf16.mxu0 0
      %909 = vmatmul.mubr.bf16.gmra.mrb[0].mxu0 %v666
      %v910 = vpop.f32.mrb[0].mxu0
      %v911 = vadd.f32 0.0, %v910
      %v912 = vpop.f32.mrb[0].mxu0
      %v913 = vpop.f32.mrb[0].mxu0
      %v914 = vadd.f32 0.0, %v913
      %v915 = vpop.f32.mrb[0].mxu0
      %916 = vmatprep.mubr.bf16.mxu0 0
      %917 = vmatmul.mubr.bf16.gmra.mrb[0].mxu0 %v669
      %v918 = vpop.f32.mrb[0].mxu0
      %v919 = vadd.f32 0.0, %v918
      %v920 = vpop.f32.mrb[0].mxu0
      %v921 = vpop.f32.mrb[0].mxu0
      %v922 = vadd.f32 0.0, %v921
      %v923 = vpop.f32.mrb[0].mxu0
      %924 = vmatprep.mubr.bf16.mxu0 0
      %925 = vmatmul.mubr.bf16.gmra.mrb[0].mxu0 %v672
      %v926 = vpop.f32.mrb[0].mxu0
      %v927 = vadd.f32 0.0, %v926
      %v928 = vpop.f32.mrb[0].mxu0
      %v929 = vpop.f32.mrb[0].mxu0
      %v930 = vadd.f32 0.0, %v929
      %v931 = vpop.f32.mrb[0].mxu0
      %932 = vmatprep.mubr.bf16.mxu0 0
      %933 = vmatmul.mubr.bf16.gmra.mrb[0].mxu0 %v675
      %v934 = vpop.f32.mrb[0].mxu0
      %v935 = vadd.f32 0.0, %v934
      %v936 = vpop.f32.mrb[0].mxu0
      %v937 = vpop.f32.mrb[0].mxu0
      %v938 = vadd.f32 0.0, %v937
      %v939 = vpop.f32.mrb[0].mxu0
      %940 = vmatprep.mubr.bf16.mxu0 0
      %941 = vmatmul.mubr.bf16.gmra.mrb[0].mxu0 %v678
      %v942 = vpop.f32.mrb[0].mxu0
      %v943 = vadd.f32 0.0, %v942
      %v944 = vpop.f32.mrb[0].mxu0
      %v945 = vpop.f32.mrb[0].mxu0
      %v946 = vadd.f32 0.0, %v945
      %v947 = vpop.f32.mrb[0].mxu0
      %948 = vmatprep.mubr.bf16.mxu0 0
      %949 = vmatmul.mubr.bf16.gmra.mrb[0].mxu0 %v681
      %v950 = vpop.f32.mrb[0].mxu0
      %v951 = vadd.f32 0.0, %v950
      %v952 = vpop.f32.mrb[0].mxu0
      %v953 = vpop.f32.mrb[0].mxu0
      %v954 = vadd.f32 0.0, %v953
      %v955 = vpop.f32.mrb[0].mxu0
      %956 = vmatprep.mubr.bf16.mxu0 0
      %957 = vmatmul.mubr.bf16.gmra.mrb[0].mxu0 %v684
      %v958 = vpop.f32.mrb[0].mxu0
      %v959 = vadd.f32 0.0, %v958
      %v960 = vpop.f32.mrb[0].mxu0
      %v961 = vpop.f32.mrb[0].mxu0
      %v962 = vadd.f32 0.0, %v961
      %v963 = vpop.f32.mrb[0].mxu0
      %964 = vmatprep.mubr.bf16.mxu0 0
      %965 = vmatmul.mubr.bf16.gmra.mrb[0].mxu0 %v687
      %v966 = vpop.f32.mrb[0].mxu0
      %v967 = vadd.f32 0.0, %v966
      %v968 = vpop.f32.mrb[0].mxu0
      %v969 = vpop.f32.mrb[0].mxu0
      %v970 = vadd.f32 0.0, %v969
      %v971 = vpop.f32.mrb[0].mxu0
      %972 = vmatprep.mubr.bf16.mxu0 0
      %973 = vmatmul.mubr.bf16.gmra.mrb[0].mxu0 %v690
      %v974 = vpop.f32.mrb[0].mxu0
      %v975 = vadd.f32 0.0, %v974
      %v976 = vpop.f32.mrb[0].mxu0
      %v977 = vpop.f32.mrb[0].mxu0
      %v978 = vadd.f32 0.0, %v977
      %v979 = vpop.f32.mrb[0].mxu0
      %980 = vmatprep.mubr.bf16.mxu0 0
      %981 = vmatmul.mubr.bf16.gmra.mrb[0].mxu0 %v693
      %v982 = vpop.f32.mrb[0].mxu0
      %v983 = vadd.f32 0.0, %v982
      %v984 = vpop.f32.mrb[0].mxu0
      %v985 = vpop.f32.mrb[0].mxu0
      %v986 = vadd.f32 0.0, %v985
      %v987 = vpop.f32.mrb[0].mxu0
      %988 = vmatprep.mubr.bf16.mxu0 0
      %989 = vmatmul.mubr.bf16.gmra.mrb[0].mxu0 %v696
      %v990 = vpop.f32.mrb[0].mxu0
      %v991 = vadd.f32 0.0, %v990
      %v992 = vpop.f32.mrb[0].mxu0
      %v993 = vpop.f32.mrb[0].mxu0
      %v994 = vadd.f32 0.0, %v993
      %v995 = vpop.f32.mrb[0].mxu0
      %996 = vmatprep.mubr.bf16.mxu0 0
      %997 = vmatmul.mubr.bf16.gmra.mrb[0].mxu0 %v699
      %v998 = vpop.f32.mrb[0].mxu0
      %v999 = vadd.f32 0.0, %v998
      %v1000 = vpop.f32.mrb[0].mxu0
      %v1001 = vpop.f32.mrb[0].mxu0
      %v1002 = vadd.f32 0.0, %v1001
      %v1003 = vpop.f32.mrb[0].mxu0
      %1004 = vmatprep.mubr.bf16.mxu0 0
      %1005 = vmatmul.mubr.bf16.gmra.mrb[0].mxu0 %v702
      %v1006 = vpop.f32.mrb[0].mxu0
      %v1007 = vadd.f32 0.0, %v1006
      %v1008 = vpop.f32.mrb[0].mxu0
      %v1009 = vpop.f32.mrb[0].mxu0
      %v1010 = vadd.f32 0.0, %v1009
      %v1011 = vpop.f32.mrb[0].mxu0
      %1012 = vmatprep.mubr.bf16.mxu0 0
      %1013 = vmatmul.mubr.bf16.gmra.mrb[0].mxu0 %v705
      %v1014 = vpop.f32.mrb[0].mxu0
      %v1015 = vadd.f32 0.0, %v1014
      %v1016 = vpop.f32.mrb[0].mxu0
      %v1017 = vpop.f32.mrb[0].mxu0
      %v1018 = vadd.f32 0.0, %v1017
      %v1019 = vpop.f32.mrb[0].mxu0
      %1020 = vmatprep.mubr.bf16.mxu0 0
      %1021 = vmatmul.mubr.bf16.gmra.mrb[0].mxu0 %v708
      %v1022 = vpop.f32.mrb[0].mxu0
      %v1023 = vadd.f32 0.0, %v1022
      %v1024 = vpop.f32.mrb[0].mxu0
      %v1025 = vpop.f32.mrb[0].mxu0
      %v1026 = vadd.f32 0.0, %v1025
      %v1027 = vpop.f32.mrb[0].mxu0
      %1028 = vmatprep.mubr.bf16.mxu0 0
      %1029 = vmatmul.mubr.bf16.gmra.mrb[0].mxu0 %v711
      %v1030 = vpop.f32.mrb[0].mxu0
      %v1031 = vadd.f32 0.0, %v1030
      %v1032 = vpop.f32.mrb[0].mxu0
      %v1033 = vpop.f32.mrb[0].mxu0
      %v1034 = vadd.f32 0.0, %v1033
      %v1035 = vpop.f32.mrb[0].mxu0
      %1036 = vmatprep.mubr.bf16.mxu0 0
      %1037 = vmatmul.mubr.bf16.gmra.mrb[0].mxu0 %v714
      %v1038 = vpop.f32.mrb[0].mxu0
      %v1039 = vadd.f32 0.0, %v1038
      %v1040 = vpop.f32.mrb[0].mxu0
      %v1041 = vpop.f32.mrb[0].mxu0
      %v1042 = vadd.f32 0.0, %v1041
      %v1043 = vpop.f32.mrb[0].mxu0
      %1044 = vmatprep.mubr.bf16.mxu0 0
      %1045 = vmatmul.mubr.bf16.gmra.mrb[0].mxu0 %v717
      %v1046 = vpop.f32.mrb[0].mxu0
      %v1047 = vadd.f32 0.0, %v1046
      %v1048 = vpop.f32.mrb[0].mxu0
      %v1049 = vpop.f32.mrb[0].mxu0
      %v1050 = vadd.f32 0.0, %v1049
      %v1051 = vpop.f32.mrb[0].mxu0
      %1052 = vmatprep.mubr.bf16.mxu0 0
      %1053 = vmatmul.mubr.bf16.gmra.mrb[0].mxu0 %v720
      %v1054 = vpop.f32.mrb[0].mxu0
      %v1055 = vadd.f32 0.0, %v1054
      %v1056 = vpop.f32.mrb[0].mxu0
      %v1057 = vpop.f32.mrb[0].mxu0
      %v1058 = vadd.f32 0.0, %v1057
      %v1059 = vpop.f32.mrb[0].mxu0
      %1060 = vmatprep.mubr.bf16.mxu0 0
      %1061 = vmatmul.mubr.bf16.gmra.mrb[0].mxu0 %v723
      %v1062 = vpop.f32.mrb[0].mxu0
      %v1063 = vadd.f32 0.0, %v1062
      %v1064 = vpop.f32.mrb[0].mxu0
      %v1065 = vpop.f32.mrb[0].mxu0
      %v1066 = vadd.f32 0.0, %v1065
      %v1067 = vpop.f32.mrb[0].mxu0
      %1068 = vmatprep.mubr.bf16.mxu0 0
      %1069 = vmatmul.mubr.bf16.gmra.mrb[0].mxu0 %v726
      %v1070 = vpop.f32.mrb[0].mxu0
      %v1071 = vadd.f32 0.0, %v1070
      %v1072 = vpop.f32.mrb[0].mxu0
      %v1073 = vpop.f32.mrb[0].mxu0
      %v1074 = vadd.f32 0.0, %v1073
      %v1075 = vpop.f32.mrb[0].mxu0
      %1076 = vmatprep.mubr.bf16.mxu0 0
      %1077 = vmatmul.mubr.bf16.gmra.mrb[0].mxu0 %v729
      %v1078 = vpop.f32.mrb[0].mxu0
      %v1079 = vadd.f32 0.0, %v1078
      %v1080 = vpop.f32.mrb[0].mxu0
      %v1081 = vpop.f32.mrb[0].mxu0
      %v1082 = vadd.f32 0.0, %v1081
      %v1083 = vpop.f32.mrb[0].mxu0
      %1084 = vmatprep.mubr.bf16.mxu0 0
      %1085 = vmatmul.mubr.bf16.gmra.mrb[0].mxu0 %v732
      %v1086 = vpop.f32.mrb[0].mxu0
      %v1087 = vadd.f32 0.0, %v1086
      %v1088 = vpop.f32.mrb[0].mxu0
      %v1089 = vpop.f32.mrb[0].mxu0
      %v1090 = vadd.f32 0.0, %v1089
      %v1091 = vpop.f32.mrb[0].mxu0
      %1092 = vmatprep.mubr.bf16.mxu0 0
      %1093 = vmatmul.mubr.bf16.gmra.mrb[0].mxu0 %v735
      %v1094 = vpop.f32.mrb[0].mxu0
      %v1095 = vadd.f32 0.0, %v1094
      %v1096 = vpop.f32.mrb[0].mxu0
      %v1097 = vpop.f32.mrb[0].mxu0
      %v1098 = vadd.f32 0.0, %v1097
      %v1099 = vpop.f32.mrb[0].mxu0
      %1100 = vmatprep.mubr.bf16.mxu0 0
      %1101 = vmatmul.mubr.bf16.gmra.mrb[0].mxu0 %v738
      %v1102 = vpop.f32.mrb[0].mxu0
      %v1103 = vadd.f32 0.0, %v1102
      %v1104 = vpop.f32.mrb[0].mxu0
      %v1105 = vpop.f32.mrb[0].mxu0
      %v1106 = vadd.f32 0.0, %v1105
      %v1107 = vpop.f32.mrb[0].mxu0
      %1108 = vmatprep.mubr.bf16.mxu0 0
      %1109 = vmatmul.mubr.bf16.gmra.mrb[0].mxu0 %v741
      %v1110 = vpop.f32.mrb[0].mxu0
      %v1111 = vadd.f32 0.0, %v1110
      %v1112 = vpop.f32.mrb[0].mxu0
      %v1113 = vpop.f32.mrb[0].mxu0
      %v1114 = vadd.f32 0.0, %v1113
      %v1115 = vpop.f32.mrb[0].mxu0
      %1116 = vmatprep.mubr.bf16.mxu0 0
      %1117 = vmatmul.mubr.bf16.gmra.mrb[0].mxu0 %v744
      %v1118 = vpop.f32.mrb[0].mxu0
      %v1119 = vadd.f32 0.0, %v1118
      %v1120 = vpop.f32.mrb[0].mxu0
      %v1121 = vpop.f32.mrb[0].mxu0
      %v1122 = vadd.f32 0.0, %v1121
      %v1123 = vpop.f32.mrb[0].mxu0
      %1124 = vmatprep.mubr.bf16.mxu0 0
      %1125 = vmatmul.mubr.bf16.gmra.mrb[0].mxu0 %v747
      %v1126 = vpop.f32.mrb[0].mxu0
      %v1127 = vadd.f32 0.0, %v1126
      %v1128 = vpop.f32.mrb[0].mxu0
      %v1129 = vpop.f32.mrb[0].mxu0
      %v1130 = vpop.f32.mrb[0].mxu0
      %1131 = vdwg.mxu0
      %v1132 = vld [vmem:[%s296] sm:$0xf]
      %v1133 = vld [vmem:[%s296 + $0x4] sm:$0xf]
      %v1134 = vld [vmem:[%s296 + $0x8] sm:$0xf]
      %v1135 = vld [vmem:[%s296 + $0xc] sm:$0xf]
      %v1136 = vld [vmem:[%s296 + $0x10] sm:$0xf]
      %v1137 = vld [vmem:[%s296 + $0x14] sm:$0xf]
      %v1138 = vld [vmem:[%s296 + $0x18] sm:$0xf]
      %v1139 = vld [vmem:[%s296 + $0x1c] sm:$0xf]
      %v1140 = vld [vmem:[%s296 + $0x20] sm:$0xf]
      %v1141 = vld [vmem:[%s296 + $0x24] sm:$0xf]
      %v1142 = vld [vmem:[%s296 + $0x28] sm:$0xf]
      %v1143 = vld [vmem:[%s296 + $0x2c] sm:$0xf]
      %v1144 = vld [vmem:[%s296 + $0x30] sm:$0xf]
      %v1145 = vld [vmem:[%s296 + $0x34] sm:$0xf]
      %v1146 = vld [vmem:[%s296 + $0x38] sm:$0xf]
      %v1147 = vld [vmem:[%s296 + $0x3c] sm:$0xf]
      %v1148 = vld [vmem:[%s296 + $0x40] sm:$0xf]
      %v1149 = vld [vmem:[%s296 + $0x44] sm:$0xf]
      %v1150 = vld [vmem:[%s296 + $0x48] sm:$0xf]
      %v1151 = vld [vmem:[%s296 + $0x4c] sm:$0xf]
      %v1152 = vld [vmem:[%s296 + $0x50] sm:$0xf]
      %v1153 = vld [vmem:[%s296 + $0x54] sm:$0xf]
      %v1154 = vld [vmem:[%s296 + $0x58] sm:$0xf]
      %v1155 = vld [vmem:[%s296 + $0x5c] sm:$0xf]
      %v1156 = vld [vmem:[%s296 + $0x60] sm:$0xf]
      %v1157 = vld [vmem:[%s296 + $0x64] sm:$0xf]
      %v1158 = vld [vmem:[%s296 + $0x68] sm:$0xf]
      %v1159 = vld [vmem:[%s296 + $0x6c] sm:$0xf]
      %v1160 = vld [vmem:[%s296 + $0x70] sm:$0xf]
      %v1161 = vld [vmem:[%s296 + $0x74] sm:$0xf]
      %v1162 = vld [vmem:[%s296 + $0x78] sm:$0xf]
      %v1163 = vld [vmem:[%s296 + $0x7c] sm:$0xf]
      %v1164 = vld [vmem:[%s296 + $0x80] sm:$0xf]
      %v1165 = vld [vmem:[%s296 + $0x84] sm:$0xf]
      %v1166 = vld [vmem:[%s296 + $0x88] sm:$0xf]
      %v1167 = vld [vmem:[%s296 + $0x8c] sm:$0xf]
      %v1168 = vld [vmem:[%s296 + $0x90] sm:$0xf]
      %v1169 = vld [vmem:[%s296 + $0x94] sm:$0xf]
      %v1170 = vld [vmem:[%s296 + $0x98] sm:$0xf]
      %v1171 = vld [vmem:[%s296 + $0x9c] sm:$0xf]
      %v1172 = vld [vmem:[%s296 + $0xa0] sm:$0xf]
      %v1173 = vld [vmem:[%s296 + $0xa4] sm:$0xf]
      %v1174 = vld [vmem:[%s296 + $0xa8] sm:$0xf]
      %v1175 = vld [vmem:[%s296 + $0xac] sm:$0xf]
      %v1176 = vld [vmem:[%s296 + $0xb0] sm:$0xf]
      %v1177 = vld [vmem:[%s296 + $0xb4] sm:$0xf]
      %v1178 = vld [vmem:[%s296 + $0xb8] sm:$0xf]
      %v1179 = vld [vmem:[%s296 + $0xbc] sm:$0xf]
      %v1180 = vld [vmem:[%s296 + $0xc0] sm:$0xf]
      %v1181 = vld [vmem:[%s296 + $0xc4] sm:$0xf]
      %v1182 = vld [vmem:[%s296 + $0xc8] sm:$0xf]
      %v1183 = vld [vmem:[%s296 + $0xcc] sm:$0xf]
      %v1184 = vld [vmem:[%s296 + $0xd0] sm:$0xf]
      %v1185 = vld [vmem:[%s296 + $0xd4] sm:$0xf]
      %v1186 = vld [vmem:[%s296 + $0xd8] sm:$0xf]
      %v1187 = vld [vmem:[%s296 + $0xdc] sm:$0xf]
      %v1188 = vld [vmem:[%s296 + $0xe0] sm:$0xf]
      %v1189 = vld [vmem:[%s296 + $0xe4] sm:$0xf]
      %v1190 = vld [vmem:[%s296 + $0xe8] sm:$0xf]
      %v1191 = vld [vmem:[%s296 + $0xec] sm:$0xf]
      %v1192 = vld [vmem:[%s296 + $0xf0] sm:$0xf]
      %v1193 = vld [vmem:[%s296 + $0xf4] sm:$0xf]
      %v1194 = vld [vmem:[%s296 + $0xf8] sm:$0xf]
      %v1195 = vld [vmem:[%s296 + $0xfc] sm:$0xf]
      %v1196 = vld [vmem:[%s296 + $0x100] sm:$0xf]
      %v1197 = vld [vmem:[%s296 + $0x104] sm:$0xf]
      %v1198 = vld [vmem:[%s296 + $0x108] sm:$0xf]
      %v1199 = vld [vmem:[%s296 + $0x10c] sm:$0xf]
      %v1200 = vld [vmem:[%s296 + $0x110] sm:$0xf]
      %v1201 = vld [vmem:[%s296 + $0x114] sm:$0xf]
      %v1202 = vld [vmem:[%s296 + $0x118] sm:$0xf]
      %v1203 = vld [vmem:[%s296 + $0x11c] sm:$0xf]
      %v1204 = vld [vmem:[%s296 + $0x120] sm:$0xf]
      %v1205 = vld [vmem:[%s296 + $0x124] sm:$0xf]
      %v1206 = vld [vmem:[%s296 + $0x128] sm:$0xf]
      %v1207 = vld [vmem:[%s296 + $0x12c] sm:$0xf]
      %v1208 = vld [vmem:[%s296 + $0x130] sm:$0xf]
      %v1209 = vld [vmem:[%s296 + $0x134] sm:$0xf]
      %v1210 = vld [vmem:[%s296 + $0x138] sm:$0xf]
      %v1211 = vld [vmem:[%s296 + $0x13c] sm:$0xf]
      %v1212 = vld [vmem:[%s296 + $0x140] sm:$0xf]
      %v1213 = vld [vmem:[%s296 + $0x144] sm:$0xf]
      %v1214 = vld [vmem:[%s296 + $0x148] sm:$0xf]
      %v1215 = vld [vmem:[%s296 + $0x14c] sm:$0xf]
      %v1216 = vld [vmem:[%s296 + $0x150] sm:$0x3]
      %v1302 = vunpack.c.l.b16 %v1132
      %v1303 = vunpack.c.l.b16 %v1133
      %v1304 = vunpack.c.l.b16 %v1134
      %v1305 = vunpack.c.l.b16 %v1135
      %v1306 = vunpack.c.l.b16 %v1136
      %v1307 = vunpack.c.l.b16 %v1137
      %v1308 = vunpack.c.l.b16 %v1138
      %v1309 = vunpack.c.l.b16 %v1139
      %v1310 = vunpack.c.l.b16 %v1140
      %v1311 = vunpack.c.l.b16 %v1141
      %v1312 = vunpack.c.l.b16 %v1142
      %v1313 = vunpack.c.l.b16 %v1143
      %v1314 = vunpack.c.l.b16 %v1144
      %v1315 = vunpack.c.l.b16 %v1145
      %v1316 = vunpack.c.l.b16 %v1146
      %v1317 = vunpack.c.l.b16 %v1147
      %v1318 = vunpack.c.l.b16 %v1148
      %v1319 = vunpack.c.l.b16 %v1149
      %v1320 = vunpack.c.l.b16 %v1150
      %v1321 = vunpack.c.l.b16 %v1151
      %v1322 = vunpack.c.l.b16 %v1152
      %v1323 = vunpack.c.l.b16 %v1153
      %v1324 = vunpack.c.l.b16 %v1154
      %v1325 = vunpack.c.l.b16 %v1155
      %v1326 = vunpack.c.l.b16 %v1156
      %v1327 = vunpack.c.l.b16 %v1157
      %v1328 = vunpack.c.l.b16 %v1158
      %v1329 = vunpack.c.l.b16 %v1159
      %v1330 = vunpack.c.l.b16 %v1160
      %v1331 = vunpack.c.l.b16 %v1161
      %v1332 = vunpack.c.l.b16 %v1162
      %v1333 = vunpack.c.l.b16 %v1163
      %v1334 = vunpack.c.l.b16 %v1164
      %v1335 = vunpack.c.l.b16 %v1165
      %v1336 = vunpack.c.l.b16 %v1166
      %v1337 = vunpack.c.l.b16 %v1167
      %v1338 = vunpack.c.l.b16 %v1168
      %v1339 = vunpack.c.l.b16 %v1169
      %v1340 = vunpack.c.l.b16 %v1170
      %v1341 = vunpack.c.l.b16 %v1171
      %v1342 = vunpack.c.l.b16 %v1172
      %v1343 = vunpack.c.l.b16 %v1173
      %v1344 = vunpack.c.l.b16 %v1174
      %v1345 = vunpack.c.l.b16 %v1175
      %v1346 = vunpack.c.l.b16 %v1176
      %v1347 = vunpack.c.l.b16 %v1177
      %v1348 = vunpack.c.l.b16 %v1178
      %v1349 = vunpack.c.l.b16 %v1179
      %v1350 = vunpack.c.l.b16 %v1180
      %v1351 = vunpack.c.l.b16 %v1181
      %v1352 = vunpack.c.l.b16 %v1182
      %v1353 = vunpack.c.l.b16 %v1183
      %v1354 = vunpack.c.l.b16 %v1184
      %v1355 = vunpack.c.l.b16 %v1185
      %v1356 = vunpack.c.l.b16 %v1186
      %v1357 = vunpack.c.l.b16 %v1187
      %v1358 = vunpack.c.l.b16 %v1188
      %v1359 = vunpack.c.l.b16 %v1189
      %v1360 = vunpack.c.l.b16 %v1190
      %v1361 = vunpack.c.l.b16 %v1191
      %v1362 = vunpack.c.l.b16 %v1192
      %v1363 = vunpack.c.l.b16 %v1193
      %v1364 = vunpack.c.l.b16 %v1194
      %v1365 = vunpack.c.l.b16 %v1195
      %v1366 = vunpack.c.l.b16 %v1196
      %v1367 = vunpack.c.l.b16 %v1197
      %v1368 = vunpack.c.l.b16 %v1198
      %v1369 = vunpack.c.l.b16 %v1199
      %v1370 = vunpack.c.l.b16 %v1200
      %v1371 = vunpack.c.l.b16 %v1201
      %v1372 = vunpack.c.l.b16 %v1202
      %v1373 = vunpack.c.l.b16 %v1203
      %v1374 = vunpack.c.l.b16 %v1204
      %v1375 = vunpack.c.l.b16 %v1205
      %v1376 = vunpack.c.l.b16 %v1206
      %v1377 = vunpack.c.l.b16 %v1207
      %v1378 = vunpack.c.l.b16 %v1208
      %v1379 = vunpack.c.l.b16 %v1209
      %v1380 = vunpack.c.l.b16 %v1210
      %v1381 = vunpack.c.l.b16 %v1211
      %v1382 = vunpack.c.l.b16 %v1212
      %v1383 = vunpack.c.l.b16 %v1213
      %v1384 = vunpack.c.l.b16 %v1214
      %v1385 = vunpack.c.l.b16 %v1215
      %v1386 = vunpack.c.l.b16 %v1216
      %v1387 = vpack.c.b16 %v1303, %v1302
      %v1388 = vpack.c.b16 %v1305, %v1304
      %v1389 = vpack.c.b16 %v1307, %v1306
      %v1390 = vpack.c.b16 %v1309, %v1308
      %v1391 = vpack.c.b16 %v1311, %v1310
      %v1392 = vpack.c.b16 %v1313, %v1312
      %v1393 = vpack.c.b16 %v1315, %v1314
      %v1394 = vpack.c.b16 %v1317, %v1316
      %v1395 = vpack.c.b16 %v1319, %v1318
      %v1396 = vpack.c.b16 %v1321, %v1320
      %v1397 = vpack.c.b16 %v1323, %v1322
      %v1398 = vpack.c.b16 %v1325, %v1324
      %v1399 = vpack.c.b16 %v1327, %v1326
      %v1400 = vpack.c.b16 %v1329, %v1328
      %v1401 = vpack.c.b16 %v1331, %v1330
      %v1402 = vpack.c.b16 %v1333, %v1332
      %v1403 = vpack.c.b16 %v1335, %v1334
      %v1404 = vpack.c.b16 %v1337, %v1336
      %v1405 = vpack.c.b16 %v1339, %v1338
      %v1406 = vpack.c.b16 %v1341, %v1340
      %v1407 = vpack.c.b16 %v1343, %v1342
      %v1408 = vpack.c.b16 %v1345, %v1344
      %v1409 = vpack.c.b16 %v1347, %v1346
      %v1410 = vpack.c.b16 %v1349, %v1348
      %v1411 = vpack.c.b16 %v1351, %v1350
      %v1412 = vpack.c.b16 %v1353, %v1352
      %v1413 = vpack.c.b16 %v1355, %v1354
      %v1414 = vpack.c.b16 %v1357, %v1356
      %v1415 = vpack.c.b16 %v1359, %v1358
      %v1416 = vpack.c.b16 %v1361, %v1360
      %v1417 = vpack.c.b16 %v1363, %v1362
      %v1418 = vpack.c.b16 %v1365, %v1364
      %v1419 = vpack.c.b16 %v1367, %v1366
      %v1420 = vpack.c.b16 %v1369, %v1368
      %v1421 = vpack.c.b16 %v1371, %v1370
      %v1422 = vpack.c.b16 %v1373, %v1372
      %v1423 = vpack.c.b16 %v1375, %v1374
      %v1424 = vpack.c.b16 %v1377, %v1376
      %v1425 = vpack.c.b16 %v1379, %v1378
      %v1426 = vpack.c.b16 %v1381, %v1380
      %v1427 = vpack.c.b16 %v1383, %v1382
      %v1428 = vpack.c.b16 %v1385, %v1384
      %v1429 = vpack.c.b16 %v1386, %v1386
      %v1431 = vsel %vm619, %v1387, 0
      %v1434 = vsel %vm619, %v1388, 0
      %v1437 = vsel %vm619, %v1389, 0
      %v1440 = vsel %vm619, %v1390, 0
      %v1443 = vsel %vm619, %v1391, 0
      %v1446 = vsel %vm619, %v1392, 0
      %v1449 = vsel %vm619, %v1393, 0
      %v1452 = vsel %vm619, %v1394, 0
      %v1455 = vsel %vm619, %v1395, 0
      %v1458 = vsel %vm619, %v1396, 0
      %v1461 = vsel %vm619, %v1397, 0
      %v1464 = vsel %vm619, %v1398, 0
      %v1467 = vsel %vm619, %v1399, 0
      %v1470 = vsel %vm619, %v1400, 0
      %v1473 = vsel %vm619, %v1401, 0
      %v1476 = vsel %vm619, %v1402, 0
      %v1479 = vsel %vm619, %v1403, 0
      %v1482 = vsel %vm619, %v1404, 0
      %v1485 = vsel %vm619, %v1405, 0
      %v1488 = vsel %vm619, %v1406, 0
      %v1491 = vsel %vm619, %v1407, 0
      %v1494 = vsel %vm619, %v1408, 0
      %v1497 = vsel %vm619, %v1409, 0
      %v1500 = vsel %vm619, %v1410, 0
      %v1503 = vsel %vm619, %v1411, 0
      %v1506 = vsel %vm619, %v1412, 0
      %v1509 = vsel %vm619, %v1413, 0
      %v1512 = vsel %vm619, %v1414, 0
      %v1515 = vsel %vm619, %v1415, 0
      %v1518 = vsel %vm619, %v1416, 0
      %v1521 = vsel %vm619, %v1417, 0
      %v1524 = vsel %vm619, %v1418, 0
      %v1527 = vsel %vm619, %v1419, 0
      %v1530 = vsel %vm619, %v1420, 0
      %v1533 = vsel %vm619, %v1421, 0
      %v1536 = vsel %vm619, %v1422, 0
      %v1539 = vsel %vm619, %v1423, 0
      %v1542 = vsel %vm619, %v1424, 0
      %v1545 = vsel %vm619, %v1425, 0
      %v1548 = vsel %vm619, %v1426, 0
      %v1551 = vsel %vm619, %v1427, 0
      %v1554 = vsel %vm619, %v1428, 0
      %v1557 = vsel %vm619, %v1429, 0
      %1559 = vmatprep.subr.bf16.mxu0 0
      %1560 = vmatpush1.bf16.msra.mxu0 %v754
      %1561 = vmatprep.subr.bf16.mxu0 0
      %1562 = vmatpush1.bf16.msra.mxu0 0
      %1563 = vmatprep.subr.bf16.mxu0 0
      %1564 = vmatpush1.bf16.msra.mxu0 0
      %1565 = vmatprep.subr.bf16.mxu0 0
      %1566 = vmatpush1.bf16.msra.mxu0 0
      %1567 = vmatprep.subr.bf16.mxu0 0
      %1568 = vmatpush1.bf16.msra.mxu0 0
      %1569 = vmatprep.subr.bf16.mxu0 0
      %1570 = vmatpush1.bf16.msra.mxu0 0
      %1571 = vmatprep.subr.bf16.mxu0 0
      %1572 = vmatpush1.bf16.msra.mxu0 0
      %1573 = vmatprep.subr.bf16.mxu0 0
      %1574 = vmatpush1.bf16.msra.mxu0 0
      %1575 = vmatprep.subr.bf16.mxu0 0
      %1576 = vmatpush1.bf16.msra.mxu0 0
      %1577 = vmatprep.subr.bf16.mxu0 0
      %1578 = vmatpush1.bf16.msra.mxu0 0
      %1579 = vmatprep.subr.bf16.mxu0 0
      %1580 = vmatpush1.bf16.msra.mxu0 0
      %1581 = vmatprep.subr.bf16.mxu0 0
      %1582 = vmatpush1.bf16.msra.mxu0 0
      %1583 = vmatprep.subr.bf16.mxu0 0
      %1584 = vmatpush1.bf16.msra.mxu0 0
      %1585 = vmatprep.subr.bf16.mxu0 0
      %1586 = vmatpush1.bf16.msra.mxu0 0
      %1587 = vmatprep.subr.bf16.mxu0 0
      %1588 = vmatpush1.bf16.msra.mxu0 0
      %1589 = vmatprep.subr.bf16.mxu0 0
      %1590 = vmatpush1.bf16.msra.mxu0 0
      %1591 = vmatprep.mubr.bf16.mxu0 0
      %1592 = vmatmul.mubr.bf16.gmra.mrb[0].mxu0 %v1431
      %v1593 = vpop.f32.mrb[0].mxu0
      %v1594 = vadd.f32 0.0, %v1593
      %v1595 = vpop.f32.mrb[0].mxu0
      %v1596 = vpop.f32.mrb[0].mxu0
      %v1597 = vadd.f32 0.0, %v1596
      %v1598 = vpop.f32.mrb[0].mxu0
      %1599 = vmatprep.mubr.bf16.mxu0 0
      %1600 = vmatmul.mubr.bf16.gmra.mrb[0].mxu0 %v1434
      %v1601 = vpop.f32.mrb[0].mxu0
      %v1602 = vadd.f32 0.0, %v1601
      %v1603 = vpop.f32.mrb[0].mxu0
      %v1604 = vpop.f32.mrb[0].mxu0
      %v1605 = vadd.f32 0.0, %v1604
      %v1606 = vpop.f32.mrb[0].mxu0
      %1607 = vmatprep.mubr.bf16.mxu0 0
      %1608 = vmatmul.mubr.bf16.gmra.mrb[0].mxu0 %v1437
      %v1609 = vpop.f32.mrb[0].mxu0
      %v1610 = vadd.f32 0.0, %v1609
      %v1611 = vpop.f32.mrb[0].mxu0
      %v1612 = vpop.f32.mrb[0].mxu0
      %v1613 = vadd.f32 0.0, %v1612
      %v1614 = vpop.f32.mrb[0].mxu0
      %1615 = vmatprep.mubr.bf16.mxu0 0
      %1616 = vmatmul.mubr.bf16.gmra.mrb[0].mxu0 %v1440
      %v1617 = vpop.f32.mrb[0].mxu0
      %v1618 = vadd.f32 0.0, %v1617
      %v1619 = vpop.f32.mrb[0].mxu0
      %v1620 = vpop.f32.mrb[0].mxu0
      %v1621 = vadd.f32 0.0, %v1620
      %v1622 = vpop.f32.mrb[0].mxu0
      %1623 = vmatprep.mubr.bf16.mxu0 0
      %1624 = vmatmul.mubr.bf16.gmra.mrb[0].mxu0 %v1443
      %v1625 = vpop.f32.mrb[0].mxu0
      %v1626 = vadd.f32 0.0, %v1625
      %v1627 = vpop.f32.mrb[0].mxu0
      %v1628 = vpop.f32.mrb[0].mxu0
      %v1629 = vadd.f32 0.0, %v1628
      %v1630 = vpop.f32.mrb[0].mxu0
      %1631 = vmatprep.mubr.bf16.mxu0 0
      %1632 = vmatmul.mubr.bf16.gmra.mrb[0].mxu0 %v1446
      %v1633 = vpop.f32.mrb[0].mxu0
      %v1634 = vadd.f32 0.0, %v1633
      %v1635 = vpop.f32.mrb[0].mxu0
      %v1636 = vpop.f32.mrb[0].mxu0
      %v1637 = vadd.f32 0.0, %v1636
      %v1638 = vpop.f32.mrb[0].mxu0
      %1639 = vmatprep.mubr.bf16.mxu0 0
      %1640 = vmatmul.mubr.bf16.gmra.mrb[0].mxu0 %v1449
      %v1641 = vpop.f32.mrb[0].mxu0
      %v1642 = vadd.f32 0.0, %v1641
      %v1643 = vpop.f32.mrb[0].mxu0
      %v1644 = vpop.f32.mrb[0].mxu0
      %v1645 = vadd.f32 0.0, %v1644
      %v1646 = vpop.f32.mrb[0].mxu0
      %1647 = vmatprep.mubr.bf16.mxu0 0
      %1648 = vmatmul.mubr.bf16.gmra.mrb[0].mxu0 %v1452
      %v1649 = vpop.f32.mrb[0].mxu0
      %v1650 = vadd.f32 0.0, %v1649
      %v1651 = vpop.f32.mrb[0].mxu0
      %v1652 = vpop.f32.mrb[0].mxu0
      %v1653 = vadd.f32 0.0, %v1652
      %v1654 = vpop.f32.mrb[0].mxu0
      %1655 = vmatprep.mubr.bf16.mxu0 0
      %1656 = vmatmul.mubr.bf16.gmra.mrb[0].mxu0 %v1455
      %v1657 = vpop.f32.mrb[0].mxu0
      %v1658 = vadd.f32 0.0, %v1657
      %v1659 = vpop.f32.mrb[0].mxu0
      %v1660 = vpop.f32.mrb[0].mxu0
      %v1661 = vadd.f32 0.0, %v1660
      %v1662 = vpop.f32.mrb[0].mxu0
      %1663 = vmatprep.mubr.bf16.mxu0 0
      %1664 = vmatmul.mubr.bf16.gmra.mrb[0].mxu0 %v1458
      %v1665 = vpop.f32.mrb[0].mxu0
      %v1666 = vadd.f32 0.0, %v1665
      %v1667 = vpop.f32.mrb[0].mxu0
      %v1668 = vpop.f32.mrb[0].mxu0
      %v1669 = vadd.f32 0.0, %v1668
      %v1670 = vpop.f32.mrb[0].mxu0
      %1671 = vmatprep.mubr.bf16.mxu0 0
      %1672 = vmatmul.mubr.bf16.gmra.mrb[0].mxu0 %v1461
      %v1673 = vpop.f32.mrb[0].mxu0
      %v1674 = vadd.f32 0.0, %v1673
      %v1675 = vpop.f32.mrb[0].mxu0
      %v1676 = vpop.f32.mrb[0].mxu0
      %v1677 = vadd.f32 0.0, %v1676
      %v1678 = vpop.f32.mrb[0].mxu0
      %1679 = vmatprep.mubr.bf16.mxu0 0
      %1680 = vmatmul.mubr.bf16.gmra.mrb[0].mxu0 %v1464
      %v1681 = vpop.f32.mrb[0].mxu0
      %v1682 = vadd.f32 0.0, %v1681
      %v1683 = vpop.f32.mrb[0].mxu0
      %v1684 = vpop.f32.mrb[0].mxu0
      %v1685 = vadd.f32 0.0, %v1684
      %v1686 = vpop.f32.mrb[0].mxu0
      %1687 = vmatprep.mubr.bf16.mxu0 0
      %1688 = vmatmul.mubr.bf16.gmra.mrb[0].mxu0 %v1467
      %v1689 = vpop.f32.mrb[0].mxu0
      %v1690 = vadd.f32 0.0, %v1689
      %v1691 = vpop.f32.mrb[0].mxu0
      %v1692 = vpop.f32.mrb[0].mxu0
      %v1693 = vadd.f32 0.0, %v1692
      %v1694 = vpop.f32.mrb[0].mxu0
      %1695 = vmatprep.mubr.bf16.mxu0 0
      %1696 = vmatmul.mubr.bf16.gmra.mrb[0].mxu0 %v1470
      %v1697 = vpop.f32.mrb[0].mxu0
      %v1698 = vadd.f32 0.0, %v1697
      %v1699 = vpop.f32.mrb[0].mxu0
      %v1700 = vpop.f32.mrb[0].mxu0
      %v1701 = vadd.f32 0.0, %v1700
      %v1702 = vpop.f32.mrb[0].mxu0
      %1703 = vmatprep.mubr.bf16.mxu0 0
      %1704 = vmatmul.mubr.bf16.gmra.mrb[0].mxu0 %v1473
      %v1705 = vpop.f32.mrb[0].mxu0
      %v1706 = vadd.f32 0.0, %v1705
      %v1707 = vpop.f32.mrb[0].mxu0
      %v1708 = vpop.f32.mrb[0].mxu0
      %v1709 = vadd.f32 0.0, %v1708
      %v1710 = vpop.f32.mrb[0].mxu0
      %1711 = vmatprep.mubr.bf16.mxu0 0
      %1712 = vmatmul.mubr.bf16.gmra.mrb[0].mxu0 %v1476
      %v1713 = vpop.f32.mrb[0].mxu0
      %v1714 = vadd.f32 0.0, %v1713
      %v1715 = vpop.f32.mrb[0].mxu0
      %v1716 = vpop.f32.mrb[0].mxu0
      %v1717 = vadd.f32 0.0, %v1716
      %v1718 = vpop.f32.mrb[0].mxu0
      %1719 = vmatprep.mubr.bf16.mxu0 0
      %1720 = vmatmul.mubr.bf16.gmra.mrb[0].mxu0 %v1479
      %v1721 = vpop.f32.mrb[0].mxu0
      %v1722 = vadd.f32 0.0, %v1721
      %v1723 = vpop.f32.mrb[0].mxu0
      %v1724 = vpop.f32.mrb[0].mxu0
      %v1725 = vadd.f32 0.0, %v1724
      %v1726 = vpop.f32.mrb[0].mxu0
      %1727 = vmatprep.mubr.bf16.mxu0 0
      %1728 = vmatmul.mubr.bf16.gmra.mrb[0].mxu0 %v1482
      %v1729 = vpop.f32.mrb[0].mxu0
      %v1730 = vadd.f32 0.0, %v1729
      %v1731 = vpop.f32.mrb[0].mxu0
      %v1732 = vpop.f32.mrb[0].mxu0
      %v1733 = vadd.f32 0.0, %v1732
      %v1734 = vpop.f32.mrb[0].mxu0
      %1735 = vmatprep.mubr.bf16.mxu0 0
      %1736 = vmatmul.mubr.bf16.gmra.mrb[0].mxu0 %v1485
      %v1737 = vpop.f32.mrb[0].mxu0
      %v1738 = vadd.f32 0.0, %v1737
      %v1739 = vpop.f32.mrb[0].mxu0
      %v1740 = vpop.f32.mrb[0].mxu0
      %v1741 = vadd.f32 0.0, %v1740
      %v1742 = vpop.f32.mrb[0].mxu0
      %1743 = vmatprep.mubr.bf16.mxu0 0
      %1744 = vmatmul.mubr.bf16.gmra.mrb[0].mxu0 %v1488
      %v1745 = vpop.f32.mrb[0].mxu0
      %v1746 = vadd.f32 0.0, %v1745
      %v1747 = vpop.f32.mrb[0].mxu0
      %v1748 = vpop.f32.mrb[0].mxu0
      %v1749 = vadd.f32 0.0, %v1748
      %v1750 = vpop.f32.mrb[0].mxu0
      %1751 = vmatprep.mubr.bf16.mxu0 0
      %1752 = vmatmul.mubr.bf16.gmra.mrb[0].mxu0 %v1491
      %v1753 = vpop.f32.mrb[0].mxu0
      %v1754 = vadd.f32 0.0, %v1753
      %v1755 = vpop.f32.mrb[0].mxu0
      %v1756 = vpop.f32.mrb[0].mxu0
      %v1757 = vadd.f32 0.0, %v1756
      %v1758 = vpop.f32.mrb[0].mxu0
      %1759 = vmatprep.mubr.bf16.mxu0 0
      %1760 = vmatmul.mubr.bf16.gmra.mrb[0].mxu0 %v1494
      %v1761 = vpop.f32.mrb[0].mxu0
      %v1762 = vadd.f32 0.0, %v1761
      %v1763 = vpop.f32.mrb[0].mxu0
      %v1764 = vpop.f32.mrb[0].mxu0
      %v1765 = vadd.f32 0.0, %v1764
      %v1766 = vpop.f32.mrb[0].mxu0
      %1767 = vmatprep.mubr.bf16.mxu0 0
      %1768 = vmatmul.mubr.bf16.gmra.mrb[0].mxu0 %v1497
      %v1769 = vpop.f32.mrb[0].mxu0
      %v1770 = vadd.f32 0.0, %v1769
      %v1771 = vpop.f32.mrb[0].mxu0
      %v1772 = vpop.f32.mrb[0].mxu0
      %v1773 = vadd.f32 0.0, %v1772
      %v1774 = vpop.f32.mrb[0].mxu0
      %1775 = vmatprep.mubr.bf16.mxu0 0
      %1776 = vmatmul.mubr.bf16.gmra.mrb[0].mxu0 %v1500
      %v1777 = vpop.f32.mrb[0].mxu0
      %v1778 = vadd.f32 0.0, %v1777
      %v1779 = vpop.f32.mrb[0].mxu0
      %v1780 = vpop.f32.mrb[0].mxu0
      %v1781 = vadd.f32 0.0, %v1780
      %v1782 = vpop.f32.mrb[0].mxu0
      %1783 = vmatprep.mubr.bf16.mxu0 0
      %1784 = vmatmul.mubr.bf16.gmra.mrb[0].mxu0 %v1503
      %v1785 = vpop.f32.mrb[0].mxu0
      %v1786 = vadd.f32 0.0, %v1785
      %v1787 = vpop.f32.mrb[0].mxu0
      %v1788 = vpop.f32.mrb[0].mxu0
      %v1789 = vadd.f32 0.0, %v1788
      %v1790 = vpop.f32.mrb[0].mxu0
      %1791 = vmatprep.mubr.bf16.mxu0 0
      %1792 = vmatmul.mubr.bf16.gmra.mrb[0].mxu0 %v1506
      %v1793 = vpop.f32.mrb[0].mxu0
      %v1794 = vadd.f32 0.0, %v1793
      %v1795 = vpop.f32.mrb[0].mxu0
      %v1796 = vpop.f32.mrb[0].mxu0
      %v1797 = vadd.f32 0.0, %v1796
      %v1798 = vpop.f32.mrb[0].mxu0
      %1799 = vmatprep.mubr.bf16.mxu0 0
      %1800 = vmatmul.mubr.bf16.gmra.mrb[0].mxu0 %v1509
      %v1801 = vpop.f32.mrb[0].mxu0
      %v1802 = vadd.f32 0.0, %v1801
      %v1803 = vpop.f32.mrb[0].mxu0
      %v1804 = vpop.f32.mrb[0].mxu0
      %v1805 = vadd.f32 0.0, %v1804
      %v1806 = vpop.f32.mrb[0].mxu0
      %1807 = vmatprep.mubr.bf16.mxu0 0
      %1808 = vmatmul.mubr.bf16.gmra.mrb[0].mxu0 %v1512
      %v1809 = vpop.f32.mrb[0].mxu0
      %v1810 = vadd.f32 0.0, %v1809
      %v1811 = vpop.f32.mrb[0].mxu0
      %v1812 = vpop.f32.mrb[0].mxu0
      %v1813 = vadd.f32 0.0, %v1812
      %v1814 = vpop.f32.mrb[0].mxu0
      %1815 = vmatprep.mubr.bf16.mxu0 0
      %1816 = vmatmul.mubr.bf16.gmra.mrb[0].mxu0 %v1515
      %v1817 = vpop.f32.mrb[0].mxu0
      %v1818 = vadd.f32 0.0, %v1817
      %v1819 = vpop.f32.mrb[0].mxu0
      %v1820 = vpop.f32.mrb[0].mxu0
      %v1821 = vadd.f32 0.0, %v1820
      %v1822 = vpop.f32.mrb[0].mxu0
      %1823 = vmatprep.mubr.bf16.mxu0 0
      %1824 = vmatmul.mubr.bf16.gmra.mrb[0].mxu0 %v1518
      %v1825 = vpop.f32.mrb[0].mxu0
      %v1826 = vadd.f32 0.0, %v1825
      %v1827 = vpop.f32.mrb[0].mxu0
      %v1828 = vpop.f32.mrb[0].mxu0
      %v1829 = vadd.f32 0.0, %v1828
      %v1830 = vpop.f32.mrb[0].mxu0
      %1831 = vmatprep.mubr.bf16.mxu0 0
      %1832 = vmatmul.mubr.bf16.gmra.mrb[0].mxu0 %v1521
      %v1833 = vpop.f32.mrb[0].mxu0
      %v1834 = vadd.f32 0.0, %v1833
      %v1835 = vpop.f32.mrb[0].mxu0
      %v1836 = vpop.f32.mrb[0].mxu0
      %v1837 = vadd.f32 0.0, %v1836
      %v1838 = vpop.f32.mrb[0].mxu0
      %1839 = vmatprep.mubr.bf16.mxu0 0
      %1840 = vmatmul.mubr.bf16.gmra.mrb[0].mxu0 %v1524
      %v1841 = vpop.f32.mrb[0].mxu0
      %v1842 = vadd.f32 0.0, %v1841
      %v1843 = vpop.f32.mrb[0].mxu0
      %v1844 = vpop.f32.mrb[0].mxu0
      %v1845 = vadd.f32 0.0, %v1844
      %v1846 = vpop.f32.mrb[0].mxu0
      %1847 = vmatprep.mubr.bf16.mxu0 0
      %1848 = vmatmul.mubr.bf16.gmra.mrb[0].mxu0 %v1527
      %v1849 = vpop.f32.mrb[0].mxu0
      %v1850 = vadd.f32 0.0, %v1849
      %v1851 = vpop.f32.mrb[0].mxu0
      %v1852 = vpop.f32.mrb[0].mxu0
      %v1853 = vadd.f32 0.0, %v1852
      %v1854 = vpop.f32.mrb[0].mxu0
      %1855 = vmatprep.mubr.bf16.mxu0 0
      %1856 = vmatmul.mubr.bf16.gmra.mrb[0].mxu0 %v1530
      %v1857 = vpop.f32.mrb[0].mxu0
      %v1858 = vadd.f32 0.0, %v1857
      %v1859 = vpop.f32.mrb[0].mxu0
      %v1860 = vpop.f32.mrb[0].mxu0
      %v1861 = vadd.f32 0.0, %v1860
      %v1862 = vpop.f32.mrb[0].mxu0
      %1863 = vmatprep.mubr.bf16.mxu0 0
      %1864 = vmatmul.mubr.bf16.gmra.mrb[0].mxu0 %v1533
      %v1865 = vpop.f32.mrb[0].mxu0
      %v1866 = vadd.f32 0.0, %v1865
      %v1867 = vpop.f32.mrb[0].mxu0
      %v1868 = vpop.f32.mrb[0].mxu0
      %v1869 = vadd.f32 0.0, %v1868
      %v1870 = vpop.f32.mrb[0].mxu0
      %1871 = vmatprep.mubr.bf16.mxu0 0
      %1872 = vmatmul.mubr.bf16.gmra.mrb[0].mxu0 %v1536
      %v1873 = vpop.f32.mrb[0].mxu0
      %v1874 = vadd.f32 0.0, %v1873
      %v1875 = vpop.f32.mrb[0].mxu0
      %v1876 = vpop.f32.mrb[0].mxu0
      %v1877 = vadd.f32 0.0, %v1876
      %v1878 = vpop.f32.mrb[0].mxu0
      %1879 = vmatprep.mubr.bf16.mxu0 0
      %1880 = vmatmul.mubr.bf16.gmra.mrb[0].mxu0 %v1539
      %v1881 = vpop.f32.mrb[0].mxu0
      %v1882 = vadd.f32 0.0, %v1881
      %v1883 = vpop.f32.mrb[0].mxu0
      %v1884 = vpop.f32.mrb[0].mxu0
      %v1885 = vadd.f32 0.0, %v1884
      %v1886 = vpop.f32.mrb[0].mxu0
      %1887 = vmatprep.mubr.bf16.mxu0 0
      %1888 = vmatmul.mubr.bf16.gmra.mrb[0].mxu0 %v1542
      %v1889 = vpop.f32.mrb[0].mxu0
      %v1890 = vadd.f32 0.0, %v1889
      %v1891 = vpop.f32.mrb[0].mxu0
      %v1892 = vpop.f32.mrb[0].mxu0
      %v1893 = vadd.f32 0.0, %v1892
      %v1894 = vpop.f32.mrb[0].mxu0
      %1895 = vmatprep.mubr.bf16.mxu0 0
      %1896 = vmatmul.mubr.bf16.gmra.mrb[0].mxu0 %v1545
      %v1897 = vpop.f32.mrb[0].mxu0
      %v1898 = vadd.f32 0.0, %v1897
      %v1899 = vpop.f32.mrb[0].mxu0
      %v1900 = vpop.f32.mrb[0].mxu0
      %v1901 = vadd.f32 0.0, %v1900
      %v1902 = vpop.f32.mrb[0].mxu0
      %1903 = vmatprep.mubr.bf16.mxu0 0
      %1904 = vmatmul.mubr.bf16.gmra.mrb[0].mxu0 %v1548
      %v1905 = vpop.f32.mrb[0].mxu0
      %v1906 = vadd.f32 0.0, %v1905
      %v1907 = vpop.f32.mrb[0].mxu0
      %v1908 = vpop.f32.mrb[0].mxu0
      %v1909 = vadd.f32 0.0, %v1908
      %v1910 = vpop.f32.mrb[0].mxu0
      %1911 = vmatprep.mubr.bf16.mxu0 0
      %1912 = vmatmul.mubr.bf16.gmra.mrb[0].mxu0 %v1551
      %v1913 = vpop.f32.mrb[0].mxu0
      %v1914 = vadd.f32 0.0, %v1913
      %v1915 = vpop.f32.mrb[0].mxu0
      %v1916 = vpop.f32.mrb[0].mxu0
      %v1917 = vadd.f32 0.0, %v1916
      %v1918 = vpop.f32.mrb[0].mxu0
      %1919 = vmatprep.mubr.bf16.mxu0 0
      %1920 = vmatmul.mubr.bf16.gmra.mrb[0].mxu0 %v1554
      %v1921 = vpop.f32.mrb[0].mxu0
      %v1922 = vadd.f32 0.0, %v1921
      %v1923 = vpop.f32.mrb[0].mxu0
      %v1924 = vpop.f32.mrb[0].mxu0
      %v1925 = vadd.f32 0.0, %v1924
      %v1926 = vpop.f32.mrb[0].mxu0
      %1927 = vmatprep.mubr.bf16.mxu0 0
      %1928 = vmatmul.mubr.bf16.gmra.mrb[0].mxu0 %v1557
      %v1929 = vpop.f32.mrb[0].mxu0
      %v1930 = vadd.f32 0.0, %v1929
      %v1931 = vpop.f32.mrb[0].mxu0
      %v1932 = vpop.f32.mrb[0].mxu0
      %v1933 = vpop.f32.mrb[0].mxu0
      %1934 = vdwg.mxu0
      %v1935 = vmax.f32 %v791, %v1594
      %v1936 = vmax.f32 %v794, %v1597
      %v1937 = vmax.f32 %v799, %v1602
      %v1938 = vmax.f32 %v802, %v1605
      %v1939 = vmax.f32 %v807, %v1610
      %v1940 = vmax.f32 %v810, %v1613
      %v1941 = vmax.f32 %v815, %v1618
      %v1942 = vmax.f32 %v818, %v1621
      %v1943 = vmax.f32 %v823, %v1626
      %v1944 = vmax.f32 %v826, %v1629
      %v1945 = vmax.f32 %v831, %v1634
      %v1946 = vmax.f32 %v834, %v1637
      %v1947 = vmax.f32 %v839, %v1642
      %v1948 = vmax.f32 %v842, %v1645
      %v1949 = vmax.f32 %v847, %v1650
      %v1950 = vmax.f32 %v850, %v1653
      %v1951 = vmax.f32 %v855, %v1658
      %v1952 = vmax.f32 %v858, %v1661
      %v1953 = vmax.f32 %v863, %v1666
      %v1954 = vmax.f32 %v866, %v1669
      %v1955 = vmax.f32 %v871, %v1674
      %v1956 = vmax.f32 %v874, %v1677
      %v1957 = vmax.f32 %v879, %v1682
      %v1958 = vmax.f32 %v882, %v1685
      %v1959 = vmax.f32 %v887, %v1690
      %v1960 = vmax.f32 %v890, %v1693
      %v1961 = vmax.f32 %v895, %v1698
      %v1962 = vmax.f32 %v898, %v1701
      %v1963 = vmax.f32 %v903, %v1706
      %v1964 = vmax.f32 %v906, %v1709
      %v1965 = vmax.f32 %v911, %v1714
      %v1966 = vmax.f32 %v914, %v1717
      %v1967 = vmax.f32 %v919, %v1722
      %v1968 = vmax.f32 %v922, %v1725
      %v1969 = vmax.f32 %v927, %v1730
      %v1970 = vmax.f32 %v930, %v1733
      %v1971 = vmax.f32 %v935, %v1738
      %v1972 = vmax.f32 %v938, %v1741
      %v1973 = vmax.f32 %v943, %v1746
      %v1974 = vmax.f32 %v946, %v1749
      %v1975 = vmax.f32 %v951, %v1754
      %v1976 = vmax.f32 %v954, %v1757
      %v1977 = vmax.f32 %v959, %v1762
      %v1978 = vmax.f32 %v962, %v1765
      %v1979 = vmax.f32 %v967, %v1770
      %v1980 = vmax.f32 %v970, %v1773
      %v1981 = vmax.f32 %v975, %v1778
      %v1982 = vmax.f32 %v978, %v1781
      %v1983 = vmax.f32 %v983, %v1786
      %v1984 = vmax.f32 %v986, %v1789
      %v1985 = vmax.f32 %v991, %v1794
      %v1986 = vmax.f32 %v994, %v1797
      %v1987 = vmax.f32 %v999, %v1802
      %v1988 = vmax.f32 %v1002, %v1805
      %v1989 = vmax.f32 %v1007, %v1810
      %v1990 = vmax.f32 %v1010, %v1813
      %v1991 = vmax.f32 %v1015, %v1818
      %v1992 = vmax.f32 %v1018, %v1821
      %v1993 = vmax.f32 %v1023, %v1826
      %v1994 = vmax.f32 %v1026, %v1829
      %v1995 = vmax.f32 %v1031, %v1834
      %v1996 = vmax.f32 %v1034, %v1837
      %v1997 = vmax.f32 %v1039, %v1842
      %v1998 = vmax.f32 %v1042, %v1845
      %v1999 = vmax.f32 %v1047, %v1850
      %v2000 = vmax.f32 %v1050, %v1853
      %v2001 = vmax.f32 %v1055, %v1858
      %v2002 = vmax.f32 %v1058, %v1861
      %v2003 = vmax.f32 %v1063, %v1866
      %v2004 = vmax.f32 %v1066, %v1869
      %v2005 = vmax.f32 %v1071, %v1874
      %v2006 = vmax.f32 %v1074, %v1877
      %v2007 = vmax.f32 %v1079, %v1882
      %v2008 = vmax.f32 %v1082, %v1885
      %v2009 = vmax.f32 %v1087, %v1890
      %v2010 = vmax.f32 %v1090, %v1893
      %v2011 = vmax.f32 %v1095, %v1898
      %v2012 = vmax.f32 %v1098, %v1901
      %v2013 = vmax.f32 %v1103, %v1906
      %v2014 = vmax.f32 %v1106, %v1909
      %v2015 = vmax.f32 %v1111, %v1914
      %v2016 = vmax.f32 %v1114, %v1917
      %v2017 = vmax.f32 %v1119, %v1922
      %v2018 = vmax.f32 %v1122, %v1925
      %v2019 = vmax.f32 %v1127, %v1930
      %v2020 = vld [vmem:[%s301] sm:$0xf]
      %v2021 = vld [vmem:[%s301 + $0x4] sm:$0xf]
      %v2022 = vld [vmem:[%s301 + $0x8] sm:$0xf]
      %v2023 = vld [vmem:[%s301 + $0xc] sm:$0xf]
      %v2024 = vld [vmem:[%s301 + $0x10] sm:$0xf]
      %v2025 = vld [vmem:[%s301 + $0x14] sm:$0xf]
      %v2026 = vld [vmem:[%s301 + $0x18] sm:$0xf]
      %v2027 = vld [vmem:[%s301 + $0x1c] sm:$0xf]
      %v2028 = vld [vmem:[%s301 + $0x20] sm:$0xf]
      %v2029 = vld [vmem:[%s301 + $0x24] sm:$0xf]
      %v2030 = vld [vmem:[%s301 + $0x28] sm:$0xf]
      %v2031 = vld [vmem:[%s301 + $0x2c] sm:$0xf]
      %v2032 = vld [vmem:[%s301 + $0x30] sm:$0xf]
      %v2033 = vld [vmem:[%s301 + $0x34] sm:$0xf]
      %v2034 = vld [vmem:[%s301 + $0x38] sm:$0xf]
      %v2035 = vld [vmem:[%s301 + $0x3c] sm:$0xf]
      %v2036 = vld [vmem:[%s301 + $0x40] sm:$0xf]
      %v2037 = vld [vmem:[%s301 + $0x44] sm:$0xf]
      %v2038 = vld [vmem:[%s301 + $0x48] sm:$0xf]
      %v2039 = vld [vmem:[%s301 + $0x4c] sm:$0xf]
      %v2040 = vld [vmem:[%s301 + $0x50] sm:$0xf]
      %v2041 = vld [vmem:[%s301 + $0x54] sm:$0xf]
      %v2042 = vld [vmem:[%s301 + $0x58] sm:$0xf]
      %v2043 = vld [vmem:[%s301 + $0x5c] sm:$0xf]
      %v2044 = vld [vmem:[%s301 + $0x60] sm:$0xf]
      %v2045 = vld [vmem:[%s301 + $0x64] sm:$0xf]
      %v2046 = vld [vmem:[%s301 + $0x68] sm:$0xf]
      %v2047 = vld [vmem:[%s301 + $0x6c] sm:$0xf]
      %v2048 = vld [vmem:[%s301 + $0x70] sm:$0xf]
      %v2049 = vld [vmem:[%s301 + $0x74] sm:$0xf]
      %v2050 = vld [vmem:[%s301 + $0x78] sm:$0xf]
      %v2051 = vld [vmem:[%s301 + $0x7c] sm:$0xf]
      %v2052 = vld [vmem:[%s301 + $0x80] sm:$0xf]
      %v2053 = vld [vmem:[%s301 + $0x84] sm:$0xf]
      %v2054 = vld [vmem:[%s301 + $0x88] sm:$0xf]
      %v2055 = vld [vmem:[%s301 + $0x8c] sm:$0xf]
      %v2056 = vld [vmem:[%s301 + $0x90] sm:$0xf]
      %v2057 = vld [vmem:[%s301 + $0x94] sm:$0xf]
      %v2058 = vld [vmem:[%s301 + $0x98] sm:$0xf]
      %v2059 = vld [vmem:[%s301 + $0x9c] sm:$0xf]
      %v2060 = vld [vmem:[%s301 + $0xa0] sm:$0xf]
      %v2061 = vld [vmem:[%s301 + $0xa4] sm:$0xf]
      %v2062 = vld [vmem:[%s301 + $0xa8] sm:$0xf]
      %v2063 = vld [vmem:[%s301 + $0xac] sm:$0xf]
      %v2064 = vld [vmem:[%s301 + $0xb0] sm:$0xf]
      %v2065 = vld [vmem:[%s301 + $0xb4] sm:$0xf]
      %v2066 = vld [vmem:[%s301 + $0xb8] sm:$0xf]
      %v2067 = vld [vmem:[%s301 + $0xbc] sm:$0xf]
      %v2068 = vld [vmem:[%s301 + $0xc0] sm:$0xf]
      %v2069 = vld [vmem:[%s301 + $0xc4] sm:$0xf]
      %v2070 = vld [vmem:[%s301 + $0xc8] sm:$0xf]
      %v2071 = vld [vmem:[%s301 + $0xcc] sm:$0xf]
      %v2072 = vld [vmem:[%s301 + $0xd0] sm:$0xf]
      %v2073 = vld [vmem:[%s301 + $0xd4] sm:$0xf]
      %v2074 = vld [vmem:[%s301 + $0xd8] sm:$0xf]
      %v2075 = vld [vmem:[%s301 + $0xdc] sm:$0xf]
      %v2076 = vld [vmem:[%s301 + $0xe0] sm:$0xf]
      %v2077 = vld [vmem:[%s301 + $0xe4] sm:$0xf]
      %v2078 = vld [vmem:[%s301 + $0xe8] sm:$0xf]
      %v2079 = vld [vmem:[%s301 + $0xec] sm:$0xf]
      %v2080 = vld [vmem:[%s301 + $0xf0] sm:$0xf]
      %v2081 = vld [vmem:[%s301 + $0xf4] sm:$0xf]
      %v2082 = vld [vmem:[%s301 + $0xf8] sm:$0xf]
      %v2083 = vld [vmem:[%s301 + $0xfc] sm:$0xf]
      %v2084 = vld [vmem:[%s301 + $0x100] sm:$0xf]
      %v2085 = vld [vmem:[%s301 + $0x104] sm:$0xf]
      %v2086 = vld [vmem:[%s301 + $0x108] sm:$0xf]
      %v2087 = vld [vmem:[%s301 + $0x10c] sm:$0xf]
      %v2088 = vld [vmem:[%s301 + $0x110] sm:$0xf]
      %v2089 = vld [vmem:[%s301 + $0x114] sm:$0xf]
      %v2090 = vld [vmem:[%s301 + $0x118] sm:$0xf]
      %v2091 = vld [vmem:[%s301 + $0x11c] sm:$0xf]
      %v2092 = vld [vmem:[%s301 + $0x120] sm:$0xf]
      %v2093 = vld [vmem:[%s301 + $0x124] sm:$0xf]
      %v2094 = vld [vmem:[%s301 + $0x128] sm:$0xf]
      %v2095 = vld [vmem:[%s301 + $0x12c] sm:$0xf]
      %v2096 = vld [vmem:[%s301 + $0x130] sm:$0xf]
      %v2097 = vld [vmem:[%s301 + $0x134] sm:$0xf]
      %v2098 = vld [vmem:[%s301 + $0x138] sm:$0xf]
      %v2099 = vld [vmem:[%s301 + $0x13c] sm:$0xf]
      %v2100 = vld [vmem:[%s301 + $0x140] sm:$0xf]
      %v2101 = vld [vmem:[%s301 + $0x144] sm:$0xf]
      %v2102 = vld [vmem:[%s301 + $0x148] sm:$0xf]
      %v2103 = vld [vmem:[%s301 + $0x14c] sm:$0xf]
      %v2104 = vld [vmem:[%s301 + $0x150] sm:$0x3]
      %v2190 = vunpack.c.l.b16 %v2020
      %v2191 = vunpack.c.l.b16 %v2021
      %v2192 = vunpack.c.l.b16 %v2022
      %v2193 = vunpack.c.l.b16 %v2023
      %v2194 = vunpack.c.l.b16 %v2024
      %v2195 = vunpack.c.l.b16 %v2025
      %v2196 = vunpack.c.l.b16 %v2026
      %v2197 = vunpack.c.l.b16 %v2027
      %v2198 = vunpack.c.l.b16 %v2028
      %v2199 = vunpack.c.l.b16 %v2029
      %v2200 = vunpack.c.l.b16 %v2030
      %v2201 = vunpack.c.l.b16 %v2031
      %v2202 = vunpack.c.l.b16 %v2032
      %v2203 = vunpack.c.l.b16 %v2033
      %v2204 = vunpack.c.l.b16 %v2034
      %v2205 = vunpack.c.l.b16 %v2035
      %v2206 = vunpack.c.l.b16 %v2036
      %v2207 = vunpack.c.l.b16 %v2037
      %v2208 = vunpack.c.l.b16 %v2038
      %v2209 = vunpack.c.l.b16 %v2039
      %v2210 = vunpack.c.l.b16 %v2040
      %v2211 = vunpack.c.l.b16 %v2041
      %v2212 = vunpack.c.l.b16 %v2042
      %v2213 = vunpack.c.l.b16 %v2043
      %v2214 = vunpack.c.l.b16 %v2044
      %v2215 = vunpack.c.l.b16 %v2045
      %v2216 = vunpack.c.l.b16 %v2046
      %v2217 = vunpack.c.l.b16 %v2047
      %v2218 = vunpack.c.l.b16 %v2048
      %v2219 = vunpack.c.l.b16 %v2049
      %v2220 = vunpack.c.l.b16 %v2050
      %v2221 = vunpack.c.l.b16 %v2051
      %v2222 = vunpack.c.l.b16 %v2052
      %v2223 = vunpack.c.l.b16 %v2053
      %v2224 = vunpack.c.l.b16 %v2054
      %v2225 = vunpack.c.l.b16 %v2055
      %v2226 = vunpack.c.l.b16 %v2056
      %v2227 = vunpack.c.l.b16 %v2057
      %v2228 = vunpack.c.l.b16 %v2058
      %v2229 = vunpack.c.l.b16 %v2059
      %v2230 = vunpack.c.l.b16 %v2060
      %v2231 = vunpack.c.l.b16 %v2061
      %v2232 = vunpack.c.l.b16 %v2062
      %v2233 = vunpack.c.l.b16 %v2063
      %v2234 = vunpack.c.l.b16 %v2064
      %v2235 = vunpack.c.l.b16 %v2065
      %v2236 = vunpack.c.l.b16 %v2066
      %v2237 = vunpack.c.l.b16 %v2067
      %v2238 = vunpack.c.l.b16 %v2068
      %v2239 = vunpack.c.l.b16 %v2069
      %v2240 = vunpack.c.l.b16 %v2070
      %v2241 = vunpack.c.l.b16 %v2071
      %v2242 = vunpack.c.l.b16 %v2072
      %v2243 = vunpack.c.l.b16 %v2073
      %v2244 = vunpack.c.l.b16 %v2074
      %v2245 = vunpack.c.l.b16 %v2075
      %v2246 = vunpack.c.l.b16 %v2076
      %v2247 = vunpack.c.l.b16 %v2077
      %v2248 = vunpack.c.l.b16 %v2078
      %v2249 = vunpack.c.l.b16 %v2079
      %v2250 = vunpack.c.l.b16 %v2080
      %v2251 = vunpack.c.l.b16 %v2081
      %v2252 = vunpack.c.l.b16 %v2082
      %v2253 = vunpack.c.l.b16 %v2083
      %v2254 = vunpack.c.l.b16 %v2084
      %v2255 = vunpack.c.l.b16 %v2085
      %v2256 = vunpack.c.l.b16 %v2086
      %v2257 = vunpack.c.l.b16 %v2087
      %v2258 = vunpack.c.l.b16 %v2088
      %v2259 = vunpack.c.l.b16 %v2089
      %v2260 = vunpack.c.l.b16 %v2090
      %v2261 = vunpack.c.l.b16 %v2091
      %v2262 = vunpack.c.l.b16 %v2092
      %v2263 = vunpack.c.l.b16 %v2093
      %v2264 = vunpack.c.l.b16 %v2094
      %v2265 = vunpack.c.l.b16 %v2095
      %v2266 = vunpack.c.l.b16 %v2096
      %v2267 = vunpack.c.l.b16 %v2097
      %v2268 = vunpack.c.l.b16 %v2098
      %v2269 = vunpack.c.l.b16 %v2099
      %v2270 = vunpack.c.l.b16 %v2100
      %v2271 = vunpack.c.l.b16 %v2101
      %v2272 = vunpack.c.l.b16 %v2102
      %v2273 = vunpack.c.l.b16 %v2103
      %v2274 = vunpack.c.l.b16 %v2104
      %v2275 = vpack.c.b16 %v2191, %v2190
      %v2276 = vpack.c.b16 %v2193, %v2192
      %v2277 = vpack.c.b16 %v2195, %v2194
      %v2278 = vpack.c.b16 %v2197, %v2196
      %v2279 = vpack.c.b16 %v2199, %v2198
      %v2280 = vpack.c.b16 %v2201, %v2200
      %v2281 = vpack.c.b16 %v2203, %v2202
      %v2282 = vpack.c.b16 %v2205, %v2204
      %v2283 = vpack.c.b16 %v2207, %v2206
      %v2284 = vpack.c.b16 %v2209, %v2208
      %v2285 = vpack.c.b16 %v2211, %v2210
      %v2286 = vpack.c.b16 %v2213, %v2212
      %v2287 = vpack.c.b16 %v2215, %v2214
      %v2288 = vpack.c.b16 %v2217, %v2216
      %v2289 = vpack.c.b16 %v2219, %v2218
      %v2290 = vpack.c.b16 %v2221, %v2220
      %v2291 = vpack.c.b16 %v2223, %v2222
      %v2292 = vpack.c.b16 %v2225, %v2224
      %v2293 = vpack.c.b16 %v2227, %v2226
      %v2294 = vpack.c.b16 %v2229, %v2228
      %v2295 = vpack.c.b16 %v2231, %v2230
      %v2296 = vpack.c.b16 %v2233, %v2232
      %v2297 = vpack.c.b16 %v2235, %v2234
      %v2298 = vpack.c.b16 %v2237, %v2236
      %v2299 = vpack.c.b16 %v2239, %v2238
      %v2300 = vpack.c.b16 %v2241, %v2240
      %v2301 = vpack.c.b16 %v2243, %v2242
      %v2302 = vpack.c.b16 %v2245, %v2244
      %v2303 = vpack.c.b16 %v2247, %v2246
      %v2304 = vpack.c.b16 %v2249, %v2248
      %v2305 = vpack.c.b16 %v2251, %v2250
      %v2306 = vpack.c.b16 %v2253, %v2252
      %v2307 = vpack.c.b16 %v2255, %v2254
      %v2308 = vpack.c.b16 %v2257, %v2256
      %v2309 = vpack.c.b16 %v2259, %v2258
      %v2310 = vpack.c.b16 %v2261, %v2260
      %v2311 = vpack.c.b16 %v2263, %v2262
      %v2312 = vpack.c.b16 %v2265, %v2264
      %v2313 = vpack.c.b16 %v2267, %v2266
      %v2314 = vpack.c.b16 %v2269, %v2268
      %v2315 = vpack.c.b16 %v2271, %v2270
      %v2316 = vpack.c.b16 %v2273, %v2272
      %v2317 = vpack.c.b16 %v2274, %v2274
      %v2319 = vsel %vm619, %v2275, 0
      %v2322 = vsel %vm619, %v2276, 0
      %v2325 = vsel %vm619, %v2277, 0
      %v2328 = vsel %vm619, %v2278, 0
      %v2331 = vsel %vm619, %v2279, 0
      %v2334 = vsel %vm619, %v2280, 0
      %v2337 = vsel %vm619, %v2281, 0
      %v2340 = vsel %vm619, %v2282, 0
      %v2343 = vsel %vm619, %v2283, 0
      %v2346 = vsel %vm619, %v2284, 0
      %v2349 = vsel %vm619, %v2285, 0
      %v2352 = vsel %vm619, %v2286, 0
      %v2355 = vsel %vm619, %v2287, 0
      %v2358 = vsel %vm619, %v2288, 0
      %v2361 = vsel %vm619, %v2289, 0
      %v2364 = vsel %vm619, %v2290, 0
      %v2367 = vsel %vm619, %v2291, 0
      %v2370 = vsel %vm619, %v2292, 0
      %v2373 = vsel %vm619, %v2293, 0
      %v2376 = vsel %vm619, %v2294, 0
      %v2379 = vsel %vm619, %v2295, 0
      %v2382 = vsel %vm619, %v2296, 0
      %v2385 = vsel %vm619, %v2297, 0
      %v2388 = vsel %vm619, %v2298, 0
      %v2391 = vsel %vm619, %v2299, 0
      %v2394 = vsel %vm619, %v2300, 0
      %v2397 = vsel %vm619, %v2301, 0
      %v2400 = vsel %vm619, %v2302, 0
      %v2403 = vsel %vm619, %v2303, 0
      %v2406 = vsel %vm619, %v2304, 0
      %v2409 = vsel %vm619, %v2305, 0
      %v2412 = vsel %vm619, %v2306, 0
      %v2415 = vsel %vm619, %v2307, 0
      %v2418 = vsel %vm619, %v2308, 0
      %v2421 = vsel %vm619, %v2309, 0
      %v2424 = vsel %vm619, %v2310, 0
      %v2427 = vsel %vm619, %v2311, 0
      %v2430 = vsel %vm619, %v2312, 0
      %v2433 = vsel %vm619, %v2313, 0
      %v2436 = vsel %vm619, %v2314, 0
      %v2439 = vsel %vm619, %v2315, 0
      %v2442 = vsel %vm619, %v2316, 0
      %v2445 = vsel %vm619, %v2317, 0
      %2447 = vmatprep.subr.bf16.mxu0 0
      %2448 = vmatpush1.bf16.msra.mxu0 %v754
      %2449 = vmatprep.subr.bf16.mxu0 0
      %2450 = vmatpush1.bf16.msra.mxu0 0
      %2451 = vmatprep.subr.bf16.mxu0 0
      %2452 = vmatpush1.bf16.msra.mxu0 0
      %2453 = vmatprep.subr.bf16.mxu0 0
      %2454 = vmatpush1.bf16.msra.mxu0 0
      %2455 = vmatprep.subr.bf16.mxu0 0
      %2456 = vmatpush1.bf16.msra.mxu0 0
      %2457 = vmatprep.subr.bf16.mxu0 0
      %2458 = vmatpush1.bf16.msra.mxu0 0
      %2459 = vmatprep.subr.bf16.mxu0 0
      %2460 = vmatpush1.bf16.msra.mxu0 0
      %2461 = vmatprep.subr.bf16.mxu0 0
      %2462 = vmatpush1.bf16.msra.mxu0 0
      %2463 = vmatprep.subr.bf16.mxu0 0
      %2464 = vmatpush1.bf16.msra.mxu0 0
      %2465 = vmatprep.subr.bf16.mxu0 0
      %2466 = vmatpush1.bf16.msra.mxu0 0
      %2467 = vmatprep.subr.bf16.mxu0 0
      %2468 = vmatpush1.bf16.msra.mxu0 0
      %2469 = vmatprep.subr.bf16.mxu0 0
      %2470 = vmatpush1.bf16.msra.mxu0 0
      %2471 = vmatprep.subr.bf16.mxu0 0
      %2472 = vmatpush1.bf16.msra.mxu0 0
      %2473 = vmatprep.subr.bf16.mxu0 0
      %2474 = vmatpush1.bf16.msra.mxu0 0
      %2475 = vmatprep.subr.bf16.mxu0 0
      %2476 = vmatpush1.bf16.msra.mxu0 0
      %2477 = vmatprep.subr.bf16.mxu0 0
      %2478 = vmatpush1.bf16.msra.mxu0 0
      %2479 = vmatprep.mubr.bf16.mxu0 0
      %2480 = vmatmul.mubr.bf16.gmra.mrb[0].mxu0 %v2319
      %v2481 = vpop.f32.mrb[0].mxu0
      %v2482 = vadd.f32 0.0, %v2481
      %v2483 = vpop.f32.mrb[0].mxu0
      %v2484 = vpop.f32.mrb[0].mxu0
      %v2485 = vadd.f32 0.0, %v2484
      %v2486 = vpop.f32.mrb[0].mxu0
      %2487 = vmatprep.mubr.bf16.mxu0 0
      %2488 = vmatmul.mubr.bf16.gmra.mrb[0].mxu0 %v2322
      %v2489 = vpop.f32.mrb[0].mxu0
      %v2490 = vadd.f32 0.0, %v2489
      %v2491 = vpop.f32.mrb[0].mxu0
      %v2492 = vpop.f32.mrb[0].mxu0
      %v2493 = vadd.f32 0.0, %v2492
      %v2494 = vpop.f32.mrb[0].mxu0
      %2495 = vmatprep.mubr.bf16.mxu0 0
      %2496 = vmatmul.mubr.bf16.gmra.mrb[0].mxu0 %v2325
      %v2497 = vpop.f32.mrb[0].mxu0
      %v2498 = vadd.f32 0.0, %v2497
      %v2499 = vpop.f32.mrb[0].mxu0
      %v2500 = vpop.f32.mrb[0].mxu0
      %v2501 = vadd.f32 0.0, %v2500
      %v2502 = vpop.f32.mrb[0].mxu0
      %2503 = vmatprep.mubr.bf16.mxu0 0
      %2504 = vmatmul.mubr.bf16.gmra.mrb[0].mxu0 %v2328
      %v2505 = vpop.f32.mrb[0].mxu0
      %v2506 = vadd.f32 0.0, %v2505
      %v2507 = vpop.f32.mrb[0].mxu0
      %v2508 = vpop.f32.mrb[0].mxu0
      %v2509 = vadd.f32 0.0, %v2508
      %v2510 = vpop.f32.mrb[0].mxu0
      %2511 = vmatprep.mubr.bf16.mxu0 0
      %2512 = vmatmul.mubr.bf16.gmra.mrb[0].mxu0 %v2331
      %v2513 = vpop.f32.mrb[0].mxu0
      %v2514 = vadd.f32 0.0, %v2513
      %v2515 = vpop.f32.mrb[0].mxu0
      %v2516 = vpop.f32.mrb[0].mxu0
      %v2517 = vadd.f32 0.0, %v2516
      %v2518 = vpop.f32.mrb[0].mxu0
      %2519 = vmatprep.mubr.bf16.mxu0 0
      %2520 = vmatmul.mubr.bf16.gmra.mrb[0].mxu0 %v2334
      %v2521 = vpop.f32.mrb[0].mxu0
      %v2522 = vadd.f32 0.0, %v2521
      %v2523 = vpop.f32.mrb[0].mxu0
      %v2524 = vpop.f32.mrb[0].mxu0
      %v2525 = vadd.f32 0.0, %v2524
      %v2526 = vpop.f32.mrb[0].mxu0
      %2527 = vmatprep.mubr.bf16.mxu0 0
      %2528 = vmatmul.mubr.bf16.gmra.mrb[0].mxu0 %v2337
      %v2529 = vpop.f32.mrb[0].mxu0
      %v2530 = vadd.f32 0.0, %v2529
      %v2531 = vpop.f32.mrb[0].mxu0
      %v2532 = vpop.f32.mrb[0].mxu0
      %v2533 = vadd.f32 0.0, %v2532
      %v2534 = vpop.f32.mrb[0].mxu0
      %2535 = vmatprep.mubr.bf16.mxu0 0
      %2536 = vmatmul.mubr.bf16.gmra.mrb[0].mxu0 %v2340
      %v2537 = vpop.f32.mrb[0].mxu0
      %v2538 = vadd.f32 0.0, %v2537
      %v2539 = vpop.f32.mrb[0].mxu0
      %v2540 = vpop.f32.mrb[0].mxu0
      %v2541 = vadd.f32 0.0, %v2540
      %v2542 = vpop.f32.mrb[0].mxu0
      %2543 = vmatprep.mubr.bf16.mxu0 0
      %2544 = vmatmul.mubr.bf16.gmra.mrb[0].mxu0 %v2343
      %v2545 = vpop.f32.mrb[0].mxu0
      %v2546 = vadd.f32 0.0, %v2545
      %v2547 = vpop.f32.mrb[0].mxu0
      %v2548 = vpop.f32.mrb[0].mxu0
      %v2549 = vadd.f32 0.0, %v2548
      %v2550 = vpop.f32.mrb[0].mxu0
      %2551 = vmatprep.mubr.bf16.mxu0 0
      %2552 = vmatmul.mubr.bf16.gmra.mrb[0].mxu0 %v2346
      %v2553 = vpop.f32.mrb[0].mxu0
      %v2554 = vadd.f32 0.0, %v2553
      %v2555 = vpop.f32.mrb[0].mxu0
      %v2556 = vpop.f32.mrb[0].mxu0
      %v2557 = vadd.f32 0.0, %v2556
      %v2558 = vpop.f32.mrb[0].mxu0
      %2559 = vmatprep.mubr.bf16.mxu0 0
      %2560 = vmatmul.mubr.bf16.gmra.mrb[0].mxu0 %v2349
      %v2561 = vpop.f32.mrb[0].mxu0
      %v2562 = vadd.f32 0.0, %v2561
      %v2563 = vpop.f32.mrb[0].mxu0
      %v2564 = vpop.f32.mrb[0].mxu0
      %v2565 = vadd.f32 0.0, %v2564
      %v2566 = vpop.f32.mrb[0].mxu0
      %2567 = vmatprep.mubr.bf16.mxu0 0
      %2568 = vmatmul.mubr.bf16.gmra.mrb[0].mxu0 %v2352
      %v2569 = vpop.f32.mrb[0].mxu0
      %v2570 = vadd.f32 0.0, %v2569
      %v2571 = vpop.f32.mrb[0].mxu0
      %v2572 = vpop.f32.mrb[0].mxu0
      %v2573 = vadd.f32 0.0, %v2572
      %v2574 = vpop.f32.mrb[0].mxu0
      %2575 = vmatprep.mubr.bf16.mxu0 0
      %2576 = vmatmul.mubr.bf16.gmra.mrb[0].mxu0 %v2355
      %v2577 = vpop.f32.mrb[0].mxu0
      %v2578 = vadd.f32 0.0, %v2577
      %v2579 = vpop.f32.mrb[0].mxu0
      %v2580 = vpop.f32.mrb[0].mxu0
      %v2581 = vadd.f32 0.0, %v2580
      %v2582 = vpop.f32.mrb[0].mxu0
      %2583 = vmatprep.mubr.bf16.mxu0 0
      %2584 = vmatmul.mubr.bf16.gmra.mrb[0].mxu0 %v2358
      %v2585 = vpop.f32.mrb[0].mxu0
      %v2586 = vadd.f32 0.0, %v2585
      %v2587 = vpop.f32.mrb[0].mxu0
      %v2588 = vpop.f32.mrb[0].mxu0
      %v2589 = vadd.f32 0.0, %v2588
      %v2590 = vpop.f32.mrb[0].mxu0
      %2591 = vmatprep.mubr.bf16.mxu0 0
      %2592 = vmatmul.mubr.bf16.gmra.mrb[0].mxu0 %v2361
      %v2593 = vpop.f32.mrb[0].mxu0
      %v2594 = vadd.f32 0.0, %v2593
      %v2595 = vpop.f32.mrb[0].mxu0
      %v2596 = vpop.f32.mrb[0].mxu0
      %v2597 = vadd.f32 0.0, %v2596
      %v2598 = vpop.f32.mrb[0].mxu0
      %2599 = vmatprep.mubr.bf16.mxu0 0
      %2600 = vmatmul.mubr.bf16.gmra.mrb[0].mxu0 %v2364
      %v2601 = vpop.f32.mrb[0].mxu0
      %v2602 = vadd.f32 0.0, %v2601
      %v2603 = vpop.f32.mrb[0].mxu0
      %v2604 = vpop.f32.mrb[0].mxu0
      %v2605 = vadd.f32 0.0, %v2604
      %v2606 = vpop.f32.mrb[0].mxu0
      %2607 = vmatprep.mubr.bf16.mxu0 0
      %2608 = vmatmul.mubr.bf16.gmra.mrb[0].mxu0 %v2367
      %v2609 = vpop.f32.mrb[0].mxu0
      %v2610 = vadd.f32 0.0, %v2609
      %v2611 = vpop.f32.mrb[0].mxu0
      %v2612 = vpop.f32.mrb[0].mxu0
      %v2613 = vadd.f32 0.0, %v2612
      %v2614 = vpop.f32.mrb[0].mxu0
      %2615 = vmatprep.mubr.bf16.mxu0 0
      %2616 = vmatmul.mubr.bf16.gmra.mrb[0].mxu0 %v2370
      %v2617 = vpop.f32.mrb[0].mxu0
      %v2618 = vadd.f32 0.0, %v2617
      %v2619 = vpop.f32.mrb[0].mxu0
      %v2620 = vpop.f32.mrb[0].mxu0
      %v2621 = vadd.f32 0.0, %v2620
      %v2622 = vpop.f32.mrb[0].mxu0
      %2623 = vmatprep.mubr.bf16.mxu0 0
      %2624 = vmatmul.mubr.bf16.gmra.mrb[0].mxu0 %v2373
      %v2625 = vpop.f32.mrb[0].mxu0
      %v2626 = vadd.f32 0.0, %v2625
      %v2627 = vpop.f32.mrb[0].mxu0
      %v2628 = vpop.f32.mrb[0].mxu0
      %v2629 = vadd.f32 0.0, %v2628
      %v2630 = vpop.f32.mrb[0].mxu0
      %2631 = vmatprep.mubr.bf16.mxu0 0
      %2632 = vmatmul.mubr.bf16.gmra.mrb[0].mxu0 %v2376
      %v2633 = vpop.f32.mrb[0].mxu0
      %v2634 = vadd.f32 0.0, %v2633
      %v2635 = vpop.f32.mrb[0].mxu0
      %v2636 = vpop.f32.mrb[0].mxu0
      %v2637 = vadd.f32 0.0, %v2636
      %v2638 = vpop.f32.mrb[0].mxu0
      %2639 = vmatprep.mubr.bf16.mxu0 0
      %2640 = vmatmul.mubr.bf16.gmra.mrb[0].mxu0 %v2379
      %v2641 = vpop.f32.mrb[0].mxu0
      %v2642 = vadd.f32 0.0, %v2641
      %v2643 = vpop.f32.mrb[0].mxu0
      %v2644 = vpop.f32.mrb[0].mxu0
      %v2645 = vadd.f32 0.0, %v2644
      %v2646 = vpop.f32.mrb[0].mxu0
      %2647 = vmatprep.mubr.bf16.mxu0 0
      %2648 = vmatmul.mubr.bf16.gmra.mrb[0].mxu0 %v2382
      %v2649 = vpop.f32.mrb[0].mxu0
      %v2650 = vadd.f32 0.0, %v2649
      %v2651 = vpop.f32.mrb[0].mxu0
      %v2652 = vpop.f32.mrb[0].mxu0
      %v2653 = vadd.f32 0.0, %v2652
      %v2654 = vpop.f32.mrb[0].mxu0
      %2655 = vmatprep.mubr.bf16.mxu0 0
      %2656 = vmatmul.mubr.bf16.gmra.mrb[0].mxu0 %v2385
      %v2657 = vpop.f32.mrb[0].mxu0
      %v2658 = vadd.f32 0.0, %v2657
      %v2659 = vpop.f32.mrb[0].mxu0
      %v2660 = vpop.f32.mrb[0].mxu0
      %v2661 = vadd.f32 0.0, %v2660
      %v2662 = vpop.f32.mrb[0].mxu0
      %2663 = vmatprep.mubr.bf16.mxu0 0
      %2664 = vmatmul.mubr.bf16.gmra.mrb[0].mxu0 %v2388
      %v2665 = vpop.f32.mrb[0].mxu0
      %v2666 = vadd.f32 0.0, %v2665
      %v2667 = vpop.f32.mrb[0].mxu0
      %v2668 = vpop.f32.mrb[0].mxu0
      %v2669 = vadd.f32 0.0, %v2668
      %v2670 = vpop.f32.mrb[0].mxu0
      %2671 = vmatprep.mubr.bf16.mxu0 0
      %2672 = vmatmul.mubr.bf16.gmra.mrb[0].mxu0 %v2391
      %v2673 = vpop.f32.mrb[0].mxu0
      %v2674 = vadd.f32 0.0, %v2673
      %v2675 = vpop.f32.mrb[0].mxu0
      %v2676 = vpop.f32.mrb[0].mxu0
      %v2677 = vadd.f32 0.0, %v2676
      %v2678 = vpop.f32.mrb[0].mxu0
      %2679 = vmatprep.mubr.bf16.mxu0 0
      %2680 = vmatmul.mubr.bf16.gmra.mrb[0].mxu0 %v2394
      %v2681 = vpop.f32.mrb[0].mxu0
      %v2682 = vadd.f32 0.0, %v2681
      %v2683 = vpop.f32.mrb[0].mxu0
      %v2684 = vpop.f32.mrb[0].mxu0
      %v2685 = vadd.f32 0.0, %v2684
      %v2686 = vpop.f32.mrb[0].mxu0
      %2687 = vmatprep.mubr.bf16.mxu0 0
      %2688 = vmatmul.mubr.bf16.gmra.mrb[0].mxu0 %v2397
      %v2689 = vpop.f32.mrb[0].mxu0
      %v2690 = vadd.f32 0.0, %v2689
      %v2691 = vpop.f32.mrb[0].mxu0
      %v2692 = vpop.f32.mrb[0].mxu0
      %v2693 = vadd.f32 0.0, %v2692
      %v2694 = vpop.f32.mrb[0].mxu0
      %2695 = vmatprep.mubr.bf16.mxu0 0
      %2696 = vmatmul.mubr.bf16.gmra.mrb[0].mxu0 %v2400
      %v2697 = vpop.f32.mrb[0].mxu0
      %v2698 = vadd.f32 0.0, %v2697
      %v2699 = vpop.f32.mrb[0].mxu0
      %v2700 = vpop.f32.mrb[0].mxu0
      %v2701 = vadd.f32 0.0, %v2700
      %v2702 = vpop.f32.mrb[0].mxu0
      %2703 = vmatprep.mubr.bf16.mxu0 0
      %2704 = vmatmul.mubr.bf16.gmra.mrb[0].mxu0 %v2403
      %v2705 = vpop.f32.mrb[0].mxu0
      %v2706 = vadd.f32 0.0, %v2705
      %v2707 = vpop.f32.mrb[0].mxu0
      %v2708 = vpop.f32.mrb[0].mxu0
      %v2709 = vadd.f32 0.0, %v2708
      %v2710 = vpop.f32.mrb[0].mxu0
      %2711 = vmatprep.mubr.bf16.mxu0 0
      %2712 = vmatmul.mubr.bf16.gmra.mrb[0].mxu0 %v2406
      %v2713 = vpop.f32.mrb[0].mxu0
      %v2714 = vadd.f32 0.0, %v2713
      %v2715 = vpop.f32.mrb[0].mxu0
      %v2716 = vpop.f32.mrb[0].mxu0
      %v2717 = vadd.f32 0.0, %v2716
      %v2718 = vpop.f32.mrb[0].mxu0
      %2719 = vmatprep.mubr.bf16.mxu0 0
      %2720 = vmatmul.mubr.bf16.gmra.mrb[0].mxu0 %v2409
      %v2721 = vpop.f32.mrb[0].mxu0
      %v2722 = vadd.f32 0.0, %v2721
      %v2723 = vpop.f32.mrb[0].mxu0
      %v2724 = vpop.f32.mrb[0].mxu0
      %v2725 = vadd.f32 0.0, %v2724
      %v2726 = vpop.f32.mrb[0].mxu0
      %2727 = vmatprep.mubr.bf16.mxu0 0
      %2728 = vmatmul.mubr.bf16.gmra.mrb[0].mxu0 %v2412
      %v2729 = vpop.f32.mrb[0].mxu0
      %v2730 = vadd.f32 0.0, %v2729
      %v2731 = vpop.f32.mrb[0].mxu0
      %v2732 = vpop.f32.mrb[0].mxu0
      %v2733 = vadd.f32 0.0, %v2732
      %v2734 = vpop.f32.mrb[0].mxu0
      %2735 = vmatprep.mubr.bf16.mxu0 0
      %2736 = vmatmul.mubr.bf16.gmra.mrb[0].mxu0 %v2415
      %v2737 = vpop.f32.mrb[0].mxu0
      %v2738 = vadd.f32 0.0, %v2737
      %v2739 = vpop.f32.mrb[0].mxu0
      %v2740 = vpop.f32.mrb[0].mxu0
      %v2741 = vadd.f32 0.0, %v2740
      %v2742 = vpop.f32.mrb[0].mxu0
      %2743 = vmatprep.mubr.bf16.mxu0 0
      %2744 = vmatmul.mubr.bf16.gmra.mrb[0].mxu0 %v2418
      %v2745 = vpop.f32.mrb[0].mxu0
      %v2746 = vadd.f32 0.0, %v2745
      %v2747 = vpop.f32.mrb[0].mxu0
      %v2748 = vpop.f32.mrb[0].mxu0
      %v2749 = vadd.f32 0.0, %v2748
      %v2750 = vpop.f32.mrb[0].mxu0
      %2751 = vmatprep.mubr.bf16.mxu0 0
      %2752 = vmatmul.mubr.bf16.gmra.mrb[0].mxu0 %v2421
      %v2753 = vpop.f32.mrb[0].mxu0
      %v2754 = vadd.f32 0.0, %v2753
      %v2755 = vpop.f32.mrb[0].mxu0
      %v2756 = vpop.f32.mrb[0].mxu0
      %v2757 = vadd.f32 0.0, %v2756
      %v2758 = vpop.f32.mrb[0].mxu0
      %2759 = vmatprep.mubr.bf16.mxu0 0
      %2760 = vmatmul.mubr.bf16.gmra.mrb[0].mxu0 %v2424
      %v2761 = vpop.f32.mrb[0].mxu0
      %v2762 = vadd.f32 0.0, %v2761
      %v2763 = vpop.f32.mrb[0].mxu0
      %v2764 = vpop.f32.mrb[0].mxu0
      %v2765 = vadd.f32 0.0, %v2764
      %v2766 = vpop.f32.mrb[0].mxu0
      %2767 = vmatprep.mubr.bf16.mxu0 0
      %2768 = vmatmul.mubr.bf16.gmra.mrb[0].mxu0 %v2427
      %v2769 = vpop.f32.mrb[0].mxu0
      %v2770 = vadd.f32 0.0, %v2769
      %v2771 = vpop.f32.mrb[0].mxu0
      %v2772 = vpop.f32.mrb[0].mxu0
      %v2773 = vadd.f32 0.0, %v2772
      %v2774 = vpop.f32.mrb[0].mxu0
      %2775 = vmatprep.mubr.bf16.mxu0 0
      %2776 = vmatmul.mubr.bf16.gmra.mrb[0].mxu0 %v2430
      %v2777 = vpop.f32.mrb[0].mxu0
      %v2778 = vadd.f32 0.0, %v2777
      %v2779 = vpop.f32.mrb[0].mxu0
      %v2780 = vpop.f32.mrb[0].mxu0
      %v2781 = vadd.f32 0.0, %v2780
      %v2782 = vpop.f32.mrb[0].mxu0
      %2783 = vmatprep.mubr.bf16.mxu0 0
      %2784 = vmatmul.mubr.bf16.gmra.mrb[0].mxu0 %v2433
      %v2785 = vpop.f32.mrb[0].mxu0
      %v2786 = vadd.f32 0.0, %v2785
      %v2787 = vpop.f32.mrb[0].mxu0
      %v2788 = vpop.f32.mrb[0].mxu0
      %v2789 = vadd.f32 0.0, %v2788
      %v2790 = vpop.f32.mrb[0].mxu0
      %2791 = vmatprep.mubr.bf16.mxu0 0
      %2792 = vmatmul.mubr.bf16.gmra.mrb[0].mxu0 %v2436
      %v2793 = vpop.f32.mrb[0].mxu0
      %v2794 = vadd.f32 0.0, %v2793
      %v2795 = vpop.f32.mrb[0].mxu0
      %v2796 = vpop.f32.mrb[0].mxu0
      %v2797 = vadd.f32 0.0, %v2796
      %v2798 = vpop.f32.mrb[0].mxu0
      %2799 = vmatprep.mubr.bf16.mxu0 0
      %2800 = vmatmul.mubr.bf16.gmra.mrb[0].mxu0 %v2439
      %v2801 = vpop.f32.mrb[0].mxu0
      %v2802 = vadd.f32 0.0, %v2801
      %v2803 = vpop.f32.mrb[0].mxu0
      %v2804 = vpop.f32.mrb[0].mxu0
      %v2805 = vadd.f32 0.0, %v2804
      %v2806 = vpop.f32.mrb[0].mxu0
      %2807 = vmatprep.mubr.bf16.mxu0 0
      %2808 = vmatmul.mubr.bf16.gmra.mrb[0].mxu0 %v2442
      %v2809 = vpop.f32.mrb[0].mxu0
      %v2810 = vadd.f32 0.0, %v2809
      %v2811 = vpop.f32.mrb[0].mxu0
      %v2812 = vpop.f32.mrb[0].mxu0
      %v2813 = vadd.f32 0.0, %v2812
      %v2814 = vpop.f32.mrb[0].mxu0
      %2815 = vmatprep.mubr.bf16.mxu0 0
      %2816 = vmatmul.mubr.bf16.gmra.mrb[0].mxu0 %v2445
      %v2817 = vpop.f32.mrb[0].mxu0
      %v2818 = vadd.f32 0.0, %v2817
      %v2819 = vpop.f32.mrb[0].mxu0
      %v2820 = vpop.f32.mrb[0].mxu0
      %v2821 = vpop.f32.mrb[0].mxu0
      %2822 = vdwg.mxu0
      %v2823 = vld [vmem:[%s306] sm:$0xf]
      %v2824 = vld [vmem:[%s306 + $0x4] sm:$0xf]
      %v2825 = vld [vmem:[%s306 + $0x8] sm:$0xf]
      %v2826 = vld [vmem:[%s306 + $0xc] sm:$0xf]
      %v2827 = vld [vmem:[%s306 + $0x10] sm:$0xf]
      %v2828 = vld [vmem:[%s306 + $0x14] sm:$0xf]
      %v2829 = vld [vmem:[%s306 + $0x18] sm:$0xf]
      %v2830 = vld [vmem:[%s306 + $0x1c] sm:$0xf]
      %v2831 = vld [vmem:[%s306 + $0x20] sm:$0xf]
      %v2832 = vld [vmem:[%s306 + $0x24] sm:$0xf]
      %v2833 = vld [vmem:[%s306 + $0x28] sm:$0xf]
      %v2834 = vld [vmem:[%s306 + $0x2c] sm:$0xf]
      %v2835 = vld [vmem:[%s306 + $0x30] sm:$0xf]
      %v2836 = vld [vmem:[%s306 + $0x34] sm:$0xf]
      %v2837 = vld [vmem:[%s306 + $0x38] sm:$0xf]
      %v2838 = vld [vmem:[%s306 + $0x3c] sm:$0xf]
      %v2839 = vld [vmem:[%s306 + $0x40] sm:$0xf]
      %v2840 = vld [vmem:[%s306 + $0x44] sm:$0xf]
      %v2841 = vld [vmem:[%s306 + $0x48] sm:$0xf]
      %v2842 = vld [vmem:[%s306 + $0x4c] sm:$0xf]
      %v2843 = vld [vmem:[%s306 + $0x50] sm:$0xf]
      %v2844 = vld [vmem:[%s306 + $0x54] sm:$0xf]
      %v2845 = vld [vmem:[%s306 + $0x58] sm:$0xf]
      %v2846 = vld [vmem:[%s306 + $0x5c] sm:$0xf]
      %v2847 = vld [vmem:[%s306 + $0x60] sm:$0xf]
      %v2848 = vld [vmem:[%s306 + $0x64] sm:$0xf]
      %v2849 = vld [vmem:[%s306 + $0x68] sm:$0xf]
      %v2850 = vld [vmem:[%s306 + $0x6c] sm:$0xf]
      %v2851 = vld [vmem:[%s306 + $0x70] sm:$0xf]
      %v2852 = vld [vmem:[%s306 + $0x74] sm:$0xf]
      %v2853 = vld [vmem:[%s306 + $0x78] sm:$0xf]
      %v2854 = vld [vmem:[%s306 + $0x7c] sm:$0xf]
      %v2855 = vld [vmem:[%s306 + $0x80] sm:$0xf]
      %v2856 = vld [vmem:[%s306 + $0x84] sm:$0xf]
      %v2857 = vld [vmem:[%s306 + $0x88] sm:$0xf]
      %v2858 = vld [vmem:[%s306 + $0x8c] sm:$0xf]
      %v2859 = vld [vmem:[%s306 + $0x90] sm:$0xf]
      %v2860 = vld [vmem:[%s306 + $0x94] sm:$0xf]
      %v2861 = vld [vmem:[%s306 + $0x98] sm:$0xf]
      %v2862 = vld [vmem:[%s306 + $0x9c] sm:$0xf]
      %v2863 = vld [vmem:[%s306 + $0xa0] sm:$0xf]
      %v2864 = vld [vmem:[%s306 + $0xa4] sm:$0xf]
      %v2865 = vld [vmem:[%s306 + $0xa8] sm:$0xf]
      %v2866 = vld [vmem:[%s306 + $0xac] sm:$0xf]
      %v2867 = vld [vmem:[%s306 + $0xb0] sm:$0xf]
      %v2868 = vld [vmem:[%s306 + $0xb4] sm:$0xf]
      %v2869 = vld [vmem:[%s306 + $0xb8] sm:$0xf]
      %v2870 = vld [vmem:[%s306 + $0xbc] sm:$0xf]
      %v2871 = vld [vmem:[%s306 + $0xc0] sm:$0xf]
      %v2872 = vld [vmem:[%s306 + $0xc4] sm:$0xf]
      %v2873 = vld [vmem:[%s306 + $0xc8] sm:$0xf]
      %v2874 = vld [vmem:[%s306 + $0xcc] sm:$0xf]
      %v2875 = vld [vmem:[%s306 + $0xd0] sm:$0xf]
      %v2876 = vld [vmem:[%s306 + $0xd4] sm:$0xf]
      %v2877 = vld [vmem:[%s306 + $0xd8] sm:$0xf]
      %v2878 = vld [vmem:[%s306 + $0xdc] sm:$0xf]
      %v2879 = vld [vmem:[%s306 + $0xe0] sm:$0xf]
      %v2880 = vld [vmem:[%s306 + $0xe4] sm:$0xf]
      %v2881 = vld [vmem:[%s306 + $0xe8] sm:$0xf]
      %v2882 = vld [vmem:[%s306 + $0xec] sm:$0xf]
      %v2883 = vld [vmem:[%s306 + $0xf0] sm:$0xf]
      %v2884 = vld [vmem:[%s306 + $0xf4] sm:$0xf]
      %v2885 = vld [vmem:[%s306 + $0xf8] sm:$0xf]
      %v2886 = vld [vmem:[%s306 + $0xfc] sm:$0xf]
      %v2887 = vld [vmem:[%s306 + $0x100] sm:$0xf]
      %v2888 = vld [vmem:[%s306 + $0x104] sm:$0xf]
      %v2889 = vld [vmem:[%s306 + $0x108] sm:$0xf]
      %v2890 = vld [vmem:[%s306 + $0x10c] sm:$0xf]
      %v2891 = vld [vmem:[%s306 + $0x110] sm:$0xf]
      %v2892 = vld [vmem:[%s306 + $0x114] sm:$0xf]
      %v2893 = vld [vmem:[%s306 + $0x118] sm:$0xf]
      %v2894 = vld [vmem:[%s306 + $0x11c] sm:$0xf]
      %v2895 = vld [vmem:[%s306 + $0x120] sm:$0xf]
      %v2896 = vld [vmem:[%s306 + $0x124] sm:$0xf]
      %v2897 = vld [vmem:[%s306 + $0x128] sm:$0xf]
      %v2898 = vld [vmem:[%s306 + $0x12c] sm:$0xf]
      %v2899 = vld [vmem:[%s306 + $0x130] sm:$0xf]
      %v2900 = vld [vmem:[%s306 + $0x134] sm:$0xf]
      %v2901 = vld [vmem:[%s306 + $0x138] sm:$0xf]
      %v2902 = vld [vmem:[%s306 + $0x13c] sm:$0xf]
      %v2903 = vld [vmem:[%s306 + $0x140] sm:$0xf]
      %v2904 = vld [vmem:[%s306 + $0x144] sm:$0xf]
      %v2905 = vld [vmem:[%s306 + $0x148] sm:$0xf]
      %v2906 = vld [vmem:[%s306 + $0x14c] sm:$0xf]
      %v2907 = vld [vmem:[%s306 + $0x150] sm:$0x3]
      %v2993 = vunpack.c.l.b16 %v2823
      %v2994 = vunpack.c.l.b16 %v2824
      %v2995 = vunpack.c.l.b16 %v2825
      %v2996 = vunpack.c.l.b16 %v2826
      %v2997 = vunpack.c.l.b16 %v2827
      %v2998 = vunpack.c.l.b16 %v2828
      %v2999 = vunpack.c.l.b16 %v2829
      %v3000 = vunpack.c.l.b16 %v2830
      %v3001 = vunpack.c.l.b16 %v2831
      %v3002 = vunpack.c.l.b16 %v2832
      %v3003 = vunpack.c.l.b16 %v2833
      %v3004 = vunpack.c.l.b16 %v2834
      %v3005 = vunpack.c.l.b16 %v2835
      %v3006 = vunpack.c.l.b16 %v2836
      %v3007 = vunpack.c.l.b16 %v2837
      %v3008 = vunpack.c.l.b16 %v2838
      %v3009 = vunpack.c.l.b16 %v2839
      %v3010 = vunpack.c.l.b16 %v2840
      %v3011 = vunpack.c.l.b16 %v2841
      %v3012 = vunpack.c.l.b16 %v2842
      %v3013 = vunpack.c.l.b16 %v2843
      %v3014 = vunpack.c.l.b16 %v2844
      %v3015 = vunpack.c.l.b16 %v2845
      %v3016 = vunpack.c.l.b16 %v2846
      %v3017 = vunpack.c.l.b16 %v2847
      %v3018 = vunpack.c.l.b16 %v2848
      %v3019 = vunpack.c.l.b16 %v2849
      %v3020 = vunpack.c.l.b16 %v2850
      %v3021 = vunpack.c.l.b16 %v2851
      %v3022 = vunpack.c.l.b16 %v2852
      %v3023 = vunpack.c.l.b16 %v2853
      %v3024 = vunpack.c.l.b16 %v2854
      %v3025 = vunpack.c.l.b16 %v2855
      %v3026 = vunpack.c.l.b16 %v2856
      %v3027 = vunpack.c.l.b16 %v2857
      %v3028 = vunpack.c.l.b16 %v2858
      %v3029 = vunpack.c.l.b16 %v2859
      %v3030 = vunpack.c.l.b16 %v2860
      %v3031 = vunpack.c.l.b16 %v2861
      %v3032 = vunpack.c.l.b16 %v2862
      %v3033 = vunpack.c.l.b16 %v2863
      %v3034 = vunpack.c.l.b16 %v2864
      %v3035 = vunpack.c.l.b16 %v2865
      %v3036 = vunpack.c.l.b16 %v2866
      %v3037 = vunpack.c.l.b16 %v2867
      %v3038 = vunpack.c.l.b16 %v2868
      %v3039 = vunpack.c.l.b16 %v2869
      %v3040 = vunpack.c.l.b16 %v2870
      %v3041 = vunpack.c.l.b16 %v2871
      %v3042 = vunpack.c.l.b16 %v2872
      %v3043 = vunpack.c.l.b16 %v2873
      %v3044 = vunpack.c.l.b16 %v2874
      %v3045 = vunpack.c.l.b16 %v2875
      %v3046 = vunpack.c.l.b16 %v2876
      %v3047 = vunpack.c.l.b16 %v2877
      %v3048 = vunpack.c.l.b16 %v2878
      %v3049 = vunpack.c.l.b16 %v2879
      %v3050 = vunpack.c.l.b16 %v2880
      %v3051 = vunpack.c.l.b16 %v2881
      %v3052 = vunpack.c.l.b16 %v2882
      %v3053 = vunpack.c.l.b16 %v2883
      %v3054 = vunpack.c.l.b16 %v2884
      %v3055 = vunpack.c.l.b16 %v2885
      %v3056 = vunpack.c.l.b16 %v2886
      %v3057 = vunpack.c.l.b16 %v2887
      %v3058 = vunpack.c.l.b16 %v2888
      %v3059 = vunpack.c.l.b16 %v2889
      %v3060 = vunpack.c.l.b16 %v2890
      %v3061 = vunpack.c.l.b16 %v2891
      %v3062 = vunpack.c.l.b16 %v2892
      %v3063 = vunpack.c.l.b16 %v2893
      %v3064 = vunpack.c.l.b16 %v2894
      %v3065 = vunpack.c.l.b16 %v2895
      %v3066 = vunpack.c.l.b16 %v2896
      %v3067 = vunpack.c.l.b16 %v2897
      %v3068 = vunpack.c.l.b16 %v2898
      %v3069 = vunpack.c.l.b16 %v2899
      %v3070 = vunpack.c.l.b16 %v2900
      %v3071 = vunpack.c.l.b16 %v2901
      %v3072 = vunpack.c.l.b16 %v2902
      %v3073 = vunpack.c.l.b16 %v2903
      %v3074 = vunpack.c.l.b16 %v2904
      %v3075 = vunpack.c.l.b16 %v2905
      %v3076 = vunpack.c.l.b16 %v2906
      %v3077 = vunpack.c.l.b16 %v2907
      %v3078 = vpack.c.b16 %v2994, %v2993
      %v3079 = vpack.c.b16 %v2996, %v2995
      %v3080 = vpack.c.b16 %v2998, %v2997
      %v3081 = vpack.c.b16 %v3000, %v2999
      %v3082 = vpack.c.b16 %v3002, %v3001
      %v3083 = vpack.c.b16 %v3004, %v3003
      %v3084 = vpack.c.b16 %v3006, %v3005
      %v3085 = vpack.c.b16 %v3008, %v3007
      %v3086 = vpack.c.b16 %v3010, %v3009
      %v3087 = vpack.c.b16 %v3012, %v3011
      %v3088 = vpack.c.b16 %v3014, %v3013
      %v3089 = vpack.c.b16 %v3016, %v3015
      %v3090 = vpack.c.b16 %v3018, %v3017
      %v3091 = vpack.c.b16 %v3020, %v3019
      %v3092 = vpack.c.b16 %v3022, %v3021
      %v3093 = vpack.c.b16 %v3024, %v3023
      %v3094 = vpack.c.b16 %v3026, %v3025
      %v3095 = vpack.c.b16 %v3028, %v3027
      %v3096 = vpack.c.b16 %v3030, %v3029
      %v3097 = vpack.c.b16 %v3032, %v3031
      %v3098 = vpack.c.b16 %v3034, %v3033
      %v3099 = vpack.c.b16 %v3036, %v3035
      %v3100 = vpack.c.b16 %v3038, %v3037
      %v3101 = vpack.c.b16 %v3040, %v3039
      %v3102 = vpack.c.b16 %v3042, %v3041
      %v3103 = vpack.c.b16 %v3044, %v3043
      %v3104 = vpack.c.b16 %v3046, %v3045
      %v3105 = vpack.c.b16 %v3048, %v3047
      %v3106 = vpack.c.b16 %v3050, %v3049
      %v3107 = vpack.c.b16 %v3052, %v3051
      %v3108 = vpack.c.b16 %v3054, %v3053
      %v3109 = vpack.c.b16 %v3056, %v3055
      %v3110 = vpack.c.b16 %v3058, %v3057
      %v3111 = vpack.c.b16 %v3060, %v3059
      %v3112 = vpack.c.b16 %v3062, %v3061
      %v3113 = vpack.c.b16 %v3064, %v3063
      %v3114 = vpack.c.b16 %v3066, %v3065
      %v3115 = vpack.c.b16 %v3068, %v3067
      %v3116 = vpack.c.b16 %v3070, %v3069
      %v3117 = vpack.c.b16 %v3072, %v3071
      %v3118 = vpack.c.b16 %v3074, %v3073
      %v3119 = vpack.c.b16 %v3076, %v3075
      %v3120 = vpack.c.b16 %v3077, %v3077
      %v3122 = vsel %vm619, %v3078, 0
      %v3125 = vsel %vm619, %v3079, 0
      %v3128 = vsel %vm619, %v3080, 0
      %v3131 = vsel %vm619, %v3081, 0
      %v3134 = vsel %vm619, %v3082, 0
      %v3137 = vsel %vm619, %v3083, 0
      %v3140 = vsel %vm619, %v3084, 0
      %v3143 = vsel %vm619, %v3085, 0
      %v3146 = vsel %vm619, %v3086, 0
      %v3149 = vsel %vm619, %v3087, 0
      %v3152 = vsel %vm619, %v3088, 0
      %v3155 = vsel %vm619, %v3089, 0
      %v3158 = vsel %vm619, %v3090, 0
      %v3161 = vsel %vm619, %v3091, 0
      %v3164 = vsel %vm619, %v3092, 0
      %v3167 = vsel %vm619, %v3093, 0
      %v3170 = vsel %vm619, %v3094, 0
      %v3173 = vsel %vm619, %v3095, 0
      %v3176 = vsel %vm619, %v3096, 0
      %v3179 = vsel %vm619, %v3097, 0
      %v3182 = vsel %vm619, %v3098, 0
      %v3185 = vsel %vm619, %v3099, 0
      %v3188 = vsel %vm619, %v3100, 0
      %v3191 = vsel %vm619, %v3101, 0
      %v3194 = vsel %vm619, %v3102, 0
      %v3197 = vsel %vm619, %v3103, 0
      %v3200 = vsel %vm619, %v3104, 0
      %v3203 = vsel %vm619, %v3105, 0
      %v3206 = vsel %vm619, %v3106, 0
      %v3209 = vsel %vm619, %v3107, 0
      %v3212 = vsel %vm619, %v3108, 0
      %v3215 = vsel %vm619, %v3109, 0
      %v3218 = vsel %vm619, %v3110, 0
      %v3221 = vsel %vm619, %v3111, 0
      %v3224 = vsel %vm619, %v3112, 0
      %v3227 = vsel %vm619, %v3113, 0
      %v3230 = vsel %vm619, %v3114, 0
      %v3233 = vsel %vm619, %v3115, 0
      %v3236 = vsel %vm619, %v3116, 0
      %v3239 = vsel %vm619, %v3117, 0
      %v3242 = vsel %vm619, %v3118, 0
      %v3245 = vsel %vm619, %v3119, 0
      %v3248 = vsel %vm619, %v3120, 0
      %3250 = vmatprep.subr.bf16.mxu0 0
      %3251 = vmatpush1.bf16.msra.mxu0 %v754
      %3252 = vmatprep.subr.bf16.mxu0 0
      %3253 = vmatpush1.bf16.msra.mxu0 0
      %3254 = vmatprep.subr.bf16.mxu0 0
      %3255 = vmatpush1.bf16.msra.mxu0 0
      %3256 = vmatprep.subr.bf16.mxu0 0
      %3257 = vmatpush1.bf16.msra.mxu0 0
      %3258 = vmatprep.subr.bf16.mxu0 0
      %3259 = vmatpush1.bf16.msra.mxu0 0
      %3260 = vmatprep.subr.bf16.mxu0 0
      %3261 = vmatpush1.bf16.msra.mxu0 0
      %3262 = vmatprep.subr.bf16.mxu0 0
      %3263 = vmatpush1.bf16.msra.mxu0 0
      %3264 = vmatprep.subr.bf16.mxu0 0
      %3265 = vmatpush1.bf16.msra.mxu0 0
      %3266 = vmatprep.subr.bf16.mxu0 0
      %3267 = vmatpush1.bf16.msra.mxu0 0
      %3268 = vmatprep.subr.bf16.mxu0 0
      %3269 = vmatpush1.bf16.msra.mxu0 0
      %3270 = vmatprep.subr.bf16.mxu0 0
      %3271 = vmatpush1.bf16.msra.mxu0 0
      %3272 = vmatprep.subr.bf16.mxu0 0
      %3273 = vmatpush1.bf16.msra.mxu0 0
      %3274 = vmatprep.subr.bf16.mxu0 0
      %3275 = vmatpush1.bf16.msra.mxu0 0
      %3276 = vmatprep.subr.bf16.mxu0 0
      %3277 = vmatpush1.bf16.msra.mxu0 0
      %3278 = vmatprep.subr.bf16.mxu0 0
      %3279 = vmatpush1.bf16.msra.mxu0 0
      %3280 = vmatprep.subr.bf16.mxu0 0
      %3281 = vmatpush1.bf16.msra.mxu0 0
      %3282 = vmatprep.mubr.bf16.mxu0 0
      %3283 = vmatmul.mubr.bf16.gmra.mrb[0].mxu0 %v3122
      %v3284 = vpop.f32.mrb[0].mxu0
      %v3285 = vadd.f32 0.0, %v3284
      %v3286 = vpop.f32.mrb[0].mxu0
      %v3287 = vpop.f32.mrb[0].mxu0
      %v3288 = vadd.f32 0.0, %v3287
      %v3289 = vpop.f32.mrb[0].mxu0
      %3290 = vmatprep.mubr.bf16.mxu0 0
      %3291 = vmatmul.mubr.bf16.gmra.mrb[0].mxu0 %v3125
      %v3292 = vpop.f32.mrb[0].mxu0
      %v3293 = vadd.f32 0.0, %v3292
      %v3294 = vpop.f32.mrb[0].mxu0
      %v3295 = vpop.f32.mrb[0].mxu0
      %v3296 = vadd.f32 0.0, %v3295
      %v3297 = vpop.f32.mrb[0].mxu0
      %3298 = vmatprep.mubr.bf16.mxu0 0
      %3299 = vmatmul.mubr.bf16.gmra.mrb[0].mxu0 %v3128
      %v3300 = vpop.f32.mrb[0].mxu0
      %v3301 = vadd.f32 0.0, %v3300
      %v3302 = vpop.f32.mrb[0].mxu0
      %v3303 = vpop.f32.mrb[0].mxu0
      %v3304 = vadd.f32 0.0, %v3303
      %v3305 = vpop.f32.mrb[0].mxu0
      %3306 = vmatprep.mubr.bf16.mxu0 0
      %3307 = vmatmul.mubr.bf16.gmra.mrb[0].mxu0 %v3131
      %v3308 = vpop.f32.mrb[0].mxu0
      %v3309 = vadd.f32 0.0, %v3308
      %v3310 = vpop.f32.mrb[0].mxu0
      %v3311 = vpop.f32.mrb[0].mxu0
      %v3312 = vadd.f32 0.0, %v3311
      %v3313 = vpop.f32.mrb[0].mxu0
      %3314 = vmatprep.mubr.bf16.mxu0 0
      %3315 = vmatmul.mubr.bf16.gmra.mrb[0].mxu0 %v3134
      %v3316 = vpop.f32.mrb[0].mxu0
      %v3317 = vadd.f32 0.0, %v3316
      %v3318 = vpop.f32.mrb[0].mxu0
      %v3319 = vpop.f32.mrb[0].mxu0
      %v3320 = vadd.f32 0.0, %v3319
      %v3321 = vpop.f32.mrb[0].mxu0
      %3322 = vmatprep.mubr.bf16.mxu0 0
      %3323 = vmatmul.mubr.bf16.gmra.mrb[0].mxu0 %v3137
      %v3324 = vpop.f32.mrb[0].mxu0
      %v3325 = vadd.f32 0.0, %v3324
      %v3326 = vpop.f32.mrb[0].mxu0
      %v3327 = vpop.f32.mrb[0].mxu0
      %v3328 = vadd.f32 0.0, %v3327
      %v3329 = vpop.f32.mrb[0].mxu0
      %3330 = vmatprep.mubr.bf16.mxu0 0
      %3331 = vmatmul.mubr.bf16.gmra.mrb[0].mxu0 %v3140
      %v3332 = vpop.f32.mrb[0].mxu0
      %v3333 = vadd.f32 0.0, %v3332
      %v3334 = vpop.f32.mrb[0].mxu0
      %v3335 = vpop.f32.mrb[0].mxu0
      %v3336 = vadd.f32 0.0, %v3335
      %v3337 = vpop.f32.mrb[0].mxu0
      %3338 = vmatprep.mubr.bf16.mxu0 0
      %3339 = vmatmul.mubr.bf16.gmra.mrb[0].mxu0 %v3143
      %v3340 = vpop.f32.mrb[0].mxu0
      %v3341 = vadd.f32 0.0, %v3340
      %v3342 = vpop.f32.mrb[0].mxu0
      %v3343 = vpop.f32.mrb[0].mxu0
      %v3344 = vadd.f32 0.0, %v3343
      %v3345 = vpop.f32.mrb[0].mxu0
      %3346 = vmatprep.mubr.bf16.mxu0 0
      %3347 = vmatmul.mubr.bf16.gmra.mrb[0].mxu0 %v3146
      %v3348 = vpop.f32.mrb[0].mxu0
      %v3349 = vadd.f32 0.0, %v3348
      %v3350 = vpop.f32.mrb[0].mxu0
      %v3351 = vpop.f32.mrb[0].mxu0
      %v3352 = vadd.f32 0.0, %v3351
      %v3353 = vpop.f32.mrb[0].mxu0
      %3354 = vmatprep.mubr.bf16.mxu0 0
      %3355 = vmatmul.mubr.bf16.gmra.mrb[0].mxu0 %v3149
      %v3356 = vpop.f32.mrb[0].mxu0
      %v3357 = vadd.f32 0.0, %v3356
      %v3358 = vpop.f32.mrb[0].mxu0
      %v3359 = vpop.f32.mrb[0].mxu0
      %v3360 = vadd.f32 0.0, %v3359
      %v3361 = vpop.f32.mrb[0].mxu0
      %3362 = vmatprep.mubr.bf16.mxu0 0
      %3363 = vmatmul.mubr.bf16.gmra.mrb[0].mxu0 %v3152
      %v3364 = vpop.f32.mrb[0].mxu0
      %v3365 = vadd.f32 0.0, %v3364
      %v3366 = vpop.f32.mrb[0].mxu0
      %v3367 = vpop.f32.mrb[0].mxu0
      %v3368 = vadd.f32 0.0, %v3367
      %v3369 = vpop.f32.mrb[0].mxu0
      %3370 = vmatprep.mubr.bf16.mxu0 0
      %3371 = vmatmul.mubr.bf16.gmra.mrb[0].mxu0 %v3155
      %v3372 = vpop.f32.mrb[0].mxu0
      %v3373 = vadd.f32 0.0, %v3372
      %v3374 = vpop.f32.mrb[0].mxu0
      %v3375 = vpop.f32.mrb[0].mxu0
      %v3376 = vadd.f32 0.0, %v3375
      %v3377 = vpop.f32.mrb[0].mxu0
      %3378 = vmatprep.mubr.bf16.mxu0 0
      %3379 = vmatmul.mubr.bf16.gmra.mrb[0].mxu0 %v3158
      %v3380 = vpop.f32.mrb[0].mxu0
      %v3381 = vadd.f32 0.0, %v3380
      %v3382 = vpop.f32.mrb[0].mxu0
      %v3383 = vpop.f32.mrb[0].mxu0
      %v3384 = vadd.f32 0.0, %v3383
      %v3385 = vpop.f32.mrb[0].mxu0
      %3386 = vmatprep.mubr.bf16.mxu0 0
      %3387 = vmatmul.mubr.bf16.gmra.mrb[0].mxu0 %v3161
      %v3388 = vpop.f32.mrb[0].mxu0
      %v3389 = vadd.f32 0.0, %v3388
      %v3390 = vpop.f32.mrb[0].mxu0
      %v3391 = vpop.f32.mrb[0].mxu0
      %v3392 = vadd.f32 0.0, %v3391
      %v3393 = vpop.f32.mrb[0].mxu0
      %3394 = vmatprep.mubr.bf16.mxu0 0
      %3395 = vmatmul.mubr.bf16.gmra.mrb[0].mxu0 %v3164
      %v3396 = vpop.f32.mrb[0].mxu0
      %v3397 = vadd.f32 0.0, %v3396
      %v3398 = vpop.f32.mrb[0].mxu0
      %v3399 = vpop.f32.mrb[0].mxu0
      %v3400 = vadd.f32 0.0, %v3399
      %v3401 = vpop.f32.mrb[0].mxu0
      %3402 = vmatprep.mubr.bf16.mxu0 0
      %3403 = vmatmul.mubr.bf16.gmra.mrb[0].mxu0 %v3167
      %v3404 = vpop.f32.mrb[0].mxu0
      %v3405 = vadd.f32 0.0, %v3404
      %v3406 = vpop.f32.mrb[0].mxu0
      %v3407 = vpop.f32.mrb[0].mxu0
      %v3408 = vadd.f32 0.0, %v3407
      %v3409 = vpop.f32.mrb[0].mxu0
      %3410 = vmatprep.mubr.bf16.mxu0 0
      %3411 = vmatmul.mubr.bf16.gmra.mrb[0].mxu0 %v3170
      %v3412 = vpop.f32.mrb[0].mxu0
      %v3413 = vadd.f32 0.0, %v3412
      %v3414 = vpop.f32.mrb[0].mxu0
      %v3415 = vpop.f32.mrb[0].mxu0
      %v3416 = vadd.f32 0.0, %v3415
      %v3417 = vpop.f32.mrb[0].mxu0
      %3418 = vmatprep.mubr.bf16.mxu0 0
      %3419 = vmatmul.mubr.bf16.gmra.mrb[0].mxu0 %v3173
      %v3420 = vpop.f32.mrb[0].mxu0
      %v3421 = vadd.f32 0.0, %v3420
      %v3422 = vpop.f32.mrb[0].mxu0
      %v3423 = vpop.f32.mrb[0].mxu0
      %v3424 = vadd.f32 0.0, %v3423
      %v3425 = vpop.f32.mrb[0].mxu0
      %3426 = vmatprep.mubr.bf16.mxu0 0
      %3427 = vmatmul.mubr.bf16.gmra.mrb[0].mxu0 %v3176
      %v3428 = vpop.f32.mrb[0].mxu0
      %v3429 = vadd.f32 0.0, %v3428
      %v3430 = vpop.f32.mrb[0].mxu0
      %v3431 = vpop.f32.mrb[0].mxu0
      %v3432 = vadd.f32 0.0, %v3431
      %v3433 = vpop.f32.mrb[0].mxu0
      %3434 = vmatprep.mubr.bf16.mxu0 0
      %3435 = vmatmul.mubr.bf16.gmra.mrb[0].mxu0 %v3179
      %v3436 = vpop.f32.mrb[0].mxu0
      %v3437 = vadd.f32 0.0, %v3436
      %v3438 = vpop.f32.mrb[0].mxu0
      %v3439 = vpop.f32.mrb[0].mxu0
      %v3440 = vadd.f32 0.0, %v3439
      %v3441 = vpop.f32.mrb[0].mxu0
      %3442 = vmatprep.mubr.bf16.mxu0 0
      %3443 = vmatmul.mubr.bf16.gmra.mrb[0].mxu0 %v3182
      %v3444 = vpop.f32.mrb[0].mxu0
      %v3445 = vadd.f32 0.0, %v3444
      %v3446 = vpop.f32.mrb[0].mxu0
      %v3447 = vpop.f32.mrb[0].mxu0
      %v3448 = vadd.f32 0.0, %v3447
      %v3449 = vpop.f32.mrb[0].mxu0
      %3450 = vmatprep.mubr.bf16.mxu0 0
      %3451 = vmatmul.mubr.bf16.gmra.mrb[0].mxu0 %v3185
      %v3452 = vpop.f32.mrb[0].mxu0
      %v3453 = vadd.f32 0.0, %v3452
      %v3454 = vpop.f32.mrb[0].mxu0
      %v3455 = vpop.f32.mrb[0].mxu0
      %v3456 = vadd.f32 0.0, %v3455
      %v3457 = vpop.f32.mrb[0].mxu0
      %3458 = vmatprep.mubr.bf16.mxu0 0
      %3459 = vmatmul.mubr.bf16.gmra.mrb[0].mxu0 %v3188
      %v3460 = vpop.f32.mrb[0].mxu0
      %v3461 = vadd.f32 0.0, %v3460
      %v3462 = vpop.f32.mrb[0].mxu0
      %v3463 = vpop.f32.mrb[0].mxu0
      %v3464 = vadd.f32 0.0, %v3463
      %v3465 = vpop.f32.mrb[0].mxu0
      %3466 = vmatprep.mubr.bf16.mxu0 0
      %3467 = vmatmul.mubr.bf16.gmra.mrb[0].mxu0 %v3191
      %v3468 = vpop.f32.mrb[0].mxu0
      %v3469 = vadd.f32 0.0, %v3468
      %v3470 = vpop.f32.mrb[0].mxu0
      %v3471 = vpop.f32.mrb[0].mxu0
      %v3472 = vadd.f32 0.0, %v3471
      %v3473 = vpop.f32.mrb[0].mxu0
      %3474 = vmatprep.mubr.bf16.mxu0 0
      %3475 = vmatmul.mubr.bf16.gmra.mrb[0].mxu0 %v3194
      %v3476 = vpop.f32.mrb[0].mxu0
      %v3477 = vadd.f32 0.0, %v3476
      %v3478 = vpop.f32.mrb[0].mxu0
      %v3479 = vpop.f32.mrb[0].mxu0
      %v3480 = vadd.f32 0.0, %v3479
      %v3481 = vpop.f32.mrb[0].mxu0
      %3482 = vmatprep.mubr.bf16.mxu0 0
      %3483 = vmatmul.mubr.bf16.gmra.mrb[0].mxu0 %v3197
      %v3484 = vpop.f32.mrb[0].mxu0
      %v3485 = vadd.f32 0.0, %v3484
      %v3486 = vpop.f32.mrb[0].mxu0
      %v3487 = vpop.f32.mrb[0].mxu0
      %v3488 = vadd.f32 0.0, %v3487
      %v3489 = vpop.f32.mrb[0].mxu0
      %3490 = vmatprep.mubr.bf16.mxu0 0
      %3491 = vmatmul.mubr.bf16.gmra.mrb[0].mxu0 %v3200
      %v3492 = vpop.f32.mrb[0].mxu0
      %v3493 = vadd.f32 0.0, %v3492
      %v3494 = vpop.f32.mrb[0].mxu0
      %v3495 = vpop.f32.mrb[0].mxu0
      %v3496 = vadd.f32 0.0, %v3495
      %v3497 = vpop.f32.mrb[0].mxu0
      %3498 = vmatprep.mubr.bf16.mxu0 0
      %3499 = vmatmul.mubr.bf16.gmra.mrb[0].mxu0 %v3203
      %v3500 = vpop.f32.mrb[0].mxu0
      %v3501 = vadd.f32 0.0, %v3500
      %v3502 = vpop.f32.mrb[0].mxu0
      %v3503 = vpop.f32.mrb[0].mxu0
      %v3504 = vadd.f32 0.0, %v3503
      %v3505 = vpop.f32.mrb[0].mxu0
      %3506 = vmatprep.mubr.bf16.mxu0 0
      %3507 = vmatmul.mubr.bf16.gmra.mrb[0].mxu0 %v3206
      %v3508 = vpop.f32.mrb[0].mxu0
      %v3509 = vadd.f32 0.0, %v3508
      %v3510 = vpop.f32.mrb[0].mxu0
      %v3511 = vpop.f32.mrb[0].mxu0
      %v3512 = vadd.f32 0.0, %v3511
      %v3513 = vpop.f32.mrb[0].mxu0
      %3514 = vmatprep.mubr.bf16.mxu0 0
      %3515 = vmatmul.mubr.bf16.gmra.mrb[0].mxu0 %v3209
      %v3516 = vpop.f32.mrb[0].mxu0
      %v3517 = vadd.f32 0.0, %v3516
      %v3518 = vpop.f32.mrb[0].mxu0
      %v3519 = vpop.f32.mrb[0].mxu0
      %v3520 = vadd.f32 0.0, %v3519
      %v3521 = vpop.f32.mrb[0].mxu0
      %3522 = vmatprep.mubr.bf16.mxu0 0
      %3523 = vmatmul.mubr.bf16.gmra.mrb[0].mxu0 %v3212
      %v3524 = vpop.f32.mrb[0].mxu0
      %v3525 = vadd.f32 0.0, %v3524
      %v3526 = vpop.f32.mrb[0].mxu0
      %v3527 = vpop.f32.mrb[0].mxu0
      %v3528 = vadd.f32 0.0, %v3527
      %v3529 = vpop.f32.mrb[0].mxu0
      %3530 = vmatprep.mubr.bf16.mxu0 0
      %3531 = vmatmul.mubr.bf16.gmra.mrb[0].mxu0 %v3215
      %v3532 = vpop.f32.mrb[0].mxu0
      %v3533 = vadd.f32 0.0, %v3532
      %v3534 = vpop.f32.mrb[0].mxu0
      %v3535 = vpop.f32.mrb[0].mxu0
      %v3536 = vadd.f32 0.0, %v3535
      %v3537 = vpop.f32.mrb[0].mxu0
      %3538 = vmatprep.mubr.bf16.mxu0 0
      %3539 = vmatmul.mubr.bf16.gmra.mrb[0].mxu0 %v3218
      %v3540 = vpop.f32.mrb[0].mxu0
      %v3541 = vadd.f32 0.0, %v3540
      %v3542 = vpop.f32.mrb[0].mxu0
      %v3543 = vpop.f32.mrb[0].mxu0
      %v3544 = vadd.f32 0.0, %v3543
      %v3545 = vpop.f32.mrb[0].mxu0
      %3546 = vmatprep.mubr.bf16.mxu0 0
      %3547 = vmatmul.mubr.bf16.gmra.mrb[0].mxu0 %v3221
      %v3548 = vpop.f32.mrb[0].mxu0
      %v3549 = vadd.f32 0.0, %v3548
      %v3550 = vpop.f32.mrb[0].mxu0
      %v3551 = vpop.f32.mrb[0].mxu0
      %v3552 = vadd.f32 0.0, %v3551
      %v3553 = vpop.f32.mrb[0].mxu0
      %3554 = vmatprep.mubr.bf16.mxu0 0
      %3555 = vmatmul.mubr.bf16.gmra.mrb[0].mxu0 %v3224
      %v3556 = vpop.f32.mrb[0].mxu0
      %v3557 = vadd.f32 0.0, %v3556
      %v3558 = vpop.f32.mrb[0].mxu0
      %v3559 = vpop.f32.mrb[0].mxu0
      %v3560 = vadd.f32 0.0, %v3559
      %v3561 = vpop.f32.mrb[0].mxu0
      %3562 = vmatprep.mubr.bf16.mxu0 0
      %3563 = vmatmul.mubr.bf16.gmra.mrb[0].mxu0 %v3227
      %v3564 = vpop.f32.mrb[0].mxu0
      %v3565 = vadd.f32 0.0, %v3564
      %v3566 = vpop.f32.mrb[0].mxu0
      %v3567 = vpop.f32.mrb[0].mxu0
      %v3568 = vadd.f32 0.0, %v3567
      %v3569 = vpop.f32.mrb[0].mxu0
      %3570 = vmatprep.mubr.bf16.mxu0 0
      %3571 = vmatmul.mubr.bf16.gmra.mrb[0].mxu0 %v3230
      %v3572 = vpop.f32.mrb[0].mxu0
      %v3573 = vadd.f32 0.0, %v3572
      %v3574 = vpop.f32.mrb[0].mxu0
      %v3575 = vpop.f32.mrb[0].mxu0
      %v3576 = vadd.f32 0.0, %v3575
      %v3577 = vpop.f32.mrb[0].mxu0
      %3578 = vmatprep.mubr.bf16.mxu0 0
      %3579 = vmatmul.mubr.bf16.gmra.mrb[0].mxu0 %v3233
      %v3580 = vpop.f32.mrb[0].mxu0
      %v3581 = vadd.f32 0.0, %v3580
      %v3582 = vpop.f32.mrb[0].mxu0
      %v3583 = vpop.f32.mrb[0].mxu0
      %v3584 = vadd.f32 0.0, %v3583
      %v3585 = vpop.f32.mrb[0].mxu0
      %3586 = vmatprep.mubr.bf16.mxu0 0
      %3587 = vmatmul.mubr.bf16.gmra.mrb[0].mxu0 %v3236
      %v3588 = vpop.f32.mrb[0].mxu0
      %v3589 = vadd.f32 0.0, %v3588
      %v3590 = vpop.f32.mrb[0].mxu0
      %v3591 = vpop.f32.mrb[0].mxu0
      %v3592 = vadd.f32 0.0, %v3591
      %v3593 = vpop.f32.mrb[0].mxu0
      %3594 = vmatprep.mubr.bf16.mxu0 0
      %3595 = vmatmul.mubr.bf16.gmra.mrb[0].mxu0 %v3239
      %v3596 = vpop.f32.mrb[0].mxu0
      %v3597 = vadd.f32 0.0, %v3596
      %v3598 = vpop.f32.mrb[0].mxu0
      %v3599 = vpop.f32.mrb[0].mxu0
      %v3600 = vadd.f32 0.0, %v3599
      %v3601 = vpop.f32.mrb[0].mxu0
      %3602 = vmatprep.mubr.bf16.mxu0 0
      %3603 = vmatmul.mubr.bf16.gmra.mrb[0].mxu0 %v3242
      %v3604 = vpop.f32.mrb[0].mxu0
      %v3605 = vadd.f32 0.0, %v3604
      %v3606 = vpop.f32.mrb[0].mxu0
      %v3607 = vpop.f32.mrb[0].mxu0
      %v3608 = vadd.f32 0.0, %v3607
      %v3609 = vpop.f32.mrb[0].mxu0
      %3610 = vmatprep.mubr.bf16.mxu0 0
      %3611 = vmatmul.mubr.bf16.gmra.mrb[0].mxu0 %v3245
      %v3612 = vpop.f32.mrb[0].mxu0
      %v3613 = vadd.f32 0.0, %v3612
      %v3614 = vpop.f32.mrb[0].mxu0
      %v3615 = vpop.f32.mrb[0].mxu0
      %v3616 = vadd.f32 0.0, %v3615
      %v3617 = vpop.f32.mrb[0].mxu0
      %3618 = vmatprep.mubr.bf16.mxu0 0
      %3619 = vmatmul.mubr.bf16.gmra.mrb[0].mxu0 %v3248
      %v3620 = vpop.f32.mrb[0].mxu0
      %v3621 = vadd.f32 0.0, %v3620
      %v3622 = vpop.f32.mrb[0].mxu0
      %v3623 = vpop.f32.mrb[0].mxu0
      %v3624 = vpop.f32.mrb[0].mxu0
      %3625 = vdwg.mxu0
      %v3626 = vmax.f32 %v2482, %v3285
      %v3627 = vmax.f32 %v2485, %v3288
      %v3628 = vmax.f32 %v2490, %v3293
      %v3629 = vmax.f32 %v2493, %v3296
      %v3630 = vmax.f32 %v2498, %v3301
      %v3631 = vmax.f32 %v2501, %v3304
      %v3632 = vmax.f32 %v2506, %v3309
      %v3633 = vmax.f32 %v2509, %v3312
      %v3634 = vmax.f32 %v2514, %v3317
      %v3635 = vmax.f32 %v2517, %v3320
      %v3636 = vmax.f32 %v2522, %v3325
      %v3637 = vmax.f32 %v2525, %v3328
      %v3638 = vmax.f32 %v2530, %v3333
      %v3639 = vmax.f32 %v2533, %v3336
      %v3640 = vmax.f32 %v2538, %v3341
      %v3641 = vmax.f32 %v2541, %v3344
      %v3642 = vmax.f32 %v2546, %v3349
      %v3643 = vmax.f32 %v2549, %v3352
      %v3644 = vmax.f32 %v2554, %v3357
      %v3645 = vmax.f32 %v2557, %v3360
      %v3646 = vmax.f32 %v2562, %v3365
      %v3647 = vmax.f32 %v2565, %v3368
      %v3648 = vmax.f32 %v2570, %v3373
      %v3649 = vmax.f32 %v2573, %v3376
      %v3650 = vmax.f32 %v2578, %v3381
      %v3651 = vmax.f32 %v2581, %v3384
      %v3652 = vmax.f32 %v2586, %v3389
      %v3653 = vmax.f32 %v2589, %v3392
      %v3654 = vmax.f32 %v2594, %v3397
      %v3655 = vmax.f32 %v2597, %v3400
      %v3656 = vmax.f32 %v2602, %v3405
      %v3657 = vmax.f32 %v2605, %v3408
      %v3658 = vmax.f32 %v2610, %v3413
      %v3659 = vmax.f32 %v2613, %v3416
      %v3660 = vmax.f32 %v2618, %v3421
      %v3661 = vmax.f32 %v2621, %v3424
      %v3662 = vmax.f32 %v2626, %v3429
      %v3663 = vmax.f32 %v2629, %v3432
      %v3664 = vmax.f32 %v2634, %v3437
      %v3665 = vmax.f32 %v2637, %v3440
      %v3666 = vmax.f32 %v2642, %v3445
      %v3667 = vmax.f32 %v2645, %v3448
      %v3668 = vmax.f32 %v2650, %v3453
      %v3669 = vmax.f32 %v2653, %v3456
      %v3670 = vmax.f32 %v2658, %v3461
      %v3671 = vmax.f32 %v2661, %v3464
      %v3672 = vmax.f32 %v2666, %v3469
      %v3673 = vmax.f32 %v2669, %v3472
      %v3674 = vmax.f32 %v2674, %v3477
      %v3675 = vmax.f32 %v2677, %v3480
      %v3676 = vmax.f32 %v2682, %v3485
      %v3677 = vmax.f32 %v2685, %v3488
      %v3678 = vmax.f32 %v2690, %v3493
      %v3679 = vmax.f32 %v2693, %v3496
      %v3680 = vmax.f32 %v2698, %v3501
      %v3681 = vmax.f32 %v2701, %v3504
      %v3682 = vmax.f32 %v2706, %v3509
      %v3683 = vmax.f32 %v2709, %v3512
      %v3684 = vmax.f32 %v2714, %v3517
      %v3685 = vmax.f32 %v2717, %v3520
      %v3686 = vmax.f32 %v2722, %v3525
      %v3687 = vmax.f32 %v2725, %v3528
      %v3688 = vmax.f32 %v2730, %v3533
      %v3689 = vmax.f32 %v2733, %v3536
      %v3690 = vmax.f32 %v2738, %v3541
      %v3691 = vmax.f32 %v2741, %v3544
      %v3692 = vmax.f32 %v2746, %v3549
      %v3693 = vmax.f32 %v2749, %v3552
      %v3694 = vmax.f32 %v2754, %v3557
      %v3695 = vmax.f32 %v2757, %v3560
      %v3696 = vmax.f32 %v2762, %v3565
      %v3697 = vmax.f32 %v2765, %v3568
      %v3698 = vmax.f32 %v2770, %v3573
      %v3699 = vmax.f32 %v2773, %v3576
      %v3700 = vmax.f32 %v2778, %v3581
      %v3701 = vmax.f32 %v2781, %v3584
      %v3702 = vmax.f32 %v2786, %v3589
      %v3703 = vmax.f32 %v2789, %v3592
      %v3704 = vmax.f32 %v2794, %v3597
      %v3705 = vmax.f32 %v2797, %v3600
      %v3706 = vmax.f32 %v2802, %v3605
      %v3707 = vmax.f32 %v2805, %v3608
      %v3708 = vmax.f32 %v2810, %v3613
      %v3709 = vmax.f32 %v2813, %v3616
      %v3710 = vmax.f32 %v2818, %v3621
      %v3711 = vmax.f32 %v1935, %v3626
      %v3712 = vmax.f32 %v1936, %v3627
      %v3713 = vmax.f32 %v1937, %v3628
      %v3714 = vmax.f32 %v1938, %v3629
      %v3715 = vmax.f32 %v1939, %v3630
      %v3716 = vmax.f32 %v1940, %v3631
      %v3717 = vmax.f32 %v1941, %v3632
      %v3718 = vmax.f32 %v1942, %v3633
      %v3719 = vmax.f32 %v1943, %v3634
      %v3720 = vmax.f32 %v1944, %v3635
      %v3721 = vmax.f32 %v1945, %v3636
      %v3722 = vmax.f32 %v1946, %v3637
      %v3723 = vmax.f32 %v1947, %v3638
      %v3724 = vmax.f32 %v1948, %v3639
      %v3725 = vmax.f32 %v1949, %v3640
      %v3726 = vmax.f32 %v1950, %v3641
      %v3727 = vmax.f32 %v1951, %v3642
      %v3728 = vmax.f32 %v1952, %v3643
      %v3729 = vmax.f32 %v1953, %v3644
      %v3730 = vmax.f32 %v1954, %v3645
      %v3731 = vmax.f32 %v1955, %v3646
      %v3732 = vmax.f32 %v1956, %v3647
      %v3733 = vmax.f32 %v1957, %v3648
      %v3734 = vmax.f32 %v1958, %v3649
      %v3735 = vmax.f32 %v1959, %v3650
      %v3736 = vmax.f32 %v1960, %v3651
      %v3737 = vmax.f32 %v1961, %v3652
      %v3738 = vmax.f32 %v1962, %v3653
      %v3739 = vmax.f32 %v1963, %v3654
      %v3740 = vmax.f32 %v1964, %v3655
      %v3741 = vmax.f32 %v1965, %v3656
      %v3742 = vmax.f32 %v1966, %v3657
      %v3743 = vmax.f32 %v1967, %v3658
      %v3744 = vmax.f32 %v1968, %v3659
      %v3745 = vmax.f32 %v1969, %v3660
      %v3746 = vmax.f32 %v1970, %v3661
      %v3747 = vmax.f32 %v1971, %v3662
      %v3748 = vmax.f32 %v1972, %v3663
      %v3749 = vmax.f32 %v1973, %v3664
      %v3750 = vmax.f32 %v1974, %v3665
      %v3751 = vmax.f32 %v1975, %v3666
      %v3752 = vmax.f32 %v1976, %v3667
      %v3753 = vmax.f32 %v1977, %v3668
      %v3754 = vmax.f32 %v1978, %v3669
      %v3755 = vmax.f32 %v1979, %v3670
      %v3756 = vmax.f32 %v1980, %v3671
      %v3757 = vmax.f32 %v1981, %v3672
      %v3758 = vmax.f32 %v1982, %v3673
      %v3759 = vmax.f32 %v1983, %v3674
      %v3760 = vmax.f32 %v1984, %v3675
      %v3761 = vmax.f32 %v1985, %v3676
      %v3762 = vmax.f32 %v1986, %v3677
      %v3763 = vmax.f32 %v1987, %v3678
      %v3764 = vmax.f32 %v1988, %v3679
      %v3765 = vmax.f32 %v1989, %v3680
      %v3766 = vmax.f32 %v1990, %v3681
      %v3767 = vmax.f32 %v1991, %v3682
      %v3768 = vmax.f32 %v1992, %v3683
      %v3769 = vmax.f32 %v1993, %v3684
      %v3770 = vmax.f32 %v1994, %v3685
      %v3771 = vmax.f32 %v1995, %v3686
      %v3772 = vmax.f32 %v1996, %v3687
      %v3773 = vmax.f32 %v1997, %v3688
      %v3774 = vmax.f32 %v1998, %v3689
      %v3775 = vmax.f32 %v1999, %v3690
      %v3776 = vmax.f32 %v2000, %v3691
      %v3777 = vmax.f32 %v2001, %v3692
      %v3778 = vmax.f32 %v2002, %v3693
      %v3779 = vmax.f32 %v2003, %v3694
      %v3780 = vmax.f32 %v2004, %v3695
      %v3781 = vmax.f32 %v2005, %v3696
      %v3782 = vmax.f32 %v2006, %v3697
      %v3783 = vmax.f32 %v2007, %v3698
      %v3784 = vmax.f32 %v2008, %v3699
      %v3785 = vmax.f32 %v2009, %v3700
      %v3786 = vmax.f32 %v2010, %v3701
      %v3787 = vmax.f32 %v2011, %v3702
      %v3788 = vmax.f32 %v2012, %v3703
      %v3789 = vmax.f32 %v2013, %v3704
      %v3790 = vmax.f32 %v2014, %v3705
      %v3791 = vmax.f32 %v2015, %v3706
      %v3792 = vmax.f32 %v2016, %v3707
      %v3793 = vmax.f32 %v2017, %v3708
      %v3794 = vmax.f32 %v2018, %v3709
      %v3795 = vmax.f32 %v2019, %v3710
      %v3797 = vlaneseq
      %v3798 = vshrl.u32 %v3797, 7
      %v3799 = vsub.s32 0, %v3798
      %v3800 = vrot.slane %v315, %v3799
      %v3802 = vadd.f32 %v3711, %v3800
      %v3803 = vadd.f32 %v3712, %v3800
      %v3804 = vadd.f32 %v3713, %v3800
      %v3805 = vadd.f32 %v3714, %v3800
      %v3806 = vadd.f32 %v3715, %v3800
      %v3807 = vadd.f32 %v3716, %v3800
      %v3808 = vadd.f32 %v3717, %v3800
      %v3809 = vadd.f32 %v3718, %v3800
      %v3810 = vadd.f32 %v3719, %v3800
      %v3811 = vadd.f32 %v3720, %v3800
      %v3812 = vadd.f32 %v3721, %v3800
      %v3813 = vadd.f32 %v3722, %v3800
      %v3814 = vadd.f32 %v3723, %v3800
      %v3815 = vadd.f32 %v3724, %v3800
      %v3816 = vadd.f32 %v3725, %v3800
      %v3817 = vadd.f32 %v3726, %v3800
      %v3818 = vadd.f32 %v3727, %v3800
      %v3819 = vadd.f32 %v3728, %v3800
      %v3820 = vadd.f32 %v3729, %v3800
      %v3821 = vadd.f32 %v3730, %v3800
      %v3822 = vadd.f32 %v3731, %v3800
      %v3823 = vadd.f32 %v3732, %v3800
      %v3824 = vadd.f32 %v3733, %v3800
      %v3825 = vadd.f32 %v3734, %v3800
      %v3826 = vadd.f32 %v3735, %v3800
      %v3827 = vadd.f32 %v3736, %v3800
      %v3828 = vadd.f32 %v3737, %v3800
      %v3829 = vadd.f32 %v3738, %v3800
      %v3830 = vadd.f32 %v3739, %v3800
      %v3831 = vadd.f32 %v3740, %v3800
      %v3832 = vadd.f32 %v3741, %v3800
      %v3833 = vadd.f32 %v3742, %v3800
      %v3834 = vadd.f32 %v3743, %v3800
      %v3835 = vadd.f32 %v3744, %v3800
      %v3836 = vadd.f32 %v3745, %v3800
      %v3837 = vadd.f32 %v3746, %v3800
      %v3838 = vadd.f32 %v3747, %v3800
      %v3839 = vadd.f32 %v3748, %v3800
      %v3840 = vadd.f32 %v3749, %v3800
      %v3841 = vadd.f32 %v3750, %v3800
      %v3842 = vadd.f32 %v3751, %v3800
      %v3843 = vadd.f32 %v3752, %v3800
      %v3844 = vadd.f32 %v3753, %v3800
      %v3845 = vadd.f32 %v3754, %v3800
      %v3846 = vadd.f32 %v3755, %v3800
      %v3847 = vadd.f32 %v3756, %v3800
      %v3848 = vadd.f32 %v3757, %v3800
      %v3849 = vadd.f32 %v3758, %v3800
      %v3850 = vadd.f32 %v3759, %v3800
      %v3851 = vadd.f32 %v3760, %v3800
      %v3852 = vadd.f32 %v3761, %v3800
      %v3853 = vadd.f32 %v3762, %v3800
      %v3854 = vadd.f32 %v3763, %v3800
      %v3855 = vadd.f32 %v3764, %v3800
      %v3856 = vadd.f32 %v3765, %v3800
      %v3857 = vadd.f32 %v3766, %v3800
      %v3858 = vadd.f32 %v3767, %v3800
      %v3859 = vadd.f32 %v3768, %v3800
      %v3860 = vadd.f32 %v3769, %v3800
      %v3861 = vadd.f32 %v3770, %v3800
      %v3862 = vadd.f32 %v3771, %v3800
      %v3863 = vadd.f32 %v3772, %v3800
      %v3864 = vadd.f32 %v3773, %v3800
      %v3865 = vadd.f32 %v3774, %v3800
      %v3866 = vadd.f32 %v3775, %v3800
      %v3867 = vadd.f32 %v3776, %v3800
      %v3868 = vadd.f32 %v3777, %v3800
      %v3869 = vadd.f32 %v3778, %v3800
      %v3870 = vadd.f32 %v3779, %v3800
      %v3871 = vadd.f32 %v3780, %v3800
      %v3872 = vadd.f32 %v3781, %v3800
      %v3873 = vadd.f32 %v3782, %v3800
      %v3874 = vadd.f32 %v3783, %v3800
      %v3875 = vadd.f32 %v3784, %v3800
      %v3876 = vadd.f32 %v3785, %v3800
      %v3877 = vadd.f32 %v3786, %v3800
      %v3878 = vadd.f32 %v3787, %v3800
      %v3879 = vadd.f32 %v3788, %v3800
      %v3880 = vadd.f32 %v3789, %v3800
      %v3881 = vadd.f32 %v3790, %v3800
      %v3882 = vadd.f32 %v3791, %v3800
      %v3883 = vadd.f32 %v3792, %v3800
      %v3884 = vadd.f32 %v3793, %v3800
      %v3885 = vadd.f32 %v3794, %v3800
      %v3886 = vadd.f32 %v3795, %v3800
      %v3887 = vmax.f32 %v3802, 0.0
      %v3888 = vmax.f32 %v3803, 0.0
      %v3889 = vmax.f32 %v3804, 0.0
      %v3890 = vmax.f32 %v3805, 0.0
      %v3891 = vmax.f32 %v3806, 0.0
      %v3892 = vmax.f32 %v3807, 0.0
      %v3893 = vmax.f32 %v3808, 0.0
      %v3894 = vmax.f32 %v3809, 0.0
      %v3895 = vmax.f32 %v3810, 0.0
      %v3896 = vmax.f32 %v3811, 0.0
      %v3897 = vmax.f32 %v3812, 0.0
      %v3898 = vmax.f32 %v3813, 0.0
      %v3899 = vmax.f32 %v3814, 0.0
      %v3900 = vmax.f32 %v3815, 0.0
      %v3901 = vmax.f32 %v3816, 0.0
      %v3902 = vmax.f32 %v3817, 0.0
      %v3903 = vmax.f32 %v3818, 0.0
      %v3904 = vmax.f32 %v3819, 0.0
      %v3905 = vmax.f32 %v3820, 0.0
      %v3906 = vmax.f32 %v3821, 0.0
      %v3907 = vmax.f32 %v3822, 0.0
      %v3908 = vmax.f32 %v3823, 0.0
      %v3909 = vmax.f32 %v3824, 0.0
      %v3910 = vmax.f32 %v3825, 0.0
      %v3911 = vmax.f32 %v3826, 0.0
      %v3912 = vmax.f32 %v3827, 0.0
      %v3913 = vmax.f32 %v3828, 0.0
      %v3914 = vmax.f32 %v3829, 0.0
      %v3915 = vmax.f32 %v3830, 0.0
      %v3916 = vmax.f32 %v3831, 0.0
      %v3917 = vmax.f32 %v3832, 0.0
      %v3918 = vmax.f32 %v3833, 0.0
      %v3919 = vmax.f32 %v3834, 0.0
      %v3920 = vmax.f32 %v3835, 0.0
      %v3921 = vmax.f32 %v3836, 0.0
      %v3922 = vmax.f32 %v3837, 0.0
      %v3923 = vmax.f32 %v3838, 0.0
      %v3924 = vmax.f32 %v3839, 0.0
      %v3925 = vmax.f32 %v3840, 0.0
      %v3926 = vmax.f32 %v3841, 0.0
      %v3927 = vmax.f32 %v3842, 0.0
      %v3928 = vmax.f32 %v3843, 0.0
      %v3929 = vmax.f32 %v3844, 0.0
      %v3930 = vmax.f32 %v3845, 0.0
      %v3931 = vmax.f32 %v3846, 0.0
      %v3932 = vmax.f32 %v3847, 0.0
      %v3933 = vmax.f32 %v3848, 0.0
      %v3934 = vmax.f32 %v3849, 0.0
      %v3935 = vmax.f32 %v3850, 0.0
      %v3936 = vmax.f32 %v3851, 0.0
      %v3937 = vmax.f32 %v3852, 0.0
      %v3938 = vmax.f32 %v3853, 0.0
      %v3939 = vmax.f32 %v3854, 0.0
      %v3940 = vmax.f32 %v3855, 0.0
      %v3941 = vmax.f32 %v3856, 0.0
      %v3942 = vmax.f32 %v3857, 0.0
      %v3943 = vmax.f32 %v3858, 0.0
      %v3944 = vmax.f32 %v3859, 0.0
      %v3945 = vmax.f32 %v3860, 0.0
      %v3946 = vmax.f32 %v3861, 0.0
      %v3947 = vmax.f32 %v3862, 0.0
      %v3948 = vmax.f32 %v3863, 0.0
      %v3949 = vmax.f32 %v3864, 0.0
      %v3950 = vmax.f32 %v3865, 0.0
      %v3951 = vmax.f32 %v3866, 0.0
      %v3952 = vmax.f32 %v3867, 0.0
      %v3953 = vmax.f32 %v3868, 0.0
      %v3954 = vmax.f32 %v3869, 0.0
      %v3955 = vmax.f32 %v3870, 0.0
      %v3956 = vmax.f32 %v3871, 0.0
      %v3957 = vmax.f32 %v3872, 0.0
      %v3958 = vmax.f32 %v3873, 0.0
      %v3959 = vmax.f32 %v3874, 0.0
      %v3960 = vmax.f32 %v3875, 0.0
      %v3961 = vmax.f32 %v3876, 0.0
      %v3962 = vmax.f32 %v3877, 0.0
      %v3963 = vmax.f32 %v3878, 0.0
      %v3964 = vmax.f32 %v3879, 0.0
      %v3965 = vmax.f32 %v3880, 0.0
      %v3966 = vmax.f32 %v3881, 0.0
      %v3967 = vmax.f32 %v3882, 0.0
      %v3968 = vmax.f32 %v3883, 0.0
      %v3969 = vmax.f32 %v3884, 0.0
      %v3970 = vmax.f32 %v3885, 0.0
      %v3971 = vmax.f32 %v3886, 0.0
      %v3972 = vpack.c.bf16 %v3888, %v3887
      %v3973 = vpack.c.bf16 %v3890, %v3889
      %v3974 = vpack.c.bf16 %v3892, %v3891
      %v3975 = vpack.c.bf16 %v3894, %v3893
      %v3976 = vpack.c.bf16 %v3896, %v3895
      %v3977 = vpack.c.bf16 %v3898, %v3897
      %v3978 = vpack.c.bf16 %v3900, %v3899
      %v3979 = vpack.c.bf16 %v3902, %v3901
      %v3980 = vpack.c.bf16 %v3904, %v3903
      %v3981 = vpack.c.bf16 %v3906, %v3905
      %v3982 = vpack.c.bf16 %v3908, %v3907
      %v3983 = vpack.c.bf16 %v3910, %v3909
      %v3984 = vpack.c.bf16 %v3912, %v3911
      %v3985 = vpack.c.bf16 %v3914, %v3913
      %v3986 = vpack.c.bf16 %v3916, %v3915
      %v3987 = vpack.c.bf16 %v3918, %v3917
      %v3988 = vpack.c.bf16 %v3920, %v3919
      %v3989 = vpack.c.bf16 %v3922, %v3921
      %v3990 = vpack.c.bf16 %v3924, %v3923
      %v3991 = vpack.c.bf16 %v3926, %v3925
      %v3992 = vpack.c.bf16 %v3928, %v3927
      %v3993 = vpack.c.bf16 %v3930, %v3929
      %v3994 = vpack.c.bf16 %v3932, %v3931
      %v3995 = vpack.c.bf16 %v3934, %v3933
      %v3996 = vpack.c.bf16 %v3936, %v3935
      %v3997 = vpack.c.bf16 %v3938, %v3937
      %v3998 = vpack.c.bf16 %v3940, %v3939
      %v3999 = vpack.c.bf16 %v3942, %v3941
      %v4000 = vpack.c.bf16 %v3944, %v3943
      %v4001 = vpack.c.bf16 %v3946, %v3945
      %v4002 = vpack.c.bf16 %v3948, %v3947
      %v4003 = vpack.c.bf16 %v3950, %v3949
      %v4004 = vpack.c.bf16 %v3952, %v3951
      %v4005 = vpack.c.bf16 %v3954, %v3953
      %v4006 = vpack.c.bf16 %v3956, %v3955
      %v4007 = vpack.c.bf16 %v3958, %v3957
      %v4008 = vpack.c.bf16 %v3960, %v3959
      %v4009 = vpack.c.bf16 %v3962, %v3961
      %v4010 = vpack.c.bf16 %v3964, %v3963
      %v4011 = vpack.c.bf16 %v3966, %v3965
      %v4012 = vpack.c.bf16 %v3968, %v3967
      %v4013 = vpack.c.bf16 %v3970, %v3969
      %v4014 = vpack.c.bf16 %v3971, %v3971
      %v4058 = vunpack.c.l.b16 %v3972
      %v4059 = vunpack.c.h.b16 %v3972
      %v4060 = vunpack.c.l.b16 %v3973
      %v4061 = vunpack.c.h.b16 %v3973
      %v4062 = vunpack.c.l.b16 %v3974
      %v4063 = vunpack.c.h.b16 %v3974
      %v4064 = vunpack.c.l.b16 %v3975
      %v4065 = vunpack.c.h.b16 %v3975
      %v4066 = vunpack.c.l.b16 %v3976
      %v4067 = vunpack.c.h.b16 %v3976
      %v4068 = vunpack.c.l.b16 %v3977
      %v4069 = vunpack.c.h.b16 %v3977
      %v4070 = vunpack.c.l.b16 %v3978
      %v4071 = vunpack.c.h.b16 %v3978
      %v4072 = vunpack.c.l.b16 %v3979
      %v4073 = vunpack.c.h.b16 %v3979
      %v4074 = vunpack.c.l.b16 %v3980
      %v4075 = vunpack.c.h.b16 %v3980
      %v4076 = vunpack.c.l.b16 %v3981
      %v4077 = vunpack.c.h.b16 %v3981
      %v4078 = vunpack.c.l.b16 %v3982
      %v4079 = vunpack.c.h.b16 %v3982
      %v4080 = vunpack.c.l.b16 %v3983
      %v4081 = vunpack.c.h.b16 %v3983
      %v4082 = vunpack.c.l.b16 %v3984
      %v4083 = vunpack.c.h.b16 %v3984
      %v4084 = vunpack.c.l.b16 %v3985
      %v4085 = vunpack.c.h.b16 %v3985
      %v4086 = vunpack.c.l.b16 %v3986
      %v4087 = vunpack.c.h.b16 %v3986
      %v4088 = vunpack.c.l.b16 %v3987
      %v4089 = vunpack.c.h.b16 %v3987
      %v4090 = vunpack.c.l.b16 %v3988
      %v4091 = vunpack.c.h.b16 %v3988
      %v4092 = vunpack.c.l.b16 %v3989
      %v4093 = vunpack.c.h.b16 %v3989
      %v4094 = vunpack.c.l.b16 %v3990
      %v4095 = vunpack.c.h.b16 %v3990
      %v4096 = vunpack.c.l.b16 %v3991
      %v4097 = vunpack.c.h.b16 %v3991
      %v4098 = vunpack.c.l.b16 %v3992
      %v4099 = vunpack.c.h.b16 %v3992
      %v4100 = vunpack.c.l.b16 %v3993
      %v4101 = vunpack.c.h.b16 %v3993
      %v4102 = vunpack.c.l.b16 %v3994
      %v4103 = vunpack.c.h.b16 %v3994
      %v4104 = vunpack.c.l.b16 %v3995
      %v4105 = vunpack.c.h.b16 %v3995
      %v4106 = vunpack.c.l.b16 %v3996
      %v4107 = vunpack.c.h.b16 %v3996
      %v4108 = vunpack.c.l.b16 %v3997
      %v4109 = vunpack.c.h.b16 %v3997
      %v4110 = vunpack.c.l.b16 %v3998
      %v4111 = vunpack.c.h.b16 %v3998
      %v4112 = vunpack.c.l.b16 %v3999
      %v4113 = vunpack.c.h.b16 %v3999
      %v4114 = vunpack.c.l.b16 %v4000
      %v4115 = vunpack.c.h.b16 %v4000
      %v4116 = vunpack.c.l.b16 %v4001
      %v4117 = vunpack.c.h.b16 %v4001
      %v4118 = vunpack.c.l.b16 %v4002
      %v4119 = vunpack.c.h.b16 %v4002
      %v4120 = vunpack.c.l.b16 %v4003
      %v4121 = vunpack.c.h.b16 %v4003
      %v4122 = vunpack.c.l.b16 %v4004
      %v4123 = vunpack.c.h.b16 %v4004
      %v4124 = vunpack.c.l.b16 %v4005
      %v4125 = vunpack.c.h.b16 %v4005
      %v4126 = vunpack.c.l.b16 %v4006
      %v4127 = vunpack.c.h.b16 %v4006
      %v4128 = vunpack.c.l.b16 %v4007
      %v4129 = vunpack.c.h.b16 %v4007
      %v4130 = vunpack.c.l.b16 %v4008
      %v4131 = vunpack.c.h.b16 %v4008
      %v4132 = vunpack.c.l.b16 %v4009
      %v4133 = vunpack.c.h.b16 %v4009
      %v4134 = vunpack.c.l.b16 %v4010
      %v4135 = vunpack.c.h.b16 %v4010
      %v4136 = vunpack.c.l.b16 %v4011
      %v4137 = vunpack.c.h.b16 %v4011
      %v4138 = vunpack.c.l.b16 %v4012
      %v4139 = vunpack.c.h.b16 %v4012
      %v4140 = vunpack.c.l.b16 %v4013
      %v4141 = vunpack.c.h.b16 %v4013
      %v4142 = vunpack.c.l.b16 %v4014
      %v4143 = vpack.c.b16 %v4058, %v4058
      %v4144 = vpack.c.b16 %v4059, %v4059
      %v4145 = vpack.c.b16 %v4060, %v4060
      %v4146 = vpack.c.b16 %v4061, %v4061
      %v4147 = vpack.c.b16 %v4062, %v4062
      %v4148 = vpack.c.b16 %v4063, %v4063
      %v4149 = vpack.c.b16 %v4064, %v4064
      %v4150 = vpack.c.b16 %v4065, %v4065
      %v4151 = vpack.c.b16 %v4066, %v4066
      %v4152 = vpack.c.b16 %v4067, %v4067
      %v4153 = vpack.c.b16 %v4068, %v4068
      %v4154 = vpack.c.b16 %v4069, %v4069
      %v4155 = vpack.c.b16 %v4070, %v4070
      %v4156 = vpack.c.b16 %v4071, %v4071
      %v4157 = vpack.c.b16 %v4072, %v4072
      %v4158 = vpack.c.b16 %v4073, %v4073
      %v4159 = vpack.c.b16 %v4074, %v4074
      %v4160 = vpack.c.b16 %v4075, %v4075
      %v4161 = vpack.c.b16 %v4076, %v4076
      %v4162 = vpack.c.b16 %v4077, %v4077
      %v4163 = vpack.c.b16 %v4078, %v4078
      %v4164 = vpack.c.b16 %v4079, %v4079
      %v4165 = vpack.c.b16 %v4080, %v4080
      %v4166 = vpack.c.b16 %v4081, %v4081
      %v4167 = vpack.c.b16 %v4082, %v4082
      %v4168 = vpack.c.b16 %v4083, %v4083
      %v4169 = vpack.c.b16 %v4084, %v4084
      %v4170 = vpack.c.b16 %v4085, %v4085
      %v4171 = vpack.c.b16 %v4086, %v4086
      %v4172 = vpack.c.b16 %v4087, %v4087
      %v4173 = vpack.c.b16 %v4088, %v4088
      %v4174 = vpack.c.b16 %v4089, %v4089
      %v4175 = vpack.c.b16 %v4090, %v4090
      %v4176 = vpack.c.b16 %v4091, %v4091
      %v4177 = vpack.c.b16 %v4092, %v4092
      %v4178 = vpack.c.b16 %v4093, %v4093
      %v4179 = vpack.c.b16 %v4094, %v4094
      %v4180 = vpack.c.b16 %v4095, %v4095
      %v4181 = vpack.c.b16 %v4096, %v4096
      %v4182 = vpack.c.b16 %v4097, %v4097
      %v4183 = vpack.c.b16 %v4098, %v4098
      %v4184 = vpack.c.b16 %v4099, %v4099
      %v4185 = vpack.c.b16 %v4100, %v4100
      %v4186 = vpack.c.b16 %v4101, %v4101
      %v4187 = vpack.c.b16 %v4102, %v4102
      %v4188 = vpack.c.b16 %v4103, %v4103
      %v4189 = vpack.c.b16 %v4104, %v4104
      %v4190 = vpack.c.b16 %v4105, %v4105
      %v4191 = vpack.c.b16 %v4106, %v4106
      %v4192 = vpack.c.b16 %v4107, %v4107
      %v4193 = vpack.c.b16 %v4108, %v4108
      %v4194 = vpack.c.b16 %v4109, %v4109
      %v4195 = vpack.c.b16 %v4110, %v4110
      %v4196 = vpack.c.b16 %v4111, %v4111
      %v4197 = vpack.c.b16 %v4112, %v4112
      %v4198 = vpack.c.b16 %v4113, %v4113
      %v4199 = vpack.c.b16 %v4114, %v4114
      %v4200 = vpack.c.b16 %v4115, %v4115
      %v4201 = vpack.c.b16 %v4116, %v4116
      %v4202 = vpack.c.b16 %v4117, %v4117
      %v4203 = vpack.c.b16 %v4118, %v4118
      %v4204 = vpack.c.b16 %v4119, %v4119
      %v4205 = vpack.c.b16 %v4120, %v4120
      %v4206 = vpack.c.b16 %v4121, %v4121
      %v4207 = vpack.c.b16 %v4122, %v4122
      %v4208 = vpack.c.b16 %v4123, %v4123
      %v4209 = vpack.c.b16 %v4124, %v4124
      %v4210 = vpack.c.b16 %v4125, %v4125
      %v4211 = vpack.c.b16 %v4126, %v4126
      %v4212 = vpack.c.b16 %v4127, %v4127
      %v4213 = vpack.c.b16 %v4128, %v4128
      %v4214 = vpack.c.b16 %v4129, %v4129
      %v4215 = vpack.c.b16 %v4130, %v4130
      %v4216 = vpack.c.b16 %v4131, %v4131
      %v4217 = vpack.c.b16 %v4132, %v4132
      %v4218 = vpack.c.b16 %v4133, %v4133
      %v4219 = vpack.c.b16 %v4134, %v4134
      %v4220 = vpack.c.b16 %v4135, %v4135
      %v4221 = vpack.c.b16 %v4136, %v4136
      %v4222 = vpack.c.b16 %v4137, %v4137
      %v4223 = vpack.c.b16 %v4138, %v4138
      %v4224 = vpack.c.b16 %v4139, %v4139
      %v4225 = vpack.c.b16 %v4140, %v4140
      %v4226 = vpack.c.b16 %v4141, %v4141
      %v4227 = vpack.c.b16 %v4142, %v4142
      %vm4313 = vcmask 257024
      %4314 = vst.msk [vmem:[%s311] sm:$0xf] %vm4313, %v4143
      %4315 = vst.msk [vmem:[%s311 + $0x4] sm:$0xf] %vm4313, %v4144
      %4316 = vst.msk [vmem:[%s311 + $0x8] sm:$0xf] %vm4313, %v4145
      %4317 = vst.msk [vmem:[%s311 + $0xc] sm:$0xf] %vm4313, %v4146
      %4318 = vst.msk [vmem:[%s311 + $0x10] sm:$0xf] %vm4313, %v4147
      %4319 = vst.msk [vmem:[%s311 + $0x14] sm:$0xf] %vm4313, %v4148
      %4320 = vst.msk [vmem:[%s311 + $0x18] sm:$0xf] %vm4313, %v4149
      %4321 = vst.msk [vmem:[%s311 + $0x1c] sm:$0xf] %vm4313, %v4150
      %4322 = vst.msk [vmem:[%s311 + $0x20] sm:$0xf] %vm4313, %v4151
      %4323 = vst.msk [vmem:[%s311 + $0x24] sm:$0xf] %vm4313, %v4152
      %4324 = vst.msk [vmem:[%s311 + $0x28] sm:$0xf] %vm4313, %v4153
      %4325 = vst.msk [vmem:[%s311 + $0x2c] sm:$0xf] %vm4313, %v4154
      %4326 = vst.msk [vmem:[%s311 + $0x30] sm:$0xf] %vm4313, %v4155
      %4327 = vst.msk [vmem:[%s311 + $0x34] sm:$0xf] %vm4313, %v4156
      %4328 = vst.msk [vmem:[%s311 + $0x38] sm:$0xf] %vm4313, %v4157
      %4329 = vst.msk [vmem:[%s311 + $0x3c] sm:$0xf] %vm4313, %v4158
      %4330 = vst.msk [vmem:[%s311 + $0x40] sm:$0xf] %vm4313, %v4159
      %4331 = vst.msk [vmem:[%s311 + $0x44] sm:$0xf] %vm4313, %v4160
      %4332 = vst.msk [vmem:[%s311 + $0x48] sm:$0xf] %vm4313, %v4161
      %4333 = vst.msk [vmem:[%s311 + $0x4c] sm:$0xf] %vm4313, %v4162
      %4334 = vst.msk [vmem:[%s311 + $0x50] sm:$0xf] %vm4313, %v4163
      %4335 = vst.msk [vmem:[%s311 + $0x54] sm:$0xf] %vm4313, %v4164
      %4336 = vst.msk [vmem:[%s311 + $0x58] sm:$0xf] %vm4313, %v4165
      %4337 = vst.msk [vmem:[%s311 + $0x5c] sm:$0xf] %vm4313, %v4166
      %4338 = vst.msk [vmem:[%s311 + $0x60] sm:$0xf] %vm4313, %v4167
      %4339 = vst.msk [vmem:[%s311 + $0x64] sm:$0xf] %vm4313, %v4168
      %4340 = vst.msk [vmem:[%s311 + $0x68] sm:$0xf] %vm4313, %v4169
      %4341 = vst.msk [vmem:[%s311 + $0x6c] sm:$0xf] %vm4313, %v4170
      %4342 = vst.msk [vmem:[%s311 + $0x70] sm:$0xf] %vm4313, %v4171
      %4343 = vst.msk [vmem:[%s311 + $0x74] sm:$0xf] %vm4313, %v4172
      %4344 = vst.msk [vmem:[%s311 + $0x78] sm:$0xf] %vm4313, %v4173
      %4345 = vst.msk [vmem:[%s311 + $0x7c] sm:$0xf] %vm4313, %v4174
      %4346 = vst.msk [vmem:[%s311 + $0x80] sm:$0xf] %vm4313, %v4175
      %4347 = vst.msk [vmem:[%s311 + $0x84] sm:$0xf] %vm4313, %v4176
      %4348 = vst.msk [vmem:[%s311 + $0x88] sm:$0xf] %vm4313, %v4177
      %4349 = vst.msk [vmem:[%s311 + $0x8c] sm:$0xf] %vm4313, %v4178
      %4350 = vst.msk [vmem:[%s311 + $0x90] sm:$0xf] %vm4313, %v4179
      %4351 = vst.msk [vmem:[%s311 + $0x94] sm:$0xf] %vm4313, %v4180
      %4352 = vst.msk [vmem:[%s311 + $0x98] sm:$0xf] %vm4313, %v4181
      %4353 = vst.msk [vmem:[%s311 + $0x9c] sm:$0xf] %vm4313, %v4182
      %4354 = vst.msk [vmem:[%s311 + $0xa0] sm:$0xf] %vm4313, %v4183
      %4355 = vst.msk [vmem:[%s311 + $0xa4] sm:$0xf] %vm4313, %v4184
      %4356 = vst.msk [vmem:[%s311 + $0xa8] sm:$0xf] %vm4313, %v4185
      %4357 = vst.msk [vmem:[%s311 + $0xac] sm:$0xf] %vm4313, %v4186
      %4358 = vst.msk [vmem:[%s311 + $0xb0] sm:$0xf] %vm4313, %v4187
      %4359 = vst.msk [vmem:[%s311 + $0xb4] sm:$0xf] %vm4313, %v4188
      %4360 = vst.msk [vmem:[%s311 + $0xb8] sm:$0xf] %vm4313, %v4189
      %4361 = vst.msk [vmem:[%s311 + $0xbc] sm:$0xf] %vm4313, %v4190
      %4362 = vst.msk [vmem:[%s311 + $0xc0] sm:$0xf] %vm4313, %v4191
      %4363 = vst.msk [vmem:[%s311 + $0xc4] sm:$0xf] %vm4313, %v4192
      %4364 = vst.msk [vmem:[%s311 + $0xc8] sm:$0xf] %vm4313, %v4193
      %4365 = vst.msk [vmem:[%s311 + $0xcc] sm:$0xf] %vm4313, %v4194
      %4366 = vst.msk [vmem:[%s311 + $0xd0] sm:$0xf] %vm4313, %v4195
      %4367 = vst.msk [vmem:[%s311 + $0xd4] sm:$0xf] %vm4313, %v4196
      %4368 = vst.msk [vmem:[%s311 + $0xd8] sm:$0xf] %vm4313, %v4197
      %4369 = vst.msk [vmem:[%s311 + $0xdc] sm:$0xf] %vm4313, %v4198
      %4370 = vst.msk [vmem:[%s311 + $0xe0] sm:$0xf] %vm4313, %v4199
      %4371 = vst.msk [vmem:[%s311 + $0xe4] sm:$0xf] %vm4313, %v4200
      %4372 = vst.msk [vmem:[%s311 + $0xe8] sm:$0xf] %vm4313, %v4201
      %4373 = vst.msk [vmem:[%s311 + $0xec] sm:$0xf] %vm4313, %v4202
      %4374 = vst.msk [vmem:[%s311 + $0xf0] sm:$0xf] %vm4313, %v4203
      %4375 = vst.msk [vmem:[%s311 + $0xf4] sm:$0xf] %vm4313, %v4204
      %4376 = vst.msk [vmem:[%s311 + $0xf8] sm:$0xf] %vm4313, %v4205
      %4377 = vst.msk [vmem:[%s311 + $0xfc] sm:$0xf] %vm4313, %v4206
      %4378 = vst.msk [vmem:[%s311 + $0x100] sm:$0xf] %vm4313, %v4207
      %4379 = vst.msk [vmem:[%s311 + $0x104] sm:$0xf] %vm4313, %v4208
      %4380 = vst.msk [vmem:[%s311 + $0x108] sm:$0xf] %vm4313, %v4209
      %4381 = vst.msk [vmem:[%s311 + $0x10c] sm:$0xf] %vm4313, %v4210
      %4382 = vst.msk [vmem:[%s311 + $0x110] sm:$0xf] %vm4313, %v4211
      %4383 = vst.msk [vmem:[%s311 + $0x114] sm:$0xf] %vm4313, %v4212
      %4384 = vst.msk [vmem:[%s311 + $0x118] sm:$0xf] %vm4313, %v4213
      %4385 = vst.msk [vmem:[%s311 + $0x11c] sm:$0xf] %vm4313, %v4214
      %4386 = vst.msk [vmem:[%s311 + $0x120] sm:$0xf] %vm4313, %v4215
      %4387 = vst.msk [vmem:[%s311 + $0x124] sm:$0xf] %vm4313, %v4216
      %4388 = vst.msk [vmem:[%s311 + $0x128] sm:$0xf] %vm4313, %v4217
      %4389 = vst.msk [vmem:[%s311 + $0x12c] sm:$0xf] %vm4313, %v4218
      %4390 = vst.msk [vmem:[%s311 + $0x130] sm:$0xf] %vm4313, %v4219
      %4391 = vst.msk [vmem:[%s311 + $0x134] sm:$0xf] %vm4313, %v4220
      %4392 = vst.msk [vmem:[%s311 + $0x138] sm:$0xf] %vm4313, %v4221
      %4393 = vst.msk [vmem:[%s311 + $0x13c] sm:$0xf] %vm4313, %v4222
      %4394 = vst.msk [vmem:[%s311 + $0x140] sm:$0xf] %vm4313, %v4223
      %4395 = vst.msk [vmem:[%s311 + $0x144] sm:$0xf] %vm4313, %v4224
      %4396 = vst.msk [vmem:[%s311 + $0x148] sm:$0xf] %vm4313, %v4225
      %4397 = vst.msk [vmem:[%s311 + $0x14c] sm:$0xf] %vm4313, %v4226
      %vm4398 = vcmask 254976
      %4399 = vst.msk [vmem:[%s311 + $0x150] sm:$0x3] %vm4398, %v4227
      %p4400 = scmp.lt.s32.totalorder %s17, 1
      %s4401 = scalar_select %p4400, %s17, 1
      %s4402 = smul.addr %s4401, 85
      %s4403 = smul.addr %s4402, 4
      %s4404 = scalar_lea.vmem %s6, %s4403
      // Predicated region
      $region45: #{lnsnet_forward.3} parent=43 // pred_check
        %p4405 = pneg %p181
      $region46: #{lnsnet_forward.3} parent=43 // pred_check_branch
        %4407 = sbr.rel (%p4405) target = $region48
      $region47: #{lnsnet_forward.3} parent=43 // pred_region
        _
      $region48: #{lnsnet_forward.3} parent=43 // pred_fallthru
        _
    $region44: #{lnsnet_forward.3} parent=5 // pred_fallthru
      _
    %p4408 = scmp.le.s32.totalorder 2, %s12
    // Predicated region
    $region49: #{lnsnet_forward.3} parent=5 // pred_check
      %p4409 = pneg %p4408
    $region50: #{lnsnet_forward.3} parent=5 // pred_check_branch
      %4411 = sbr.rel (%p4409) target = $region52
    $region51: #{lnsnet_forward.3} parent=5 // pred_region
      %s4412 = ssub.s32 %s12, 2
      // Predicated region
      $region53: #{lnsnet_forward.3} parent=51 // pred_check
        %p4413 = pneg %p187
      $region54: #{lnsnet_forward.3} parent=51 // pred_check_branch
        %4415 = sbr.rel (%p4413) target = $region56
      $region55: #{lnsnet_forward.3} parent=51 // pred_region
        %p4416 = scmp.lt.s32.totalorder %s18, 1
        %s4417 = scalar_select %p4416, %s18, 1
        %s4418 = smul.addr %s4417, 85
        %s4419 = smul.addr %s4418, 4
        %s4420 = scalar_lea.vmem %s6, %s4419
      $region56: #{lnsnet_forward.3} parent=51 // pred_fallthru
        _
    $region52: #{lnsnet_forward.3} parent=5 // pred_fallthru
      _
  $region6: #{lnsnet_forward.3} parent=0 // loop_footer
    %s16 = sadd.s32 1, %s12
  $region7: #{lnsnet_forward.3} parent=0 // loop_footer_branch
    %11 = sbr.rel target = $region3
  $region8: #{lnsnet_forward.3} parent=0 // loop_exit
    _

// kernel: lnsnet_forward.4
$region0: #{lnsnet_forward.4}
  #allocation0 [shape = 'u32[]', space=smem, size = 0x4, offset = 0x4, fixed_abs, tag = 'smem constant byte address 0x4 - core index']
  #allocation1 [shape = 'u32[144,128]{1,0:T(1,128)}', space=vmem, size = 0x12000, scoped, tag = 'internal scratch']
  %s0 = inlined_call_operand.vmem [shape: bf16[2,144,288], index: 0, kind: input, shape index: {}]
  %s1 = inlined_call_operand.vmem [shape: bf16[2,144,288], index: 1, kind: input, shape index: {}]
  %s2 = inlined_call_operand.vmem [shape: bf16[2,144,288], index: 2, kind: input, shape index: {}]
  %s3 = inlined_call_operand.vmem [shape: bf16[2,144,288], index: 3, kind: input, shape index: {}]
  %s4 = inlined_call_operand.vmem [shape: bf16[288,64], index: 4, kind: input, shape index: {}]
  %s5 = inlined_call_operand.vmem [shape: f32[1,64], index: 5, kind: input, shape index: {}]
  %s6 = inlined_call_operand.vmem [shape: bf16[2,144,64], index: 6, kind: output, shape index: {}]
  %s7 = sld [smem:[#allocation0]]
  $region57: #{lnsnet_forward.4} parent=0
    _
  %s9 = ssub.s32 1, %s7
  %s10 = scalar_select 0, %s9, %s7
  loop: start=0, step=1, limit=4
  $region2: #{lnsnet_forward.4} parent=0 // loop_pre_header
    _
  $region3: #{lnsnet_forward.4} parent=0 // loop_header
    %s12 = sphi 0, %s16
    %p13 = scmp.ge.s32.totalorder %s12, 4
    %s22 = sphi 0, %s24
    %s25 = sphi 0, %s22
    %s26 = sphi 0, %s25
    %s42 = sphi 0, %s26
    %s48 = sphi 0, %s50
    %s51 = sphi 0, %s48
    %s52 = sphi 0, %s51
    %s68 = sphi 0, %s52
    %s74 = sphi 0, %s76
    %s77 = sphi 0, %s74
    %s78 = sphi 0, %s77
    %s94 = sphi 0, %s78
    %s100 = sphi 0, %s102
    %s103 = sphi 0, %s100
    %s104 = sphi 0, %s103
    %s120 = sphi 0, %s104
    %s124 = sphi 0, %s124
    %s126 = sphi 0, %s124
    %s127 = sphi 0, %s126
    %s141 = sphi 0, %s127
    %s145 = sphi 0, %s145
    %s147 = sphi 0, %s145
    %s148 = sphi 0, %s147
    %s162 = sphi 0, %s148
    %s168 = sphi 0, %s170
    %s171 = sphi 0, %s168
    %s172 = sphi 0, %s171
    %s188 = sphi 0, %s172
  $region4: #{lnsnet_forward.4} parent=0 // loop_header_branch
    %15 = sbr.rel (%p13) target = $region8
  $region5: #{lnsnet_forward.4} parent=0 // loop_body
    %s17 = ssub.s32 %s12, 1
    %s18 = ssub.s32 %s12, 2
    %s19 = sadd.s32 %s12, 1
    %s20 = ssub.s32 %s12, %s19
    %p21 = scmp.eq.s32.totalorder %s20, 0
    %s23 = sadd.s32 %s22, 1
    %s24 = scalar_select %p21, %s22, %s23
    %p27 = pneg %p21
    %p28 = scmp.eq.s32.totalorder %s12, 1
    %p29 = por %p27, %p28
    %p30 = scmp.ne.s32.totalorder %s22, %s25
    %p31 = scmp.eq.s32.totalorder %s12, 0
    %p32 = por %p30, %p31
    %p33 = scmp.ne.s32.totalorder %s22, %s25
    %p34 = scmp.eq.s32.totalorder %s17, 1
    %p35 = por %p33, %p34
    %p36 = scmp.ne.s32.totalorder %s25, %s26
    %p37 = scmp.eq.s32.totalorder %s17, 0
    %p38 = por %p36, %p37
    %p39 = scmp.ne.s32.totalorder %s25, %s26
    %p40 = scmp.eq.s32.totalorder %s18, 1
    %p41 = por %p39, %p40
    %p43 = scmp.ne.s32.totalorder %s26, %s42
    %p44 = scmp.eq.s32.totalorder %s18, 0
    %p45 = por %p43, %p44
    %s46 = ssub.s32 %s12, %s19
    %p47 = scmp.eq.s32.totalorder %s46, 0
    %s49 = sadd.s32 %s48, 1
    %s50 = scalar_select %p47, %s48, %s49
    %p53 = pneg %p47
    %p54 = scmp.eq.s32.totalorder %s12, 1
    %p55 = por %p53, %p54
    %p56 = scmp.ne.s32.totalorder %s48, %s51
    %p57 = scmp.eq.s32.totalorder %s12, 0
    %p58 = por %p56, %p57
    %p59 = scmp.ne.s32.totalorder %s48, %s51
    %p60 = scmp.eq.s32.totalorder %s17, 1
    %p61 = por %p59, %p60
    %p62 = scmp.ne.s32.totalorder %s51, %s52
    %p63 = scmp.eq.s32.totalorder %s17, 0
    %p64 = por %p62, %p63
    %p65 = scmp.ne.s32.totalorder %s51, %s52
    %p66 = scmp.eq.s32.totalorder %s18, 1
    %p67 = por %p65, %p66
    %p69 = scmp.ne.s32.totalorder %s52, %s68
    %p70 = scmp.eq.s32.totalorder %s18, 0
    %p71 = por %p69, %p70
    %s72 = ssub.s32 %s12, %s19
    %p73 = scmp.eq.s32.totalorder %s72, 0
    %s75 = sadd.s32 %s74, 1
    %s76 = scalar_select %p73, %s74, %s75
    %p79 = pneg %p73
    %p80 = scmp.eq.s32.totalorder %s12, 1
    %p81 = por %p79, %p80
    %p82 = scmp.ne.s32.totalorder %s74, %s77
    %p83 = scmp.eq.s32.totalorder %s12, 0
    %p84 = por %p82, %p83
    %p85 = scmp.ne.s32.totalorder %s74, %s77
    %p86 = scmp.eq.s32.totalorder %s17, 1
    %p87 = por %p85, %p86
    %p88 = scmp.ne.s32.totalorder %s77, %s78
    %p89 = scmp.eq.s32.totalorder %s17, 0
    %p90 = por %p88, %p89
    %p91 = scmp.ne.s32.totalorder %s77, %s78
    %p92 = scmp.eq.s32.totalorder %s18, 1
    %p93 = por %p91, %p92
    %p95 = scmp.ne.s32.totalorder %s78, %s94
    %p96 = scmp.eq.s32.totalorder %s18, 0
    %p97 = por %p95, %p96
    %s98 = ssub.s32 %s12, %s19
    %p99 = scmp.eq.s32.totalorder %s98, 0
    %s101 = sadd.s32 %s100, 1
    %s102 = scalar_select %p99, %s100, %s101
    %p105 = pneg %p99
    %p106 = scmp.eq.s32.totalorder %s12, 1
    %p107 = por %p105, %p106
    %p108 = scmp.ne.s32.totalorder %s100, %s103
    %p109 = scmp.eq.s32.totalorder %s12, 0
    %p110 = por %p108, %p109
    %p111 = scmp.ne.s32.totalorder %s100, %s103
    %p112 = scmp.eq.s32.totalorder %s17, 1
    %p113 = por %p111, %p112
    %p114 = scmp.ne.s32.totalorder %s103, %s104
    %p115 = scmp.eq.s32.totalorder %s17, 0
    %p116 = por %p114, %p115
    %p117 = scmp.ne.s32.totalorder %s103, %s104
    %p118 = scmp.eq.s32.totalorder %s18, 1
    %p119 = por %p117, %p118
    %p121 = scmp.ne.s32.totalorder %s104, %s120
    %p122 = scmp.eq.s32.totalorder %s18, 0
    %p123 = por %p121, %p122
    %s125 = sadd.s32 %s124, 1
    %p128 = scmp.eq.s32.totalorder %s12, 1
    %p129 = scmp.ne.s32.totalorder %s124, %s126
    %p130 = scmp.eq.s32.totalorder %s12, 0
    %p131 = por %p129, %p130
    %p132 = scmp.ne.s32.totalorder %s124, %s126
    %p133 = scmp.eq.s32.totalorder %s17, 1
    %p134 = por %p132, %p133
    %p135 = scmp.ne.s32.totalorder %s126, %s127
    %p136 = scmp.eq.s32.totalorder %s17, 0
    %p137 = por %p135, %p136
    %p138 = scmp.ne.s32.totalorder %s126, %s127
    %p139 = scmp.eq.s32.totalorder %s18, 1
    %p140 = por %p138, %p139
    %p142 = scmp.ne.s32.totalorder %s127, %s141
    %p143 = scmp.eq.s32.totalorder %s18, 0
    %p144 = por %p142, %p143
    %s146 = sadd.s32 %s145, 1
    %p149 = scmp.eq.s32.totalorder %s12, 1
    %p150 = scmp.ne.s32.totalorder %s145, %s147
    %p151 = scmp.eq.s32.totalorder %s12, 0
    %p152 = por %p150, %p151
    %p153 = scmp.ne.s32.totalorder %s145, %s147
    %p154 = scmp.eq.s32.totalorder %s17, 1
    %p155 = por %p153, %p154
    %p156 = scmp.ne.s32.totalorder %s147, %s148
    %p157 = scmp.eq.s32.totalorder %s17, 0
    %p158 = por %p156, %p157
    %p159 = scmp.ne.s32.totalorder %s147, %s148
    %p160 = scmp.eq.s32.totalorder %s18, 1
    %p161 = por %p159, %p160
    %p163 = scmp.ne.s32.totalorder %s148, %s162
    %p164 = scmp.eq.s32.totalorder %s18, 0
    %p165 = por %p163, %p164
    %s166 = ssub.s32 %s12, %s19
    %p167 = scmp.eq.s32.totalorder %s166, 0
    %s169 = sadd.s32 %s168, 1
    %s170 = scalar_select %p167, %s168, %s169
    %p173 = pneg %p167
    %p174 = scmp.eq.s32.totalorder %s12, 1
    %p175 = por %p173, %p174
    %p176 = scmp.ne.s32.totalorder %s168, %s171
    %p177 = scmp.eq.s32.totalorder %s12, 0
    %p178 = por %p176, %p177
    %p179 = scmp.ne.s32.totalorder %s168, %s171
    %p180 = scmp.eq.s32.totalorder %s17, 1
    %p181 = por %p179, %p180
    %p182 = scmp.ne.s32.totalorder %s171, %s172
    %p183 = scmp.eq.s32.totalorder %s17, 0
    %p184 = por %p182, %p183
    %p185 = scmp.ne.s32.totalorder %s171, %s172
    %p186 = scmp.eq.s32.totalorder %s18, 1
    %p187 = por %p185, %p186
    %p189 = scmp.ne.s32.totalorder %s172, %s188
    %p190 = scmp.eq.s32.totalorder %s18, 0
    %p191 = por %p189, %p190
    %p192 = scmp.le.s32.totalorder 1, %s12
    %p193 = scmp.lt.s32.totalorder %s12, 3
    %p194 = pnand %p192, %p193
    %p195 = pneg %p194
    // Predicated region
    $region9: #{lnsnet_forward.4} parent=5 // pred_check
      _
    $region10: #{lnsnet_forward.4} parent=5 // pred_check_branch
      %197 = sbr.rel (%p194) target = $region12
    $region11: #{lnsnet_forward.4} parent=5 // pred_region
      %s198 = ssub.s32 %s12, 1
      // Predicated region
      $region13: #{lnsnet_forward.4} parent=11 // pred_check
        %p199 = pneg %p137
      $region14: #{lnsnet_forward.4} parent=11 // pred_check_branch
        %201 = sbr.rel (%p199) target = $region16
      $region15: #{lnsnet_forward.4} parent=11 // pred_region
        _
      $region16: #{lnsnet_forward.4} parent=11 // pred_fallthru
        _
      // Predicated region
      $region17: #{lnsnet_forward.4} parent=11 // pred_check
        %p202 = pneg %p158
      $region18: #{lnsnet_forward.4} parent=11 // pred_check_branch
        %204 = sbr.rel (%p202) target = $region20
      $region19: #{lnsnet_forward.4} parent=11 // pred_region
        _
      $region20: #{lnsnet_forward.4} parent=11 // pred_fallthru
        _
    $region12: #{lnsnet_forward.4} parent=5 // pred_fallthru
      _
    %p205 = scmp.lt.s32.totalorder %s12, 2
    // Predicated region
    $region21: #{lnsnet_forward.4} parent=5 // pred_check
      %p206 = pneg %p205
    $region22: #{lnsnet_forward.4} parent=5 // pred_check_branch
      %208 = sbr.rel (%p206) target = $region24
    $region23: #{lnsnet_forward.4} parent=5 // pred_region
      // Predicated region
      $region25: #{lnsnet_forward.4} parent=23 // pred_check
        %p209 = pneg %p32
      $region26: #{lnsnet_forward.4} parent=23 // pred_check_branch
        %211 = sbr.rel (%p209) target = $region28
      $region27: #{lnsnet_forward.4} parent=23 // pred_region
        %p212 = scmp.lt.s32.totalorder %s12, 1
        %s213 = scalar_select %p212, %s12, 1
        %s214 = smul.addr %s213, 54
        %s215 = smul.addr %s214, 4
        %s216 = scalar_lea.vmem %s0, %s215
      $region28: #{lnsnet_forward.4} parent=23 // pred_fallthru
        _
      // Predicated region
      $region29: #{lnsnet_forward.4} parent=23 // pred_check
        %p217 = pneg %p58
      $region30: #{lnsnet_forward.4} parent=23 // pred_check_branch
        %219 = sbr.rel (%p217) target = $region32
      $region31: #{lnsnet_forward.4} parent=23 // pred_region
        %p220 = scmp.lt.s32.totalorder %s12, 1
        %s221 = scalar_select %p220, %s12, 1
        %s222 = smul.addr %s221, 54
        %s223 = smul.addr %s222, 4
        %s224 = scalar_lea.vmem %s1, %s223
      $region32: #{lnsnet_forward.4} parent=23 // pred_fallthru
        _
      // Predicated region
      $region33: #{lnsnet_forward.4} parent=23 // pred_check
        %p225 = pneg %p84
      $region34: #{lnsnet_forward.4} parent=23 // pred_check_branch
        %227 = sbr.rel (%p225) target = $region36
      $region35: #{lnsnet_forward.4} parent=23 // pred_region
        %p228 = scmp.lt.s32.totalorder %s12, 1
        %s229 = scalar_select %p228, %s12, 1
        %s230 = smul.addr %s229, 54
        %s231 = smul.addr %s230, 4
        %s232 = scalar_lea.vmem %s2, %s231
      $region36: #{lnsnet_forward.4} parent=23 // pred_fallthru
        _
      // Predicated region
      $region37: #{lnsnet_forward.4} parent=23 // pred_check
        %p233 = pneg %p110
      $region38: #{lnsnet_forward.4} parent=23 // pred_check_branch
        %235 = sbr.rel (%p233) target = $region40
      $region39: #{lnsnet_forward.4} parent=23 // pred_region
        %p236 = scmp.lt.s32.totalorder %s12, 1
        %s237 = scalar_select %p236, %s12, 1
        %s238 = smul.addr %s237, 54
        %s239 = smul.addr %s238, 4
        %s240 = scalar_lea.vmem %s3, %s239
      $region40: #{lnsnet_forward.4} parent=23 // pred_fallthru
        _
    $region24: #{lnsnet_forward.4} parent=5 // pred_fallthru
      _
    %p241 = scmp.le.s32.totalorder 1, %s12
    %p242 = scmp.lt.s32.totalorder %s12, 3
    %p243 = pnand %p241, %p242
    %p244 = pneg %p243
    // Predicated region
    $region41: #{lnsnet_forward.4} parent=5 // pred_check
      _
    $region42: #{lnsnet_forward.4} parent=5 // pred_check_branch
      %246 = sbr.rel (%p243) target = $region44
    $region43: #{lnsnet_forward.4} parent=5 // pred_region
      %s247 = ssub.s32 %s12, 1
      %p248 = scmp.lt.s32.totalorder %s17, 1
      %s249 = scalar_select %p248, %s17, 1
      %s250 = smul.addr %s249, 54
      %s251 = smul.addr %s250, 4
      %s252 = scalar_lea.vmem %s0, %s251
      %p253 = pneg %p38
      %p254 = pneg %p35
      %p255 = scmp.lt.s32.totalorder %s17, 1
      %s256 = scalar_select %p255, %s17, 1
      %s257 = smul.addr %s256, 54
      %s258 = smul.addr %s257, 4
      %s259 = scalar_lea.vmem %s1, %s258
      %p260 = pneg %p64
      %p261 = pneg %p61
      %p262 = scmp.lt.s32.totalorder %s17, 1
      %s263 = scalar_select %p262, %s17, 1
      %s264 = smul.addr %s263, 54
      %s265 = smul.addr %s264, 4
      %s266 = scalar_lea.vmem %s2, %s265
      %p267 = pneg %p90
      %p268 = pneg %p87
      %p269 = scmp.lt.s32.totalorder %s17, 1
      %s270 = scalar_select %p269, %s17, 1
      %s271 = smul.addr %s270, 54
      %s272 = smul.addr %s271, 4
      %s273 = scalar_lea.vmem %s3, %s272
      %p274 = pneg %p116
      %p275 = pneg %p113
      %p276 = pneg %p137
      %p277 = pneg %p134
      %p278 = pneg %p158
      %p279 = pneg %p155
      %p280 = pneg %p184
      %p281 = pneg %p181
      %p282 = scmp.lt.s32.totalorder %s17, 1
      %s283 = scalar_select %p282, %s17, 1
      %s284 = smul.addr %s283, 18
      %s285 = smul.addr %s284, 4
      %s286 = scalar_lea.vmem %s6, %s285
      %p287 = scmp.lt.s32.totalorder %s17, 1
      %s288 = scalar_select %p287, %s17, 1
      %s289 = smul.addr %s288, 54
      %s290 = smul.addr %s289, 4
      %s291 = scalar_lea.vmem %s0, %s290
      %p292 = scmp.lt.s32.totalorder %s17, 1
      %s293 = scalar_select %p292, %s17, 1
      %s294 = smul.addr %s293, 54
      %s295 = smul.addr %s294, 4
      %s296 = scalar_lea.vmem %s1, %s295
      %p297 = scmp.lt.s32.totalorder %s17, 1
      %s298 = scalar_select %p297, %s17, 1
      %s299 = smul.addr %s298, 54
      %s300 = smul.addr %s299, 4
      %s301 = scalar_lea.vmem %s2, %s300
      %p302 = scmp.lt.s32.totalorder %s17, 1
      %s303 = scalar_select %p302, %s17, 1
      %s304 = smul.addr %s303, 54
      %s305 = smul.addr %s304, 4
      %s306 = scalar_lea.vmem %s3, %s305
      %p307 = scmp.lt.s32.totalorder %s17, 1
      %s308 = scalar_select %p307, %s17, 1
      %s309 = smul.addr %s308, 18
      %s310 = smul.addr %s309, 4
      %s311 = scalar_lea.vmem %s6, %s310
      %v313 = vld [vmem:[%s4] sm:$0xf]
      %v314 = vld [vmem:[%s4 + $0x4] sm:$0xf]
      %v315 = vld [vmem:[%s4 + $0x8] sm:$0xf]
      %v316 = vld [vmem:[%s4 + $0xc] sm:$0xf]
      %v317 = vld [vmem:[%s4 + $0x10] sm:$0xf]
      %v318 = vld [vmem:[%s4 + $0x14] sm:$0xf]
      %v319 = vld [vmem:[%s4 + $0x18] sm:$0xf]
      %v320 = vld [vmem:[%s4 + $0x1c] sm:$0xf]
      %v321 = vld [vmem:[%s4 + $0x20] sm:$0xf]
      %v322 = vld [vmem:[%s4 + $0x24] sm:$0xf]
      %v323 = vld [vmem:[%s4 + $0x28] sm:$0xf]
      %v324 = vld [vmem:[%s4 + $0x2c] sm:$0xf]
      %v325 = vld [vmem:[%s4 + $0x30] sm:$0xf]
      %v326 = vld [vmem:[%s4 + $0x34] sm:$0xf]
      %v327 = vld [vmem:[%s4 + $0x38] sm:$0xf]
      %v328 = vld [vmem:[%s4 + $0x3c] sm:$0xf]
      %v329 = vld [vmem:[%s4 + $0x40] sm:$0xf]
      %v330 = vld [vmem:[%s4 + $0x44] sm:$0xf]
      %v331 = vld [vmem:[%s4 + $0x48] sm:$0xf]
      %v332 = vld [vmem:[%s4 + $0x4c] sm:$0xf]
      %v333 = vld [vmem:[%s4 + $0x50] sm:$0xf]
      %v334 = vld [vmem:[%s4 + $0x54] sm:$0xf]
      %v335 = vld [vmem:[%s4 + $0x58] sm:$0xf]
      %v336 = vld [vmem:[%s4 + $0x5c] sm:$0xf]
      %v337 = vld [vmem:[%s4 + $0x60] sm:$0xf]
      %v338 = vld [vmem:[%s4 + $0x64] sm:$0xf]
      %v339 = vld [vmem:[%s4 + $0x68] sm:$0xf]
      %v340 = vld [vmem:[%s4 + $0x6c] sm:$0xf]
      %v341 = vld [vmem:[%s4 + $0x70] sm:$0xf]
      %v342 = vld [vmem:[%s4 + $0x74] sm:$0xf]
      %v343 = vld [vmem:[%s4 + $0x78] sm:$0xf]
      %v344 = vld [vmem:[%s4 + $0x7c] sm:$0xf]
      %v345 = vld [vmem:[%s4 + $0x80] sm:$0xf]
      %v346 = vld [vmem:[%s4 + $0x84] sm:$0xf]
      %v347 = vld [vmem:[%s4 + $0x88] sm:$0xf]
      %v348 = vld [vmem:[%s4 + $0x8c] sm:$0xf]
      %v349 = vld [vmem:[%s5] sm:$0x1]
      %v350 = vld [vmem:[%s291] sm:$0xff]
      %v351 = vld [vmem:[%s291 + $0x8] sm:$0xf]
      %v352 = vld [vmem:[%s291 + $0xc] sm:$0xff]
      %v353 = vld [vmem:[%s291 + $0x14] sm:$0xf]
      %v354 = vld [vmem:[%s291 + $0x18] sm:$0xff]
      %v355 = vld [vmem:[%s291 + $0x20] sm:$0xf]
      %v356 = vld [vmem:[%s291 + $0x24] sm:$0xff]
      %v357 = vld [vmem:[%s291 + $0x2c] sm:$0xf]
      %v358 = vld [vmem:[%s291 + $0x30] sm:$0xff]
      %v359 = vld [vmem:[%s291 + $0x38] sm:$0xf]
      %v360 = vld [vmem:[%s291 + $0x3c] sm:$0xff]
      %v361 = vld [vmem:[%s291 + $0x44] sm:$0xf]
      %v362 = vld [vmem:[%s291 + $0x48] sm:$0xff]
      %v363 = vld [vmem:[%s291 + $0x50] sm:$0xf]
      %v364 = vld [vmem:[%s291 + $0x54] sm:$0xff]
      %v365 = vld [vmem:[%s291 + $0x5c] sm:$0xf]
      %v366 = vld [vmem:[%s291 + $0x60] sm:$0xff]
      %v367 = vld [vmem:[%s291 + $0x68] sm:$0xf]
      %v368 = vld [vmem:[%s291 + $0x6c] sm:$0xff]
      %v369 = vld [vmem:[%s291 + $0x74] sm:$0xf]
      %v370 = vld [vmem:[%s291 + $0x78] sm:$0xff]
      %v371 = vld [vmem:[%s291 + $0x80] sm:$0xf]
      %v372 = vld [vmem:[%s291 + $0x84] sm:$0xff]
      %v373 = vld [vmem:[%s291 + $0x8c] sm:$0xf]
      %v374 = vld [vmem:[%s291 + $0x90] sm:$0xff]
      %v375 = vld [vmem:[%s291 + $0x98] sm:$0xf]
      %v376 = vld [vmem:[%s291 + $0x9c] sm:$0xff]
      %v377 = vld [vmem:[%s291 + $0xa4] sm:$0xf]
      %v378 = vld [vmem:[%s291 + $0xa8] sm:$0xff]
      %v379 = vld [vmem:[%s291 + $0xb0] sm:$0xf]
      %v380 = vld [vmem:[%s291 + $0xb4] sm:$0xff]
      %v381 = vld [vmem:[%s291 + $0xbc] sm:$0xf]
      %v382 = vld [vmem:[%s291 + $0xc0] sm:$0xff]
      %v383 = vld [vmem:[%s291 + $0xc8] sm:$0xf]
      %v384 = vld [vmem:[%s291 + $0xcc] sm:$0xff]
      %v385 = vld [vmem:[%s291 + $0xd4] sm:$0xf]
      %v422 = vunpack.c.l.b16 %v350
      %v423 = vunpack.c.h.b16 %v350
      %v424 = vunpack.c.l.b16 %v351
      %v425 = vunpack.c.l.b16 %v352
      %v426 = vunpack.c.h.b16 %v352
      %v427 = vunpack.c.l.b16 %v353
      %v428 = vunpack.c.l.b16 %v354
      %v429 = vunpack.c.h.b16 %v354
      %v430 = vunpack.c.l.b16 %v355
      %v431 = vunpack.c.l.b16 %v356
      %v432 = vunpack.c.h.b16 %v356
      %v433 = vunpack.c.l.b16 %v357
      %v434 = vunpack.c.l.b16 %v358
      %v435 = vunpack.c.h.b16 %v358
      %v436 = vunpack.c.l.b16 %v359
      %v437 = vunpack.c.l.b16 %v360
      %v438 = vunpack.c.h.b16 %v360
      %v439 = vunpack.c.l.b16 %v361
      %v440 = vunpack.c.l.b16 %v362
      %v441 = vunpack.c.h.b16 %v362
      %v442 = vunpack.c.l.b16 %v363
      %v443 = vunpack.c.l.b16 %v364
      %v444 = vunpack.c.h.b16 %v364
      %v445 = vunpack.c.l.b16 %v365
      %v446 = vunpack.c.l.b16 %v366
      %v447 = vunpack.c.h.b16 %v366
      %v448 = vunpack.c.l.b16 %v367
      %v449 = vunpack.c.l.b16 %v368
      %v450 = vunpack.c.h.b16 %v368
      %v451 = vunpack.c.l.b16 %v369
      %v452 = vunpack.c.l.b16 %v370
      %v453 = vunpack.c.h.b16 %v370
      %v454 = vunpack.c.l.b16 %v371
      %v455 = vunpack.c.l.b16 %v372
      %v456 = vunpack.c.h.b16 %v372
      %v457 = vunpack.c.l.b16 %v373
      %v458 = vunpack.c.l.b16 %v374
      %v459 = vunpack.c.h.b16 %v374
      %v460 = vunpack.c.l.b16 %v375
      %v461 = vunpack.c.l.b16 %v376
      %v462 = vunpack.c.h.b16 %v376
      %v463 = vunpack.c.l.b16 %v377
      %v464 = vunpack.c.l.b16 %v378
      %v465 = vunpack.c.h.b16 %v378
      %v466 = vunpack.c.l.b16 %v379
      %v467 = vunpack.c.l.b16 %v380
      %v468 = vunpack.c.h.b16 %v380
      %v469 = vunpack.c.l.b16 %v381
      %v470 = vunpack.c.l.b16 %v382
      %v471 = vunpack.c.h.b16 %v382
      %v472 = vunpack.c.l.b16 %v383
      %v473 = vunpack.c.l.b16 %v384
      %v474 = vunpack.c.h.b16 %v384
      %v475 = vunpack.c.l.b16 %v385
      %v476 = vpack.c.b16 %v425, %v422
      %v477 = vpack.c.b16 %v426, %v423
      %v478 = vpack.c.b16 %v427, %v424
      %v479 = vpack.c.b16 %v431, %v428
      %v480 = vpack.c.b16 %v432, %v429
      %v481 = vpack.c.b16 %v433, %v430
      %v482 = vpack.c.b16 %v437, %v434
      %v483 = vpack.c.b16 %v438, %v435
      %v484 = vpack.c.b16 %v439, %v436
      %v485 = vpack.c.b16 %v443, %v440
      %v486 = vpack.c.b16 %v444, %v441
      %v487 = vpack.c.b16 %v445, %v442
      %v488 = vpack.c.b16 %v449, %v446
      %v489 = vpack.c.b16 %v450, %v447
      %v490 = vpack.c.b16 %v451, %v448
      %v491 = vpack.c.b16 %v455, %v452
      %v492 = vpack.c.b16 %v456, %v453
      %v493 = vpack.c.b16 %v457, %v454
      %v494 = vpack.c.b16 %v461, %v458
      %v495 = vpack.c.b16 %v462, %v459
      %v496 = vpack.c.b16 %v463, %v460
      %v497 = vpack.c.b16 %v467, %v464
      %v498 = vpack.c.b16 %v468, %v465
      %v499 = vpack.c.b16 %v469, %v466
      %v500 = vpack.c.b16 %v473, %v470
      %v501 = vpack.c.b16 %v474, %v471
      %v502 = vpack.c.b16 %v475, %v472
      %v557 = vunpack.c.l.b16 %v313
      %v558 = vunpack.c.l.b16 %v314
      %v559 = vunpack.c.l.b16 %v315
      %v560 = vunpack.c.l.b16 %v316
      %v561 = vunpack.c.l.b16 %v317
      %v562 = vunpack.c.l.b16 %v318
      %v563 = vunpack.c.l.b16 %v319
      %v564 = vunpack.c.l.b16 %v320
      %v565 = vunpack.c.l.b16 %v321
      %v566 = vunpack.c.l.b16 %v322
      %v567 = vunpack.c.l.b16 %v323
      %v568 = vunpack.c.l.b16 %v324
      %v569 = vunpack.c.l.b16 %v325
      %v570 = vunpack.c.l.b16 %v326
      %v571 = vunpack.c.l.b16 %v327
      %v572 = vunpack.c.l.b16 %v328
      %v573 = vunpack.c.l.b16 %v329
      %v574 = vunpack.c.l.b16 %v330
      %v575 = vunpack.c.l.b16 %v331
      %v576 = vunpack.c.l.b16 %v332
      %v577 = vunpack.c.l.b16 %v333
      %v578 = vunpack.c.l.b16 %v334
      %v579 = vunpack.c.l.b16 %v335
      %v580 = vunpack.c.l.b16 %v336
      %v581 = vunpack.c.l.b16 %v337
      %v582 = vunpack.c.l.b16 %v338
      %v583 = vunpack.c.l.b16 %v339
      %v584 = vunpack.c.l.b16 %v340
      %v585 = vunpack.c.l.b16 %v341
      %v586 = vunpack.c.l.b16 %v342
      %v587 = vunpack.c.l.b16 %v343
      %v588 = vunpack.c.l.b16 %v344
      %v589 = vunpack.c.l.b16 %v345
      %v590 = vunpack.c.l.b16 %v346
      %v591 = vunpack.c.l.b16 %v347
      %v592 = vunpack.c.l.b16 %v348
      %v593 = vpack.c.b16 %v558, %v557
      %v594 = vpack.c.b16 %v560, %v559
      %v595 = vpack.c.b16 %v562, %v561
      %v596 = vpack.c.b16 %v564, %v563
      %v597 = vpack.c.b16 %v566, %v565
      %v598 = vpack.c.b16 %v568, %v567
      %v599 = vpack.c.b16 %v570, %v569
      %v600 = vpack.c.b16 %v572, %v571
      %v601 = vpack.c.b16 %v574, %v573
      %v602 = vpack.c.b16 %v576, %v575
      %v603 = vpack.c.b16 %v578, %v577
      %v604 = vpack.c.b16 %v580, %v579
      %v605 = vpack.c.b16 %v582, %v581
      %v606 = vpack.c.b16 %v584, %v583
      %v607 = vpack.c.b16 %v586, %v585
      %v608 = vpack.c.b16 %v588, %v587
      %v609 = vpack.c.b16 %v590, %v589
      %v610 = vpack.c.b16 %v592, %v591
      %vm629 = vcmask 261120
      %v631 = vsel %vm629, %v478, 0
      %v634 = vsel %vm629, %v481, 0
      %v637 = vsel %vm629, %v484, 0
      %v640 = vsel %vm629, %v487, 0
      %v643 = vsel %vm629, %v490, 0
      %v646 = vsel %vm629, %v493, 0
      %v649 = vsel %vm629, %v496, 0
      %v652 = vsel %vm629, %v499, 0
      %v655 = vsel %vm629, %v502, 0
      %657 = vmatprep.subr.bf16.mxu0 0
      %658 = vmatpush1.bf16.msra.mxu0 %v593
      %659 = vmatprep.subr.bf16.mxu0 0
      %660 = vmatpush1.bf16.msra.mxu0 %v594
      %661 = vmatprep.subr.bf16.mxu0 0
      %662 = vmatpush1.bf16.msra.mxu0 %v595
      %663 = vmatprep.subr.bf16.mxu0 0
      %664 = vmatpush1.bf16.msra.mxu0 %v596
      %665 = vmatprep.subr.bf16.mxu0 0
      %666 = vmatpush1.bf16.msra.mxu0 %v597
      %667 = vmatprep.subr.bf16.mxu0 0
      %668 = vmatpush1.bf16.msra.mxu0 %v598
      %669 = vmatprep.subr.bf16.mxu0 0
      %670 = vmatpush1.bf16.msra.mxu0 %v599
      %671 = vmatprep.subr.bf16.mxu0 0
      %672 = vmatpush1.bf16.msra.mxu0 %v600
      %673 = vmatprep.subr.bf16.mxu0 0
      %674 = vmatpush1.bf16.msra.mxu0 %v601
      %675 = vmatprep.subr.bf16.mxu0 0
      %676 = vmatpush1.bf16.msra.mxu0 %v602
      %677 = vmatprep.subr.bf16.mxu0 0
      %678 = vmatpush1.bf16.msra.mxu0 %v603
      %679 = vmatprep.subr.bf16.mxu0 0
      %680 = vmatpush1.bf16.msra.mxu0 %v604
      %681 = vmatprep.subr.bf16.mxu0 0
      %682 = vmatpush1.bf16.msra.mxu0 %v605
      %683 = vmatprep.subr.bf16.mxu0 0
      %684 = vmatpush1.bf16.msra.mxu0 %v606
      %685 = vmatprep.subr.bf16.mxu0 0
      %686 = vmatpush1.bf16.msra.mxu0 %v607
      %687 = vmatprep.subr.bf16.mxu0 0
      %688 = vmatpush1.bf16.msra.mxu0 %v608
      %689 = vmatprep.mubr.bf16.mxu0 %v477
      %690 = vmatmul.mubr.bf16.gmra.mrb[0].mxu0 %v476
      %v691 = vpop.f32.mrb[0].mxu0
      %v692 = vadd.f32 0.0, %v691
      %v693 = vpop.f32.mrb[0].mxu0
      %v694 = vpop.f32.mrb[0].mxu0
      %v695 = vadd.f32 0.0, %v694
      %v696 = vpop.f32.mrb[0].mxu0
      %697 = vmatprep.mubr.bf16.mxu0 %v480
      %698 = vmatmul.mubr.bf16.gmra.mrb[0].mxu0 %v479
      %v699 = vpop.f32.mrb[0].mxu0
      %v700 = vadd.f32 0.0, %v699
      %v701 = vpop.f32.mrb[0].mxu0
      %v702 = vpop.f32.mrb[0].mxu0
      %v703 = vadd.f32 0.0, %v702
      %v704 = vpop.f32.mrb[0].mxu0
      %705 = vmatprep.mubr.bf16.mxu0 %v483
      %706 = vmatmul.mubr.bf16.gmra.mrb[0].mxu0 %v482
      %v707 = vpop.f32.mrb[0].mxu0
      %v708 = vadd.f32 0.0, %v707
      %v709 = vpop.f32.mrb[0].mxu0
      %v710 = vpop.f32.mrb[0].mxu0
      %v711 = vadd.f32 0.0, %v710
      %v712 = vpop.f32.mrb[0].mxu0
      %713 = vmatprep.mubr.bf16.mxu0 %v486
      %714 = vmatmul.mubr.bf16.gmra.mrb[0].mxu0 %v485
      %v715 = vpop.f32.mrb[0].mxu0
      %v716 = vadd.f32 0.0, %v715
      %v717 = vpop.f32.mrb[0].mxu0
      %v718 = vpop.f32.mrb[0].mxu0
      %v719 = vadd.f32 0.0, %v718
      %v720 = vpop.f32.mrb[0].mxu0
      %721 = vmatprep.mubr.bf16.mxu0 %v489
      %722 = vmatmul.mubr.bf16.gmra.mrb[0].mxu0 %v488
      %v723 = vpop.f32.mrb[0].mxu0
      %v724 = vadd.f32 0.0, %v723
      %v725 = vpop.f32.mrb[0].mxu0
      %v726 = vpop.f32.mrb[0].mxu0
      %v727 = vadd.f32 0.0, %v726
      %v728 = vpop.f32.mrb[0].mxu0
      %729 = vmatprep.mubr.bf16.mxu0 %v492
      %730 = vmatmul.mubr.bf16.gmra.mrb[0].mxu0 %v491
      %v731 = vpop.f32.mrb[0].mxu0
      %v732 = vadd.f32 0.0, %v731
      %v733 = vpop.f32.mrb[0].mxu0
      %v734 = vpop.f32.mrb[0].mxu0
      %v735 = vadd.f32 0.0, %v734
      %v736 = vpop.f32.mrb[0].mxu0
      %737 = vmatprep.mubr.bf16.mxu0 %v495
      %738 = vmatmul.mubr.bf16.gmra.mrb[0].mxu0 %v494
      %v739 = vpop.f32.mrb[0].mxu0
      %v740 = vadd.f32 0.0, %v739
      %v741 = vpop.f32.mrb[0].mxu0
      %v742 = vpop.f32.mrb[0].mxu0
      %v743 = vadd.f32 0.0, %v742
      %v744 = vpop.f32.mrb[0].mxu0
      %745 = vmatprep.mubr.bf16.mxu0 %v498
      %746 = vmatmul.mubr.bf16.gmra.mrb[0].mxu0 %v497
      %v747 = vpop.f32.mrb[0].mxu0
      %v748 = vadd.f32 0.0, %v747
      %v749 = vpop.f32.mrb[0].mxu0
      %v750 = vpop.f32.mrb[0].mxu0
      %v751 = vadd.f32 0.0, %v750
      %v752 = vpop.f32.mrb[0].mxu0
      %753 = vmatprep.mubr.bf16.mxu0 %v501
      %754 = vmatmul.mubr.bf16.gmra.mrb[0].mxu0 %v500
      %v755 = vpop.f32.mrb[0].mxu0
      %v756 = vadd.f32 0.0, %v755
      %v757 = vpop.f32.mrb[0].mxu0
      %v758 = vpop.f32.mrb[0].mxu0
      %v759 = vadd.f32 0.0, %v758
      %v760 = vpop.f32.mrb[0].mxu0
      %761 = vdwg.mxu0
      %762 = vmatprep.subr.bf16.mxu0 0
      %763 = vmatpush1.bf16.msra.mxu0 %v609
      %764 = vmatprep.subr.bf16.mxu0 0
      %765 = vmatpush1.bf16.msra.mxu0 %v610
      %766 = vmatprep.subr.bf16.mxu0 0
      %767 = vmatpush1.bf16.msra.mxu0 0
      %768 = vmatprep.subr.bf16.mxu0 0
      %769 = vmatpush1.bf16.msra.mxu0 0
      %770 = vmatprep.subr.bf16.mxu0 0
      %771 = vmatpush1.bf16.msra.mxu0 0
      %772 = vmatprep.subr.bf16.mxu0 0
      %773 = vmatpush1.bf16.msra.mxu0 0
      %774 = vmatprep.subr.bf16.mxu0 0
      %775 = vmatpush1.bf16.msra.mxu0 0
      %776 = vmatprep.subr.bf16.mxu0 0
      %777 = vmatpush1.bf16.msra.mxu0 0
      %778 = vmatprep.subr.bf16.mxu0 0
      %779 = vmatpush1.bf16.msra.mxu0 0
      %780 = vmatprep.subr.bf16.mxu0 0
      %781 = vmatpush1.bf16.msra.mxu0 0
      %782 = vmatprep.subr.bf16.mxu0 0
      %783 = vmatpush1.bf16.msra.mxu0 0
      %784 = vmatprep.subr.bf16.mxu0 0
      %785 = vmatpush1.bf16.msra.mxu0 0
      %786 = vmatprep.subr.bf16.mxu0 0
      %787 = vmatpush1.bf16.msra.mxu0 0
      %788 = vmatprep.subr.bf16.mxu0 0
      %789 = vmatpush1.bf16.msra.mxu0 0
      %790 = vmatprep.subr.bf16.mxu0 0
      %791 = vmatpush1.bf16.msra.mxu0 0
      %792 = vmatprep.subr.bf16.mxu0 0
      %793 = vmatpush1.bf16.msra.mxu0 0
      %794 = vmatprep.mubr.bf16.mxu0 0
      %795 = vmatmul.mubr.bf16.gmra.mrb[0].mxu0 %v631
      %v796 = vpop.f32.mrb[0].mxu0
      %v797 = vadd.f32 %v692, %v796
      %v798 = vpop.f32.mrb[0].mxu0
      %v799 = vpop.f32.mrb[0].mxu0
      %v800 = vadd.f32 %v695, %v799
      %v801 = vpop.f32.mrb[0].mxu0
      %802 = vmatprep.mubr.bf16.mxu0 0
      %803 = vmatmul.mubr.bf16.gmra.mrb[0].mxu0 %v634
      %v804 = vpop.f32.mrb[0].mxu0
      %v805 = vadd.f32 %v700, %v804
      %v806 = vpop.f32.mrb[0].mxu0
      %v807 = vpop.f32.mrb[0].mxu0
      %v808 = vadd.f32 %v703, %v807
      %v809 = vpop.f32.mrb[0].mxu0
      %810 = vmatprep.mubr.bf16.mxu0 0
      %811 = vmatmul.mubr.bf16.gmra.mrb[0].mxu0 %v637
      %v812 = vpop.f32.mrb[0].mxu0
      %v813 = vadd.f32 %v708, %v812
      %v814 = vpop.f32.mrb[0].mxu0
      %v815 = vpop.f32.mrb[0].mxu0
      %v816 = vadd.f32 %v711, %v815
      %v817 = vpop.f32.mrb[0].mxu0
      %818 = vmatprep.mubr.bf16.mxu0 0
      %819 = vmatmul.mubr.bf16.gmra.mrb[0].mxu0 %v640
      %v820 = vpop.f32.mrb[0].mxu0
      %v821 = vadd.f32 %v716, %v820
      %v822 = vpop.f32.mrb[0].mxu0
      %v823 = vpop.f32.mrb[0].mxu0
      %v824 = vadd.f32 %v719, %v823
      %v825 = vpop.f32.mrb[0].mxu0
      %826 = vmatprep.mubr.bf16.mxu0 0
      %827 = vmatmul.mubr.bf16.gmra.mrb[0].mxu0 %v643
      %v828 = vpop.f32.mrb[0].mxu0
      %v829 = vadd.f32 %v724, %v828
      %v830 = vpop.f32.mrb[0].mxu0
      %v831 = vpop.f32.mrb[0].mxu0
      %v832 = vadd.f32 %v727, %v831
      %v833 = vpop.f32.mrb[0].mxu0
      %834 = vmatprep.mubr.bf16.mxu0 0
      %835 = vmatmul.mubr.bf16.gmra.mrb[0].mxu0 %v646
      %v836 = vpop.f32.mrb[0].mxu0
      %v837 = vadd.f32 %v732, %v836
      %v838 = vpop.f32.mrb[0].mxu0
      %v839 = vpop.f32.mrb[0].mxu0
      %v840 = vadd.f32 %v735, %v839
      %v841 = vpop.f32.mrb[0].mxu0
      %842 = vmatprep.mubr.bf16.mxu0 0
      %843 = vmatmul.mubr.bf16.gmra.mrb[0].mxu0 %v649
      %v844 = vpop.f32.mrb[0].mxu0
      %v845 = vadd.f32 %v740, %v844
      %v846 = vpop.f32.mrb[0].mxu0
      %v847 = vpop.f32.mrb[0].mxu0
      %v848 = vadd.f32 %v743, %v847
      %v849 = vpop.f32.mrb[0].mxu0
      %850 = vmatprep.mubr.bf16.mxu0 0
      %851 = vmatmul.mubr.bf16.gmra.mrb[0].mxu0 %v652
      %v852 = vpop.f32.mrb[0].mxu0
      %v853 = vadd.f32 %v748, %v852
      %v854 = vpop.f32.mrb[0].mxu0
      %v855 = vpop.f32.mrb[0].mxu0
      %v856 = vadd.f32 %v751, %v855
      %v857 = vpop.f32.mrb[0].mxu0
      %858 = vmatprep.mubr.bf16.mxu0 0
      %859 = vmatmul.mubr.bf16.gmra.mrb[0].mxu0 %v655
      %v860 = vpop.f32.mrb[0].mxu0
      %v861 = vadd.f32 %v756, %v860
      %v862 = vpop.f32.mrb[0].mxu0
      %v863 = vpop.f32.mrb[0].mxu0
      %v864 = vadd.f32 %v759, %v863
      %v865 = vpop.f32.mrb[0].mxu0
      %866 = vdwg.mxu0
      %v867 = vld [vmem:[%s296] sm:$0xff]
      %v868 = vld [vmem:[%s296 + $0x8] sm:$0xf]
      %v869 = vld [vmem:[%s296 + $0xc] sm:$0xff]
      %v870 = vld [vmem:[%s296 + $0x14] sm:$0xf]
      %v871 = vld [vmem:[%s296 + $0x18] sm:$0xff]
      %v872 = vld [vmem:[%s296 + $0x20] sm:$0xf]
      %v873 = vld [vmem:[%s296 + $0x24] sm:$0xff]
      %v874 = vld [vmem:[%s296 + $0x2c] sm:$0xf]
      %v875 = vld [vmem:[%s296 + $0x30] sm:$0xff]
      %v876 = vld [vmem:[%s296 + $0x38] sm:$0xf]
      %v877 = vld [vmem:[%s296 + $0x3c] sm:$0xff]
      %v878 = vld [vmem:[%s296 + $0x44] sm:$0xf]
      %v879 = vld [vmem:[%s296 + $0x48] sm:$0xff]
      %v880 = vld [vmem:[%s296 + $0x50] sm:$0xf]
      %v881 = vld [vmem:[%s296 + $0x54] sm:$0xff]
      %v882 = vld [vmem:[%s296 + $0x5c] sm:$0xf]
      %v883 = vld [vmem:[%s296 + $0x60] sm:$0xff]
      %v884 = vld [vmem:[%s296 + $0x68] sm:$0xf]
      %v885 = vld [vmem:[%s296 + $0x6c] sm:$0xff]
      %v886 = vld [vmem:[%s296 + $0x74] sm:$0xf]
      %v887 = vld [vmem:[%s296 + $0x78] sm:$0xff]
      %v888 = vld [vmem:[%s296 + $0x80] sm:$0xf]
      %v889 = vld [vmem:[%s296 + $0x84] sm:$0xff]
      %v890 = vld [vmem:[%s296 + $0x8c] sm:$0xf]
      %v891 = vld [vmem:[%s296 + $0x90] sm:$0xff]
      %v892 = vld [vmem:[%s296 + $0x98] sm:$0xf]
      %v893 = vld [vmem:[%s296 + $0x9c] sm:$0xff]
      %v894 = vld [vmem:[%s296 + $0xa4] sm:$0xf]
      %v895 = vld [vmem:[%s296 + $0xa8] sm:$0xff]
      %v896 = vld [vmem:[%s296 + $0xb0] sm:$0xf]
      %v897 = vld [vmem:[%s296 + $0xb4] sm:$0xff]
      %v898 = vld [vmem:[%s296 + $0xbc] sm:$0xf]
      %v899 = vld [vmem:[%s296 + $0xc0] sm:$0xff]
      %v900 = vld [vmem:[%s296 + $0xc8] sm:$0xf]
      %v901 = vld [vmem:[%s296 + $0xcc] sm:$0xff]
      %v902 = vld [vmem:[%s296 + $0xd4] sm:$0xf]
      %v939 = vunpack.c.l.b16 %v867
      %v940 = vunpack.c.h.b16 %v867
      %v941 = vunpack.c.l.b16 %v868
      %v942 = vunpack.c.l.b16 %v869
      %v943 = vunpack.c.h.b16 %v869
      %v944 = vunpack.c.l.b16 %v870
      %v945 = vunpack.c.l.b16 %v871
      %v946 = vunpack.c.h.b16 %v871
      %v947 = vunpack.c.l.b16 %v872
      %v948 = vunpack.c.l.b16 %v873
      %v949 = vunpack.c.h.b16 %v873
      %v950 = vunpack.c.l.b16 %v874
      %v951 = vunpack.c.l.b16 %v875
      %v952 = vunpack.c.h.b16 %v875
      %v953 = vunpack.c.l.b16 %v876
      %v954 = vunpack.c.l.b16 %v877
      %v955 = vunpack.c.h.b16 %v877
      %v956 = vunpack.c.l.b16 %v878
      %v957 = vunpack.c.l.b16 %v879
      %v958 = vunpack.c.h.b16 %v879
      %v959 = vunpack.c.l.b16 %v880
      %v960 = vunpack.c.l.b16 %v881
      %v961 = vunpack.c.h.b16 %v881
      %v962 = vunpack.c.l.b16 %v882
      %v963 = vunpack.c.l.b16 %v883
      %v964 = vunpack.c.h.b16 %v883
      %v965 = vunpack.c.l.b16 %v884
      %v966 = vunpack.c.l.b16 %v885
      %v967 = vunpack.c.h.b16 %v885
      %v968 = vunpack.c.l.b16 %v886
      %v969 = vunpack.c.l.b16 %v887
      %v970 = vunpack.c.h.b16 %v887
      %v971 = vunpack.c.l.b16 %v888
      %v972 = vunpack.c.l.b16 %v889
      %v973 = vunpack.c.h.b16 %v889
      %v974 = vunpack.c.l.b16 %v890
      %v975 = vunpack.c.l.b16 %v891
      %v976 = vunpack.c.h.b16 %v891
      %v977 = vunpack.c.l.b16 %v892
      %v978 = vunpack.c.l.b16 %v893
      %v979 = vunpack.c.h.b16 %v893
      %v980 = vunpack.c.l.b16 %v894
      %v981 = vunpack.c.l.b16 %v895
      %v982 = vunpack.c.h.b16 %v895
      %v983 = vunpack.c.l.b16 %v896
      %v984 = vunpack.c.l.b16 %v897
      %v985 = vunpack.c.h.b16 %v897
      %v986 = vunpack.c.l.b16 %v898
      %v987 = vunpack.c.l.b16 %v899
      %v988 = vunpack.c.h.b16 %v899
      %v989 = vunpack.c.l.b16 %v900
      %v990 = vunpack.c.l.b16 %v901
      %v991 = vunpack.c.h.b16 %v901
      %v992 = vunpack.c.l.b16 %v902
      %v993 = vpack.c.b16 %v942, %v939
      %v994 = vpack.c.b16 %v943, %v940
      %v995 = vpack.c.b16 %v944, %v941
      %v996 = vpack.c.b16 %v948, %v945
      %v997 = vpack.c.b16 %v949, %v946
      %v998 = vpack.c.b16 %v950, %v947
      %v999 = vpack.c.b16 %v954, %v951
      %v1000 = vpack.c.b16 %v955, %v952
      %v1001 = vpack.c.b16 %v956, %v953
      %v1002 = vpack.c.b16 %v960, %v957
      %v1003 = vpack.c.b16 %v961, %v958
      %v1004 = vpack.c.b16 %v962, %v959
      %v1005 = vpack.c.b16 %v966, %v963
      %v1006 = vpack.c.b16 %v967, %v964
      %v1007 = vpack.c.b16 %v968, %v965
      %v1008 = vpack.c.b16 %v972, %v969
      %v1009 = vpack.c.b16 %v973, %v970
      %v1010 = vpack.c.b16 %v974, %v971
      %v1011 = vpack.c.b16 %v978, %v975
      %v1012 = vpack.c.b16 %v979, %v976
      %v1013 = vpack.c.b16 %v980, %v977
      %v1014 = vpack.c.b16 %v984, %v981
      %v1015 = vpack.c.b16 %v985, %v982
      %v1016 = vpack.c.b16 %v986, %v983
      %v1017 = vpack.c.b16 %v990, %v987
      %v1018 = vpack.c.b16 %v991, %v988
      %v1019 = vpack.c.b16 %v992, %v989
      %v1039 = vsel %vm629, %v995, 0
      %v1042 = vsel %vm629, %v998, 0
      %v1045 = vsel %vm629, %v1001, 0
      %v1048 = vsel %vm629, %v1004, 0
      %v1051 = vsel %vm629, %v1007, 0
      %v1054 = vsel %vm629, %v1010, 0
      %v1057 = vsel %vm629, %v1013, 0
      %v1060 = vsel %vm629, %v1016, 0
      %v1063 = vsel %vm629, %v1019, 0
      %1065 = vmatprep.subr.bf16.mxu0 0
      %1066 = vmatpush1.bf16.msra.mxu0 %v593
      %1067 = vmatprep.subr.bf16.mxu0 0
      %1068 = vmatpush1.bf16.msra.mxu0 %v594
      %1069 = vmatprep.subr.bf16.mxu0 0
      %1070 = vmatpush1.bf16.msra.mxu0 %v595
      %1071 = vmatprep.subr.bf16.mxu0 0
      %1072 = vmatpush1.bf16.msra.mxu0 %v596
      %1073 = vmatprep.subr.bf16.mxu0 0
      %1074 = vmatpush1.bf16.msra.mxu0 %v597
      %1075 = vmatprep.subr.bf16.mxu0 0
      %1076 = vmatpush1.bf16.msra.mxu0 %v598
      %1077 = vmatprep.subr.bf16.mxu0 0
      %1078 = vmatpush1.bf16.msra.mxu0 %v599
      %1079 = vmatprep.subr.bf16.mxu0 0
      %1080 = vmatpush1.bf16.msra.mxu0 %v600
      %1081 = vmatprep.subr.bf16.mxu0 0
      %1082 = vmatpush1.bf16.msra.mxu0 %v601
      %1083 = vmatprep.subr.bf16.mxu0 0
      %1084 = vmatpush1.bf16.msra.mxu0 %v602
      %1085 = vmatprep.subr.bf16.mxu0 0
      %1086 = vmatpush1.bf16.msra.mxu0 %v603
      %1087 = vmatprep.subr.bf16.mxu0 0
      %1088 = vmatpush1.bf16.msra.mxu0 %v604
      %1089 = vmatprep.subr.bf16.mxu0 0
      %1090 = vmatpush1.bf16.msra.mxu0 %v605
      %1091 = vmatprep.subr.bf16.mxu0 0
      %1092 = vmatpush1.bf16.msra.mxu0 %v606
      %1093 = vmatprep.subr.bf16.mxu0 0
      %1094 = vmatpush1.bf16.msra.mxu0 %v607
      %1095 = vmatprep.subr.bf16.mxu0 0
      %1096 = vmatpush1.bf16.msra.mxu0 %v608
      %1097 = vmatprep.mubr.bf16.mxu0 %v994
      %1098 = vmatmul.mubr.bf16.gmra.mrb[0].mxu0 %v993
      %v1099 = vpop.f32.mrb[0].mxu0
      %v1100 = vadd.f32 0.0, %v1099
      %v1101 = vpop.f32.mrb[0].mxu0
      %v1102 = vpop.f32.mrb[0].mxu0
      %v1103 = vadd.f32 0.0, %v1102
      %v1104 = vpop.f32.mrb[0].mxu0
      %1105 = vmatprep.mubr.bf16.mxu0 %v997
      %1106 = vmatmul.mubr.bf16.gmra.mrb[0].mxu0 %v996
      %v1107 = vpop.f32.mrb[0].mxu0
      %v1108 = vadd.f32 0.0, %v1107
      %v1109 = vpop.f32.mrb[0].mxu0
      %v1110 = vpop.f32.mrb[0].mxu0
      %v1111 = vadd.f32 0.0, %v1110
      %v1112 = vpop.f32.mrb[0].mxu0
      %1113 = vmatprep.mubr.bf16.mxu0 %v1000
      %1114 = vmatmul.mubr.bf16.gmra.mrb[0].mxu0 %v999
      %v1115 = vpop.f32.mrb[0].mxu0
      %v1116 = vadd.f32 0.0, %v1115
      %v1117 = vpop.f32.mrb[0].mxu0
      %v1118 = vpop.f32.mrb[0].mxu0
      %v1119 = vadd.f32 0.0, %v1118
      %v1120 = vpop.f32.mrb[0].mxu0
      %1121 = vmatprep.mubr.bf16.mxu0 %v1003
      %1122 = vmatmul.mubr.bf16.gmra.mrb[0].mxu0 %v1002
      %v1123 = vpop.f32.mrb[0].mxu0
      %v1124 = vadd.f32 0.0, %v1123
      %v1125 = vpop.f32.mrb[0].mxu0
      %v1126 = vpop.f32.mrb[0].mxu0
      %v1127 = vadd.f32 0.0, %v1126
      %v1128 = vpop.f32.mrb[0].mxu0
      %1129 = vmatprep.mubr.bf16.mxu0 %v1006
      %1130 = vmatmul.mubr.bf16.gmra.mrb[0].mxu0 %v1005
      %v1131 = vpop.f32.mrb[0].mxu0
      %v1132 = vadd.f32 0.0, %v1131
      %v1133 = vpop.f32.mrb[0].mxu0
      %v1134 = vpop.f32.mrb[0].mxu0
      %v1135 = vadd.f32 0.0, %v1134
      %v1136 = vpop.f32.mrb[0].mxu0
      %1137 = vmatprep.mubr.bf16.mxu0 %v1009
      %1138 = vmatmul.mubr.bf16.gmra.mrb[0].mxu0 %v1008
      %v1139 = vpop.f32.mrb[0].mxu0
      %v1140 = vadd.f32 0.0, %v1139
      %v1141 = vpop.f32.mrb[0].mxu0
      %v1142 = vpop.f32.mrb[0].mxu0
      %v1143 = vadd.f32 0.0, %v1142
      %v1144 = vpop.f32.mrb[0].mxu0
      %1145 = vmatprep.mubr.bf16.mxu0 %v1012
      %1146 = vmatmul.mubr.bf16.gmra.mrb[0].mxu0 %v1011
      %v1147 = vpop.f32.mrb[0].mxu0
      %v1148 = vadd.f32 0.0, %v1147
      %v1149 = vpop.f32.mrb[0].mxu0
      %v1150 = vpop.f32.mrb[0].mxu0
      %v1151 = vadd.f32 0.0, %v1150
      %v1152 = vpop.f32.mrb[0].mxu0
      %1153 = vmatprep.mubr.bf16.mxu0 %v1015
      %1154 = vmatmul.mubr.bf16.gmra.mrb[0].mxu0 %v1014
      %v1155 = vpop.f32.mrb[0].mxu0
      %v1156 = vadd.f32 0.0, %v1155
      %v1157 = vpop.f32.mrb[0].mxu0
      %v1158 = vpop.f32.mrb[0].mxu0
      %v1159 = vadd.f32 0.0, %v1158
      %v1160 = vpop.f32.mrb[0].mxu0
      %1161 = vmatprep.mubr.bf16.mxu0 %v1018
      %1162 = vmatmul.mubr.bf16.gmra.mrb[0].mxu0 %v1017
      %v1163 = vpop.f32.mrb[0].mxu0
      %v1164 = vadd.f32 0.0, %v1163
      %v1165 = vpop.f32.mrb[0].mxu0
      %v1166 = vpop.f32.mrb[0].mxu0
      %v1167 = vadd.f32 0.0, %v1166
      %v1168 = vpop.f32.mrb[0].mxu0
      %1169 = vdwg.mxu0
      %1170 = vmatprep.subr.bf16.mxu0 0
      %1171 = vmatpush1.bf16.msra.mxu0 %v609
      %1172 = vmatprep.subr.bf16.mxu0 0
      %1173 = vmatpush1.bf16.msra.mxu0 %v610
      %1174 = vmatprep.subr.bf16.mxu0 0
      %1175 = vmatpush1.bf16.msra.mxu0 0
      %1176 = vmatprep.subr.bf16.mxu0 0
      %1177 = vmatpush1.bf16.msra.mxu0 0
      %1178 = vmatprep.subr.bf16.mxu0 0
      %1179 = vmatpush1.bf16.msra.mxu0 0
      %1180 = vmatprep.subr.bf16.mxu0 0
      %1181 = vmatpush1.bf16.msra.mxu0 0
      %1182 = vmatprep.subr.bf16.mxu0 0
      %1183 = vmatpush1.bf16.msra.mxu0 0
      %1184 = vmatprep.subr.bf16.mxu0 0
      %1185 = vmatpush1.bf16.msra.mxu0 0
      %1186 = vmatprep.subr.bf16.mxu0 0
      %1187 = vmatpush1.bf16.msra.mxu0 0
      %1188 = vmatprep.subr.bf16.mxu0 0
      %1189 = vmatpush1.bf16.msra.mxu0 0
      %1190 = vmatprep.subr.bf16.mxu0 0
      %1191 = vmatpush1.bf16.msra.mxu0 0
      %1192 = vmatprep.subr.bf16.mxu0 0
      %1193 = vmatpush1.bf16.msra.mxu0 0
      %1194 = vmatprep.subr.bf16.mxu0 0
      %1195 = vmatpush1.bf16.msra.mxu0 0
      %1196 = vmatprep.subr.bf16.mxu0 0
      %1197 = vmatpush1.bf16.msra.mxu0 0
      %1198 = vmatprep.subr.bf16.mxu0 0
      %1199 = vmatpush1.bf16.msra.mxu0 0
      %1200 = vmatprep.subr.bf16.mxu0 0
      %1201 = vmatpush1.bf16.msra.mxu0 0
      %1202 = vmatprep.mubr.bf16.mxu0 0
      %1203 = vmatmul.mubr.bf16.gmra.mrb[0].mxu0 %v1039
      %v1204 = vpop.f32.mrb[0].mxu0
      %v1205 = vadd.f32 %v1100, %v1204
      %v1206 = vpop.f32.mrb[0].mxu0
      %v1207 = vpop.f32.mrb[0].mxu0
      %v1208 = vadd.f32 %v1103, %v1207
      %v1209 = vpop.f32.mrb[0].mxu0
      %1210 = vmatprep.mubr.bf16.mxu0 0
      %1211 = vmatmul.mubr.bf16.gmra.mrb[0].mxu0 %v1042
      %v1212 = vpop.f32.mrb[0].mxu0
      %v1213 = vadd.f32 %v1108, %v1212
      %v1214 = vpop.f32.mrb[0].mxu0
      %v1215 = vpop.f32.mrb[0].mxu0
      %v1216 = vadd.f32 %v1111, %v1215
      %v1217 = vpop.f32.mrb[0].mxu0
      %1218 = vmatprep.mubr.bf16.mxu0 0
      %1219 = vmatmul.mubr.bf16.gmra.mrb[0].mxu0 %v1045
      %v1220 = vpop.f32.mrb[0].mxu0
      %v1221 = vadd.f32 %v1116, %v1220
      %v1222 = vpop.f32.mrb[0].mxu0
      %v1223 = vpop.f32.mrb[0].mxu0
      %v1224 = vadd.f32 %v1119, %v1223
      %v1225 = vpop.f32.mrb[0].mxu0
      %1226 = vmatprep.mubr.bf16.mxu0 0
      %1227 = vmatmul.mubr.bf16.gmra.mrb[0].mxu0 %v1048
      %v1228 = vpop.f32.mrb[0].mxu0
      %v1229 = vadd.f32 %v1124, %v1228
      %v1230 = vpop.f32.mrb[0].mxu0
      %v1231 = vpop.f32.mrb[0].mxu0
      %v1232 = vadd.f32 %v1127, %v1231
      %v1233 = vpop.f32.mrb[0].mxu0
      %1234 = vmatprep.mubr.bf16.mxu0 0
      %1235 = vmatmul.mubr.bf16.gmra.mrb[0].mxu0 %v1051
      %v1236 = vpop.f32.mrb[0].mxu0
      %v1237 = vadd.f32 %v1132, %v1236
      %v1238 = vpop.f32.mrb[0].mxu0
      %v1239 = vpop.f32.mrb[0].mxu0
      %v1240 = vadd.f32 %v1135, %v1239
      %v1241 = vpop.f32.mrb[0].mxu0
      %1242 = vmatprep.mubr.bf16.mxu0 0
      %1243 = vmatmul.mubr.bf16.gmra.mrb[0].mxu0 %v1054
      %v1244 = vpop.f32.mrb[0].mxu0
      %v1245 = vadd.f32 %v1140, %v1244
      %v1246 = vpop.f32.mrb[0].mxu0
      %v1247 = vpop.f32.mrb[0].mxu0
      %v1248 = vadd.f32 %v1143, %v1247
      %v1249 = vpop.f32.mrb[0].mxu0
      %1250 = vmatprep.mubr.bf16.mxu0 0
      %1251 = vmatmul.mubr.bf16.gmra.mrb[0].mxu0 %v1057
      %v1252 = vpop.f32.mrb[0].mxu0
      %v1253 = vadd.f32 %v1148, %v1252
      %v1254 = vpop.f32.mrb[0].mxu0
      %v1255 = vpop.f32.mrb[0].mxu0
      %v1256 = vadd.f32 %v1151, %v1255
      %v1257 = vpop.f32.mrb[0].mxu0
      %1258 = vmatprep.mubr.bf16.mxu0 0
      %1259 = vmatmul.mubr.bf16.gmra.mrb[0].mxu0 %v1060
      %v1260 = vpop.f32.mrb[0].mxu0
      %v1261 = vadd.f32 %v1156, %v1260
      %v1262 = vpop.f32.mrb[0].mxu0
      %v1263 = vpop.f32.mrb[0].mxu0
      %v1264 = vadd.f32 %v1159, %v1263
      %v1265 = vpop.f32.mrb[0].mxu0
      %1266 = vmatprep.mubr.bf16.mxu0 0
      %1267 = vmatmul.mubr.bf16.gmra.mrb[0].mxu0 %v1063
      %v1268 = vpop.f32.mrb[0].mxu0
      %v1269 = vadd.f32 %v1164, %v1268
      %v1270 = vpop.f32.mrb[0].mxu0
      %v1271 = vpop.f32.mrb[0].mxu0
      %v1272 = vadd.f32 %v1167, %v1271
      %v1273 = vpop.f32.mrb[0].mxu0
      %1274 = vdwg.mxu0
      %v1275 = vmax.f32 %v797, %v1205
      %v1276 = vmax.f32 %v800, %v1208
      %v1277 = vmax.f32 %v805, %v1213
      %v1278 = vmax.f32 %v808, %v1216
      %v1279 = vmax.f32 %v813, %v1221
      %v1280 = vmax.f32 %v816, %v1224
      %v1281 = vmax.f32 %v821, %v1229
      %v1282 = vmax.f32 %v824, %v1232
      %v1283 = vmax.f32 %v829, %v1237
      %v1284 = vmax.f32 %v832, %v1240
      %v1285 = vmax.f32 %v837, %v1245
      %v1286 = vmax.f32 %v840, %v1248
      %v1287 = vmax.f32 %v845, %v1253
      %v1288 = vmax.f32 %v848, %v1256
      %v1289 = vmax.f32 %v853, %v1261
      %v1290 = vmax.f32 %v856, %v1264
      %v1291 = vmax.f32 %v861, %v1269
      %v1292 = vmax.f32 %v864, %v1272
      %v1293 = vld [vmem:[%s301] sm:$0xff]
      %v1294 = vld [vmem:[%s301 + $0x8] sm:$0xf]
      %v1295 = vld [vmem:[%s301 + $0xc] sm:$0xff]
      %v1296 = vld [vmem:[%s301 + $0x14] sm:$0xf]
      %v1297 = vld [vmem:[%s301 + $0x18] sm:$0xff]
      %v1298 = vld [vmem:[%s301 + $0x20] sm:$0xf]
      %v1299 = vld [vmem:[%s301 + $0x24] sm:$0xff]
      %v1300 = vld [vmem:[%s301 + $0x2c] sm:$0xf]
      %v1301 = vld [vmem:[%s301 + $0x30] sm:$0xff]
      %v1302 = vld [vmem:[%s301 + $0x38] sm:$0xf]
      %v1303 = vld [vmem:[%s301 + $0x3c] sm:$0xff]
      %v1304 = vld [vmem:[%s301 + $0x44] sm:$0xf]
      %v1305 = vld [vmem:[%s301 + $0x48] sm:$0xff]
      %v1306 = vld [vmem:[%s301 + $0x50] sm:$0xf]
      %v1307 = vld [vmem:[%s301 + $0x54] sm:$0xff]
      %v1308 = vld [vmem:[%s301 + $0x5c] sm:$0xf]
      %v1309 = vld [vmem:[%s301 + $0x60] sm:$0xff]
      %v1310 = vld [vmem:[%s301 + $0x68] sm:$0xf]
      %v1311 = vld [vmem:[%s301 + $0x6c] sm:$0xff]
      %v1312 = vld [vmem:[%s301 + $0x74] sm:$0xf]
      %v1313 = vld [vmem:[%s301 + $0x78] sm:$0xff]
      %v1314 = vld [vmem:[%s301 + $0x80] sm:$0xf]
      %v1315 = vld [vmem:[%s301 + $0x84] sm:$0xff]
      %v1316 = vld [vmem:[%s301 + $0x8c] sm:$0xf]
      %v1317 = vld [vmem:[%s301 + $0x90] sm:$0xff]
      %v1318 = vld [vmem:[%s301 + $0x98] sm:$0xf]
      %v1319 = vld [vmem:[%s301 + $0x9c] sm:$0xff]
      %v1320 = vld [vmem:[%s301 + $0xa4] sm:$0xf]
      %v1321 = vld [vmem:[%s301 + $0xa8] sm:$0xff]
      %v1322 = vld [vmem:[%s301 + $0xb0] sm:$0xf]
      %v1323 = vld [vmem:[%s301 + $0xb4] sm:$0xff]
      %v1324 = vld [vmem:[%s301 + $0xbc] sm:$0xf]
      %v1325 = vld [vmem:[%s301 + $0xc0] sm:$0xff]
      %v1326 = vld [vmem:[%s301 + $0xc8] sm:$0xf]
      %v1327 = vld [vmem:[%s301 + $0xcc] sm:$0xff]
      %v1328 = vld [vmem:[%s301 + $0xd4] sm:$0xf]
      %v1365 = vunpack.c.l.b16 %v1293
      %v1366 = vunpack.c.h.b16 %v1293
      %v1367 = vunpack.c.l.b16 %v1294
      %v1368 = vunpack.c.l.b16 %v1295
      %v1369 = vunpack.c.h.b16 %v1295
      %v1370 = vunpack.c.l.b16 %v1296
      %v1371 = vunpack.c.l.b16 %v1297
      %v1372 = vunpack.c.h.b16 %v1297
      %v1373 = vunpack.c.l.b16 %v1298
      %v1374 = vunpack.c.l.b16 %v1299
      %v1375 = vunpack.c.h.b16 %v1299
      %v1376 = vunpack.c.l.b16 %v1300
      %v1377 = vunpack.c.l.b16 %v1301
      %v1378 = vunpack.c.h.b16 %v1301
      %v1379 = vunpack.c.l.b16 %v1302
      %v1380 = vunpack.c.l.b16 %v1303
      %v1381 = vunpack.c.h.b16 %v1303
      %v1382 = vunpack.c.l.b16 %v1304
      %v1383 = vunpack.c.l.b16 %v1305
      %v1384 = vunpack.c.h.b16 %v1305
      %v1385 = vunpack.c.l.b16 %v1306
      %v1386 = vunpack.c.l.b16 %v1307
      %v1387 = vunpack.c.h.b16 %v1307
      %v1388 = vunpack.c.l.b16 %v1308
      %v1389 = vunpack.c.l.b16 %v1309
      %v1390 = vunpack.c.h.b16 %v1309
      %v1391 = vunpack.c.l.b16 %v1310
      %v1392 = vunpack.c.l.b16 %v1311
      %v1393 = vunpack.c.h.b16 %v1311
      %v1394 = vunpack.c.l.b16 %v1312
      %v1395 = vunpack.c.l.b16 %v1313
      %v1396 = vunpack.c.h.b16 %v1313
      %v1397 = vunpack.c.l.b16 %v1314
      %v1398 = vunpack.c.l.b16 %v1315
      %v1399 = vunpack.c.h.b16 %v1315
      %v1400 = vunpack.c.l.b16 %v1316
      %v1401 = vunpack.c.l.b16 %v1317
      %v1402 = vunpack.c.h.b16 %v1317
      %v1403 = vunpack.c.l.b16 %v1318
      %v1404 = vunpack.c.l.b16 %v1319
      %v1405 = vunpack.c.h.b16 %v1319
      %v1406 = vunpack.c.l.b16 %v1320
      %v1407 = vunpack.c.l.b16 %v1321
      %v1408 = vunpack.c.h.b16 %v1321
      %v1409 = vunpack.c.l.b16 %v1322
      %v1410 = vunpack.c.l.b16 %v1323
      %v1411 = vunpack.c.h.b16 %v1323
      %v1412 = vunpack.c.l.b16 %v1324
      %v1413 = vunpack.c.l.b16 %v1325
      %v1414 = vunpack.c.h.b16 %v1325
      %v1415 = vunpack.c.l.b16 %v1326
      %v1416 = vunpack.c.l.b16 %v1327
      %v1417 = vunpack.c.h.b16 %v1327
      %v1418 = vunpack.c.l.b16 %v1328
      %v1419 = vpack.c.b16 %v1368, %v1365
      %v1420 = vpack.c.b16 %v1369, %v1366
      %v1421 = vpack.c.b16 %v1370, %v1367
      %v1422 = vpack.c.b16 %v1374, %v1371
      %v1423 = vpack.c.b16 %v1375, %v1372
      %v1424 = vpack.c.b16 %v1376, %v1373
      %v1425 = vpack.c.b16 %v1380, %v1377
      %v1426 = vpack.c.b16 %v1381, %v1378
      %v1427 = vpack.c.b16 %v1382, %v1379
      %v1428 = vpack.c.b16 %v1386, %v1383
      %v1429 = vpack.c.b16 %v1387, %v1384
      %v1430 = vpack.c.b16 %v1388, %v1385
      %v1431 = vpack.c.b16 %v1392, %v1389
      %v1432 = vpack.c.b16 %v1393, %v1390
      %v1433 = vpack.c.b16 %v1394, %v1391
      %v1434 = vpack.c.b16 %v1398, %v1395
      %v1435 = vpack.c.b16 %v1399, %v1396
      %v1436 = vpack.c.b16 %v1400, %v1397
      %v1437 = vpack.c.b16 %v1404, %v1401
      %v1438 = vpack.c.b16 %v1405, %v1402
      %v1439 = vpack.c.b16 %v1406, %v1403
      %v1440 = vpack.c.b16 %v1410, %v1407
      %v1441 = vpack.c.b16 %v1411, %v1408
      %v1442 = vpack.c.b16 %v1412, %v1409
      %v1443 = vpack.c.b16 %v1416, %v1413
      %v1444 = vpack.c.b16 %v1417, %v1414
      %v1445 = vpack.c.b16 %v1418, %v1415
      %v1465 = vsel %vm629, %v1421, 0
      %v1468 = vsel %vm629, %v1424, 0
      %v1471 = vsel %vm629, %v1427, 0
      %v1474 = vsel %vm629, %v1430, 0
      %v1477 = vsel %vm629, %v1433, 0
      %v1480 = vsel %vm629, %v1436, 0
      %v1483 = vsel %vm629, %v1439, 0
      %v1486 = vsel %vm629, %v1442, 0
      %v1489 = vsel %vm629, %v1445, 0
      %1491 = vmatprep.subr.bf16.mxu0 0
      %1492 = vmatpush1.bf16.msra.mxu0 %v593
      %1493 = vmatprep.subr.bf16.mxu0 0
      %1494 = vmatpush1.bf16.msra.mxu0 %v594
      %1495 = vmatprep.subr.bf16.mxu0 0
      %1496 = vmatpush1.bf16.msra.mxu0 %v595
      %1497 = vmatprep.subr.bf16.mxu0 0
      %1498 = vmatpush1.bf16.msra.mxu0 %v596
      %1499 = vmatprep.subr.bf16.mxu0 0
      %1500 = vmatpush1.bf16.msra.mxu0 %v597
      %1501 = vmatprep.subr.bf16.mxu0 0
      %1502 = vmatpush1.bf16.msra.mxu0 %v598
      %1503 = vmatprep.subr.bf16.mxu0 0
      %1504 = vmatpush1.bf16.msra.mxu0 %v599
      %1505 = vmatprep.subr.bf16.mxu0 0
      %1506 = vmatpush1.bf16.msra.mxu0 %v600
      %1507 = vmatprep.subr.bf16.mxu0 0
      %1508 = vmatpush1.bf16.msra.mxu0 %v601
      %1509 = vmatprep.subr.bf16.mxu0 0
      %1510 = vmatpush1.bf16.msra.mxu0 %v602
      %1511 = vmatprep.subr.bf16.mxu0 0
      %1512 = vmatpush1.bf16.msra.mxu0 %v603
      %1513 = vmatprep.subr.bf16.mxu0 0
      %1514 = vmatpush1.bf16.msra.mxu0 %v604
      %1515 = vmatprep.subr.bf16.mxu0 0
      %1516 = vmatpush1.bf16.msra.mxu0 %v605
      %1517 = vmatprep.subr.bf16.mxu0 0
      %1518 = vmatpush1.bf16.msra.mxu0 %v606
      %1519 = vmatprep.subr.bf16.mxu0 0
      %1520 = vmatpush1.bf16.msra.mxu0 %v607
      %1521 = vmatprep.subr.bf16.mxu0 0
      %1522 = vmatpush1.bf16.msra.mxu0 %v608
      %1523 = vmatprep.mubr.bf16.mxu0 %v1420
      %1524 = vmatmul.mubr.bf16.gmra.mrb[0].mxu0 %v1419
      %v1525 = vpop.f32.mrb[0].mxu0
      %v1526 = vadd.f32 0.0, %v1525
      %v1527 = vpop.f32.mrb[0].mxu0
      %v1528 = vpop.f32.mrb[0].mxu0
      %v1529 = vadd.f32 0.0, %v1528
      %v1530 = vpop.f32.mrb[0].mxu0
      %1531 = vmatprep.mubr.bf16.mxu0 %v1423
      %1532 = vmatmul.mubr.bf16.gmra.mrb[0].mxu0 %v1422
      %v1533 = vpop.f32.mrb[0].mxu0
      %v1534 = vadd.f32 0.0, %v1533
      %v1535 = vpop.f32.mrb[0].mxu0
      %v1536 = vpop.f32.mrb[0].mxu0
      %v1537 = vadd.f32 0.0, %v1536
      %v1538 = vpop.f32.mrb[0].mxu0
      %1539 = vmatprep.mubr.bf16.mxu0 %v1426
      %1540 = vmatmul.mubr.bf16.gmra.mrb[0].mxu0 %v1425
      %v1541 = vpop.f32.mrb[0].mxu0
      %v1542 = vadd.f32 0.0, %v1541
      %v1543 = vpop.f32.mrb[0].mxu0
      %v1544 = vpop.f32.mrb[0].mxu0
      %v1545 = vadd.f32 0.0, %v1544
      %v1546 = vpop.f32.mrb[0].mxu0
      %1547 = vmatprep.mubr.bf16.mxu0 %v1429
      %1548 = vmatmul.mubr.bf16.gmra.mrb[0].mxu0 %v1428
      %v1549 = vpop.f32.mrb[0].mxu0
      %v1550 = vadd.f32 0.0, %v1549
      %v1551 = vpop.f32.mrb[0].mxu0
      %v1552 = vpop.f32.mrb[0].mxu0
      %v1553 = vadd.f32 0.0, %v1552
      %v1554 = vpop.f32.mrb[0].mxu0
      %1555 = vmatprep.mubr.bf16.mxu0 %v1432
      %1556 = vmatmul.mubr.bf16.gmra.mrb[0].mxu0 %v1431
      %v1557 = vpop.f32.mrb[0].mxu0
      %v1558 = vadd.f32 0.0, %v1557
      %v1559 = vpop.f32.mrb[0].mxu0
      %v1560 = vpop.f32.mrb[0].mxu0
      %v1561 = vadd.f32 0.0, %v1560
      %v1562 = vpop.f32.mrb[0].mxu0
      %1563 = vmatprep.mubr.bf16.mxu0 %v1435
      %1564 = vmatmul.mubr.bf16.gmra.mrb[0].mxu0 %v1434
      %v1565 = vpop.f32.mrb[0].mxu0
      %v1566 = vadd.f32 0.0, %v1565
      %v1567 = vpop.f32.mrb[0].mxu0
      %v1568 = vpop.f32.mrb[0].mxu0
      %v1569 = vadd.f32 0.0, %v1568
      %v1570 = vpop.f32.mrb[0].mxu0
      %1571 = vmatprep.mubr.bf16.mxu0 %v1438
      %1572 = vmatmul.mubr.bf16.gmra.mrb[0].mxu0 %v1437
      %v1573 = vpop.f32.mrb[0].mxu0
      %v1574 = vadd.f32 0.0, %v1573
      %v1575 = vpop.f32.mrb[0].mxu0
      %v1576 = vpop.f32.mrb[0].mxu0
      %v1577 = vadd.f32 0.0, %v1576
      %v1578 = vpop.f32.mrb[0].mxu0
      %1579 = vmatprep.mubr.bf16.mxu0 %v1441
      %1580 = vmatmul.mubr.bf16.gmra.mrb[0].mxu0 %v1440
      %v1581 = vpop.f32.mrb[0].mxu0
      %v1582 = vadd.f32 0.0, %v1581
      %v1583 = vpop.f32.mrb[0].mxu0
      %v1584 = vpop.f32.mrb[0].mxu0
      %v1585 = vadd.f32 0.0, %v1584
      %v1586 = vpop.f32.mrb[0].mxu0
      %1587 = vmatprep.mubr.bf16.mxu0 %v1444
      %1588 = vmatmul.mubr.bf16.gmra.mrb[0].mxu0 %v1443
      %v1589 = vpop.f32.mrb[0].mxu0
      %v1590 = vadd.f32 0.0, %v1589
      %v1591 = vpop.f32.mrb[0].mxu0
      %v1592 = vpop.f32.mrb[0].mxu0
      %v1593 = vadd.f32 0.0, %v1592
      %v1594 = vpop.f32.mrb[0].mxu0
      %1595 = vdwg.mxu0
      %1596 = vmatprep.subr.bf16.mxu0 0
      %1597 = vmatpush1.bf16.msra.mxu0 %v609
      %1598 = vmatprep.subr.bf16.mxu0 0
      %1599 = vmatpush1.bf16.msra.mxu0 %v610
      %1600 = vmatprep.subr.bf16.mxu0 0
      %1601 = vmatpush1.bf16.msra.mxu0 0
      %1602 = vmatprep.subr.bf16.mxu0 0
      %1603 = vmatpush1.bf16.msra.mxu0 0
      %1604 = vmatprep.subr.bf16.mxu0 0
      %1605 = vmatpush1.bf16.msra.mxu0 0
      %1606 = vmatprep.subr.bf16.mxu0 0
      %1607 = vmatpush1.bf16.msra.mxu0 0
      %1608 = vmatprep.subr.bf16.mxu0 0
      %1609 = vmatpush1.bf16.msra.mxu0 0
      %1610 = vmatprep.subr.bf16.mxu0 0
      %1611 = vmatpush1.bf16.msra.mxu0 0
      %1612 = vmatprep.subr.bf16.mxu0 0
      %1613 = vmatpush1.bf16.msra.mxu0 0
      %1614 = vmatprep.subr.bf16.mxu0 0
      %1615 = vmatpush1.bf16.msra.mxu0 0
      %1616 = vmatprep.subr.bf16.mxu0 0
      %1617 = vmatpush1.bf16.msra.mxu0 0
      %1618 = vmatprep.subr.bf16.mxu0 0
      %1619 = vmatpush1.bf16.msra.mxu0 0
      %1620 = vmatprep.subr.bf16.mxu0 0
      %1621 = vmatpush1.bf16.msra.mxu0 0
      %1622 = vmatprep.subr.bf16.mxu0 0
      %1623 = vmatpush1.bf16.msra.mxu0 0
      %1624 = vmatprep.subr.bf16.mxu0 0
      %1625 = vmatpush1.bf16.msra.mxu0 0
      %1626 = vmatprep.subr.bf16.mxu0 0
      %1627 = vmatpush1.bf16.msra.mxu0 0
      %1628 = vmatprep.mubr.bf16.mxu0 0
      %1629 = vmatmul.mubr.bf16.gmra.mrb[0].mxu0 %v1465
      %v1630 = vpop.f32.mrb[0].mxu0
      %v1631 = vadd.f32 %v1526, %v1630
      %v1632 = vpop.f32.mrb[0].mxu0
      %v1633 = vpop.f32.mrb[0].mxu0
      %v1634 = vadd.f32 %v1529, %v1633
      %v1635 = vpop.f32.mrb[0].mxu0
      %1636 = vmatprep.mubr.bf16.mxu0 0
      %1637 = vmatmul.mubr.bf16.gmra.mrb[0].mxu0 %v1468
      %v1638 = vpop.f32.mrb[0].mxu0
      %v1639 = vadd.f32 %v1534, %v1638
      %v1640 = vpop.f32.mrb[0].mxu0
      %v1641 = vpop.f32.mrb[0].mxu0
      %v1642 = vadd.f32 %v1537, %v1641
      %v1643 = vpop.f32.mrb[0].mxu0
      %1644 = vmatprep.mubr.bf16.mxu0 0
      %1645 = vmatmul.mubr.bf16.gmra.mrb[0].mxu0 %v1471
      %v1646 = vpop.f32.mrb[0].mxu0
      %v1647 = vadd.f32 %v1542, %v1646
      %v1648 = vpop.f32.mrb[0].mxu0
      %v1649 = vpop.f32.mrb[0].mxu0
      %v1650 = vadd.f32 %v1545, %v1649
      %v1651 = vpop.f32.mrb[0].mxu0
      %1652 = vmatprep.mubr.bf16.mxu0 0
      %1653 = vmatmul.mubr.bf16.gmra.mrb[0].mxu0 %v1474
      %v1654 = vpop.f32.mrb[0].mxu0
      %v1655 = vadd.f32 %v1550, %v1654
      %v1656 = vpop.f32.mrb[0].mxu0
      %v1657 = vpop.f32.mrb[0].mxu0
      %v1658 = vadd.f32 %v1553, %v1657
      %v1659 = vpop.f32.mrb[0].mxu0
      %1660 = vmatprep.mubr.bf16.mxu0 0
      %1661 = vmatmul.mubr.bf16.gmra.mrb[0].mxu0 %v1477
      %v1662 = vpop.f32.mrb[0].mxu0
      %v1663 = vadd.f32 %v1558, %v1662
      %v1664 = vpop.f32.mrb[0].mxu0
      %v1665 = vpop.f32.mrb[0].mxu0
      %v1666 = vadd.f32 %v1561, %v1665
      %v1667 = vpop.f32.mrb[0].mxu0
      %1668 = vmatprep.mubr.bf16.mxu0 0
      %1669 = vmatmul.mubr.bf16.gmra.mrb[0].mxu0 %v1480
      %v1670 = vpop.f32.mrb[0].mxu0
      %v1671 = vadd.f32 %v1566, %v1670
      %v1672 = vpop.f32.mrb[0].mxu0
      %v1673 = vpop.f32.mrb[0].mxu0
      %v1674 = vadd.f32 %v1569, %v1673
      %v1675 = vpop.f32.mrb[0].mxu0
      %1676 = vmatprep.mubr.bf16.mxu0 0
      %1677 = vmatmul.mubr.bf16.gmra.mrb[0].mxu0 %v1483
      %v1678 = vpop.f32.mrb[0].mxu0
      %v1679 = vadd.f32 %v1574, %v1678
      %v1680 = vpop.f32.mrb[0].mxu0
      %v1681 = vpop.f32.mrb[0].mxu0
      %v1682 = vadd.f32 %v1577, %v1681
      %v1683 = vpop.f32.mrb[0].mxu0
      %1684 = vmatprep.mubr.bf16.mxu0 0
      %1685 = vmatmul.mubr.bf16.gmra.mrb[0].mxu0 %v1486
      %v1686 = vpop.f32.mrb[0].mxu0
      %v1687 = vadd.f32 %v1582, %v1686
      %v1688 = vpop.f32.mrb[0].mxu0
      %v1689 = vpop.f32.mrb[0].mxu0
      %v1690 = vadd.f32 %v1585, %v1689
      %v1691 = vpop.f32.mrb[0].mxu0
      %1692 = vmatprep.mubr.bf16.mxu0 0
      %1693 = vmatmul.mubr.bf16.gmra.mrb[0].mxu0 %v1489
      %v1694 = vpop.f32.mrb[0].mxu0
      %v1695 = vadd.f32 %v1590, %v1694
      %v1696 = vpop.f32.mrb[0].mxu0
      %v1697 = vpop.f32.mrb[0].mxu0
      %v1698 = vadd.f32 %v1593, %v1697
      %v1699 = vpop.f32.mrb[0].mxu0
      %1700 = vdwg.mxu0
      %v1701 = vld [vmem:[%s306] sm:$0xff]
      %v1702 = vld [vmem:[%s306 + $0x8] sm:$0xf]
      %v1703 = vld [vmem:[%s306 + $0xc] sm:$0xff]
      %v1704 = vld [vmem:[%s306 + $0x14] sm:$0xf]
      %v1705 = vld [vmem:[%s306 + $0x18] sm:$0xff]
      %v1706 = vld [vmem:[%s306 + $0x20] sm:$0xf]
      %v1707 = vld [vmem:[%s306 + $0x24] sm:$0xff]
      %v1708 = vld [vmem:[%s306 + $0x2c] sm:$0xf]
      %v1709 = vld [vmem:[%s306 + $0x30] sm:$0xff]
      %v1710 = vld [vmem:[%s306 + $0x38] sm:$0xf]
      %v1711 = vld [vmem:[%s306 + $0x3c] sm:$0xff]
      %v1712 = vld [vmem:[%s306 + $0x44] sm:$0xf]
      %v1713 = vld [vmem:[%s306 + $0x48] sm:$0xff]
      %v1714 = vld [vmem:[%s306 + $0x50] sm:$0xf]
      %v1715 = vld [vmem:[%s306 + $0x54] sm:$0xff]
      %v1716 = vld [vmem:[%s306 + $0x5c] sm:$0xf]
      %v1717 = vld [vmem:[%s306 + $0x60] sm:$0xff]
      %v1718 = vld [vmem:[%s306 + $0x68] sm:$0xf]
      %v1719 = vld [vmem:[%s306 + $0x6c] sm:$0xff]
      %v1720 = vld [vmem:[%s306 + $0x74] sm:$0xf]
      %v1721 = vld [vmem:[%s306 + $0x78] sm:$0xff]
      %v1722 = vld [vmem:[%s306 + $0x80] sm:$0xf]
      %v1723 = vld [vmem:[%s306 + $0x84] sm:$0xff]
      %v1724 = vld [vmem:[%s306 + $0x8c] sm:$0xf]
      %v1725 = vld [vmem:[%s306 + $0x90] sm:$0xff]
      %v1726 = vld [vmem:[%s306 + $0x98] sm:$0xf]
      %v1727 = vld [vmem:[%s306 + $0x9c] sm:$0xff]
      %v1728 = vld [vmem:[%s306 + $0xa4] sm:$0xf]
      %v1729 = vld [vmem:[%s306 + $0xa8] sm:$0xff]
      %v1730 = vld [vmem:[%s306 + $0xb0] sm:$0xf]
      %v1731 = vld [vmem:[%s306 + $0xb4] sm:$0xff]
      %v1732 = vld [vmem:[%s306 + $0xbc] sm:$0xf]
      %v1733 = vld [vmem:[%s306 + $0xc0] sm:$0xff]
      %v1734 = vld [vmem:[%s306 + $0xc8] sm:$0xf]
      %v1735 = vld [vmem:[%s306 + $0xcc] sm:$0xff]
      %v1736 = vld [vmem:[%s306 + $0xd4] sm:$0xf]
      %v1773 = vunpack.c.l.b16 %v1701
      %v1774 = vunpack.c.h.b16 %v1701
      %v1775 = vunpack.c.l.b16 %v1702
      %v1776 = vunpack.c.l.b16 %v1703
      %v1777 = vunpack.c.h.b16 %v1703
      %v1778 = vunpack.c.l.b16 %v1704
      %v1779 = vunpack.c.l.b16 %v1705
      %v1780 = vunpack.c.h.b16 %v1705
      %v1781 = vunpack.c.l.b16 %v1706
      %v1782 = vunpack.c.l.b16 %v1707
      %v1783 = vunpack.c.h.b16 %v1707
      %v1784 = vunpack.c.l.b16 %v1708
      %v1785 = vunpack.c.l.b16 %v1709
      %v1786 = vunpack.c.h.b16 %v1709
      %v1787 = vunpack.c.l.b16 %v1710
      %v1788 = vunpack.c.l.b16 %v1711
      %v1789 = vunpack.c.h.b16 %v1711
      %v1790 = vunpack.c.l.b16 %v1712
      %v1791 = vunpack.c.l.b16 %v1713
      %v1792 = vunpack.c.h.b16 %v1713
      %v1793 = vunpack.c.l.b16 %v1714
      %v1794 = vunpack.c.l.b16 %v1715
      %v1795 = vunpack.c.h.b16 %v1715
      %v1796 = vunpack.c.l.b16 %v1716
      %v1797 = vunpack.c.l.b16 %v1717
      %v1798 = vunpack.c.h.b16 %v1717
      %v1799 = vunpack.c.l.b16 %v1718
      %v1800 = vunpack.c.l.b16 %v1719
      %v1801 = vunpack.c.h.b16 %v1719
      %v1802 = vunpack.c.l.b16 %v1720
      %v1803 = vunpack.c.l.b16 %v1721
      %v1804 = vunpack.c.h.b16 %v1721
      %v1805 = vunpack.c.l.b16 %v1722
      %v1806 = vunpack.c.l.b16 %v1723
      %v1807 = vunpack.c.h.b16 %v1723
      %v1808 = vunpack.c.l.b16 %v1724
      %v1809 = vunpack.c.l.b16 %v1725
      %v1810 = vunpack.c.h.b16 %v1725
      %v1811 = vunpack.c.l.b16 %v1726
      %v1812 = vunpack.c.l.b16 %v1727
      %v1813 = vunpack.c.h.b16 %v1727
      %v1814 = vunpack.c.l.b16 %v1728
      %v1815 = vunpack.c.l.b16 %v1729
      %v1816 = vunpack.c.h.b16 %v1729
      %v1817 = vunpack.c.l.b16 %v1730
      %v1818 = vunpack.c.l.b16 %v1731
      %v1819 = vunpack.c.h.b16 %v1731
      %v1820 = vunpack.c.l.b16 %v1732
      %v1821 = vunpack.c.l.b16 %v1733
      %v1822 = vunpack.c.h.b16 %v1733
      %v1823 = vunpack.c.l.b16 %v1734
      %v1824 = vunpack.c.l.b16 %v1735
      %v1825 = vunpack.c.h.b16 %v1735
      %v1826 = vunpack.c.l.b16 %v1736
      %v1827 = vpack.c.b16 %v1776, %v1773
      %v1828 = vpack.c.b16 %v1777, %v1774
      %v1829 = vpack.c.b16 %v1778, %v1775
      %v1830 = vpack.c.b16 %v1782, %v1779
      %v1831 = vpack.c.b16 %v1783, %v1780
      %v1832 = vpack.c.b16 %v1784, %v1781
      %v1833 = vpack.c.b16 %v1788, %v1785
      %v1834 = vpack.c.b16 %v1789, %v1786
      %v1835 = vpack.c.b16 %v1790, %v1787
      %v1836 = vpack.c.b16 %v1794, %v1791
      %v1837 = vpack.c.b16 %v1795, %v1792
      %v1838 = vpack.c.b16 %v1796, %v1793
      %v1839 = vpack.c.b16 %v1800, %v1797
      %v1840 = vpack.c.b16 %v1801, %v1798
      %v1841 = vpack.c.b16 %v1802, %v1799
      %v1842 = vpack.c.b16 %v1806, %v1803
      %v1843 = vpack.c.b16 %v1807, %v1804
      %v1844 = vpack.c.b16 %v1808, %v1805
      %v1845 = vpack.c.b16 %v1812, %v1809
      %v1846 = vpack.c.b16 %v1813, %v1810
      %v1847 = vpack.c.b16 %v1814, %v1811
      %v1848 = vpack.c.b16 %v1818, %v1815
      %v1849 = vpack.c.b16 %v1819, %v1816
      %v1850 = vpack.c.b16 %v1820, %v1817
      %v1851 = vpack.c.b16 %v1824, %v1821
      %v1852 = vpack.c.b16 %v1825, %v1822
      %v1853 = vpack.c.b16 %v1826, %v1823
      %v1873 = vsel %vm629, %v1829, 0
      %v1876 = vsel %vm629, %v1832, 0
      %v1879 = vsel %vm629, %v1835, 0
      %v1882 = vsel %vm629, %v1838, 0
      %v1885 = vsel %vm629, %v1841, 0
      %v1888 = vsel %vm629, %v1844, 0
      %v1891 = vsel %vm629, %v1847, 0
      %v1894 = vsel %vm629, %v1850, 0
      %v1897 = vsel %vm629, %v1853, 0
      %1899 = vmatprep.subr.bf16.mxu0 0
      %1900 = vmatpush1.bf16.msra.mxu0 %v593
      %1901 = vmatprep.subr.bf16.mxu0 0
      %1902 = vmatpush1.bf16.msra.mxu0 %v594
      %1903 = vmatprep.subr.bf16.mxu0 0
      %1904 = vmatpush1.bf16.msra.mxu0 %v595
      %1905 = vmatprep.subr.bf16.mxu0 0
      %1906 = vmatpush1.bf16.msra.mxu0 %v596
      %1907 = vmatprep.subr.bf16.mxu0 0
      %1908 = vmatpush1.bf16.msra.mxu0 %v597
      %1909 = vmatprep.subr.bf16.mxu0 0
      %1910 = vmatpush1.bf16.msra.mxu0 %v598
      %1911 = vmatprep.subr.bf16.mxu0 0
      %1912 = vmatpush1.bf16.msra.mxu0 %v599
      %1913 = vmatprep.subr.bf16.mxu0 0
      %1914 = vmatpush1.bf16.msra.mxu0 %v600
      %1915 = vmatprep.subr.bf16.mxu0 0
      %1916 = vmatpush1.bf16.msra.mxu0 %v601
      %1917 = vmatprep.subr.bf16.mxu0 0
      %1918 = vmatpush1.bf16.msra.mxu0 %v602
      %1919 = vmatprep.subr.bf16.mxu0 0
      %1920 = vmatpush1.bf16.msra.mxu0 %v603
      %1921 = vmatprep.subr.bf16.mxu0 0
      %1922 = vmatpush1.bf16.msra.mxu0 %v604
      %1923 = vmatprep.subr.bf16.mxu0 0
      %1924 = vmatpush1.bf16.msra.mxu0 %v605
      %1925 = vmatprep.subr.bf16.mxu0 0
      %1926 = vmatpush1.bf16.msra.mxu0 %v606
      %1927 = vmatprep.subr.bf16.mxu0 0
      %1928 = vmatpush1.bf16.msra.mxu0 %v607
      %1929 = vmatprep.subr.bf16.mxu0 0
      %1930 = vmatpush1.bf16.msra.mxu0 %v608
      %1931 = vmatprep.mubr.bf16.mxu0 %v1828
      %1932 = vmatmul.mubr.bf16.gmra.mrb[0].mxu0 %v1827
      %v1933 = vpop.f32.mrb[0].mxu0
      %v1934 = vadd.f32 0.0, %v1933
      %v1935 = vpop.f32.mrb[0].mxu0
      %v1936 = vpop.f32.mrb[0].mxu0
      %v1937 = vadd.f32 0.0, %v1936
      %v1938 = vpop.f32.mrb[0].mxu0
      %1939 = vmatprep.mubr.bf16.mxu0 %v1831
      %1940 = vmatmul.mubr.bf16.gmra.mrb[0].mxu0 %v1830
      %v1941 = vpop.f32.mrb[0].mxu0
      %v1942 = vadd.f32 0.0, %v1941
      %v1943 = vpop.f32.mrb[0].mxu0
      %v1944 = vpop.f32.mrb[0].mxu0
      %v1945 = vadd.f32 0.0, %v1944
      %v1946 = vpop.f32.mrb[0].mxu0
      %1947 = vmatprep.mubr.bf16.mxu0 %v1834
      %1948 = vmatmul.mubr.bf16.gmra.mrb[0].mxu0 %v1833
      %v1949 = vpop.f32.mrb[0].mxu0
      %v1950 = vadd.f32 0.0, %v1949
      %v1951 = vpop.f32.mrb[0].mxu0
      %v1952 = vpop.f32.mrb[0].mxu0
      %v1953 = vadd.f32 0.0, %v1952
      %v1954 = vpop.f32.mrb[0].mxu0
      %1955 = vmatprep.mubr.bf16.mxu0 %v1837
      %1956 = vmatmul.mubr.bf16.gmra.mrb[0].mxu0 %v1836
      %v1957 = vpop.f32.mrb[0].mxu0
      %v1958 = vadd.f32 0.0, %v1957
      %v1959 = vpop.f32.mrb[0].mxu0
      %v1960 = vpop.f32.mrb[0].mxu0
      %v1961 = vadd.f32 0.0, %v1960
      %v1962 = vpop.f32.mrb[0].mxu0
      %1963 = vmatprep.mubr.bf16.mxu0 %v1840
      %1964 = vmatmul.mubr.bf16.gmra.mrb[0].mxu0 %v1839
      %v1965 = vpop.f32.mrb[0].mxu0
      %v1966 = vadd.f32 0.0, %v1965
      %v1967 = vpop.f32.mrb[0].mxu0
      %v1968 = vpop.f32.mrb[0].mxu0
      %v1969 = vadd.f32 0.0, %v1968
      %v1970 = vpop.f32.mrb[0].mxu0
      %1971 = vmatprep.mubr.bf16.mxu0 %v1843
      %1972 = vmatmul.mubr.bf16.gmra.mrb[0].mxu0 %v1842
      %v1973 = vpop.f32.mrb[0].mxu0
      %v1974 = vadd.f32 0.0, %v1973
      %v1975 = vpop.f32.mrb[0].mxu0
      %v1976 = vpop.f32.mrb[0].mxu0
      %v1977 = vadd.f32 0.0, %v1976
      %v1978 = vpop.f32.mrb[0].mxu0
      %1979 = vmatprep.mubr.bf16.mxu0 %v1846
      %1980 = vmatmul.mubr.bf16.gmra.mrb[0].mxu0 %v1845
      %v1981 = vpop.f32.mrb[0].mxu0
      %v1982 = vadd.f32 0.0, %v1981
      %v1983 = vpop.f32.mrb[0].mxu0
      %v1984 = vpop.f32.mrb[0].mxu0
      %v1985 = vadd.f32 0.0, %v1984
      %v1986 = vpop.f32.mrb[0].mxu0
      %1987 = vmatprep.mubr.bf16.mxu0 %v1849
      %1988 = vmatmul.mubr.bf16.gmra.mrb[0].mxu0 %v1848
      %v1989 = vpop.f32.mrb[0].mxu0
      %v1990 = vadd.f32 0.0, %v1989
      %v1991 = vpop.f32.mrb[0].mxu0
      %v1992 = vpop.f32.mrb[0].mxu0
      %v1993 = vadd.f32 0.0, %v1992
      %v1994 = vpop.f32.mrb[0].mxu0
      %1995 = vmatprep.mubr.bf16.mxu0 %v1852
      %1996 = vmatmul.mubr.bf16.gmra.mrb[0].mxu0 %v1851
      %v1997 = vpop.f32.mrb[0].mxu0
      %v1998 = vadd.f32 0.0, %v1997
      %v1999 = vpop.f32.mrb[0].mxu0
      %v2000 = vpop.f32.mrb[0].mxu0
      %v2001 = vadd.f32 0.0, %v2000
      %v2002 = vpop.f32.mrb[0].mxu0
      %2003 = vdwg.mxu0
      %2004 = vmatprep.subr.bf16.mxu0 0
      %2005 = vmatpush1.bf16.msra.mxu0 %v609
      %2006 = vmatprep.subr.bf16.mxu0 0
      %2007 = vmatpush1.bf16.msra.mxu0 %v610
      %2008 = vmatprep.subr.bf16.mxu0 0
      %2009 = vmatpush1.bf16.msra.mxu0 0
      %2010 = vmatprep.subr.bf16.mxu0 0
      %2011 = vmatpush1.bf16.msra.mxu0 0
      %2012 = vmatprep.subr.bf16.mxu0 0
      %2013 = vmatpush1.bf16.msra.mxu0 0
      %2014 = vmatprep.subr.bf16.mxu0 0
      %2015 = vmatpush1.bf16.msra.mxu0 0
      %2016 = vmatprep.subr.bf16.mxu0 0
      %2017 = vmatpush1.bf16.msra.mxu0 0
      %2018 = vmatprep.subr.bf16.mxu0 0
      %2019 = vmatpush1.bf16.msra.mxu0 0
      %2020 = vmatprep.subr.bf16.mxu0 0
      %2021 = vmatpush1.bf16.msra.mxu0 0
      %2022 = vmatprep.subr.bf16.mxu0 0
      %2023 = vmatpush1.bf16.msra.mxu0 0
      %2024 = vmatprep.subr.bf16.mxu0 0
      %2025 = vmatpush1.bf16.msra.mxu0 0
      %2026 = vmatprep.subr.bf16.mxu0 0
      %2027 = vmatpush1.bf16.msra.mxu0 0
      %2028 = vmatprep.subr.bf16.mxu0 0
      %2029 = vmatpush1.bf16.msra.mxu0 0
      %2030 = vmatprep.subr.bf16.mxu0 0
      %2031 = vmatpush1.bf16.msra.mxu0 0
      %2032 = vmatprep.subr.bf16.mxu0 0
      %2033 = vmatpush1.bf16.msra.mxu0 0
      %2034 = vmatprep.subr.bf16.mxu0 0
      %2035 = vmatpush1.bf16.msra.mxu0 0
      %2036 = vmatprep.mubr.bf16.mxu0 0
      %2037 = vmatmul.mubr.bf16.gmra.mrb[0].mxu0 %v1873
      %v2038 = vpop.f32.mrb[0].mxu0
      %v2039 = vadd.f32 %v1934, %v2038
      %v2040 = vpop.f32.mrb[0].mxu0
      %v2041 = vpop.f32.mrb[0].mxu0
      %v2042 = vadd.f32 %v1937, %v2041
      %v2043 = vpop.f32.mrb[0].mxu0
      %2044 = vmatprep.mubr.bf16.mxu0 0
      %2045 = vmatmul.mubr.bf16.gmra.mrb[0].mxu0 %v1876
      %v2046 = vpop.f32.mrb[0].mxu0
      %v2047 = vadd.f32 %v1942, %v2046
      %v2048 = vpop.f32.mrb[0].mxu0
      %v2049 = vpop.f32.mrb[0].mxu0
      %v2050 = vadd.f32 %v1945, %v2049
      %v2051 = vpop.f32.mrb[0].mxu0
      %2052 = vmatprep.mubr.bf16.mxu0 0
      %2053 = vmatmul.mubr.bf16.gmra.mrb[0].mxu0 %v1879
      %v2054 = vpop.f32.mrb[0].mxu0
      %v2055 = vadd.f32 %v1950, %v2054
      %v2056 = vpop.f32.mrb[0].mxu0
      %v2057 = vpop.f32.mrb[0].mxu0
      %v2058 = vadd.f32 %v1953, %v2057
      %v2059 = vpop.f32.mrb[0].mxu0
      %2060 = vmatprep.mubr.bf16.mxu0 0
      %2061 = vmatmul.mubr.bf16.gmra.mrb[0].mxu0 %v1882
      %v2062 = vpop.f32.mrb[0].mxu0
      %v2063 = vadd.f32 %v1958, %v2062
      %v2064 = vpop.f32.mrb[0].mxu0
      %v2065 = vpop.f32.mrb[0].mxu0
      %v2066 = vadd.f32 %v1961, %v2065
      %v2067 = vpop.f32.mrb[0].mxu0
      %2068 = vmatprep.mubr.bf16.mxu0 0
      %2069 = vmatmul.mubr.bf16.gmra.mrb[0].mxu0 %v1885
      %v2070 = vpop.f32.mrb[0].mxu0
      %v2071 = vadd.f32 %v1966, %v2070
      %v2072 = vpop.f32.mrb[0].mxu0
      %v2073 = vpop.f32.mrb[0].mxu0
      %v2074 = vadd.f32 %v1969, %v2073
      %v2075 = vpop.f32.mrb[0].mxu0
      %2076 = vmatprep.mubr.bf16.mxu0 0
      %2077 = vmatmul.mubr.bf16.gmra.mrb[0].mxu0 %v1888
      %v2078 = vpop.f32.mrb[0].mxu0
      %v2079 = vadd.f32 %v1974, %v2078
      %v2080 = vpop.f32.mrb[0].mxu0
      %v2081 = vpop.f32.mrb[0].mxu0
      %v2082 = vadd.f32 %v1977, %v2081
      %v2083 = vpop.f32.mrb[0].mxu0
      %2084 = vmatprep.mubr.bf16.mxu0 0
      %2085 = vmatmul.mubr.bf16.gmra.mrb[0].mxu0 %v1891
      %v2086 = vpop.f32.mrb[0].mxu0
      %v2087 = vadd.f32 %v1982, %v2086
      %v2088 = vpop.f32.mrb[0].mxu0
      %v2089 = vpop.f32.mrb[0].mxu0
      %v2090 = vadd.f32 %v1985, %v2089
      %v2091 = vpop.f32.mrb[0].mxu0
      %2092 = vmatprep.mubr.bf16.mxu0 0
      %2093 = vmatmul.mubr.bf16.gmra.mrb[0].mxu0 %v1894
      %v2094 = vpop.f32.mrb[0].mxu0
      %v2095 = vadd.f32 %v1990, %v2094
      %v2096 = vpop.f32.mrb[0].mxu0
      %v2097 = vpop.f32.mrb[0].mxu0
      %v2098 = vadd.f32 %v1993, %v2097
      %v2099 = vpop.f32.mrb[0].mxu0
      %2100 = vmatprep.mubr.bf16.mxu0 0
      %2101 = vmatmul.mubr.bf16.gmra.mrb[0].mxu0 %v1897
      %v2102 = vpop.f32.mrb[0].mxu0
      %v2103 = vadd.f32 %v1998, %v2102
      %v2104 = vpop.f32.mrb[0].mxu0
      %v2105 = vpop.f32.mrb[0].mxu0
      %v2106 = vadd.f32 %v2001, %v2105
      %v2107 = vpop.f32.mrb[0].mxu0
      %2108 = vdwg.mxu0
      %v2109 = vmax.f32 %v1631, %v2039
      %v2110 = vmax.f32 %v1634, %v2042
      %v2111 = vmax.f32 %v1639, %v2047
      %v2112 = vmax.f32 %v1642, %v2050
      %v2113 = vmax.f32 %v1647, %v2055
      %v2114 = vmax.f32 %v1650, %v2058
      %v2115 = vmax.f32 %v1655, %v2063
      %v2116 = vmax.f32 %v1658, %v2066
      %v2117 = vmax.f32 %v1663, %v2071
      %v2118 = vmax.f32 %v1666, %v2074
      %v2119 = vmax.f32 %v1671, %v2079
      %v2120 = vmax.f32 %v1674, %v2082
      %v2121 = vmax.f32 %v1679, %v2087
      %v2122 = vmax.f32 %v1682, %v2090
      %v2123 = vmax.f32 %v1687, %v2095
      %v2124 = vmax.f32 %v1690, %v2098
      %v2125 = vmax.f32 %v1695, %v2103
      %v2126 = vmax.f32 %v1698, %v2106
      %v2127 = vmax.f32 %v1275, %v2109
      %v2128 = vmax.f32 %v1276, %v2110
      %v2129 = vmax.f32 %v1277, %v2111
      %v2130 = vmax.f32 %v1278, %v2112
      %v2131 = vmax.f32 %v1279, %v2113
      %v2132 = vmax.f32 %v1280, %v2114
      %v2133 = vmax.f32 %v1281, %v2115
      %v2134 = vmax.f32 %v1282, %v2116
      %v2135 = vmax.f32 %v1283, %v2117
      %v2136 = vmax.f32 %v1284, %v2118
      %v2137 = vmax.f32 %v1285, %v2119
      %v2138 = vmax.f32 %v1286, %v2120
      %v2139 = vmax.f32 %v1287, %v2121
      %v2140 = vmax.f32 %v1288, %v2122
      %v2141 = vmax.f32 %v1289, %v2123
      %v2142 = vmax.f32 %v1290, %v2124
      %v2143 = vmax.f32 %v1291, %v2125
      %v2144 = vmax.f32 %v1292, %v2126
      %v2146 = vlaneseq
      %v2147 = vshrl.u32 %v2146, 7
      %v2148 = vsub.s32 0, %v2147
      %v2149 = vrot.slane %v349, %v2148
      %v2151 = vadd.f32 %v2127, %v2149
      %v2152 = vadd.f32 %v2128, %v2149
      %v2153 = vadd.f32 %v2129, %v2149
      %v2154 = vadd.f32 %v2130, %v2149
      %v2155 = vadd.f32 %v2131, %v2149
      %v2156 = vadd.f32 %v2132, %v2149
      %v2157 = vadd.f32 %v2133, %v2149
      %v2158 = vadd.f32 %v2134, %v2149
      %v2159 = vadd.f32 %v2135, %v2149
      %v2160 = vadd.f32 %v2136, %v2149
      %v2161 = vadd.f32 %v2137, %v2149
      %v2162 = vadd.f32 %v2138, %v2149
      %v2163 = vadd.f32 %v2139, %v2149
      %v2164 = vadd.f32 %v2140, %v2149
      %v2165 = vadd.f32 %v2141, %v2149
      %v2166 = vadd.f32 %v2142, %v2149
      %v2167 = vadd.f32 %v2143, %v2149
      %v2168 = vadd.f32 %v2144, %v2149
      %v2169 = vmax.f32 %v2151, 0.0
      %v2170 = vmax.f32 %v2152, 0.0
      %v2171 = vmax.f32 %v2153, 0.0
      %v2172 = vmax.f32 %v2154, 0.0
      %v2173 = vmax.f32 %v2155, 0.0
      %v2174 = vmax.f32 %v2156, 0.0
      %v2175 = vmax.f32 %v2157, 0.0
      %v2176 = vmax.f32 %v2158, 0.0
      %v2177 = vmax.f32 %v2159, 0.0
      %v2178 = vmax.f32 %v2160, 0.0
      %v2179 = vmax.f32 %v2161, 0.0
      %v2180 = vmax.f32 %v2162, 0.0
      %v2181 = vmax.f32 %v2163, 0.0
      %v2182 = vmax.f32 %v2164, 0.0
      %v2183 = vmax.f32 %v2165, 0.0
      %v2184 = vmax.f32 %v2166, 0.0
      %v2185 = vmax.f32 %v2167, 0.0
      %v2186 = vmax.f32 %v2168, 0.0
      %v2187 = vpack.c.bf16 %v2170, %v2169
      %v2188 = vpack.c.bf16 %v2172, %v2171
      %v2189 = vpack.c.bf16 %v2174, %v2173
      %v2190 = vpack.c.bf16 %v2176, %v2175
      %v2191 = vpack.c.bf16 %v2178, %v2177
      %v2192 = vpack.c.bf16 %v2180, %v2179
      %v2193 = vpack.c.bf16 %v2182, %v2181
      %v2194 = vpack.c.bf16 %v2184, %v2183
      %v2195 = vpack.c.bf16 %v2186, %v2185
      %v2205 = vunpack.c.l.b16 %v2187
      %v2206 = vunpack.c.h.b16 %v2187
      %v2207 = vunpack.c.l.b16 %v2188
      %v2208 = vunpack.c.h.b16 %v2188
      %v2209 = vunpack.c.l.b16 %v2189
      %v2210 = vunpack.c.h.b16 %v2189
      %v2211 = vunpack.c.l.b16 %v2190
      %v2212 = vunpack.c.h.b16 %v2190
      %v2213 = vunpack.c.l.b16 %v2191
      %v2214 = vunpack.c.h.b16 %v2191
      %v2215 = vunpack.c.l.b16 %v2192
      %v2216 = vunpack.c.h.b16 %v2192
      %v2217 = vunpack.c.l.b16 %v2193
      %v2218 = vunpack.c.h.b16 %v2193
      %v2219 = vunpack.c.l.b16 %v2194
      %v2220 = vunpack.c.h.b16 %v2194
      %v2221 = vunpack.c.l.b16 %v2195
      %v2222 = vunpack.c.h.b16 %v2195
      %v2223 = vpack.c.b16 %v2205, %v2205
      %v2224 = vpack.c.b16 %v2206, %v2206
      %v2225 = vpack.c.b16 %v2207, %v2207
      %v2226 = vpack.c.b16 %v2208, %v2208
      %v2227 = vpack.c.b16 %v2209, %v2209
      %v2228 = vpack.c.b16 %v2210, %v2210
      %v2229 = vpack.c.b16 %v2211, %v2211
      %v2230 = vpack.c.b16 %v2212, %v2212
      %v2231 = vpack.c.b16 %v2213, %v2213
      %v2232 = vpack.c.b16 %v2214, %v2214
      %v2233 = vpack.c.b16 %v2215, %v2215
      %v2234 = vpack.c.b16 %v2216, %v2216
      %v2235 = vpack.c.b16 %v2217, %v2217
      %v2236 = vpack.c.b16 %v2218, %v2218
      %v2237 = vpack.c.b16 %v2219, %v2219
      %v2238 = vpack.c.b16 %v2220, %v2220
      %v2239 = vpack.c.b16 %v2221, %v2221
      %v2240 = vpack.c.b16 %v2222, %v2222
      %vm2259 = vcmask 519168
      %2260 = vst.msk [vmem:[%s311] sm:$0xf] %vm2259, %v2223
      %2261 = vst.msk [vmem:[%s311 + $0x4] sm:$0xf] %vm2259, %v2224
      %2262 = vst.msk [vmem:[%s311 + $0x8] sm:$0xf] %vm2259, %v2225
      %2263 = vst.msk [vmem:[%s311 + $0xc] sm:$0xf] %vm2259, %v2226
      %2264 = vst.msk [vmem:[%s311 + $0x10] sm:$0xf] %vm2259, %v2227
      %2265 = vst.msk [vmem:[%s311 + $0x14] sm:$0xf] %vm2259, %v2228
      %2266 = vst.msk [vmem:[%s311 + $0x18] sm:$0xf] %vm2259, %v2229
      %2267 = vst.msk [vmem:[%s311 + $0x1c] sm:$0xf] %vm2259, %v2230
      %2268 = vst.msk [vmem:[%s311 + $0x20] sm:$0xf] %vm2259, %v2231
      %2269 = vst.msk [vmem:[%s311 + $0x24] sm:$0xf] %vm2259, %v2232
      %2270 = vst.msk [vmem:[%s311 + $0x28] sm:$0xf] %vm2259, %v2233
      %2271 = vst.msk [vmem:[%s311 + $0x2c] sm:$0xf] %vm2259, %v2234
      %2272 = vst.msk [vmem:[%s311 + $0x30] sm:$0xf] %vm2259, %v2235
      %2273 = vst.msk [vmem:[%s311 + $0x34] sm:$0xf] %vm2259, %v2236
      %2274 = vst.msk [vmem:[%s311 + $0x38] sm:$0xf] %vm2259, %v2237
      %2275 = vst.msk [vmem:[%s311 + $0x3c] sm:$0xf] %vm2259, %v2238
      %2276 = vst.msk [vmem:[%s311 + $0x40] sm:$0xf] %vm2259, %v2239
      %2277 = vst.msk [vmem:[%s311 + $0x44] sm:$0xf] %vm2259, %v2240
      %p2278 = scmp.lt.s32.totalorder %s17, 1
      %s2279 = scalar_select %p2278, %s17, 1
      %s2280 = smul.addr %s2279, 18
      %s2281 = smul.addr %s2280, 4
      %s2282 = scalar_lea.vmem %s6, %s2281
      // Predicated region
      $region45: #{lnsnet_forward.4} parent=43 // pred_check
        %p2283 = pneg %p181
      $region46: #{lnsnet_forward.4} parent=43 // pred_check_branch
        %2285 = sbr.rel (%p2283) target = $region48
      $region47: #{lnsnet_forward.4} parent=43 // pred_region
        _
      $region48: #{lnsnet_forward.4} parent=43 // pred_fallthru
        _
    $region44: #{lnsnet_forward.4} parent=5 // pred_fallthru
      _
    %p2286 = scmp.le.s32.totalorder 2, %s12
    // Predicated region
    $region49: #{lnsnet_forward.4} parent=5 // pred_check
      %p2287 = pneg %p2286
    $region50: #{lnsnet_forward.4} parent=5 // pred_check_branch
      %2289 = sbr.rel (%p2287) target = $region52
    $region51: #{lnsnet_forward.4} parent=5 // pred_region
      %s2290 = ssub.s32 %s12, 2
      // Predicated region
      $region53: #{lnsnet_forward.4} parent=51 // pred_check
        %p2291 = pneg %p187
      $region54: #{lnsnet_forward.4} parent=51 // pred_check_branch
        %2293 = sbr.rel (%p2291) target = $region56
      $region55: #{lnsnet_forward.4} parent=51 // pred_region
        %p2294 = scmp.lt.s32.totalorder %s18, 1
        %s2295 = scalar_select %p2294, %s18, 1
        %s2296 = smul.addr %s2295, 18
        %s2297 = smul.addr %s2296, 4
        %s2298 = scalar_lea.vmem %s6, %s2297
      $region56: #{lnsnet_forward.4} parent=51 // pred_fallthru
        _
    $region52: #{lnsnet_forward.4} parent=5 // pred_fallthru
      _
  $region6: #{lnsnet_forward.4} parent=0 // loop_footer
    %s16 = sadd.s32 1, %s12
  $region7: #{lnsnet_forward.4} parent=0 // loop_footer_branch
    %11 = sbr.rel target = $region3
  $region8: #{lnsnet_forward.4} parent=0 // loop_exit
    _

// kernel: lnsnet_forward.5
$region0: #{lnsnet_forward.5}
  #allocation0 [shape = 'u32[]', space=smem, size = 0x4, offset = 0x4, fixed_abs, tag = 'smem constant byte address 0x4 - core index']
  #allocation1 [shape = 'u32[144,128]{1,0:T(1,128)}', space=vmem, size = 0x12000, scoped, tag = 'internal scratch']
  %s0 = inlined_call_operand.vmem [shape: bf16[2,9216], index: 0, kind: input, shape index: {}]
  %s1 = inlined_call_operand.vmem [shape: bf16[9216,128], index: 1, kind: input, shape index: {}]
  %s2 = inlined_call_operand.vmem [shape: f32[1,128], index: 2, kind: input, shape index: {}]
  %s3 = inlined_call_operand.vmem [shape: bf16[128,10], index: 3, kind: input, shape index: {}]
  %s4 = inlined_call_operand.vmem [shape: f32[1,10], index: 4, kind: input, shape index: {}]
  %s5 = inlined_call_operand.hbm [shape: f32[2,10], index: 5, kind: output, shape index: {}]
  %s6 = sld [smem:[#allocation0]]
  $region30: #{lnsnet_forward.5} parent=0
    _
  %s8 = ssub.s32 1, %s6
  %s9 = scalar_select 0, %s8, %s6
  $region1: #{lnsnet_forward.5} parent=0
    #allocation2 [shape = 'u8[1024]{0}', space=vmem, size = 0x400, scoped, tag = 'output window, operand 0, single buffered']
    #allocation3 [shape = 's32[1]{0}', space=sflag, size = 0x4, scoped, tag = 'scoped memory for lnsnet_forward.5']
    %10 = vsyncpa [#allocation3], 0
    // Predicated region
    $region2: #{lnsnet_forward.5} parent=1 // pred_check
      _
    $region3: #{lnsnet_forward.5} parent=1 // pred_check_branch
      %12 = sbr.rel (0) target = $region5
    $region4: #{lnsnet_forward.5} parent=1 // pred_region
      _
    $region5: #{lnsnet_forward.5} parent=1 // pred_fallthru
      _
    // Predicated region
    $region6: #{lnsnet_forward.5} parent=1 // pred_check
      _
    $region7: #{lnsnet_forward.5} parent=1 // pred_check_branch
      %14 = sbr.rel (0) target = $region9
    $region8: #{lnsnet_forward.5} parent=1 // pred_region
      _
    $region9: #{lnsnet_forward.5} parent=1 // pred_fallthru
      _
    // Predicated region
    $region10: #{lnsnet_forward.5} parent=1 // pred_check
      _
    $region11: #{lnsnet_forward.5} parent=1 // pred_check_branch
      %16 = sbr.rel (0) target = $region13
    $region12: #{lnsnet_forward.5} parent=1 // pred_region
      _
    $region13: #{lnsnet_forward.5} parent=1 // pred_fallthru
      _
    // Predicated region
    $region14: #{lnsnet_forward.5} parent=1 // pred_check
      _
    $region15: #{lnsnet_forward.5} parent=1 // pred_check_branch
      %18 = sbr.rel (0) target = $region17
    $region16: #{lnsnet_forward.5} parent=1 // pred_region
      _
    $region17: #{lnsnet_forward.5} parent=1 // pred_fallthru
      _
    // Predicated region
    $region18: #{lnsnet_forward.5} parent=1 // pred_check
      _
    $region19: #{lnsnet_forward.5} parent=1 // pred_check_branch
      %20 = sbr.rel (0) target = $region21
    $region20: #{lnsnet_forward.5} parent=1 // pred_region
      _
    $region21: #{lnsnet_forward.5} parent=1 // pred_fallthru
      _
    %v22 = vld [vmem:[%s0] sm:$0xff]
    %v23 = vld [vmem:[%s0 + $0x8] sm:$0xff]
    %v24 = vld [vmem:[%s0 + $0x10] sm:$0xff]
    %v25 = vld [vmem:[%s0 + $0x18] sm:$0xff]
    %v26 = vld [vmem:[%s0 + $0x20] sm:$0xff]
    %v27 = vld [vmem:[%s0 + $0x28] sm:$0xff]
    %v28 = vld [vmem:[%s0 + $0x30] sm:$0xff]
    %v29 = vld [vmem:[%s0 + $0x38] sm:$0xff]
    %v30 = vld [vmem:[%s0 + $0x40] sm:$0xff]
    %v31 = vld [vmem:[%s1] sm:$0xf]
    %v32 = vld [vmem:[%s1 + $0x4] sm:$0xf]
    %v33 = vld [vmem:[%s1 + $0x8] sm:$0xf]
    %v34 = vld [vmem:[%s1 + $0xc] sm:$0xf]
    %v35 = vld [vmem:[%s1 + $0x10] sm:$0xf]
    %v36 = vld [vmem:[%s1 + $0x14] sm:$0xf]
    %v37 = vld [vmem:[%s1 + $0x18] sm:$0xf]
    %v38 = vld [vmem:[%s1 + $0x1c] sm:$0xf]
    %v39 = vld [vmem:[%s1 + $0x20] sm:$0xf]
    %v40 = vld [vmem:[%s1 + $0x24] sm:$0xf]
    %v41 = vld [vmem:[%s1 + $0x28] sm:$0xf]
    %v42 = vld [vmem:[%s1 + $0x2c] sm:$0xf]
    %v43 = vld [vmem:[%s1 + $0x30] sm:$0xf]
    %v44 = vld [vmem:[%s1 + $0x34] sm:$0xf]
    %v45 = vld [vmem:[%s1 + $0x38] sm:$0xf]
    %v46 = vld [vmem:[%s1 + $0x3c] sm:$0xf]
    %v47 = vld [vmem:[%s1 + $0x40] sm:$0xf]
    %v48 = vld [vmem:[%s1 + $0x44] sm:$0xf]
    %v49 = vld [vmem:[%s1 + $0x48] sm:$0xf]
    %v50 = vld [vmem:[%s1 + $0x4c] sm:$0xf]
    %v51 = vld [vmem:[%s1 + $0x50] sm:$0xf]
    %v52 = vld [vmem:[%s1 + $0x54] sm:$0xf]
    %v53 = vld [vmem:[%s1 + $0x58] sm:$0xf]
    %v54 = vld [vmem:[%s1 + $0x5c] sm:$0xf]
    %v55 = vld [vmem:[%s1 + $0x60] sm:$0xf]
    %v56 = vld [vmem:[%s1 + $0x64] sm:$0xf]
    %v57 = vld [vmem:[%s1 + $0x68] sm:$0xf]
    %v58 = vld [vmem:[%s1 + $0x6c] sm:$0xf]
    %v59 = vld [vmem:[%s1 + $0x70] sm:$0xf]
    %v60 = vld [vmem:[%s1 + $0x74] sm:$0xf]
    %v61 = vld [vmem:[%s1 + $0x78] sm:$0xf]
    %v62 = vld [vmem:[%s1 + $0x7c] sm:$0xf]
    %v63 = vld [vmem:[%s1 + $0x80] sm:$0xf]
    %v64 = vld [vmem:[%s1 + $0x84] sm:$0xf]
    %v65 = vld [vmem:[%s1 + $0x88] sm:$0xf]
    %v66 = vld [vmem:[%s1 + $0x8c] sm:$0xf]
    %v67 = vld [vmem:[%s1 + $0x90] sm:$0xf]
    %v68 = vld [vmem:[%s1 + $0x94] sm:$0xf]
    %v69 = vld [vmem:[%s1 + $0x98] sm:$0xf]
    %v70 = vld [vmem:[%s1 + $0x9c] sm:$0xf]
    %v71 = vld [vmem:[%s1 + $0xa0] sm:$0xf]
    %v72 = vld [vmem:[%s1 + $0xa4] sm:$0xf]
    %v73 = vld [vmem:[%s1 + $0xa8] sm:$0xf]
    %v74 = vld [vmem:[%s1 + $0xac] sm:$0xf]
    %v75 = vld [vmem:[%s1 + $0xb0] sm:$0xf]
    %v76 = vld [vmem:[%s1 + $0xb4] sm:$0xf]
    %v77 = vld [vmem:[%s1 + $0xb8] sm:$0xf]
    %v78 = vld [vmem:[%s1 + $0xbc] sm:$0xf]
    %v79 = vld [vmem:[%s1 + $0xc0] sm:$0xf]
    %v80 = vld [vmem:[%s1 + $0xc4] sm:$0xf]
    %v81 = vld [vmem:[%s1 + $0xc8] sm:$0xf]
    %v82 = vld [vmem:[%s1 + $0xcc] sm:$0xf]
    %v83 = vld [vmem:[%s1 + $0xd0] sm:$0xf]
    %v84 = vld [vmem:[%s1 + $0xd4] sm:$0xf]
    %v85 = vld [vmem:[%s1 + $0xd8] sm:$0xf]
    %v86 = vld [vmem:[%s1 + $0xdc] sm:$0xf]
    %v87 = vld [vmem:[%s1 + $0xe0] sm:$0xf]
    %v88 = vld [vmem:[%s1 + $0xe4] sm:$0xf]
    %v89 = vld [vmem:[%s1 + $0xe8] sm:$0xf]
    %v90 = vld [vmem:[%s1 + $0xec] sm:$0xf]
    %v91 = vld [vmem:[%s1 + $0xf0] sm:$0xf]
    %v92 = vld [vmem:[%s1 + $0xf4] sm:$0xf]
    %v93 = vld [vmem:[%s1 + $0xf8] sm:$0xf]
    %v94 = vld [vmem:[%s1 + $0xfc] sm:$0xf]
    %v95 = vld [vmem:[%s1 + $0x100] sm:$0xf]
    %v96 = vld [vmem:[%s1 + $0x104] sm:$0xf]
    %v97 = vld [vmem:[%s1 + $0x108] sm:$0xf]
    %v98 = vld [vmem:[%s1 + $0x10c] sm:$0xf]
    %v99 = vld [vmem:[%s1 + $0x110] sm:$0xf]
    %v100 = vld [vmem:[%s1 + $0x114] sm:$0xf]
    %v101 = vld [vmem:[%s1 + $0x118] sm:$0xf]
    %v102 = vld [vmem:[%s1 + $0x11c] sm:$0xf]
    %v103 = vld [vmem:[%s1 + $0x120] sm:$0xf]
    %v104 = vld [vmem:[%s1 + $0x124] sm:$0xf]
    %v105 = vld [vmem:[%s1 + $0x128] sm:$0xf]
    %v106 = vld [vmem:[%s1 + $0x12c] sm:$0xf]
    %v107 = vld [vmem:[%s1 + $0x130] sm:$0xf]
    %v108 = vld [vmem:[%s1 + $0x134] sm:$0xf]
    %v109 = vld [vmem:[%s1 + $0x138] sm:$0xf]
    %v110 = vld [vmem:[%s1 + $0x13c] sm:$0xf]
    %v111 = vld [vmem:[%s1 + $0x140] sm:$0xf]
    %v112 = vld [vmem:[%s1 + $0x144] sm:$0xf]
    %v113 = vld [vmem:[%s1 + $0x148] sm:$0xf]
    %v114 = vld [vmem:[%s1 + $0x14c] sm:$0xf]
    %v115 = vld [vmem:[%s1 + $0x150] sm:$0xf]
    %v116 = vld [vmem:[%s1 + $0x154] sm:$0xf]
    %v117 = vld [vmem:[%s1 + $0x158] sm:$0xf]
    %v118 = vld [vmem:[%s1 + $0x15c] sm:$0xf]
    %v119 = vld [vmem:[%s1 + $0x160] sm:$0xf]
    %v120 = vld [vmem:[%s1 + $0x164] sm:$0xf]
    %v121 = vld [vmem:[%s1 + $0x168] sm:$0xf]
    %v122 = vld [vmem:[%s1 + $0x16c] sm:$0xf]
    %v123 = vld [vmem:[%s1 + $0x170] sm:$0xf]
    %v124 = vld [vmem:[%s1 + $0x174] sm:$0xf]
    %v125 = vld [vmem:[%s1 + $0x178] sm:$0xf]
    %v126 = vld [vmem:[%s1 + $0x17c] sm:$0xf]
    %v127 = vld [vmem:[%s1 + $0x180] sm:$0xf]
    %v128 = vld [vmem:[%s1 + $0x184] sm:$0xf]
    %v129 = vld [vmem:[%s1 + $0x188] sm:$0xf]
    %v130 = vld [vmem:[%s1 + $0x18c] sm:$0xf]
    %v131 = vld [vmem:[%s1 + $0x190] sm:$0xf]
    %v132 = vld [vmem:[%s1 + $0x194] sm:$0xf]
    %v133 = vld [vmem:[%s1 + $0x198] sm:$0xf]
    %v134 = vld [vmem:[%s1 + $0x19c] sm:$0xf]
    %v135 = vld [vmem:[%s1 + $0x1a0] sm:$0xf]
    %v136 = vld [vmem:[%s1 + $0x1a4] sm:$0xf]
    %v137 = vld [vmem:[%s1 + $0x1a8] sm:$0xf]
    %v138 = vld [vmem:[%s1 + $0x1ac] sm:$0xf]
    %v139 = vld [vmem:[%s1 + $0x1b0] sm:$0xf]
    %v140 = vld [vmem:[%s1 + $0x1b4] sm:$0xf]
    %v141 = vld [vmem:[%s1 + $0x1b8] sm:$0xf]
    %v142 = vld [vmem:[%s1 + $0x1bc] sm:$0xf]
    %v143 = vld [vmem:[%s1 + $0x1c0] sm:$0xf]
    %v144 = vld [vmem:[%s1 + $0x1c4] sm:$0xf]
    %v145 = vld [vmem:[%s1 + $0x1c8] sm:$0xf]
    %v146 = vld [vmem:[%s1 + $0x1cc] sm:$0xf]
    %v147 = vld [vmem:[%s1 + $0x1d0] sm:$0xf]
    %v148 = vld [vmem:[%s1 + $0x1d4] sm:$0xf]
    %v149 = vld [vmem:[%s1 + $0x1d8] sm:$0xf]
    %v150 = vld [vmem:[%s1 + $0x1dc] sm:$0xf]
    %v151 = vld [vmem:[%s1 + $0x1e0] sm:$0xf]
    %v152 = vld [vmem:[%s1 + $0x1e4] sm:$0xf]
    %v153 = vld [vmem:[%s1 + $0x1e8] sm:$0xf]
    %v154 = vld [vmem:[%s1 + $0x1ec] sm:$0xf]
    %v155 = vld [vmem:[%s1 + $0x1f0] sm:$0xf]
    %v156 = vld [vmem:[%s1 + $0x1f4] sm:$0xf]
    %v157 = vld [vmem:[%s1 + $0x1f8] sm:$0xf]
    %v158 = vld [vmem:[%s1 + $0x1fc] sm:$0xf]
    %v159 = vld [vmem:[%s1 + $0x200] sm:$0xf]
    %v160 = vld [vmem:[%s1 + $0x204] sm:$0xf]
    %v161 = vld [vmem:[%s1 + $0x208] sm:$0xf]
    %v162 = vld [vmem:[%s1 + $0x20c] sm:$0xf]
    %v163 = vld [vmem:[%s1 + $0x210] sm:$0xf]
    %v164 = vld [vmem:[%s1 + $0x214] sm:$0xf]
    %v165 = vld [vmem:[%s1 + $0x218] sm:$0xf]
    %v166 = vld [vmem:[%s1 + $0x21c] sm:$0xf]
    %v167 = vld [vmem:[%s1 + $0x220] sm:$0xf]
    %v168 = vld [vmem:[%s1 + $0x224] sm:$0xf]
    %v169 = vld [vmem:[%s1 + $0x228] sm:$0xf]
    %v170 = vld [vmem:[%s1 + $0x22c] sm:$0xf]
    %v171 = vld [vmem:[%s1 + $0x230] sm:$0xf]
    %v172 = vld [vmem:[%s1 + $0x234] sm:$0xf]
    %v173 = vld [vmem:[%s1 + $0x238] sm:$0xf]
    %v174 = vld [vmem:[%s1 + $0x23c] sm:$0xf]
    %v175 = vld [vmem:[%s1 + $0x240] sm:$0xf]
    %v176 = vld [vmem:[%s1 + $0x244] sm:$0xf]
    %v177 = vld [vmem:[%s1 + $0x248] sm:$0xf]
    %v178 = vld [vmem:[%s1 + $0x24c] sm:$0xf]
    %v179 = vld [vmem:[%s1 + $0x250] sm:$0xf]
    %v180 = vld [vmem:[%s1 + $0x254] sm:$0xf]
    %v181 = vld [vmem:[%s1 + $0x258] sm:$0xf]
    %v182 = vld [vmem:[%s1 + $0x25c] sm:$0xf]
    %v183 = vld [vmem:[%s1 + $0x260] sm:$0xf]
    %v184 = vld [vmem:[%s1 + $0x264] sm:$0xf]
    %v185 = vld [vmem:[%s1 + $0x268] sm:$0xf]
    %v186 = vld [vmem:[%s1 + $0x26c] sm:$0xf]
    %v187 = vld [vmem:[%s1 + $0x270] sm:$0xf]
    %v188 = vld [vmem:[%s1 + $0x274] sm:$0xf]
    %v189 = vld [vmem:[%s1 + $0x278] sm:$0xf]
    %v190 = vld [vmem:[%s1 + $0x27c] sm:$0xf]
    %v191 = vld [vmem:[%s1 + $0x280] sm:$0xf]
    %v192 = vld [vmem:[%s1 + $0x284] sm:$0xf]
    %v193 = vld [vmem:[%s1 + $0x288] sm:$0xf]
    %v194 = vld [vmem:[%s1 + $0x28c] sm:$0xf]
    %v195 = vld [vmem:[%s1 + $0x290] sm:$0xf]
    %v196 = vld [vmem:[%s1 + $0x294] sm:$0xf]
    %v197 = vld [vmem:[%s1 + $0x298] sm:$0xf]
    %v198 = vld [vmem:[%s1 + $0x29c] sm:$0xf]
    %v199 = vld [vmem:[%s1 + $0x2a0] sm:$0xf]
    %v200 = vld [vmem:[%s1 + $0x2a4] sm:$0xf]
    %v201 = vld [vmem:[%s1 + $0x2a8] sm:$0xf]
    %v202 = vld [vmem:[%s1 + $0x2ac] sm:$0xf]
    %v203 = vld [vmem:[%s1 + $0x2b0] sm:$0xf]
    %v204 = vld [vmem:[%s1 + $0x2b4] sm:$0xf]
    %v205 = vld [vmem:[%s1 + $0x2b8] sm:$0xf]
    %v206 = vld [vmem:[%s1 + $0x2bc] sm:$0xf]
    %v207 = vld [vmem:[%s1 + $0x2c0] sm:$0xf]
    %v208 = vld [vmem:[%s1 + $0x2c4] sm:$0xf]
    %v209 = vld [vmem:[%s1 + $0x2c8] sm:$0xf]
    %v210 = vld [vmem:[%s1 + $0x2cc] sm:$0xf]
    %v211 = vld [vmem:[%s1 + $0x2d0] sm:$0xf]
    %v212 = vld [vmem:[%s1 + $0x2d4] sm:$0xf]
    %v213 = vld [vmem:[%s1 + $0x2d8] sm:$0xf]
    %v214 = vld [vmem:[%s1 + $0x2dc] sm:$0xf]
    %v215 = vld [vmem:[%s1 + $0x2e0] sm:$0xf]
    %v216 = vld [vmem:[%s1 + $0x2e4] sm:$0xf]
    %v217 = vld [vmem:[%s1 + $0x2e8] sm:$0xf]
    %v218 = vld [vmem:[%s1 + $0x2ec] sm:$0xf]
    %v219 = vld [vmem:[%s1 + $0x2f0] sm:$0xf]
    %v220 = vld [vmem:[%s1 + $0x2f4] sm:$0xf]
    %v221 = vld [vmem:[%s1 + $0x2f8] sm:$0xf]
    %v222 = vld [vmem:[%s1 + $0x2fc] sm:$0xf]
    %v223 = vld [vmem:[%s1 + $0x300] sm:$0xf]
    %v224 = vld [vmem:[%s1 + $0x304] sm:$0xf]
    %v225 = vld [vmem:[%s1 + $0x308] sm:$0xf]
    %v226 = vld [vmem:[%s1 + $0x30c] sm:$0xf]
    %v227 = vld [vmem:[%s1 + $0x310] sm:$0xf]
    %v228 = vld [vmem:[%s1 + $0x314] sm:$0xf]
    %v229 = vld [vmem:[%s1 + $0x318] sm:$0xf]
    %v230 = vld [vmem:[%s1 + $0x31c] sm:$0xf]
    %v231 = vld [vmem:[%s1 + $0x320] sm:$0xf]
    %v232 = vld [vmem:[%s1 + $0x324] sm:$0xf]
    %v233 = vld [vmem:[%s1 + $0x328] sm:$0xf]
    %v234 = vld [vmem:[%s1 + $0x32c] sm:$0xf]
    %v235 = vld [vmem:[%s1 + $0x330] sm:$0xf]
    %v236 = vld [vmem:[%s1 + $0x334] sm:$0xf]
    %v237 = vld [vmem:[%s1 + $0x338] sm:$0xf]
    %v238 = vld [vmem:[%s1 + $0x33c] sm:$0xf]
    %v239 = vld [vmem:[%s1 + $0x340] sm:$0xf]
    %v240 = vld [vmem:[%s1 + $0x344] sm:$0xf]
    %v241 = vld [vmem:[%s1 + $0x348] sm:$0xf]
    %v242 = vld [vmem:[%s1 + $0x34c] sm:$0xf]
    %v243 = vld [vmem:[%s1 + $0x350] sm:$0xf]
    %v244 = vld [vmem:[%s1 + $0x354] sm:$0xf]
    %v245 = vld [vmem:[%s1 + $0x358] sm:$0xf]
    %v246 = vld [vmem:[%s1 + $0x35c] sm:$0xf]
    %v247 = vld [vmem:[%s1 + $0x360] sm:$0xf]
    %v248 = vld [vmem:[%s1 + $0x364] sm:$0xf]
    %v249 = vld [vmem:[%s1 + $0x368] sm:$0xf]
    %v250 = vld [vmem:[%s1 + $0x36c] sm:$0xf]
    %v251 = vld [vmem:[%s1 + $0x370] sm:$0xf]
    %v252 = vld [vmem:[%s1 + $0x374] sm:$0xf]
    %v253 = vld [vmem:[%s1 + $0x378] sm:$0xf]
    %v254 = vld [vmem:[%s1 + $0x37c] sm:$0xf]
    %v255 = vld [vmem:[%s1 + $0x380] sm:$0xf]
    %v256 = vld [vmem:[%s1 + $0x384] sm:$0xf]
    %v257 = vld [vmem:[%s1 + $0x388] sm:$0xf]
    %v258 = vld [vmem:[%s1 + $0x38c] sm:$0xf]
    %v259 = vld [vmem:[%s1 + $0x390] sm:$0xf]
    %v260 = vld [vmem:[%s1 + $0x394] sm:$0xf]
    %v261 = vld [vmem:[%s1 + $0x398] sm:$0xf]
    %v262 = vld [vmem:[%s1 + $0x39c] sm:$0xf]
    %v263 = vld [vmem:[%s1 + $0x3a0] sm:$0xf]
    %v264 = vld [vmem:[%s1 + $0x3a4] sm:$0xf]
    %v265 = vld [vmem:[%s1 + $0x3a8] sm:$0xf]
    %v266 = vld [vmem:[%s1 + $0x3ac] sm:$0xf]
    %v267 = vld [vmem:[%s1 + $0x3b0] sm:$0xf]
    %v268 = vld [vmem:[%s1 + $0x3b4] sm:$0xf]
    %v269 = vld [vmem:[%s1 + $0x3b8] sm:$0xf]
    %v270 = vld [vmem:[%s1 + $0x3bc] sm:$0xf]
    %v271 = vld [vmem:[%s1 + $0x3c0] sm:$0xf]
    %v272 = vld [vmem:[%s1 + $0x3c4] sm:$0xf]
    %v273 = vld [vmem:[%s1 + $0x3c8] sm:$0xf]
    %v274 = vld [vmem:[%s1 + $0x3cc] sm:$0xf]
    %v275 = vld [vmem:[%s1 + $0x3d0] sm:$0xf]
    %v276 = vld [vmem:[%s1 + $0x3d4] sm:$0xf]
    %v277 = vld [vmem:[%s1 + $0x3d8] sm:$0xf]
    %v278 = vld [vmem:[%s1 + $0x3dc] sm:$0xf]
    %v279 = vld [vmem:[%s1 + $0x3e0] sm:$0xf]
    %v280 = vld [vmem:[%s1 + $0x3e4] sm:$0xf]
    %v281 = vld [vmem:[%s1 + $0x3e8] sm:$0xf]
    %v282 = vld [vmem:[%s1 + $0x3ec] sm:$0xf]
    %v283 = vld [vmem:[%s1 + $0x3f0] sm:$0xf]
    %v284 = vld [vmem:[%s1 + $0x3f4] sm:$0xf]
    %v285 = vld [vmem:[%s1 + $0x3f8] sm:$0xf]
    %v286 = vld [vmem:[%s1 + $0x3fc] sm:$0xf]
    %v287 = vld [vmem:[%s1 + $0x400] sm:$0xf]
    %v288 = vld [vmem:[%s1 + $0x404] sm:$0xf]
    %v289 = vld [vmem:[%s1 + $0x408] sm:$0xf]
    %v290 = vld [vmem:[%s1 + $0x40c] sm:$0xf]
    %v291 = vld [vmem:[%s1 + $0x410] sm:$0xf]
    %v292 = vld [vmem:[%s1 + $0x414] sm:$0xf]
    %v293 = vld [vmem:[%s1 + $0x418] sm:$0xf]
    %v294 = vld [vmem:[%s1 + $0x41c] sm:$0xf]
    %v295 = vld [vmem:[%s1 + $0x420] sm:$0xf]
    %v296 = vld [vmem:[%s1 + $0x424] sm:$0xf]
    %v297 = vld [vmem:[%s1 + $0x428] sm:$0xf]
    %v298 = vld [vmem:[%s1 + $0x42c] sm:$0xf]
    %v299 = vld [vmem:[%s1 + $0x430] sm:$0xf]
    %v300 = vld [vmem:[%s1 + $0x434] sm:$0xf]
    %v301 = vld [vmem:[%s1 + $0x438] sm:$0xf]
    %v302 = vld [vmem:[%s1 + $0x43c] sm:$0xf]
    %v303 = vld [vmem:[%s1 + $0x440] sm:$0xf]
    %v304 = vld [vmem:[%s1 + $0x444] sm:$0xf]
    %v305 = vld [vmem:[%s1 + $0x448] sm:$0xf]
    %v306 = vld [vmem:[%s1 + $0x44c] sm:$0xf]
    %v307 = vld [vmem:[%s1 + $0x450] sm:$0xf]
    %v308 = vld [vmem:[%s1 + $0x454] sm:$0xf]
    %v309 = vld [vmem:[%s1 + $0x458] sm:$0xf]
    %v310 = vld [vmem:[%s1 + $0x45c] sm:$0xf]
    %v311 = vld [vmem:[%s1 + $0x460] sm:$0xf]
    %v312 = vld [vmem:[%s1 + $0x464] sm:$0xf]
    %v313 = vld [vmem:[%s1 + $0x468] sm:$0xf]
    %v314 = vld [vmem:[%s1 + $0x46c] sm:$0xf]
    %v315 = vld [vmem:[%s1 + $0x470] sm:$0xf]
    %v316 = vld [vmem:[%s1 + $0x474] sm:$0xf]
    %v317 = vld [vmem:[%s1 + $0x478] sm:$0xf]
    %v318 = vld [vmem:[%s1 + $0x47c] sm:$0xf]
    %v319 = vld [vmem:[%s1 + $0x480] sm:$0xf]
    %v320 = vld [vmem:[%s1 + $0x484] sm:$0xf]
    %v321 = vld [vmem:[%s1 + $0x488] sm:$0xf]
    %v322 = vld [vmem:[%s1 + $0x48c] sm:$0xf]
    %v323 = vld [vmem:[%s1 + $0x490] sm:$0xf]
    %v324 = vld [vmem:[%s1 + $0x494] sm:$0xf]
    %v325 = vld [vmem:[%s1 + $0x498] sm:$0xf]
    %v326 = vld [vmem:[%s1 + $0x49c] sm:$0xf]
    %v327 = vld [vmem:[%s1 + $0x4a0] sm:$0xf]
    %v328 = vld [vmem:[%s1 + $0x4a4] sm:$0xf]
    %v329 = vld [vmem:[%s1 + $0x4a8] sm:$0xf]
    %v330 = vld [vmem:[%s1 + $0x4ac] sm:$0xf]
    %v331 = vld [vmem:[%s1 + $0x4b0] sm:$0xf]
    %v332 = vld [vmem:[%s1 + $0x4b4] sm:$0xf]
    %v333 = vld [vmem:[%s1 + $0x4b8] sm:$0xf]
    %v334 = vld [vmem:[%s1 + $0x4bc] sm:$0xf]
    %v335 = vld [vmem:[%s1 + $0x4c0] sm:$0xf]
    %v336 = vld [vmem:[%s1 + $0x4c4] sm:$0xf]
    %v337 = vld [vmem:[%s1 + $0x4c8] sm:$0xf]
    %v338 = vld [vmem:[%s1 + $0x4cc] sm:$0xf]
    %v339 = vld [vmem:[%s1 + $0x4d0] sm:$0xf]
    %v340 = vld [vmem:[%s1 + $0x4d4] sm:$0xf]
    %v341 = vld [vmem:[%s1 + $0x4d8] sm:$0xf]
    %v342 = vld [vmem:[%s1 + $0x4dc] sm:$0xf]
    %v343 = vld [vmem:[%s1 + $0x4e0] sm:$0xf]
    %v344 = vld [vmem:[%s1 + $0x4e4] sm:$0xf]
    %v345 = vld [vmem:[%s1 + $0x4e8] sm:$0xf]
    %v346 = vld [vmem:[%s1 + $0x4ec] sm:$0xf]
    %v347 = vld [vmem:[%s1 + $0x4f0] sm:$0xf]
    %v348 = vld [vmem:[%s1 + $0x4f4] sm:$0xf]
    %v349 = vld [vmem:[%s1 + $0x4f8] sm:$0xf]
    %v350 = vld [vmem:[%s1 + $0x4fc] sm:$0xf]
    %v351 = vld [vmem:[%s1 + $0x500] sm:$0xf]
    %v352 = vld [vmem:[%s1 + $0x504] sm:$0xf]
    %v353 = vld [vmem:[%s1 + $0x508] sm:$0xf]
    %v354 = vld [vmem:[%s1 + $0x50c] sm:$0xf]
    %v355 = vld [vmem:[%s1 + $0x510] sm:$0xf]
    %v356 = vld [vmem:[%s1 + $0x514] sm:$0xf]
    %v357 = vld [vmem:[%s1 + $0x518] sm:$0xf]
    %v358 = vld [vmem:[%s1 + $0x51c] sm:$0xf]
    %v359 = vld [vmem:[%s1 + $0x520] sm:$0xf]
    %v360 = vld [vmem:[%s1 + $0x524] sm:$0xf]
    %v361 = vld [vmem:[%s1 + $0x528] sm:$0xf]
    %v362 = vld [vmem:[%s1 + $0x52c] sm:$0xf]
    %v363 = vld [vmem:[%s1 + $0x530] sm:$0xf]
    %v364 = vld [vmem:[%s1 + $0x534] sm:$0xf]
    %v365 = vld [vmem:[%s1 + $0x538] sm:$0xf]
    %v366 = vld [vmem:[%s1 + $0x53c] sm:$0xf]
    %v367 = vld [vmem:[%s1 + $0x540] sm:$0xf]
    %v368 = vld [vmem:[%s1 + $0x544] sm:$0xf]
    %v369 = vld [vmem:[%s1 + $0x548] sm:$0xf]
    %v370 = vld [vmem:[%s1 + $0x54c] sm:$0xf]
    %v371 = vld [vmem:[%s1 + $0x550] sm:$0xf]
    %v372 = vld [vmem:[%s1 + $0x554] sm:$0xf]
    %v373 = vld [vmem:[%s1 + $0x558] sm:$0xf]
    %v374 = vld [vmem:[%s1 + $0x55c] sm:$0xf]
    %v375 = vld [vmem:[%s1 + $0x560] sm:$0xf]
    %v376 = vld [vmem:[%s1 + $0x564] sm:$0xf]
    %v377 = vld [vmem:[%s1 + $0x568] sm:$0xf]
    %v378 = vld [vmem:[%s1 + $0x56c] sm:$0xf]
    %v379 = vld [vmem:[%s1 + $0x570] sm:$0xf]
    %v380 = vld [vmem:[%s1 + $0x574] sm:$0xf]
    %v381 = vld [vmem:[%s1 + $0x578] sm:$0xf]
    %v382 = vld [vmem:[%s1 + $0x57c] sm:$0xf]
    %v383 = vld [vmem:[%s1 + $0x580] sm:$0xf]
    %v384 = vld [vmem:[%s1 + $0x584] sm:$0xf]
    %v385 = vld [vmem:[%s1 + $0x588] sm:$0xf]
    %v386 = vld [vmem:[%s1 + $0x58c] sm:$0xf]
    %v387 = vld [vmem:[%s1 + $0x590] sm:$0xf]
    %v388 = vld [vmem:[%s1 + $0x594] sm:$0xf]
    %v389 = vld [vmem:[%s1 + $0x598] sm:$0xf]
    %v390 = vld [vmem:[%s1 + $0x59c] sm:$0xf]
    %v391 = vld [vmem:[%s1 + $0x5a0] sm:$0xf]
    %v392 = vld [vmem:[%s1 + $0x5a4] sm:$0xf]
    %v393 = vld [vmem:[%s1 + $0x5a8] sm:$0xf]
    %v394 = vld [vmem:[%s1 + $0x5ac] sm:$0xf]
    %v395 = vld [vmem:[%s1 + $0x5b0] sm:$0xf]
    %v396 = vld [vmem:[%s1 + $0x5b4] sm:$0xf]
    %v397 = vld [vmem:[%s1 + $0x5b8] sm:$0xf]
    %v398 = vld [vmem:[%s1 + $0x5bc] sm:$0xf]
    %v399 = vld [vmem:[%s1 + $0x5c0] sm:$0xf]
    %v400 = vld [vmem:[%s1 + $0x5c4] sm:$0xf]
    %v401 = vld [vmem:[%s1 + $0x5c8] sm:$0xf]
    %v402 = vld [vmem:[%s1 + $0x5cc] sm:$0xf]
    %v403 = vld [vmem:[%s1 + $0x5d0] sm:$0xf]
    %v404 = vld [vmem:[%s1 + $0x5d4] sm:$0xf]
    %v405 = vld [vmem:[%s1 + $0x5d8] sm:$0xf]
    %v406 = vld [vmem:[%s1 + $0x5dc] sm:$0xf]
    %v407 = vld [vmem:[%s1 + $0x5e0] sm:$0xf]
    %v408 = vld [vmem:[%s1 + $0x5e4] sm:$0xf]
    %v409 = vld [vmem:[%s1 + $0x5e8] sm:$0xf]
    %v410 = vld [vmem:[%s1 + $0x5ec] sm:$0xf]
    %v411 = vld [vmem:[%s1 + $0x5f0] sm:$0xf]
    %v412 = vld [vmem:[%s1 + $0x5f4] sm:$0xf]
    %v413 = vld [vmem:[%s1 + $0x5f8] sm:$0xf]
    %v414 = vld [vmem:[%s1 + $0x5fc] sm:$0xf]
    %v415 = vld [vmem:[%s1 + $0x600] sm:$0xf]
    %v416 = vld [vmem:[%s1 + $0x604] sm:$0xf]
    %v417 = vld [vmem:[%s1 + $0x608] sm:$0xf]
    %v418 = vld [vmem:[%s1 + $0x60c] sm:$0xf]
    %v419 = vld [vmem:[%s1 + $0x610] sm:$0xf]
    %v420 = vld [vmem:[%s1 + $0x614] sm:$0xf]
    %v421 = vld [vmem:[%s1 + $0x618] sm:$0xf]
    %v422 = vld [vmem:[%s1 + $0x61c] sm:$0xf]
    %v423 = vld [vmem:[%s1 + $0x620] sm:$0xf]
    %v424 = vld [vmem:[%s1 + $0x624] sm:$0xf]
    %v425 = vld [vmem:[%s1 + $0x628] sm:$0xf]
    %v426 = vld [vmem:[%s1 + $0x62c] sm:$0xf]
    %v427 = vld [vmem:[%s1 + $0x630] sm:$0xf]
    %v428 = vld [vmem:[%s1 + $0x634] sm:$0xf]
    %v429 = vld [vmem:[%s1 + $0x638] sm:$0xf]
    %v430 = vld [vmem:[%s1 + $0x63c] sm:$0xf]
    %v431 = vld [vmem:[%s1 + $0x640] sm:$0xf]
    %v432 = vld [vmem:[%s1 + $0x644] sm:$0xf]
    %v433 = vld [vmem:[%s1 + $0x648] sm:$0xf]
    %v434 = vld [vmem:[%s1 + $0x64c] sm:$0xf]
    %v435 = vld [vmem:[%s1 + $0x650] sm:$0xf]
    %v436 = vld [vmem:[%s1 + $0x654] sm:$0xf]
    %v437 = vld [vmem:[%s1 + $0x658] sm:$0xf]
    %v438 = vld [vmem:[%s1 + $0x65c] sm:$0xf]
    %v439 = vld [vmem:[%s1 + $0x660] sm:$0xf]
    %v440 = vld [vmem:[%s1 + $0x664] sm:$0xf]
    %v441 = vld [vmem:[%s1 + $0x668] sm:$0xf]
    %v442 = vld [vmem:[%s1 + $0x66c] sm:$0xf]
    %v443 = vld [vmem:[%s1 + $0x670] sm:$0xf]
    %v444 = vld [vmem:[%s1 + $0x674] sm:$0xf]
    %v445 = vld [vmem:[%s1 + $0x678] sm:$0xf]
    %v446 = vld [vmem:[%s1 + $0x67c] sm:$0xf]
    %v447 = vld [vmem:[%s1 + $0x680] sm:$0xf]
    %v448 = vld [vmem:[%s1 + $0x684] sm:$0xf]
    %v449 = vld [vmem:[%s1 + $0x688] sm:$0xf]
    %v450 = vld [vmem:[%s1 + $0x68c] sm:$0xf]
    %v451 = vld [vmem:[%s1 + $0x690] sm:$0xf]
    %v452 = vld [vmem:[%s1 + $0x694] sm:$0xf]
    %v453 = vld [vmem:[%s1 + $0x698] sm:$0xf]
    %v454 = vld [vmem:[%s1 + $0x69c] sm:$0xf]
    %v455 = vld [vmem:[%s1 + $0x6a0] sm:$0xf]
    %v456 = vld [vmem:[%s1 + $0x6a4] sm:$0xf]
    %v457 = vld [vmem:[%s1 + $0x6a8] sm:$0xf]
    %v458 = vld [vmem:[%s1 + $0x6ac] sm:$0xf]
    %v459 = vld [vmem:[%s1 + $0x6b0] sm:$0xf]
    %v460 = vld [vmem:[%s1 + $0x6b4] sm:$0xf]
    %v461 = vld [vmem:[%s1 + $0x6b8] sm:$0xf]
    %v462 = vld [vmem:[%s1 + $0x6bc] sm:$0xf]
    %v463 = vld [vmem:[%s1 + $0x6c0] sm:$0xf]
    %v464 = vld [vmem:[%s1 + $0x6c4] sm:$0xf]
    %v465 = vld [vmem:[%s1 + $0x6c8] sm:$0xf]
    %v466 = vld [vmem:[%s1 + $0x6cc] sm:$0xf]
    %v467 = vld [vmem:[%s1 + $0x6d0] sm:$0xf]
    %v468 = vld [vmem:[%s1 + $0x6d4] sm:$0xf]
    %v469 = vld [vmem:[%s1 + $0x6d8] sm:$0xf]
    %v470 = vld [vmem:[%s1 + $0x6dc] sm:$0xf]
    %v471 = vld [vmem:[%s1 + $0x6e0] sm:$0xf]
    %v472 = vld [vmem:[%s1 + $0x6e4] sm:$0xf]
    %v473 = vld [vmem:[%s1 + $0x6e8] sm:$0xf]
    %v474 = vld [vmem:[%s1 + $0x6ec] sm:$0xf]
    %v475 = vld [vmem:[%s1 + $0x6f0] sm:$0xf]
    %v476 = vld [vmem:[%s1 + $0x6f4] sm:$0xf]
    %v477 = vld [vmem:[%s1 + $0x6f8] sm:$0xf]
    %v478 = vld [vmem:[%s1 + $0x6fc] sm:$0xf]
    %v479 = vld [vmem:[%s1 + $0x700] sm:$0xf]
    %v480 = vld [vmem:[%s1 + $0x704] sm:$0xf]
    %v481 = vld [vmem:[%s1 + $0x708] sm:$0xf]
    %v482 = vld [vmem:[%s1 + $0x70c] sm:$0xf]
    %v483 = vld [vmem:[%s1 + $0x710] sm:$0xf]
    %v484 = vld [vmem:[%s1 + $0x714] sm:$0xf]
    %v485 = vld [vmem:[%s1 + $0x718] sm:$0xf]
    %v486 = vld [vmem:[%s1 + $0x71c] sm:$0xf]
    %v487 = vld [vmem:[%s1 + $0x720] sm:$0xf]
    %v488 = vld [vmem:[%s1 + $0x724] sm:$0xf]
    %v489 = vld [vmem:[%s1 + $0x728] sm:$0xf]
    %v490 = vld [vmem:[%s1 + $0x72c] sm:$0xf]
    %v491 = vld [vmem:[%s1 + $0x730] sm:$0xf]
    %v492 = vld [vmem:[%s1 + $0x734] sm:$0xf]
    %v493 = vld [vmem:[%s1 + $0x738] sm:$0xf]
    %v494 = vld [vmem:[%s1 + $0x73c] sm:$0xf]
    %v495 = vld [vmem:[%s1 + $0x740] sm:$0xf]
    %v496 = vld [vmem:[%s1 + $0x744] sm:$0xf]
    %v497 = vld [vmem:[%s1 + $0x748] sm:$0xf]
    %v498 = vld [vmem:[%s1 + $0x74c] sm:$0xf]
    %v499 = vld [vmem:[%s1 + $0x750] sm:$0xf]
    %v500 = vld [vmem:[%s1 + $0x754] sm:$0xf]
    %v501 = vld [vmem:[%s1 + $0x758] sm:$0xf]
    %v502 = vld [vmem:[%s1 + $0x75c] sm:$0xf]
    %v503 = vld [vmem:[%s1 + $0x760] sm:$0xf]
    %v504 = vld [vmem:[%s1 + $0x764] sm:$0xf]
    %v505 = vld [vmem:[%s1 + $0x768] sm:$0xf]
    %v506 = vld [vmem:[%s1 + $0x76c] sm:$0xf]
    %v507 = vld [vmem:[%s1 + $0x770] sm:$0xf]
    %v508 = vld [vmem:[%s1 + $0x774] sm:$0xf]
    %v509 = vld [vmem:[%s1 + $0x778] sm:$0xf]
    %v510 = vld [vmem:[%s1 + $0x77c] sm:$0xf]
    %v511 = vld [vmem:[%s1 + $0x780] sm:$0xf]
    %v512 = vld [vmem:[%s1 + $0x784] sm:$0xf]
    %v513 = vld [vmem:[%s1 + $0x788] sm:$0xf]
    %v514 = vld [vmem:[%s1 + $0x78c] sm:$0xf]
    %v515 = vld [vmem:[%s1 + $0x790] sm:$0xf]
    %v516 = vld [vmem:[%s1 + $0x794] sm:$0xf]
    %v517 = vld [vmem:[%s1 + $0x798] sm:$0xf]
    %v518 = vld [vmem:[%s1 + $0x79c] sm:$0xf]
    %v519 = vld [vmem:[%s1 + $0x7a0] sm:$0xf]
    %v520 = vld [vmem:[%s1 + $0x7a4] sm:$0xf]
    %v521 = vld [vmem:[%s1 + $0x7a8] sm:$0xf]
    %v522 = vld [vmem:[%s1 + $0x7ac] sm:$0xf]
    %v523 = vld [vmem:[%s1 + $0x7b0] sm:$0xf]
    %v524 = vld [vmem:[%s1 + $0x7b4] sm:$0xf]
    %v525 = vld [vmem:[%s1 + $0x7b8] sm:$0xf]
    %v526 = vld [vmem:[%s1 + $0x7bc] sm:$0xf]
    %v527 = vld [vmem:[%s1 + $0x7c0] sm:$0xf]
    %v528 = vld [vmem:[%s1 + $0x7c4] sm:$0xf]
    %v529 = vld [vmem:[%s1 + $0x7c8] sm:$0xf]
    %v530 = vld [vmem:[%s1 + $0x7cc] sm:$0xf]
    %v531 = vld [vmem:[%s1 + $0x7d0] sm:$0xf]
    %v532 = vld [vmem:[%s1 + $0x7d4] sm:$0xf]
    %v533 = vld [vmem:[%s1 + $0x7d8] sm:$0xf]
    %v534 = vld [vmem:[%s1 + $0x7dc] sm:$0xf]
    %v535 = vld [vmem:[%s1 + $0x7e0] sm:$0xf]
    %v536 = vld [vmem:[%s1 + $0x7e4] sm:$0xf]
    %v537 = vld [vmem:[%s1 + $0x7e8] sm:$0xf]
    %v538 = vld [vmem:[%s1 + $0x7ec] sm:$0xf]
    %v539 = vld [vmem:[%s1 + $0x7f0] sm:$0xf]
    %v540 = vld [vmem:[%s1 + $0x7f4] sm:$0xf]
    %v541 = vld [vmem:[%s1 + $0x7f8] sm:$0xf]
    %v542 = vld [vmem:[%s1 + $0x7fc] sm:$0xf]
    %v543 = vld [vmem:[%s1 + $0x800] sm:$0xf]
    %v544 = vld [vmem:[%s1 + $0x804] sm:$0xf]
    %v545 = vld [vmem:[%s1 + $0x808] sm:$0xf]
    %v546 = vld [vmem:[%s1 + $0x80c] sm:$0xf]
    %v547 = vld [vmem:[%s1 + $0x810] sm:$0xf]
    %v548 = vld [vmem:[%s1 + $0x814] sm:$0xf]
    %v549 = vld [vmem:[%s1 + $0x818] sm:$0xf]
    %v550 = vld [vmem:[%s1 + $0x81c] sm:$0xf]
    %v551 = vld [vmem:[%s1 + $0x820] sm:$0xf]
    %v552 = vld [vmem:[%s1 + $0x824] sm:$0xf]
    %v553 = vld [vmem:[%s1 + $0x828] sm:$0xf]
    %v554 = vld [vmem:[%s1 + $0x82c] sm:$0xf]
    %v555 = vld [vmem:[%s1 + $0x830] sm:$0xf]
    %v556 = vld [vmem:[%s1 + $0x834] sm:$0xf]
    %v557 = vld [vmem:[%s1 + $0x838] sm:$0xf]
    %v558 = vld [vmem:[%s1 + $0x83c] sm:$0xf]
    %v559 = vld [vmem:[%s1 + $0x840] sm:$0xf]
    %v560 = vld [vmem:[%s1 + $0x844] sm:$0xf]
    %v561 = vld [vmem:[%s1 + $0x848] sm:$0xf]
    %v562 = vld [vmem:[%s1 + $0x84c] sm:$0xf]
    %v563 = vld [vmem:[%s1 + $0x850] sm:$0xf]
    %v564 = vld [vmem:[%s1 + $0x854] sm:$0xf]
    %v565 = vld [vmem:[%s1 + $0x858] sm:$0xf]
    %v566 = vld [vmem:[%s1 + $0x85c] sm:$0xf]
    %v567 = vld [vmem:[%s1 + $0x860] sm:$0xf]
    %v568 = vld [vmem:[%s1 + $0x864] sm:$0xf]
    %v569 = vld [vmem:[%s1 + $0x868] sm:$0xf]
    %v570 = vld [vmem:[%s1 + $0x86c] sm:$0xf]
    %v571 = vld [vmem:[%s1 + $0x870] sm:$0xf]
    %v572 = vld [vmem:[%s1 + $0x874] sm:$0xf]
    %v573 = vld [vmem:[%s1 + $0x878] sm:$0xf]
    %v574 = vld [vmem:[%s1 + $0x87c] sm:$0xf]
    %v575 = vld [vmem:[%s1 + $0x880] sm:$0xf]
    %v576 = vld [vmem:[%s1 + $0x884] sm:$0xf]
    %v577 = vld [vmem:[%s1 + $0x888] sm:$0xf]
    %v578 = vld [vmem:[%s1 + $0x88c] sm:$0xf]
    %v579 = vld [vmem:[%s1 + $0x890] sm:$0xf]
    %v580 = vld [vmem:[%s1 + $0x894] sm:$0xf]
    %v581 = vld [vmem:[%s1 + $0x898] sm:$0xf]
    %v582 = vld [vmem:[%s1 + $0x89c] sm:$0xf]
    %v583 = vld [vmem:[%s1 + $0x8a0] sm:$0xf]
    %v584 = vld [vmem:[%s1 + $0x8a4] sm:$0xf]
    %v585 = vld [vmem:[%s1 + $0x8a8] sm:$0xf]
    %v586 = vld [vmem:[%s1 + $0x8ac] sm:$0xf]
    %v587 = vld [vmem:[%s1 + $0x8b0] sm:$0xf]
    %v588 = vld [vmem:[%s1 + $0x8b4] sm:$0xf]
    %v589 = vld [vmem:[%s1 + $0x8b8] sm:$0xf]
    %v590 = vld [vmem:[%s1 + $0x8bc] sm:$0xf]
    %v591 = vld [vmem:[%s1 + $0x8c0] sm:$0xf]
    %v592 = vld [vmem:[%s1 + $0x8c4] sm:$0xf]
    %v593 = vld [vmem:[%s1 + $0x8c8] sm:$0xf]
    %v594 = vld [vmem:[%s1 + $0x8cc] sm:$0xf]
    %v595 = vld [vmem:[%s1 + $0x8d0] sm:$0xf]
    %v596 = vld [vmem:[%s1 + $0x8d4] sm:$0xf]
    %v597 = vld [vmem:[%s1 + $0x8d8] sm:$0xf]
    %v598 = vld [vmem:[%s1 + $0x8dc] sm:$0xf]
    %v599 = vld [vmem:[%s1 + $0x8e0] sm:$0xf]
    %v600 = vld [vmem:[%s1 + $0x8e4] sm:$0xf]
    %v601 = vld [vmem:[%s1 + $0x8e8] sm:$0xf]
    %v602 = vld [vmem:[%s1 + $0x8ec] sm:$0xf]
    %v603 = vld [vmem:[%s1 + $0x8f0] sm:$0xf]
    %v604 = vld [vmem:[%s1 + $0x8f4] sm:$0xf]
    %v605 = vld [vmem:[%s1 + $0x8f8] sm:$0xf]
    %v606 = vld [vmem:[%s1 + $0x8fc] sm:$0xf]
    %v607 = vld [vmem:[%s1 + $0x900] sm:$0xf]
    %v608 = vld [vmem:[%s1 + $0x904] sm:$0xf]
    %v609 = vld [vmem:[%s1 + $0x908] sm:$0xf]
    %v610 = vld [vmem:[%s1 + $0x90c] sm:$0xf]
    %v611 = vld [vmem:[%s1 + $0x910] sm:$0xf]
    %v612 = vld [vmem:[%s1 + $0x914] sm:$0xf]
    %v613 = vld [vmem:[%s1 + $0x918] sm:$0xf]
    %v614 = vld [vmem:[%s1 + $0x91c] sm:$0xf]
    %v615 = vld [vmem:[%s1 + $0x920] sm:$0xf]
    %v616 = vld [vmem:[%s1 + $0x924] sm:$0xf]
    %v617 = vld [vmem:[%s1 + $0x928] sm:$0xf]
    %v618 = vld [vmem:[%s1 + $0x92c] sm:$0xf]
    %v619 = vld [vmem:[%s1 + $0x930] sm:$0xf]
    %v620 = vld [vmem:[%s1 + $0x934] sm:$0xf]
    %v621 = vld [vmem:[%s1 + $0x938] sm:$0xf]
    %v622 = vld [vmem:[%s1 + $0x93c] sm:$0xf]
    %v623 = vld [vmem:[%s1 + $0x940] sm:$0xf]
    %v624 = vld [vmem:[%s1 + $0x944] sm:$0xf]
    %v625 = vld [vmem:[%s1 + $0x948] sm:$0xf]
    %v626 = vld [vmem:[%s1 + $0x94c] sm:$0xf]
    %v627 = vld [vmem:[%s1 + $0x950] sm:$0xf]
    %v628 = vld [vmem:[%s1 + $0x954] sm:$0xf]
    %v629 = vld [vmem:[%s1 + $0x958] sm:$0xf]
    %v630 = vld [vmem:[%s1 + $0x95c] sm:$0xf]
    %v631 = vld [vmem:[%s1 + $0x960] sm:$0xf]
    %v632 = vld [vmem:[%s1 + $0x964] sm:$0xf]
    %v633 = vld [vmem:[%s1 + $0x968] sm:$0xf]
    %v634 = vld [vmem:[%s1 + $0x96c] sm:$0xf]
    %v635 = vld [vmem:[%s1 + $0x970] sm:$0xf]
    %v636 = vld [vmem:[%s1 + $0x974] sm:$0xf]
    %v637 = vld [vmem:[%s1 + $0x978] sm:$0xf]
    %v638 = vld [vmem:[%s1 + $0x97c] sm:$0xf]
    %v639 = vld [vmem:[%s1 + $0x980] sm:$0xf]
    %v640 = vld [vmem:[%s1 + $0x984] sm:$0xf]
    %v641 = vld [vmem:[%s1 + $0x988] sm:$0xf]
    %v642 = vld [vmem:[%s1 + $0x98c] sm:$0xf]
    %v643 = vld [vmem:[%s1 + $0x990] sm:$0xf]
    %v644 = vld [vmem:[%s1 + $0x994] sm:$0xf]
    %v645 = vld [vmem:[%s1 + $0x998] sm:$0xf]
    %v646 = vld [vmem:[%s1 + $0x99c] sm:$0xf]
    %v647 = vld [vmem:[%s1 + $0x9a0] sm:$0xf]
    %v648 = vld [vmem:[%s1 + $0x9a4] sm:$0xf]
    %v649 = vld [vmem:[%s1 + $0x9a8] sm:$0xf]
    %v650 = vld [vmem:[%s1 + $0x9ac] sm:$0xf]
    %v651 = vld [vmem:[%s1 + $0x9b0] sm:$0xf]
    %v652 = vld [vmem:[%s1 + $0x9b4] sm:$0xf]
    %v653 = vld [vmem:[%s1 + $0x9b8] sm:$0xf]
    %v654 = vld [vmem:[%s1 + $0x9bc] sm:$0xf]
    %v655 = vld [vmem:[%s1 + $0x9c0] sm:$0xf]
    %v656 = vld [vmem:[%s1 + $0x9c4] sm:$0xf]
    %v657 = vld [vmem:[%s1 + $0x9c8] sm:$0xf]
    %v658 = vld [vmem:[%s1 + $0x9cc] sm:$0xf]
    %v659 = vld [vmem:[%s1 + $0x9d0] sm:$0xf]
    %v660 = vld [vmem:[%s1 + $0x9d4] sm:$0xf]
    %v661 = vld [vmem:[%s1 + $0x9d8] sm:$0xf]
    %v662 = vld [vmem:[%s1 + $0x9dc] sm:$0xf]
    %v663 = vld [vmem:[%s1 + $0x9e0] sm:$0xf]
    %v664 = vld [vmem:[%s1 + $0x9e4] sm:$0xf]
    %v665 = vld [vmem:[%s1 + $0x9e8] sm:$0xf]
    %v666 = vld [vmem:[%s1 + $0x9ec] sm:$0xf]
    %v667 = vld [vmem:[%s1 + $0x9f0] sm:$0xf]
    %v668 = vld [vmem:[%s1 + $0x9f4] sm:$0xf]
    %v669 = vld [vmem:[%s1 + $0x9f8] sm:$0xf]
    %v670 = vld [vmem:[%s1 + $0x9fc] sm:$0xf]
    %v671 = vld [vmem:[%s1 + $0xa00] sm:$0xf]
    %v672 = vld [vmem:[%s1 + $0xa04] sm:$0xf]
    %v673 = vld [vmem:[%s1 + $0xa08] sm:$0xf]
    %v674 = vld [vmem:[%s1 + $0xa0c] sm:$0xf]
    %v675 = vld [vmem:[%s1 + $0xa10] sm:$0xf]
    %v676 = vld [vmem:[%s1 + $0xa14] sm:$0xf]
    %v677 = vld [vmem:[%s1 + $0xa18] sm:$0xf]
    %v678 = vld [vmem:[%s1 + $0xa1c] sm:$0xf]
    %v679 = vld [vmem:[%s1 + $0xa20] sm:$0xf]
    %v680 = vld [vmem:[%s1 + $0xa24] sm:$0xf]
    %v681 = vld [vmem:[%s1 + $0xa28] sm:$0xf]
    %v682 = vld [vmem:[%s1 + $0xa2c] sm:$0xf]
    %v683 = vld [vmem:[%s1 + $0xa30] sm:$0xf]
    %v684 = vld [vmem:[%s1 + $0xa34] sm:$0xf]
    %v685 = vld [vmem:[%s1 + $0xa38] sm:$0xf]
    %v686 = vld [vmem:[%s1 + $0xa3c] sm:$0xf]
    %v687 = vld [vmem:[%s1 + $0xa40] sm:$0xf]
    %v688 = vld [vmem:[%s1 + $0xa44] sm:$0xf]
    %v689 = vld [vmem:[%s1 + $0xa48] sm:$0xf]
    %v690 = vld [vmem:[%s1 + $0xa4c] sm:$0xf]
    %v691 = vld [vmem:[%s1 + $0xa50] sm:$0xf]
    %v692 = vld [vmem:[%s1 + $0xa54] sm:$0xf]
    %v693 = vld [vmem:[%s1 + $0xa58] sm:$0xf]
    %v694 = vld [vmem:[%s1 + $0xa5c] sm:$0xf]
    %v695 = vld [vmem:[%s1 + $0xa60] sm:$0xf]
    %v696 = vld [vmem:[%s1 + $0xa64] sm:$0xf]
    %v697 = vld [vmem:[%s1 + $0xa68] sm:$0xf]
    %v698 = vld [vmem:[%s1 + $0xa6c] sm:$0xf]
    %v699 = vld [vmem:[%s1 + $0xa70] sm:$0xf]
    %v700 = vld [vmem:[%s1 + $0xa74] sm:$0xf]
    %v701 = vld [vmem:[%s1 + $0xa78] sm:$0xf]
    %v702 = vld [vmem:[%s1 + $0xa7c] sm:$0xf]
    %v703 = vld [vmem:[%s1 + $0xa80] sm:$0xf]
    %v704 = vld [vmem:[%s1 + $0xa84] sm:$0xf]
    %v705 = vld [vmem:[%s1 + $0xa88] sm:$0xf]
    %v706 = vld [vmem:[%s1 + $0xa8c] sm:$0xf]
    %v707 = vld [vmem:[%s1 + $0xa90] sm:$0xf]
    %v708 = vld [vmem:[%s1 + $0xa94] sm:$0xf]
    %v709 = vld [vmem:[%s1 + $0xa98] sm:$0xf]
    %v710 = vld [vmem:[%s1 + $0xa9c] sm:$0xf]
    %v711 = vld [vmem:[%s1 + $0xaa0] sm:$0xf]
    %v712 = vld [vmem:[%s1 + $0xaa4] sm:$0xf]
    %v713 = vld [vmem:[%s1 + $0xaa8] sm:$0xf]
    %v714 = vld [vmem:[%s1 + $0xaac] sm:$0xf]
    %v715 = vld [vmem:[%s1 + $0xab0] sm:$0xf]
    %v716 = vld [vmem:[%s1 + $0xab4] sm:$0xf]
    %v717 = vld [vmem:[%s1 + $0xab8] sm:$0xf]
    %v718 = vld [vmem:[%s1 + $0xabc] sm:$0xf]
    %v719 = vld [vmem:[%s1 + $0xac0] sm:$0xf]
    %v720 = vld [vmem:[%s1 + $0xac4] sm:$0xf]
    %v721 = vld [vmem:[%s1 + $0xac8] sm:$0xf]
    %v722 = vld [vmem:[%s1 + $0xacc] sm:$0xf]
    %v723 = vld [vmem:[%s1 + $0xad0] sm:$0xf]
    %v724 = vld [vmem:[%s1 + $0xad4] sm:$0xf]
    %v725 = vld [vmem:[%s1 + $0xad8] sm:$0xf]
    %v726 = vld [vmem:[%s1 + $0xadc] sm:$0xf]
    %v727 = vld [vmem:[%s1 + $0xae0] sm:$0xf]
    %v728 = vld [vmem:[%s1 + $0xae4] sm:$0xf]
    %v729 = vld [vmem:[%s1 + $0xae8] sm:$0xf]
    %v730 = vld [vmem:[%s1 + $0xaec] sm:$0xf]
    %v731 = vld [vmem:[%s1 + $0xaf0] sm:$0xf]
    %v732 = vld [vmem:[%s1 + $0xaf4] sm:$0xf]
    %v733 = vld [vmem:[%s1 + $0xaf8] sm:$0xf]
    %v734 = vld [vmem:[%s1 + $0xafc] sm:$0xf]
    %v735 = vld [vmem:[%s1 + $0xb00] sm:$0xf]
    %v736 = vld [vmem:[%s1 + $0xb04] sm:$0xf]
    %v737 = vld [vmem:[%s1 + $0xb08] sm:$0xf]
    %v738 = vld [vmem:[%s1 + $0xb0c] sm:$0xf]
    %v739 = vld [vmem:[%s1 + $0xb10] sm:$0xf]
    %v740 = vld [vmem:[%s1 + $0xb14] sm:$0xf]
    %v741 = vld [vmem:[%s1 + $0xb18] sm:$0xf]
    %v742 = vld [vmem:[%s1 + $0xb1c] sm:$0xf]
    %v743 = vld [vmem:[%s1 + $0xb20] sm:$0xf]
    %v744 = vld [vmem:[%s1 + $0xb24] sm:$0xf]
    %v745 = vld [vmem:[%s1 + $0xb28] sm:$0xf]
    %v746 = vld [vmem:[%s1 + $0xb2c] sm:$0xf]
    %v747 = vld [vmem:[%s1 + $0xb30] sm:$0xf]
    %v748 = vld [vmem:[%s1 + $0xb34] sm:$0xf]
    %v749 = vld [vmem:[%s1 + $0xb38] sm:$0xf]
    %v750 = vld [vmem:[%s1 + $0xb3c] sm:$0xf]
    %v751 = vld [vmem:[%s1 + $0xb40] sm:$0xf]
    %v752 = vld [vmem:[%s1 + $0xb44] sm:$0xf]
    %v753 = vld [vmem:[%s1 + $0xb48] sm:$0xf]
    %v754 = vld [vmem:[%s1 + $0xb4c] sm:$0xf]
    %v755 = vld [vmem:[%s1 + $0xb50] sm:$0xf]
    %v756 = vld [vmem:[%s1 + $0xb54] sm:$0xf]
    %v757 = vld [vmem:[%s1 + $0xb58] sm:$0xf]
    %v758 = vld [vmem:[%s1 + $0xb5c] sm:$0xf]
    %v759 = vld [vmem:[%s1 + $0xb60] sm:$0xf]
    %v760 = vld [vmem:[%s1 + $0xb64] sm:$0xf]
    %v761 = vld [vmem:[%s1 + $0xb68] sm:$0xf]
    %v762 = vld [vmem:[%s1 + $0xb6c] sm:$0xf]
    %v763 = vld [vmem:[%s1 + $0xb70] sm:$0xf]
    %v764 = vld [vmem:[%s1 + $0xb74] sm:$0xf]
    %v765 = vld [vmem:[%s1 + $0xb78] sm:$0xf]
    %v766 = vld [vmem:[%s1 + $0xb7c] sm:$0xf]
    %v767 = vld [vmem:[%s1 + $0xb80] sm:$0xf]
    %v768 = vld [vmem:[%s1 + $0xb84] sm:$0xf]
    %v769 = vld [vmem:[%s1 + $0xb88] sm:$0xf]
    %v770 = vld [vmem:[%s1 + $0xb8c] sm:$0xf]
    %v771 = vld [vmem:[%s1 + $0xb90] sm:$0xf]
    %v772 = vld [vmem:[%s1 + $0xb94] sm:$0xf]
    %v773 = vld [vmem:[%s1 + $0xb98] sm:$0xf]
    %v774 = vld [vmem:[%s1 + $0xb9c] sm:$0xf]
    %v775 = vld [vmem:[%s1 + $0xba0] sm:$0xf]
    %v776 = vld [vmem:[%s1 + $0xba4] sm:$0xf]
    %v777 = vld [vmem:[%s1 + $0xba8] sm:$0xf]
    %v778 = vld [vmem:[%s1 + $0xbac] sm:$0xf]
    %v779 = vld [vmem:[%s1 + $0xbb0] sm:$0xf]
    %v780 = vld [vmem:[%s1 + $0xbb4] sm:$0xf]
    %v781 = vld [vmem:[%s1 + $0xbb8] sm:$0xf]
    %v782 = vld [vmem:[%s1 + $0xbbc] sm:$0xf]
    %v783 = vld [vmem:[%s1 + $0xbc0] sm:$0xf]
    %v784 = vld [vmem:[%s1 + $0xbc4] sm:$0xf]
    %v785 = vld [vmem:[%s1 + $0xbc8] sm:$0xf]
    %v786 = vld [vmem:[%s1 + $0xbcc] sm:$0xf]
    %v787 = vld [vmem:[%s1 + $0xbd0] sm:$0xf]
    %v788 = vld [vmem:[%s1 + $0xbd4] sm:$0xf]
    %v789 = vld [vmem:[%s1 + $0xbd8] sm:$0xf]
    %v790 = vld [vmem:[%s1 + $0xbdc] sm:$0xf]
    %v791 = vld [vmem:[%s1 + $0xbe0] sm:$0xf]
    %v792 = vld [vmem:[%s1 + $0xbe4] sm:$0xf]
    %v793 = vld [vmem:[%s1 + $0xbe8] sm:$0xf]
    %v794 = vld [vmem:[%s1 + $0xbec] sm:$0xf]
    %v795 = vld [vmem:[%s1 + $0xbf0] sm:$0xf]
    %v796 = vld [vmem:[%s1 + $0xbf4] sm:$0xf]
    %v797 = vld [vmem:[%s1 + $0xbf8] sm:$0xf]
    %v798 = vld [vmem:[%s1 + $0xbfc] sm:$0xf]
    %v799 = vld [vmem:[%s1 + $0xc00] sm:$0xf]
    %v800 = vld [vmem:[%s1 + $0xc04] sm:$0xf]
    %v801 = vld [vmem:[%s1 + $0xc08] sm:$0xf]
    %v802 = vld [vmem:[%s1 + $0xc0c] sm:$0xf]
    %v803 = vld [vmem:[%s1 + $0xc10] sm:$0xf]
    %v804 = vld [vmem:[%s1 + $0xc14] sm:$0xf]
    %v805 = vld [vmem:[%s1 + $0xc18] sm:$0xf]
    %v806 = vld [vmem:[%s1 + $0xc1c] sm:$0xf]
    %v807 = vld [vmem:[%s1 + $0xc20] sm:$0xf]
    %v808 = vld [vmem:[%s1 + $0xc24] sm:$0xf]
    %v809 = vld [vmem:[%s1 + $0xc28] sm:$0xf]
    %v810 = vld [vmem:[%s1 + $0xc2c] sm:$0xf]
    %v811 = vld [vmem:[%s1 + $0xc30] sm:$0xf]
    %v812 = vld [vmem:[%s1 + $0xc34] sm:$0xf]
    %v813 = vld [vmem:[%s1 + $0xc38] sm:$0xf]
    %v814 = vld [vmem:[%s1 + $0xc3c] sm:$0xf]
    %v815 = vld [vmem:[%s1 + $0xc40] sm:$0xf]
    %v816 = vld [vmem:[%s1 + $0xc44] sm:$0xf]
    %v817 = vld [vmem:[%s1 + $0xc48] sm:$0xf]
    %v818 = vld [vmem:[%s1 + $0xc4c] sm:$0xf]
    %v819 = vld [vmem:[%s1 + $0xc50] sm:$0xf]
    %v820 = vld [vmem:[%s1 + $0xc54] sm:$0xf]
    %v821 = vld [vmem:[%s1 + $0xc58] sm:$0xf]
    %v822 = vld [vmem:[%s1 + $0xc5c] sm:$0xf]
    %v823 = vld [vmem:[%s1 + $0xc60] sm:$0xf]
    %v824 = vld [vmem:[%s1 + $0xc64] sm:$0xf]
    %v825 = vld [vmem:[%s1 + $0xc68] sm:$0xf]
    %v826 = vld [vmem:[%s1 + $0xc6c] sm:$0xf]
    %v827 = vld [vmem:[%s1 + $0xc70] sm:$0xf]
    %v828 = vld [vmem:[%s1 + $0xc74] sm:$0xf]
    %v829 = vld [vmem:[%s1 + $0xc78] sm:$0xf]
    %v830 = vld [vmem:[%s1 + $0xc7c] sm:$0xf]
    %v831 = vld [vmem:[%s1 + $0xc80] sm:$0xf]
    %v832 = vld [vmem:[%s1 + $0xc84] sm:$0xf]
    %v833 = vld [vmem:[%s1 + $0xc88] sm:$0xf]
    %v834 = vld [vmem:[%s1 + $0xc8c] sm:$0xf]
    %v835 = vld [vmem:[%s1 + $0xc90] sm:$0xf]
    %v836 = vld [vmem:[%s1 + $0xc94] sm:$0xf]
    %v837 = vld [vmem:[%s1 + $0xc98] sm:$0xf]
    %v838 = vld [vmem:[%s1 + $0xc9c] sm:$0xf]
    %v839 = vld [vmem:[%s1 + $0xca0] sm:$0xf]
    %v840 = vld [vmem:[%s1 + $0xca4] sm:$0xf]
    %v841 = vld [vmem:[%s1 + $0xca8] sm:$0xf]
    %v842 = vld [vmem:[%s1 + $0xcac] sm:$0xf]
    %v843 = vld [vmem:[%s1 + $0xcb0] sm:$0xf]
    %v844 = vld [vmem:[%s1 + $0xcb4] sm:$0xf]
    %v845 = vld [vmem:[%s1 + $0xcb8] sm:$0xf]
    %v846 = vld [vmem:[%s1 + $0xcbc] sm:$0xf]
    %v847 = vld [vmem:[%s1 + $0xcc0] sm:$0xf]
    %v848 = vld [vmem:[%s1 + $0xcc4] sm:$0xf]
    %v849 = vld [vmem:[%s1 + $0xcc8] sm:$0xf]
    %v850 = vld [vmem:[%s1 + $0xccc] sm:$0xf]
    %v851 = vld [vmem:[%s1 + $0xcd0] sm:$0xf]
    %v852 = vld [vmem:[%s1 + $0xcd4] sm:$0xf]
    %v853 = vld [vmem:[%s1 + $0xcd8] sm:$0xf]
    %v854 = vld [vmem:[%s1 + $0xcdc] sm:$0xf]
    %v855 = vld [vmem:[%s1 + $0xce0] sm:$0xf]
    %v856 = vld [vmem:[%s1 + $0xce4] sm:$0xf]
    %v857 = vld [vmem:[%s1 + $0xce8] sm:$0xf]
    %v858 = vld [vmem:[%s1 + $0xcec] sm:$0xf]
    %v859 = vld [vmem:[%s1 + $0xcf0] sm:$0xf]
    %v860 = vld [vmem:[%s1 + $0xcf4] sm:$0xf]
    %v861 = vld [vmem:[%s1 + $0xcf8] sm:$0xf]
    %v862 = vld [vmem:[%s1 + $0xcfc] sm:$0xf]
    %v863 = vld [vmem:[%s1 + $0xd00] sm:$0xf]
    %v864 = vld [vmem:[%s1 + $0xd04] sm:$0xf]
    %v865 = vld [vmem:[%s1 + $0xd08] sm:$0xf]
    %v866 = vld [vmem:[%s1 + $0xd0c] sm:$0xf]
    %v867 = vld [vmem:[%s1 + $0xd10] sm:$0xf]
    %v868 = vld [vmem:[%s1 + $0xd14] sm:$0xf]
    %v869 = vld [vmem:[%s1 + $0xd18] sm:$0xf]
    %v870 = vld [vmem:[%s1 + $0xd1c] sm:$0xf]
    %v871 = vld [vmem:[%s1 + $0xd20] sm:$0xf]
    %v872 = vld [vmem:[%s1 + $0xd24] sm:$0xf]
    %v873 = vld [vmem:[%s1 + $0xd28] sm:$0xf]
    %v874 = vld [vmem:[%s1 + $0xd2c] sm:$0xf]
    %v875 = vld [vmem:[%s1 + $0xd30] sm:$0xf]
    %v876 = vld [vmem:[%s1 + $0xd34] sm:$0xf]
    %v877 = vld [vmem:[%s1 + $0xd38] sm:$0xf]
    %v878 = vld [vmem:[%s1 + $0xd3c] sm:$0xf]
    %v879 = vld [vmem:[%s1 + $0xd40] sm:$0xf]
    %v880 = vld [vmem:[%s1 + $0xd44] sm:$0xf]
    %v881 = vld [vmem:[%s1 + $0xd48] sm:$0xf]
    %v882 = vld [vmem:[%s1 + $0xd4c] sm:$0xf]
    %v883 = vld [vmem:[%s1 + $0xd50] sm:$0xf]
    %v884 = vld [vmem:[%s1 + $0xd54] sm:$0xf]
    %v885 = vld [vmem:[%s1 + $0xd58] sm:$0xf]
    %v886 = vld [vmem:[%s1 + $0xd5c] sm:$0xf]
    %v887 = vld [vmem:[%s1 + $0xd60] sm:$0xf]
    %v888 = vld [vmem:[%s1 + $0xd64] sm:$0xf]
    %v889 = vld [vmem:[%s1 + $0xd68] sm:$0xf]
    %v890 = vld [vmem:[%s1 + $0xd6c] sm:$0xf]
    %v891 = vld [vmem:[%s1 + $0xd70] sm:$0xf]
    %v892 = vld [vmem:[%s1 + $0xd74] sm:$0xf]
    %v893 = vld [vmem:[%s1 + $0xd78] sm:$0xf]
    %v894 = vld [vmem:[%s1 + $0xd7c] sm:$0xf]
    %v895 = vld [vmem:[%s1 + $0xd80] sm:$0xf]
    %v896 = vld [vmem:[%s1 + $0xd84] sm:$0xf]
    %v897 = vld [vmem:[%s1 + $0xd88] sm:$0xf]
    %v898 = vld [vmem:[%s1 + $0xd8c] sm:$0xf]
    %v899 = vld [vmem:[%s1 + $0xd90] sm:$0xf]
    %v900 = vld [vmem:[%s1 + $0xd94] sm:$0xf]
    %v901 = vld [vmem:[%s1 + $0xd98] sm:$0xf]
    %v902 = vld [vmem:[%s1 + $0xd9c] sm:$0xf]
    %v903 = vld [vmem:[%s1 + $0xda0] sm:$0xf]
    %v904 = vld [vmem:[%s1 + $0xda4] sm:$0xf]
    %v905 = vld [vmem:[%s1 + $0xda8] sm:$0xf]
    %v906 = vld [vmem:[%s1 + $0xdac] sm:$0xf]
    %v907 = vld [vmem:[%s1 + $0xdb0] sm:$0xf]
    %v908 = vld [vmem:[%s1 + $0xdb4] sm:$0xf]
    %v909 = vld [vmem:[%s1 + $0xdb8] sm:$0xf]
    %v910 = vld [vmem:[%s1 + $0xdbc] sm:$0xf]
    %v911 = vld [vmem:[%s1 + $0xdc0] sm:$0xf]
    %v912 = vld [vmem:[%s1 + $0xdc4] sm:$0xf]
    %v913 = vld [vmem:[%s1 + $0xdc8] sm:$0xf]
    %v914 = vld [vmem:[%s1 + $0xdcc] sm:$0xf]
    %v915 = vld [vmem:[%s1 + $0xdd0] sm:$0xf]
    %v916 = vld [vmem:[%s1 + $0xdd4] sm:$0xf]
    %v917 = vld [vmem:[%s1 + $0xdd8] sm:$0xf]
    %v918 = vld [vmem:[%s1 + $0xddc] sm:$0xf]
    %v919 = vld [vmem:[%s1 + $0xde0] sm:$0xf]
    %v920 = vld [vmem:[%s1 + $0xde4] sm:$0xf]
    %v921 = vld [vmem:[%s1 + $0xde8] sm:$0xf]
    %v922 = vld [vmem:[%s1 + $0xdec] sm:$0xf]
    %v923 = vld [vmem:[%s1 + $0xdf0] sm:$0xf]
    %v924 = vld [vmem:[%s1 + $0xdf4] sm:$0xf]
    %v925 = vld [vmem:[%s1 + $0xdf8] sm:$0xf]
    %v926 = vld [vmem:[%s1 + $0xdfc] sm:$0xf]
    %v927 = vld [vmem:[%s1 + $0xe00] sm:$0xf]
    %v928 = vld [vmem:[%s1 + $0xe04] sm:$0xf]
    %v929 = vld [vmem:[%s1 + $0xe08] sm:$0xf]
    %v930 = vld [vmem:[%s1 + $0xe0c] sm:$0xf]
    %v931 = vld [vmem:[%s1 + $0xe10] sm:$0xf]
    %v932 = vld [vmem:[%s1 + $0xe14] sm:$0xf]
    %v933 = vld [vmem:[%s1 + $0xe18] sm:$0xf]
    %v934 = vld [vmem:[%s1 + $0xe1c] sm:$0xf]
    %v935 = vld [vmem:[%s1 + $0xe20] sm:$0xf]
    %v936 = vld [vmem:[%s1 + $0xe24] sm:$0xf]
    %v937 = vld [vmem:[%s1 + $0xe28] sm:$0xf]
    %v938 = vld [vmem:[%s1 + $0xe2c] sm:$0xf]
    %v939 = vld [vmem:[%s1 + $0xe30] sm:$0xf]
    %v940 = vld [vmem:[%s1 + $0xe34] sm:$0xf]
    %v941 = vld [vmem:[%s1 + $0xe38] sm:$0xf]
    %v942 = vld [vmem:[%s1 + $0xe3c] sm:$0xf]
    %v943 = vld [vmem:[%s1 + $0xe40] sm:$0xf]
    %v944 = vld [vmem:[%s1 + $0xe44] sm:$0xf]
    %v945 = vld [vmem:[%s1 + $0xe48] sm:$0xf]
    %v946 = vld [vmem:[%s1 + $0xe4c] sm:$0xf]
    %v947 = vld [vmem:[%s1 + $0xe50] sm:$0xf]
    %v948 = vld [vmem:[%s1 + $0xe54] sm:$0xf]
    %v949 = vld [vmem:[%s1 + $0xe58] sm:$0xf]
    %v950 = vld [vmem:[%s1 + $0xe5c] sm:$0xf]
    %v951 = vld [vmem:[%s1 + $0xe60] sm:$0xf]
    %v952 = vld [vmem:[%s1 + $0xe64] sm:$0xf]
    %v953 = vld [vmem:[%s1 + $0xe68] sm:$0xf]
    %v954 = vld [vmem:[%s1 + $0xe6c] sm:$0xf]
    %v955 = vld [vmem:[%s1 + $0xe70] sm:$0xf]
    %v956 = vld [vmem:[%s1 + $0xe74] sm:$0xf]
    %v957 = vld [vmem:[%s1 + $0xe78] sm:$0xf]
    %v958 = vld [vmem:[%s1 + $0xe7c] sm:$0xf]
    %v959 = vld [vmem:[%s1 + $0xe80] sm:$0xf]
    %v960 = vld [vmem:[%s1 + $0xe84] sm:$0xf]
    %v961 = vld [vmem:[%s1 + $0xe88] sm:$0xf]
    %v962 = vld [vmem:[%s1 + $0xe8c] sm:$0xf]
    %v963 = vld [vmem:[%s1 + $0xe90] sm:$0xf]
    %v964 = vld [vmem:[%s1 + $0xe94] sm:$0xf]
    %v965 = vld [vmem:[%s1 + $0xe98] sm:$0xf]
    %v966 = vld [vmem:[%s1 + $0xe9c] sm:$0xf]
    %v967 = vld [vmem:[%s1 + $0xea0] sm:$0xf]
    %v968 = vld [vmem:[%s1 + $0xea4] sm:$0xf]
    %v969 = vld [vmem:[%s1 + $0xea8] sm:$0xf]
    %v970 = vld [vmem:[%s1 + $0xeac] sm:$0xf]
    %v971 = vld [vmem:[%s1 + $0xeb0] sm:$0xf]
    %v972 = vld [vmem:[%s1 + $0xeb4] sm:$0xf]
    %v973 = vld [vmem:[%s1 + $0xeb8] sm:$0xf]
    %v974 = vld [vmem:[%s1 + $0xebc] sm:$0xf]
    %v975 = vld [vmem:[%s1 + $0xec0] sm:$0xf]
    %v976 = vld [vmem:[%s1 + $0xec4] sm:$0xf]
    %v977 = vld [vmem:[%s1 + $0xec8] sm:$0xf]
    %v978 = vld [vmem:[%s1 + $0xecc] sm:$0xf]
    %v979 = vld [vmem:[%s1 + $0xed0] sm:$0xf]
    %v980 = vld [vmem:[%s1 + $0xed4] sm:$0xf]
    %v981 = vld [vmem:[%s1 + $0xed8] sm:$0xf]
    %v982 = vld [vmem:[%s1 + $0xedc] sm:$0xf]
    %v983 = vld [vmem:[%s1 + $0xee0] sm:$0xf]
    %v984 = vld [vmem:[%s1 + $0xee4] sm:$0xf]
    %v985 = vld [vmem:[%s1 + $0xee8] sm:$0xf]
    %v986 = vld [vmem:[%s1 + $0xeec] sm:$0xf]
    %v987 = vld [vmem:[%s1 + $0xef0] sm:$0xf]
    %v988 = vld [vmem:[%s1 + $0xef4] sm:$0xf]
    %v989 = vld [vmem:[%s1 + $0xef8] sm:$0xf]
    %v990 = vld [vmem:[%s1 + $0xefc] sm:$0xf]
    %v991 = vld [vmem:[%s1 + $0xf00] sm:$0xf]
    %v992 = vld [vmem:[%s1 + $0xf04] sm:$0xf]
    %v993 = vld [vmem:[%s1 + $0xf08] sm:$0xf]
    %v994 = vld [vmem:[%s1 + $0xf0c] sm:$0xf]
    %v995 = vld [vmem:[%s1 + $0xf10] sm:$0xf]
    %v996 = vld [vmem:[%s1 + $0xf14] sm:$0xf]
    %v997 = vld [vmem:[%s1 + $0xf18] sm:$0xf]
    %v998 = vld [vmem:[%s1 + $0xf1c] sm:$0xf]
    %v999 = vld [vmem:[%s1 + $0xf20] sm:$0xf]
    %v1000 = vld [vmem:[%s1 + $0xf24] sm:$0xf]
    %v1001 = vld [vmem:[%s1 + $0xf28] sm:$0xf]
    %v1002 = vld [vmem:[%s1 + $0xf2c] sm:$0xf]
    %v1003 = vld [vmem:[%s1 + $0xf30] sm:$0xf]
    %v1004 = vld [vmem:[%s1 + $0xf34] sm:$0xf]
    %v1005 = vld [vmem:[%s1 + $0xf38] sm:$0xf]
    %v1006 = vld [vmem:[%s1 + $0xf3c] sm:$0xf]
    %v1007 = vld [vmem:[%s1 + $0xf40] sm:$0xf]
    %v1008 = vld [vmem:[%s1 + $0xf44] sm:$0xf]
    %v1009 = vld [vmem:[%s1 + $0xf48] sm:$0xf]
    %v1010 = vld [vmem:[%s1 + $0xf4c] sm:$0xf]
    %v1011 = vld [vmem:[%s1 + $0xf50] sm:$0xf]
    %v1012 = vld [vmem:[%s1 + $0xf54] sm:$0xf]
    %v1013 = vld [vmem:[%s1 + $0xf58] sm:$0xf]
    %v1014 = vld [vmem:[%s1 + $0xf5c] sm:$0xf]
    %v1015 = vld [vmem:[%s1 + $0xf60] sm:$0xf]
    %v1016 = vld [vmem:[%s1 + $0xf64] sm:$0xf]
    %v1017 = vld [vmem:[%s1 + $0xf68] sm:$0xf]
    %v1018 = vld [vmem:[%s1 + $0xf6c] sm:$0xf]
    %v1019 = vld [vmem:[%s1 + $0xf70] sm:$0xf]
    %v1020 = vld [vmem:[%s1 + $0xf74] sm:$0xf]
    %v1021 = vld [vmem:[%s1 + $0xf78] sm:$0xf]
    %v1022 = vld [vmem:[%s1 + $0xf7c] sm:$0xf]
    %v1023 = vld [vmem:[%s1 + $0xf80] sm:$0xf]
    %v1024 = vld [vmem:[%s1 + $0xf84] sm:$0xf]
    %v1025 = vld [vmem:[%s1 + $0xf88] sm:$0xf]
    %v1026 = vld [vmem:[%s1 + $0xf8c] sm:$0xf]
    %v1027 = vld [vmem:[%s1 + $0xf90] sm:$0xf]
    %v1028 = vld [vmem:[%s1 + $0xf94] sm:$0xf]
    %v1029 = vld [vmem:[%s1 + $0xf98] sm:$0xf]
    %v1030 = vld [vmem:[%s1 + $0xf9c] sm:$0xf]
    %v1031 = vld [vmem:[%s1 + $0xfa0] sm:$0xf]
    %v1032 = vld [vmem:[%s1 + $0xfa4] sm:$0xf]
    %v1033 = vld [vmem:[%s1 + $0xfa8] sm:$0xf]
    %v1034 = vld [vmem:[%s1 + $0xfac] sm:$0xf]
    %v1035 = vld [vmem:[%s1 + $0xfb0] sm:$0xf]
    %v1036 = vld [vmem:[%s1 + $0xfb4] sm:$0xf]
    %v1037 = vld [vmem:[%s1 + $0xfb8] sm:$0xf]
    %v1038 = vld [vmem:[%s1 + $0xfbc] sm:$0xf]
    %v1039 = vld [vmem:[%s1 + $0xfc0] sm:$0xf]
    %v1040 = vld [vmem:[%s1 + $0xfc4] sm:$0xf]
    %v1041 = vld [vmem:[%s1 + $0xfc8] sm:$0xf]
    %v1042 = vld [vmem:[%s1 + $0xfcc] sm:$0xf]
    %v1043 = vld [vmem:[%s1 + $0xfd0] sm:$0xf]
    %v1044 = vld [vmem:[%s1 + $0xfd4] sm:$0xf]
    %v1045 = vld [vmem:[%s1 + $0xfd8] sm:$0xf]
    %v1046 = vld [vmem:[%s1 + $0xfdc] sm:$0xf]
    %v1047 = vld [vmem:[%s1 + $0xfe0] sm:$0xf]
    %v1048 = vld [vmem:[%s1 + $0xfe4] sm:$0xf]
    %v1049 = vld [vmem:[%s1 + $0xfe8] sm:$0xf]
    %v1050 = vld [vmem:[%s1 + $0xfec] sm:$0xf]
    %v1051 = vld [vmem:[%s1 + $0xff0] sm:$0xf]
    %v1052 = vld [vmem:[%s1 + $0xff4] sm:$0xf]
    %v1053 = vld [vmem:[%s1 + $0xff8] sm:$0xf]
    %v1054 = vld [vmem:[%s1 + $0xffc] sm:$0xf]
    %v1055 = vld [vmem:[%s1 + $0x1000] sm:$0xf]
    %v1056 = vld [vmem:[%s1 + $0x1004] sm:$0xf]
    %v1057 = vld [vmem:[%s1 + $0x1008] sm:$0xf]
    %v1058 = vld [vmem:[%s1 + $0x100c] sm:$0xf]
    %v1059 = vld [vmem:[%s1 + $0x1010] sm:$0xf]
    %v1060 = vld [vmem:[%s1 + $0x1014] sm:$0xf]
    %v1061 = vld [vmem:[%s1 + $0x1018] sm:$0xf]
    %v1062 = vld [vmem:[%s1 + $0x101c] sm:$0xf]
    %v1063 = vld [vmem:[%s1 + $0x1020] sm:$0xf]
    %v1064 = vld [vmem:[%s1 + $0x1024] sm:$0xf]
    %v1065 = vld [vmem:[%s1 + $0x1028] sm:$0xf]
    %v1066 = vld [vmem:[%s1 + $0x102c] sm:$0xf]
    %v1067 = vld [vmem:[%s1 + $0x1030] sm:$0xf]
    %v1068 = vld [vmem:[%s1 + $0x1034] sm:$0xf]
    %v1069 = vld [vmem:[%s1 + $0x1038] sm:$0xf]
    %v1070 = vld [vmem:[%s1 + $0x103c] sm:$0xf]
    %v1071 = vld [vmem:[%s1 + $0x1040] sm:$0xf]
    %v1072 = vld [vmem:[%s1 + $0x1044] sm:$0xf]
    %v1073 = vld [vmem:[%s1 + $0x1048] sm:$0xf]
    %v1074 = vld [vmem:[%s1 + $0x104c] sm:$0xf]
    %v1075 = vld [vmem:[%s1 + $0x1050] sm:$0xf]
    %v1076 = vld [vmem:[%s1 + $0x1054] sm:$0xf]
    %v1077 = vld [vmem:[%s1 + $0x1058] sm:$0xf]
    %v1078 = vld [vmem:[%s1 + $0x105c] sm:$0xf]
    %v1079 = vld [vmem:[%s1 + $0x1060] sm:$0xf]
    %v1080 = vld [vmem:[%s1 + $0x1064] sm:$0xf]
    %v1081 = vld [vmem:[%s1 + $0x1068] sm:$0xf]
    %v1082 = vld [vmem:[%s1 + $0x106c] sm:$0xf]
    %v1083 = vld [vmem:[%s1 + $0x1070] sm:$0xf]
    %v1084 = vld [vmem:[%s1 + $0x1074] sm:$0xf]
    %v1085 = vld [vmem:[%s1 + $0x1078] sm:$0xf]
    %v1086 = vld [vmem:[%s1 + $0x107c] sm:$0xf]
    %v1087 = vld [vmem:[%s1 + $0x1080] sm:$0xf]
    %v1088 = vld [vmem:[%s1 + $0x1084] sm:$0xf]
    %v1089 = vld [vmem:[%s1 + $0x1088] sm:$0xf]
    %v1090 = vld [vmem:[%s1 + $0x108c] sm:$0xf]
    %v1091 = vld [vmem:[%s1 + $0x1090] sm:$0xf]
    %v1092 = vld [vmem:[%s1 + $0x1094] sm:$0xf]
    %v1093 = vld [vmem:[%s1 + $0x1098] sm:$0xf]
    %v1094 = vld [vmem:[%s1 + $0x109c] sm:$0xf]
    %v1095 = vld [vmem:[%s1 + $0x10a0] sm:$0xf]
    %v1096 = vld [vmem:[%s1 + $0x10a4] sm:$0xf]
    %v1097 = vld [vmem:[%s1 + $0x10a8] sm:$0xf]
    %v1098 = vld [vmem:[%s1 + $0x10ac] sm:$0xf]
    %v1099 = vld [vmem:[%s1 + $0x10b0] sm:$0xf]
    %v1100 = vld [vmem:[%s1 + $0x10b4] sm:$0xf]
    %v1101 = vld [vmem:[%s1 + $0x10b8] sm:$0xf]
    %v1102 = vld [vmem:[%s1 + $0x10bc] sm:$0xf]
    %v1103 = vld [vmem:[%s1 + $0x10c0] sm:$0xf]
    %v1104 = vld [vmem:[%s1 + $0x10c4] sm:$0xf]
    %v1105 = vld [vmem:[%s1 + $0x10c8] sm:$0xf]
    %v1106 = vld [vmem:[%s1 + $0x10cc] sm:$0xf]
    %v1107 = vld [vmem:[%s1 + $0x10d0] sm:$0xf]
    %v1108 = vld [vmem:[%s1 + $0x10d4] sm:$0xf]
    %v1109 = vld [vmem:[%s1 + $0x10d8] sm:$0xf]
    %v1110 = vld [vmem:[%s1 + $0x10dc] sm:$0xf]
    %v1111 = vld [vmem:[%s1 + $0x10e0] sm:$0xf]
    %v1112 = vld [vmem:[%s1 + $0x10e4] sm:$0xf]
    %v1113 = vld [vmem:[%s1 + $0x10e8] sm:$0xf]
    %v1114 = vld [vmem:[%s1 + $0x10ec] sm:$0xf]
    %v1115 = vld [vmem:[%s1 + $0x10f0] sm:$0xf]
    %v1116 = vld [vmem:[%s1 + $0x10f4] sm:$0xf]
    %v1117 = vld [vmem:[%s1 + $0x10f8] sm:$0xf]
    %v1118 = vld [vmem:[%s1 + $0x10fc] sm:$0xf]
    %v1119 = vld [vmem:[%s1 + $0x1100] sm:$0xf]
    %v1120 = vld [vmem:[%s1 + $0x1104] sm:$0xf]
    %v1121 = vld [vmem:[%s1 + $0x1108] sm:$0xf]
    %v1122 = vld [vmem:[%s1 + $0x110c] sm:$0xf]
    %v1123 = vld [vmem:[%s1 + $0x1110] sm:$0xf]
    %v1124 = vld [vmem:[%s1 + $0x1114] sm:$0xf]
    %v1125 = vld [vmem:[%s1 + $0x1118] sm:$0xf]
    %v1126 = vld [vmem:[%s1 + $0x111c] sm:$0xf]
    %v1127 = vld [vmem:[%s1 + $0x1120] sm:$0xf]
    %v1128 = vld [vmem:[%s1 + $0x1124] sm:$0xf]
    %v1129 = vld [vmem:[%s1 + $0x1128] sm:$0xf]
    %v1130 = vld [vmem:[%s1 + $0x112c] sm:$0xf]
    %v1131 = vld [vmem:[%s1 + $0x1130] sm:$0xf]
    %v1132 = vld [vmem:[%s1 + $0x1134] sm:$0xf]
    %v1133 = vld [vmem:[%s1 + $0x1138] sm:$0xf]
    %v1134 = vld [vmem:[%s1 + $0x113c] sm:$0xf]
    %v1135 = vld [vmem:[%s1 + $0x1140] sm:$0xf]
    %v1136 = vld [vmem:[%s1 + $0x1144] sm:$0xf]
    %v1137 = vld [vmem:[%s1 + $0x1148] sm:$0xf]
    %v1138 = vld [vmem:[%s1 + $0x114c] sm:$0xf]
    %v1139 = vld [vmem:[%s1 + $0x1150] sm:$0xf]
    %v1140 = vld [vmem:[%s1 + $0x1154] sm:$0xf]
    %v1141 = vld [vmem:[%s1 + $0x1158] sm:$0xf]
    %v1142 = vld [vmem:[%s1 + $0x115c] sm:$0xf]
    %v1143 = vld [vmem:[%s1 + $0x1160] sm:$0xf]
    %v1144 = vld [vmem:[%s1 + $0x1164] sm:$0xf]
    %v1145 = vld [vmem:[%s1 + $0x1168] sm:$0xf]
    %v1146 = vld [vmem:[%s1 + $0x116c] sm:$0xf]
    %v1147 = vld [vmem:[%s1 + $0x1170] sm:$0xf]
    %v1148 = vld [vmem:[%s1 + $0x1174] sm:$0xf]
    %v1149 = vld [vmem:[%s1 + $0x1178] sm:$0xf]
    %v1150 = vld [vmem:[%s1 + $0x117c] sm:$0xf]
    %v1151 = vld [vmem:[%s1 + $0x1180] sm:$0xf]
    %v1152 = vld [vmem:[%s1 + $0x1184] sm:$0xf]
    %v1153 = vld [vmem:[%s1 + $0x1188] sm:$0xf]
    %v1154 = vld [vmem:[%s1 + $0x118c] sm:$0xf]
    %v1155 = vld [vmem:[%s1 + $0x1190] sm:$0xf]
    %v1156 = vld [vmem:[%s1 + $0x1194] sm:$0xf]
    %v1157 = vld [vmem:[%s1 + $0x1198] sm:$0xf]
    %v1158 = vld [vmem:[%s1 + $0x119c] sm:$0xf]
    %v1159 = vld [vmem:[%s1 + $0x11a0] sm:$0xf]
    %v1160 = vld [vmem:[%s1 + $0x11a4] sm:$0xf]
    %v1161 = vld [vmem:[%s1 + $0x11a8] sm:$0xf]
    %v1162 = vld [vmem:[%s1 + $0x11ac] sm:$0xf]
    %v1163 = vld [vmem:[%s1 + $0x11b0] sm:$0xf]
    %v1164 = vld [vmem:[%s1 + $0x11b4] sm:$0xf]
    %v1165 = vld [vmem:[%s1 + $0x11b8] sm:$0xf]
    %v1166 = vld [vmem:[%s1 + $0x11bc] sm:$0xf]
    %v1167 = vld [vmem:[%s1 + $0x11c0] sm:$0xf]
    %v1168 = vld [vmem:[%s1 + $0x11c4] sm:$0xf]
    %v1169 = vld [vmem:[%s1 + $0x11c8] sm:$0xf]
    %v1170 = vld [vmem:[%s1 + $0x11cc] sm:$0xf]
    %v1171 = vld [vmem:[%s1 + $0x11d0] sm:$0xf]
    %v1172 = vld [vmem:[%s1 + $0x11d4] sm:$0xf]
    %v1173 = vld [vmem:[%s1 + $0x11d8] sm:$0xf]
    %v1174 = vld [vmem:[%s1 + $0x11dc] sm:$0xf]
    %v1175 = vld [vmem:[%s1 + $0x11e0] sm:$0xf]
    %v1176 = vld [vmem:[%s1 + $0x11e4] sm:$0xf]
    %v1177 = vld [vmem:[%s1 + $0x11e8] sm:$0xf]
    %v1178 = vld [vmem:[%s1 + $0x11ec] sm:$0xf]
    %v1179 = vld [vmem:[%s1 + $0x11f0] sm:$0xf]
    %v1180 = vld [vmem:[%s1 + $0x11f4] sm:$0xf]
    %v1181 = vld [vmem:[%s1 + $0x11f8] sm:$0xf]
    %v1182 = vld [vmem:[%s1 + $0x11fc] sm:$0xf]
    %v1183 = vld [vmem:[%s2] sm:$0x1]
    %v1185 = vlaneseq
    %v1186 = vshrl.u32 %v1185, 7
    %v1187 = vsub.s32 0, %v1186
    %v1188 = vrot.slane %v1183, %v1187
    %v1199 = vcombine.high %v22, %v22
    %v1201 = vunpack.c.l.s4 1966171168
    %v1202 = vunpack.c.0.s8 %v1201
    %v1203 = vlaneseq
    %v1204 = vshrl.u32 %v1203, 7
    %v1205 = vsub.s32 %v1202, %v1204
    %v1206 = vrot.slane %v22, %v1205
    %v1208 = vunpack.c.l.s4 1966171168
    %v1209 = vunpack.c.0.s8 %v1208
    %v1210 = vlaneseq
    %v1211 = vshrl.u32 %v1210, 7
    %v1212 = vsub.s32 %v1209, %v1211
    %v1213 = vrot.slane %v1199, %v1212
    %v1214 = vcombine.high %v1206, %v1206
    %v1215 = vcombine.high %v1213, %v1213
    %v1217 = vunpack.c.l.s4 1966171168
    %v1218 = vunpack.c.0.s8 %v1217
    %v1219 = vlaneseq
    %v1220 = vshrl.u32 %v1219, 7
    %v1221 = vsub.s32 %v1218, %v1220
    %v1222 = vrot.slane %v1206, %v1221
    %v1224 = vunpack.c.l.s4 1966171168
    %v1225 = vunpack.c.0.s8 %v1224
    %v1226 = vlaneseq
    %v1227 = vshrl.u32 %v1226, 7
    %v1228 = vsub.s32 %v1225, %v1227
    %v1229 = vrot.slane %v1213, %v1228
    %v1231 = vunpack.c.l.s4 1966171168
    %v1232 = vunpack.c.0.s8 %v1231
    %v1233 = vlaneseq
    %v1234 = vshrl.u32 %v1233, 7
    %v1235 = vsub.s32 %v1232, %v1234
    %v1236 = vrot.slane %v1214, %v1235
    %v1238 = vunpack.c.l.s4 1966171168
    %v1239 = vunpack.c.0.s8 %v1238
    %v1240 = vlaneseq
    %v1241 = vshrl.u32 %v1240, 7
    %v1242 = vsub.s32 %v1239, %v1241
    %v1243 = vrot.slane %v1215, %v1242
    %v1244 = vcombine.high %v1222, %v1222
    %v1245 = vcombine.high %v1229, %v1229
    %v1246 = vcombine.high %v1236, %v1236
    %v1247 = vcombine.high %v1243, %v1243
    %v1248 = vcombine.high %v23, %v23
    %v1250 = vunpack.c.l.s4 1966171168
    %v1251 = vunpack.c.0.s8 %v1250
    %v1252 = vlaneseq
    %v1253 = vshrl.u32 %v1252, 7
    %v1254 = vsub.s32 %v1251, %v1253
    %v1255 = vrot.slane %v23, %v1254
    %v1257 = vunpack.c.l.s4 1966171168
    %v1258 = vunpack.c.0.s8 %v1257
    %v1259 = vlaneseq
    %v1260 = vshrl.u32 %v1259, 7
    %v1261 = vsub.s32 %v1258, %v1260
    %v1262 = vrot.slane %v1248, %v1261
    %v1263 = vcombine.high %v1255, %v1255
    %v1264 = vcombine.high %v1262, %v1262
    %v1266 = vunpack.c.l.s4 1966171168
    %v1267 = vunpack.c.0.s8 %v1266
    %v1268 = vlaneseq
    %v1269 = vshrl.u32 %v1268, 7
    %v1270 = vsub.s32 %v1267, %v1269
    %v1271 = vrot.slane %v1255, %v1270
    %v1273 = vunpack.c.l.s4 1966171168
    %v1274 = vunpack.c.0.s8 %v1273
    %v1275 = vlaneseq
    %v1276 = vshrl.u32 %v1275, 7
    %v1277 = vsub.s32 %v1274, %v1276
    %v1278 = vrot.slane %v1262, %v1277
    %v1280 = vunpack.c.l.s4 1966171168
    %v1281 = vunpack.c.0.s8 %v1280
    %v1282 = vlaneseq
    %v1283 = vshrl.u32 %v1282, 7
    %v1284 = vsub.s32 %v1281, %v1283
    %v1285 = vrot.slane %v1263, %v1284
    %v1287 = vunpack.c.l.s4 1966171168
    %v1288 = vunpack.c.0.s8 %v1287
    %v1289 = vlaneseq
    %v1290 = vshrl.u32 %v1289, 7
    %v1291 = vsub.s32 %v1288, %v1290
    %v1292 = vrot.slane %v1264, %v1291
    %v1293 = vcombine.high %v1271, %v1271
    %v1294 = vcombine.high %v1278, %v1278
    %v1295 = vcombine.high %v1285, %v1285
    %v1296 = vcombine.high %v1292, %v1292
    %v1297 = vcombine.high %v24, %v24
    %v1299 = vunpack.c.l.s4 1966171168
    %v1300 = vunpack.c.0.s8 %v1299
    %v1301 = vlaneseq
    %v1302 = vshrl.u32 %v1301, 7
    %v1303 = vsub.s32 %v1300, %v1302
    %v1304 = vrot.slane %v24, %v1303
    %v1306 = vunpack.c.l.s4 1966171168
    %v1307 = vunpack.c.0.s8 %v1306
    %v1308 = vlaneseq
    %v1309 = vshrl.u32 %v1308, 7
    %v1310 = vsub.s32 %v1307, %v1309
    %v1311 = vrot.slane %v1297, %v1310
    %v1312 = vcombine.high %v1304, %v1304
    %v1313 = vcombine.high %v1311, %v1311
    %v1315 = vunpack.c.l.s4 1966171168
    %v1316 = vunpack.c.0.s8 %v1315
    %v1317 = vlaneseq
    %v1318 = vshrl.u32 %v1317, 7
    %v1319 = vsub.s32 %v1316, %v1318
    %v1320 = vrot.slane %v1304, %v1319
    %v1322 = vunpack.c.l.s4 1966171168
    %v1323 = vunpack.c.0.s8 %v1322
    %v1324 = vlaneseq
    %v1325 = vshrl.u32 %v1324, 7
    %v1326 = vsub.s32 %v1323, %v1325
    %v1327 = vrot.slane %v1311, %v1326
    %v1329 = vunpack.c.l.s4 1966171168
    %v1330 = vunpack.c.0.s8 %v1329
    %v1331 = vlaneseq
    %v1332 = vshrl.u32 %v1331, 7
    %v1333 = vsub.s32 %v1330, %v1332
    %v1334 = vrot.slane %v1312, %v1333
    %v1336 = vunpack.c.l.s4 1966171168
    %v1337 = vunpack.c.0.s8 %v1336
    %v1338 = vlaneseq
    %v1339 = vshrl.u32 %v1338, 7
    %v1340 = vsub.s32 %v1337, %v1339
    %v1341 = vrot.slane %v1313, %v1340
    %v1342 = vcombine.high %v1320, %v1320
    %v1343 = vcombine.high %v1327, %v1327
    %v1344 = vcombine.high %v1334, %v1334
    %v1345 = vcombine.high %v1341, %v1341
    %v1346 = vcombine.high %v25, %v25
    %v1348 = vunpack.c.l.s4 1966171168
    %v1349 = vunpack.c.0.s8 %v1348
    %v1350 = vlaneseq
    %v1351 = vshrl.u32 %v1350, 7
    %v1352 = vsub.s32 %v1349, %v1351
    %v1353 = vrot.slane %v25, %v1352
    %v1355 = vunpack.c.l.s4 1966171168
    %v1356 = vunpack.c.0.s8 %v1355
    %v1357 = vlaneseq
    %v1358 = vshrl.u32 %v1357, 7
    %v1359 = vsub.s32 %v1356, %v1358
    %v1360 = vrot.slane %v1346, %v1359
    %v1361 = vcombine.high %v1353, %v1353
    %v1362 = vcombine.high %v1360, %v1360
    %v1364 = vunpack.c.l.s4 1966171168
    %v1365 = vunpack.c.0.s8 %v1364
    %v1366 = vlaneseq
    %v1367 = vshrl.u32 %v1366, 7
    %v1368 = vsub.s32 %v1365, %v1367
    %v1369 = vrot.slane %v1353, %v1368
    %v1371 = vunpack.c.l.s4 1966171168
    %v1372 = vunpack.c.0.s8 %v1371
    %v1373 = vlaneseq
    %v1374 = vshrl.u32 %v1373, 7
    %v1375 = vsub.s32 %v1372, %v1374
    %v1376 = vrot.slane %v1360, %v1375
    %v1378 = vunpack.c.l.s4 1966171168
    %v1379 = vunpack.c.0.s8 %v1378
    %v1380 = vlaneseq
    %v1381 = vshrl.u32 %v1380, 7
    %v1382 = vsub.s32 %v1379, %v1381
    %v1383 = vrot.slane %v1361, %v1382
    %v1385 = vunpack.c.l.s4 1966171168
    %v1386 = vunpack.c.0.s8 %v1385
    %v1387 = vlaneseq
    %v1388 = vshrl.u32 %v1387, 7
    %v1389 = vsub.s32 %v1386, %v1388
    %v1390 = vrot.slane %v1362, %v1389
    %v1391 = vcombine.high %v1369, %v1369
    %v1392 = vcombine.high %v1376, %v1376
    %v1393 = vcombine.high %v1383, %v1383
    %v1394 = vcombine.high %v1390, %v1390
    %v1395 = vcombine.high %v26, %v26
    %v1397 = vunpack.c.l.s4 1966171168
    %v1398 = vunpack.c.0.s8 %v1397
    %v1399 = vlaneseq
    %v1400 = vshrl.u32 %v1399, 7
    %v1401 = vsub.s32 %v1398, %v1400
    %v1402 = vrot.slane %v26, %v1401
    %v1404 = vunpack.c.l.s4 1966171168
    %v1405 = vunpack.c.0.s8 %v1404
    %v1406 = vlaneseq
    %v1407 = vshrl.u32 %v1406, 7
    %v1408 = vsub.s32 %v1405, %v1407
    %v1409 = vrot.slane %v1395, %v1408
    %v1410 = vcombine.high %v1402, %v1402
    %v1411 = vcombine.high %v1409, %v1409
    %v1413 = vunpack.c.l.s4 1966171168
    %v1414 = vunpack.c.0.s8 %v1413
    %v1415 = vlaneseq
    %v1416 = vshrl.u32 %v1415, 7
    %v1417 = vsub.s32 %v1414, %v1416
    %v1418 = vrot.slane %v1402, %v1417
    %v1420 = vunpack.c.l.s4 1966171168
    %v1421 = vunpack.c.0.s8 %v1420
    %v1422 = vlaneseq
    %v1423 = vshrl.u32 %v1422, 7
    %v1424 = vsub.s32 %v1421, %v1423
    %v1425 = vrot.slane %v1409, %v1424
    %v1427 = vunpack.c.l.s4 1966171168
    %v1428 = vunpack.c.0.s8 %v1427
    %v1429 = vlaneseq
    %v1430 = vshrl.u32 %v1429, 7
    %v1431 = vsub.s32 %v1428, %v1430
    %v1432 = vrot.slane %v1410, %v1431
    %v1434 = vunpack.c.l.s4 1966171168
    %v1435 = vunpack.c.0.s8 %v1434
    %v1436 = vlaneseq
    %v1437 = vshrl.u32 %v1436, 7
    %v1438 = vsub.s32 %v1435, %v1437
    %v1439 = vrot.slane %v1411, %v1438
    %v1440 = vcombine.high %v1418, %v1418
    %v1441 = vcombine.high %v1425, %v1425
    %v1442 = vcombine.high %v1432, %v1432
    %v1443 = vcombine.high %v1439, %v1439
    %v1444 = vcombine.high %v27, %v27
    %v1446 = vunpack.c.l.s4 1966171168
    %v1447 = vunpack.c.0.s8 %v1446
    %v1448 = vlaneseq
    %v1449 = vshrl.u32 %v1448, 7
    %v1450 = vsub.s32 %v1447, %v1449
    %v1451 = vrot.slane %v27, %v1450
    %v1453 = vunpack.c.l.s4 1966171168
    %v1454 = vunpack.c.0.s8 %v1453
    %v1455 = vlaneseq
    %v1456 = vshrl.u32 %v1455, 7
    %v1457 = vsub.s32 %v1454, %v1456
    %v1458 = vrot.slane %v1444, %v1457
    %v1459 = vcombine.high %v1451, %v1451
    %v1460 = vcombine.high %v1458, %v1458
    %v1462 = vunpack.c.l.s4 1966171168
    %v1463 = vunpack.c.0.s8 %v1462
    %v1464 = vlaneseq
    %v1465 = vshrl.u32 %v1464, 7
    %v1466 = vsub.s32 %v1463, %v1465
    %v1467 = vrot.slane %v1451, %v1466
    %v1469 = vunpack.c.l.s4 1966171168
    %v1470 = vunpack.c.0.s8 %v1469
    %v1471 = vlaneseq
    %v1472 = vshrl.u32 %v1471, 7
    %v1473 = vsub.s32 %v1470, %v1472
    %v1474 = vrot.slane %v1458, %v1473
    %v1476 = vunpack.c.l.s4 1966171168
    %v1477 = vunpack.c.0.s8 %v1476
    %v1478 = vlaneseq
    %v1479 = vshrl.u32 %v1478, 7
    %v1480 = vsub.s32 %v1477, %v1479
    %v1481 = vrot.slane %v1459, %v1480
    %v1483 = vunpack.c.l.s4 1966171168
    %v1484 = vunpack.c.0.s8 %v1483
    %v1485 = vlaneseq
    %v1486 = vshrl.u32 %v1485, 7
    %v1487 = vsub.s32 %v1484, %v1486
    %v1488 = vrot.slane %v1460, %v1487
    %v1489 = vcombine.high %v1467, %v1467
    %v1490 = vcombine.high %v1474, %v1474
    %v1491 = vcombine.high %v1481, %v1481
    %v1492 = vcombine.high %v1488, %v1488
    %v1493 = vcombine.high %v28, %v28
    %v1495 = vunpack.c.l.s4 1966171168
    %v1496 = vunpack.c.0.s8 %v1495
    %v1497 = vlaneseq
    %v1498 = vshrl.u32 %v1497, 7
    %v1499 = vsub.s32 %v1496, %v1498
    %v1500 = vrot.slane %v28, %v1499
    %v1502 = vunpack.c.l.s4 1966171168
    %v1503 = vunpack.c.0.s8 %v1502
    %v1504 = vlaneseq
    %v1505 = vshrl.u32 %v1504, 7
    %v1506 = vsub.s32 %v1503, %v1505
    %v1507 = vrot.slane %v1493, %v1506
    %v1508 = vcombine.high %v1500, %v1500
    %v1509 = vcombine.high %v1507, %v1507
    %v1511 = vunpack.c.l.s4 1966171168
    %v1512 = vunpack.c.0.s8 %v1511
    %v1513 = vlaneseq
    %v1514 = vshrl.u32 %v1513, 7
    %v1515 = vsub.s32 %v1512, %v1514
    %v1516 = vrot.slane %v1500, %v1515
    %v1518 = vunpack.c.l.s4 1966171168
    %v1519 = vunpack.c.0.s8 %v1518
    %v1520 = vlaneseq
    %v1521 = vshrl.u32 %v1520, 7
    %v1522 = vsub.s32 %v1519, %v1521
    %v1523 = vrot.slane %v1507, %v1522
    %v1525 = vunpack.c.l.s4 1966171168
    %v1526 = vunpack.c.0.s8 %v1525
    %v1527 = vlaneseq
    %v1528 = vshrl.u32 %v1527, 7
    %v1529 = vsub.s32 %v1526, %v1528
    %v1530 = vrot.slane %v1508, %v1529
    %v1532 = vunpack.c.l.s4 1966171168
    %v1533 = vunpack.c.0.s8 %v1532
    %v1534 = vlaneseq
    %v1535 = vshrl.u32 %v1534, 7
    %v1536 = vsub.s32 %v1533, %v1535
    %v1537 = vrot.slane %v1509, %v1536
    %v1538 = vcombine.high %v1516, %v1516
    %v1539 = vcombine.high %v1523, %v1523
    %v1540 = vcombine.high %v1530, %v1530
    %v1541 = vcombine.high %v1537, %v1537
    %v1542 = vcombine.high %v29, %v29
    %v1544 = vunpack.c.l.s4 1966171168
    %v1545 = vunpack.c.0.s8 %v1544
    %v1546 = vlaneseq
    %v1547 = vshrl.u32 %v1546, 7
    %v1548 = vsub.s32 %v1545, %v1547
    %v1549 = vrot.slane %v29, %v1548
    %v1551 = vunpack.c.l.s4 1966171168
    %v1552 = vunpack.c.0.s8 %v1551
    %v1553 = vlaneseq
    %v1554 = vshrl.u32 %v1553, 7
    %v1555 = vsub.s32 %v1552, %v1554
    %v1556 = vrot.slane %v1542, %v1555
    %v1557 = vcombine.high %v1549, %v1549
    %v1558 = vcombine.high %v1556, %v1556
    %v1560 = vunpack.c.l.s4 1966171168
    %v1561 = vunpack.c.0.s8 %v1560
    %v1562 = vlaneseq
    %v1563 = vshrl.u32 %v1562, 7
    %v1564 = vsub.s32 %v1561, %v1563
    %v1565 = vrot.slane %v1549, %v1564
    %v1567 = vunpack.c.l.s4 1966171168
    %v1568 = vunpack.c.0.s8 %v1567
    %v1569 = vlaneseq
    %v1570 = vshrl.u32 %v1569, 7
    %v1571 = vsub.s32 %v1568, %v1570
    %v1572 = vrot.slane %v1556, %v1571
    %v1574 = vunpack.c.l.s4 1966171168
    %v1575 = vunpack.c.0.s8 %v1574
    %v1576 = vlaneseq
    %v1577 = vshrl.u32 %v1576, 7
    %v1578 = vsub.s32 %v1575, %v1577
    %v1579 = vrot.slane %v1557, %v1578
    %v1581 = vunpack.c.l.s4 1966171168
    %v1582 = vunpack.c.0.s8 %v1581
    %v1583 = vlaneseq
    %v1584 = vshrl.u32 %v1583, 7
    %v1585 = vsub.s32 %v1582, %v1584
    %v1586 = vrot.slane %v1558, %v1585
    %v1587 = vcombine.high %v1565, %v1565
    %v1588 = vcombine.high %v1572, %v1572
    %v1589 = vcombine.high %v1579, %v1579
    %v1590 = vcombine.high %v1586, %v1586
    %v1591 = vcombine.high %v30, %v30
    %v1593 = vunpack.c.l.s4 1966171168
    %v1594 = vunpack.c.0.s8 %v1593
    %v1595 = vlaneseq
    %v1596 = vshrl.u32 %v1595, 7
    %v1597 = vsub.s32 %v1594, %v1596
    %v1598 = vrot.slane %v30, %v1597
    %v1600 = vunpack.c.l.s4 1966171168
    %v1601 = vunpack.c.0.s8 %v1600
    %v1602 = vlaneseq
    %v1603 = vshrl.u32 %v1602, 7
    %v1604 = vsub.s32 %v1601, %v1603
    %v1605 = vrot.slane %v1591, %v1604
    %v1606 = vcombine.high %v1598, %v1598
    %v1607 = vcombine.high %v1605, %v1605
    %v1609 = vunpack.c.l.s4 1966171168
    %v1610 = vunpack.c.0.s8 %v1609
    %v1611 = vlaneseq
    %v1612 = vshrl.u32 %v1611, 7
    %v1613 = vsub.s32 %v1610, %v1612
    %v1614 = vrot.slane %v1598, %v1613
    %v1616 = vunpack.c.l.s4 1966171168
    %v1617 = vunpack.c.0.s8 %v1616
    %v1618 = vlaneseq
    %v1619 = vshrl.u32 %v1618, 7
    %v1620 = vsub.s32 %v1617, %v1619
    %v1621 = vrot.slane %v1605, %v1620
    %v1623 = vunpack.c.l.s4 1966171168
    %v1624 = vunpack.c.0.s8 %v1623
    %v1625 = vlaneseq
    %v1626 = vshrl.u32 %v1625, 7
    %v1627 = vsub.s32 %v1624, %v1626
    %v1628 = vrot.slane %v1606, %v1627
    %v1630 = vunpack.c.l.s4 1966171168
    %v1631 = vunpack.c.0.s8 %v1630
    %v1632 = vlaneseq
    %v1633 = vshrl.u32 %v1632, 7
    %v1634 = vsub.s32 %v1631, %v1633
    %v1635 = vrot.slane %v1607, %v1634
    %v1636 = vcombine.high %v1614, %v1614
    %v1637 = vcombine.high %v1621, %v1621
    %v1638 = vcombine.high %v1628, %v1628
    %v1639 = vcombine.high %v1635, %v1635
    %v2864 = vunpack.c.l.b16 %v31
    %v2865 = vunpack.c.l.b16 %v32
    %v2866 = vunpack.c.l.b16 %v33
    %v2867 = vunpack.c.l.b16 %v34
    %v2868 = vunpack.c.l.b16 %v35
    %v2869 = vunpack.c.l.b16 %v36
    %v2870 = vunpack.c.l.b16 %v37
    %v2871 = vunpack.c.l.b16 %v38
    %v2872 = vunpack.c.l.b16 %v39
    %v2873 = vunpack.c.l.b16 %v40
    %v2874 = vunpack.c.l.b16 %v41
    %v2875 = vunpack.c.l.b16 %v42
    %v2876 = vunpack.c.l.b16 %v43
    %v2877 = vunpack.c.l.b16 %v44
    %v2878 = vunpack.c.l.b16 %v45
    %v2879 = vunpack.c.l.b16 %v46
    %v2880 = vunpack.c.l.b16 %v47
    %v2881 = vunpack.c.l.b16 %v48
    %v2882 = vunpack.c.l.b16 %v49
    %v2883 = vunpack.c.l.b16 %v50
    %v2884 = vunpack.c.l.b16 %v51
    %v2885 = vunpack.c.l.b16 %v52
    %v2886 = vunpack.c.l.b16 %v53
    %v2887 = vunpack.c.l.b16 %v54
    %v2888 = vunpack.c.l.b16 %v55
    %v2889 = vunpack.c.l.b16 %v56
    %v2890 = vunpack.c.l.b16 %v57
    %v2891 = vunpack.c.l.b16 %v58
    %v2892 = vunpack.c.l.b16 %v59
    %v2893 = vunpack.c.l.b16 %v60
    %v2894 = vunpack.c.l.b16 %v61
    %v2895 = vunpack.c.l.b16 %v62
    %v2896 = vunpack.c.l.b16 %v63
    %v2897 = vunpack.c.l.b16 %v64
    %v2898 = vunpack.c.l.b16 %v65
    %v2899 = vunpack.c.l.b16 %v66
    %v2900 = vunpack.c.l.b16 %v67
    %v2901 = vunpack.c.l.b16 %v68
    %v2902 = vunpack.c.l.b16 %v69
    %v2903 = vunpack.c.l.b16 %v70
    %v2904 = vunpack.c.l.b16 %v71
    %v2905 = vunpack.c.l.b16 %v72
    %v2906 = vunpack.c.l.b16 %v73
    %v2907 = vunpack.c.l.b16 %v74
    %v2908 = vunpack.c.l.b16 %v75
    %v2909 = vunpack.c.l.b16 %v76
    %v2910 = vunpack.c.l.b16 %v77
    %v2911 = vunpack.c.l.b16 %v78
    %v2912 = vunpack.c.l.b16 %v79
    %v2913 = vunpack.c.l.b16 %v80
    %v2914 = vunpack.c.l.b16 %v81
    %v2915 = vunpack.c.l.b16 %v82
    %v2916 = vunpack.c.l.b16 %v83
    %v2917 = vunpack.c.l.b16 %v84
    %v2918 = vunpack.c.l.b16 %v85
    %v2919 = vunpack.c.l.b16 %v86
    %v2920 = vunpack.c.l.b16 %v87
    %v2921 = vunpack.c.l.b16 %v88
    %v2922 = vunpack.c.l.b16 %v89
    %v2923 = vunpack.c.l.b16 %v90
    %v2924 = vunpack.c.l.b16 %v91
    %v2925 = vunpack.c.l.b16 %v92
    %v2926 = vunpack.c.l.b16 %v93
    %v2927 = vunpack.c.l.b16 %v94
    %v2928 = vunpack.c.l.b16 %v95
    %v2929 = vunpack.c.l.b16 %v96
    %v2930 = vunpack.c.l.b16 %v97
    %v2931 = vunpack.c.l.b16 %v98
    %v2932 = vunpack.c.l.b16 %v99
    %v2933 = vunpack.c.l.b16 %v100
    %v2934 = vunpack.c.l.b16 %v101
    %v2935 = vunpack.c.l.b16 %v102
    %v2936 = vunpack.c.l.b16 %v103
    %v2937 = vunpack.c.l.b16 %v104
    %v2938 = vunpack.c.l.b16 %v105
    %v2939 = vunpack.c.l.b16 %v106
    %v2940 = vunpack.c.l.b16 %v107
    %v2941 = vunpack.c.l.b16 %v108
    %v2942 = vunpack.c.l.b16 %v109
    %v2943 = vunpack.c.l.b16 %v110
    %v2944 = vunpack.c.l.b16 %v111
    %v2945 = vunpack.c.l.b16 %v112
    %v2946 = vunpack.c.l.b16 %v113
    %v2947 = vunpack.c.l.b16 %v114
    %v2948 = vunpack.c.l.b16 %v115
    %v2949 = vunpack.c.l.b16 %v116
    %v2950 = vunpack.c.l.b16 %v117
    %v2951 = vunpack.c.l.b16 %v118
    %v2952 = vunpack.c.l.b16 %v119
    %v2953 = vunpack.c.l.b16 %v120
    %v2954 = vunpack.c.l.b16 %v121
    %v2955 = vunpack.c.l.b16 %v122
    %v2956 = vunpack.c.l.b16 %v123
    %v2957 = vunpack.c.l.b16 %v124
    %v2958 = vunpack.c.l.b16 %v125
    %v2959 = vunpack.c.l.b16 %v126
    %v2960 = vunpack.c.l.b16 %v127
    %v2961 = vunpack.c.l.b16 %v128
    %v2962 = vunpack.c.l.b16 %v129
    %v2963 = vunpack.c.l.b16 %v130
    %v2964 = vunpack.c.l.b16 %v131
    %v2965 = vunpack.c.l.b16 %v132
    %v2966 = vunpack.c.l.b16 %v133
    %v2967 = vunpack.c.l.b16 %v134
    %v2968 = vunpack.c.l.b16 %v135
    %v2969 = vunpack.c.l.b16 %v136
    %v2970 = vunpack.c.l.b16 %v137
    %v2971 = vunpack.c.l.b16 %v138
    %v2972 = vunpack.c.l.b16 %v139
    %v2973 = vunpack.c.l.b16 %v140
    %v2974 = vunpack.c.l.b16 %v141
    %v2975 = vunpack.c.l.b16 %v142
    %v2976 = vunpack.c.l.b16 %v143
    %v2977 = vunpack.c.l.b16 %v144
    %v2978 = vunpack.c.l.b16 %v145
    %v2979 = vunpack.c.l.b16 %v146
    %v2980 = vunpack.c.l.b16 %v147
    %v2981 = vunpack.c.l.b16 %v148
    %v2982 = vunpack.c.l.b16 %v149
    %v2983 = vunpack.c.l.b16 %v150
    %v2984 = vunpack.c.l.b16 %v151
    %v2985 = vunpack.c.l.b16 %v152
    %v2986 = vunpack.c.l.b16 %v153
    %v2987 = vunpack.c.l.b16 %v154
    %v2988 = vunpack.c.l.b16 %v155
    %v2989 = vunpack.c.l.b16 %v156
    %v2990 = vunpack.c.l.b16 %v157
    %v2991 = vunpack.c.l.b16 %v158
    %v2992 = vunpack.c.l.b16 %v159
    %v2993 = vunpack.c.l.b16 %v160
    %v2994 = vunpack.c.l.b16 %v161
    %v2995 = vunpack.c.l.b16 %v162
    %v2996 = vunpack.c.l.b16 %v163
    %v2997 = vunpack.c.l.b16 %v164
    %v2998 = vunpack.c.l.b16 %v165
    %v2999 = vunpack.c.l.b16 %v166
    %v3000 = vunpack.c.l.b16 %v167
    %v3001 = vunpack.c.l.b16 %v168
    %v3002 = vunpack.c.l.b16 %v169
    %v3003 = vunpack.c.l.b16 %v170
    %v3004 = vunpack.c.l.b16 %v171
    %v3005 = vunpack.c.l.b16 %v172
    %v3006 = vunpack.c.l.b16 %v173
    %v3007 = vunpack.c.l.b16 %v174
    %v3008 = vunpack.c.l.b16 %v175
    %v3009 = vunpack.c.l.b16 %v176
    %v3010 = vunpack.c.l.b16 %v177
    %v3011 = vunpack.c.l.b16 %v178
    %v3012 = vunpack.c.l.b16 %v179
    %v3013 = vunpack.c.l.b16 %v180
    %v3014 = vunpack.c.l.b16 %v181
    %v3015 = vunpack.c.l.b16 %v182
    %v3016 = vunpack.c.l.b16 %v183
    %v3017 = vunpack.c.l.b16 %v184
    %v3018 = vunpack.c.l.b16 %v185
    %v3019 = vunpack.c.l.b16 %v186
    %v3020 = vunpack.c.l.b16 %v187
    %v3021 = vunpack.c.l.b16 %v188
    %v3022 = vunpack.c.l.b16 %v189
    %v3023 = vunpack.c.l.b16 %v190
    %v3024 = vunpack.c.l.b16 %v191
    %v3025 = vunpack.c.l.b16 %v192
    %v3026 = vunpack.c.l.b16 %v193
    %v3027 = vunpack.c.l.b16 %v194
    %v3028 = vunpack.c.l.b16 %v195
    %v3029 = vunpack.c.l.b16 %v196
    %v3030 = vunpack.c.l.b16 %v197
    %v3031 = vunpack.c.l.b16 %v198
    %v3032 = vunpack.c.l.b16 %v199
    %v3033 = vunpack.c.l.b16 %v200
    %v3034 = vunpack.c.l.b16 %v201
    %v3035 = vunpack.c.l.b16 %v202
    %v3036 = vunpack.c.l.b16 %v203
    %v3037 = vunpack.c.l.b16 %v204
    %v3038 = vunpack.c.l.b16 %v205
    %v3039 = vunpack.c.l.b16 %v206
    %v3040 = vunpack.c.l.b16 %v207
    %v3041 = vunpack.c.l.b16 %v208
    %v3042 = vunpack.c.l.b16 %v209
    %v3043 = vunpack.c.l.b16 %v210
    %v3044 = vunpack.c.l.b16 %v211
    %v3045 = vunpack.c.l.b16 %v212
    %v3046 = vunpack.c.l.b16 %v213
    %v3047 = vunpack.c.l.b16 %v214
    %v3048 = vunpack.c.l.b16 %v215
    %v3049 = vunpack.c.l.b16 %v216
    %v3050 = vunpack.c.l.b16 %v217
    %v3051 = vunpack.c.l.b16 %v218
    %v3052 = vunpack.c.l.b16 %v219
    %v3053 = vunpack.c.l.b16 %v220
    %v3054 = vunpack.c.l.b16 %v221
    %v3055 = vunpack.c.l.b16 %v222
    %v3056 = vunpack.c.l.b16 %v223
    %v3057 = vunpack.c.l.b16 %v224
    %v3058 = vunpack.c.l.b16 %v225
    %v3059 = vunpack.c.l.b16 %v226
    %v3060 = vunpack.c.l.b16 %v227
    %v3061 = vunpack.c.l.b16 %v228
    %v3062 = vunpack.c.l.b16 %v229
    %v3063 = vunpack.c.l.b16 %v230
    %v3064 = vunpack.c.l.b16 %v231
    %v3065 = vunpack.c.l.b16 %v232
    %v3066 = vunpack.c.l.b16 %v233
    %v3067 = vunpack.c.l.b16 %v234
    %v3068 = vunpack.c.l.b16 %v235
    %v3069 = vunpack.c.l.b16 %v236
    %v3070 = vunpack.c.l.b16 %v237
    %v3071 = vunpack.c.l.b16 %v238
    %v3072 = vunpack.c.l.b16 %v239
    %v3073 = vunpack.c.l.b16 %v240
    %v3074 = vunpack.c.l.b16 %v241
    %v3075 = vunpack.c.l.b16 %v242
    %v3076 = vunpack.c.l.b16 %v243
    %v3077 = vunpack.c.l.b16 %v244
    %v3078 = vunpack.c.l.b16 %v245
    %v3079 = vunpack.c.l.b16 %v246
    %v3080 = vunpack.c.l.b16 %v247
    %v3081 = vunpack.c.l.b16 %v248
    %v3082 = vunpack.c.l.b16 %v249
    %v3083 = vunpack.c.l.b16 %v250
    %v3084 = vunpack.c.l.b16 %v251
    %v3085 = vunpack.c.l.b16 %v252
    %v3086 = vunpack.c.l.b16 %v253
    %v3087 = vunpack.c.l.b16 %v254
    %v3088 = vunpack.c.l.b16 %v255
    %v3089 = vunpack.c.l.b16 %v256
    %v3090 = vunpack.c.l.b16 %v257
    %v3091 = vunpack.c.l.b16 %v258
    %v3092 = vunpack.c.l.b16 %v259
    %v3093 = vunpack.c.l.b16 %v260
    %v3094 = vunpack.c.l.b16 %v261
    %v3095 = vunpack.c.l.b16 %v262
    %v3096 = vunpack.c.l.b16 %v263
    %v3097 = vunpack.c.l.b16 %v264
    %v3098 = vunpack.c.l.b16 %v265
    %v3099 = vunpack.c.l.b16 %v266
    %v3100 = vunpack.c.l.b16 %v267
    %v3101 = vunpack.c.l.b16 %v268
    %v3102 = vunpack.c.l.b16 %v269
    %v3103 = vunpack.c.l.b16 %v270
    %v3104 = vunpack.c.l.b16 %v271
    %v3105 = vunpack.c.l.b16 %v272
    %v3106 = vunpack.c.l.b16 %v273
    %v3107 = vunpack.c.l.b16 %v274
    %v3108 = vunpack.c.l.b16 %v275
    %v3109 = vunpack.c.l.b16 %v276
    %v3110 = vunpack.c.l.b16 %v277
    %v3111 = vunpack.c.l.b16 %v278
    %v3112 = vunpack.c.l.b16 %v279
    %v3113 = vunpack.c.l.b16 %v280
    %v3114 = vunpack.c.l.b16 %v281
    %v3115 = vunpack.c.l.b16 %v282
    %v3116 = vunpack.c.l.b16 %v283
    %v3117 = vunpack.c.l.b16 %v284
    %v3118 = vunpack.c.l.b16 %v285
    %v3119 = vunpack.c.l.b16 %v286
    %v3120 = vunpack.c.l.b16 %v287
    %v3121 = vunpack.c.l.b16 %v288
    %v3122 = vunpack.c.l.b16 %v289
    %v3123 = vunpack.c.l.b16 %v290
    %v3124 = vunpack.c.l.b16 %v291
    %v3125 = vunpack.c.l.b16 %v292
    %v3126 = vunpack.c.l.b16 %v293
    %v3127 = vunpack.c.l.b16 %v294
    %v3128 = vunpack.c.l.b16 %v295
    %v3129 = vunpack.c.l.b16 %v296
    %v3130 = vunpack.c.l.b16 %v297
    %v3131 = vunpack.c.l.b16 %v298
    %v3132 = vunpack.c.l.b16 %v299
    %v3133 = vunpack.c.l.b16 %v300
    %v3134 = vunpack.c.l.b16 %v301
    %v3135 = vunpack.c.l.b16 %v302
    %v3136 = vunpack.c.l.b16 %v303
    %v3137 = vunpack.c.l.b16 %v304
    %v3138 = vunpack.c.l.b16 %v305
    %v3139 = vunpack.c.l.b16 %v306
    %v3140 = vunpack.c.l.b16 %v307
    %v3141 = vunpack.c.l.b16 %v308
    %v3142 = vunpack.c.l.b16 %v309
    %v3143 = vunpack.c.l.b16 %v310
    %v3144 = vunpack.c.l.b16 %v311
    %v3145 = vunpack.c.l.b16 %v312
    %v3146 = vunpack.c.l.b16 %v313
    %v3147 = vunpack.c.l.b16 %v314
    %v3148 = vunpack.c.l.b16 %v315
    %v3149 = vunpack.c.l.b16 %v316
    %v3150 = vunpack.c.l.b16 %v317
    %v3151 = vunpack.c.l.b16 %v318
    %v3152 = vunpack.c.l.b16 %v319
    %v3153 = vunpack.c.l.b16 %v320
    %v3154 = vunpack.c.l.b16 %v321
    %v3155 = vunpack.c.l.b16 %v322
    %v3156 = vunpack.c.l.b16 %v323
    %v3157 = vunpack.c.l.b16 %v324
    %v3158 = vunpack.c.l.b16 %v325
    %v3159 = vunpack.c.l.b16 %v326
    %v3160 = vunpack.c.l.b16 %v327
    %v3161 = vunpack.c.l.b16 %v328
    %v3162 = vunpack.c.l.b16 %v329
    %v3163 = vunpack.c.l.b16 %v330
    %v3164 = vunpack.c.l.b16 %v331
    %v3165 = vunpack.c.l.b16 %v332
    %v3166 = vunpack.c.l.b16 %v333
    %v3167 = vunpack.c.l.b16 %v334
    %v3168 = vunpack.c.l.b16 %v335
    %v3169 = vunpack.c.l.b16 %v336
    %v3170 = vunpack.c.l.b16 %v337
    %v3171 = vunpack.c.l.b16 %v338
    %v3172 = vunpack.c.l.b16 %v339
    %v3173 = vunpack.c.l.b16 %v340
    %v3174 = vunpack.c.l.b16 %v341
    %v3175 = vunpack.c.l.b16 %v342
    %v3176 = vunpack.c.l.b16 %v343
    %v3177 = vunpack.c.l.b16 %v344
    %v3178 = vunpack.c.l.b16 %v345
    %v3179 = vunpack.c.l.b16 %v346
    %v3180 = vunpack.c.l.b16 %v347
    %v3181 = vunpack.c.l.b16 %v348
    %v3182 = vunpack.c.l.b16 %v349
    %v3183 = vunpack.c.l.b16 %v350
    %v3184 = vunpack.c.l.b16 %v351
    %v3185 = vunpack.c.l.b16 %v352
    %v3186 = vunpack.c.l.b16 %v353
    %v3187 = vunpack.c.l.b16 %v354
    %v3188 = vunpack.c.l.b16 %v355
    %v3189 = vunpack.c.l.b16 %v356
    %v3190 = vunpack.c.l.b16 %v357
    %v3191 = vunpack.c.l.b16 %v358
    %v3192 = vunpack.c.l.b16 %v359
    %v3193 = vunpack.c.l.b16 %v360
    %v3194 = vunpack.c.l.b16 %v361
    %v3195 = vunpack.c.l.b16 %v362
    %v3196 = vunpack.c.l.b16 %v363
    %v3197 = vunpack.c.l.b16 %v364
    %v3198 = vunpack.c.l.b16 %v365
    %v3199 = vunpack.c.l.b16 %v366
    %v3200 = vunpack.c.l.b16 %v367
    %v3201 = vunpack.c.l.b16 %v368
    %v3202 = vunpack.c.l.b16 %v369
    %v3203 = vunpack.c.l.b16 %v370
    %v3204 = vunpack.c.l.b16 %v371
    %v3205 = vunpack.c.l.b16 %v372
    %v3206 = vunpack.c.l.b16 %v373
    %v3207 = vunpack.c.l.b16 %v374
    %v3208 = vunpack.c.l.b16 %v375
    %v3209 = vunpack.c.l.b16 %v376
    %v3210 = vunpack.c.l.b16 %v377
    %v3211 = vunpack.c.l.b16 %v378
    %v3212 = vunpack.c.l.b16 %v379
    %v3213 = vunpack.c.l.b16 %v380
    %v3214 = vunpack.c.l.b16 %v381
    %v3215 = vunpack.c.l.b16 %v382
    %v3216 = vunpack.c.l.b16 %v383
    %v3217 = vunpack.c.l.b16 %v384
    %v3218 = vunpack.c.l.b16 %v385
    %v3219 = vunpack.c.l.b16 %v386
    %v3220 = vunpack.c.l.b16 %v387
    %v3221 = vunpack.c.l.b16 %v388
    %v3222 = vunpack.c.l.b16 %v389
    %v3223 = vunpack.c.l.b16 %v390
    %v3224 = vunpack.c.l.b16 %v391
    %v3225 = vunpack.c.l.b16 %v392
    %v3226 = vunpack.c.l.b16 %v393
    %v3227 = vunpack.c.l.b16 %v394
    %v3228 = vunpack.c.l.b16 %v395
    %v3229 = vunpack.c.l.b16 %v396
    %v3230 = vunpack.c.l.b16 %v397
    %v3231 = vunpack.c.l.b16 %v398
    %v3232 = vunpack.c.l.b16 %v399
    %v3233 = vunpack.c.l.b16 %v400
    %v3234 = vunpack.c.l.b16 %v401
    %v3235 = vunpack.c.l.b16 %v402
    %v3236 = vunpack.c.l.b16 %v403
    %v3237 = vunpack.c.l.b16 %v404
    %v3238 = vunpack.c.l.b16 %v405
    %v3239 = vunpack.c.l.b16 %v406
    %v3240 = vunpack.c.l.b16 %v407
    %v3241 = vunpack.c.l.b16 %v408
    %v3242 = vunpack.c.l.b16 %v409
    %v3243 = vunpack.c.l.b16 %v410
    %v3244 = vunpack.c.l.b16 %v411
    %v3245 = vunpack.c.l.b16 %v412
    %v3246 = vunpack.c.l.b16 %v413
    %v3247 = vunpack.c.l.b16 %v414
    %v3248 = vunpack.c.l.b16 %v415
    %v3249 = vunpack.c.l.b16 %v416
    %v3250 = vunpack.c.l.b16 %v417
    %v3251 = vunpack.c.l.b16 %v418
    %v3252 = vunpack.c.l.b16 %v419
    %v3253 = vunpack.c.l.b16 %v420
    %v3254 = vunpack.c.l.b16 %v421
    %v3255 = vunpack.c.l.b16 %v422
    %v3256 = vunpack.c.l.b16 %v423
    %v3257 = vunpack.c.l.b16 %v424
    %v3258 = vunpack.c.l.b16 %v425
    %v3259 = vunpack.c.l.b16 %v426
    %v3260 = vunpack.c.l.b16 %v427
    %v3261 = vunpack.c.l.b16 %v428
    %v3262 = vunpack.c.l.b16 %v429
    %v3263 = vunpack.c.l.b16 %v430
    %v3264 = vunpack.c.l.b16 %v431
    %v3265 = vunpack.c.l.b16 %v432
    %v3266 = vunpack.c.l.b16 %v433
    %v3267 = vunpack.c.l.b16 %v434
    %v3268 = vunpack.c.l.b16 %v435
    %v3269 = vunpack.c.l.b16 %v436
    %v3270 = vunpack.c.l.b16 %v437
    %v3271 = vunpack.c.l.b16 %v438
    %v3272 = vunpack.c.l.b16 %v439
    %v3273 = vunpack.c.l.b16 %v440
    %v3274 = vunpack.c.l.b16 %v441
    %v3275 = vunpack.c.l.b16 %v442
    %v3276 = vunpack.c.l.b16 %v443
    %v3277 = vunpack.c.l.b16 %v444
    %v3278 = vunpack.c.l.b16 %v445
    %v3279 = vunpack.c.l.b16 %v446
    %v3280 = vunpack.c.l.b16 %v447
    %v3281 = vunpack.c.l.b16 %v448
    %v3282 = vunpack.c.l.b16 %v449
    %v3283 = vunpack.c.l.b16 %v450
    %v3284 = vunpack.c.l.b16 %v451
    %v3285 = vunpack.c.l.b16 %v452
    %v3286 = vunpack.c.l.b16 %v453
    %v3287 = vunpack.c.l.b16 %v454
    %v3288 = vunpack.c.l.b16 %v455
    %v3289 = vunpack.c.l.b16 %v456
    %v3290 = vunpack.c.l.b16 %v457
    %v3291 = vunpack.c.l.b16 %v458
    %v3292 = vunpack.c.l.b16 %v459
    %v3293 = vunpack.c.l.b16 %v460
    %v3294 = vunpack.c.l.b16 %v461
    %v3295 = vunpack.c.l.b16 %v462
    %v3296 = vunpack.c.l.b16 %v463
    %v3297 = vunpack.c.l.b16 %v464
    %v3298 = vunpack.c.l.b16 %v465
    %v3299 = vunpack.c.l.b16 %v466
    %v3300 = vunpack.c.l.b16 %v467
    %v3301 = vunpack.c.l.b16 %v468
    %v3302 = vunpack.c.l.b16 %v469
    %v3303 = vunpack.c.l.b16 %v470
    %v3304 = vunpack.c.l.b16 %v471
    %v3305 = vunpack.c.l.b16 %v472
    %v3306 = vunpack.c.l.b16 %v473
    %v3307 = vunpack.c.l.b16 %v474
    %v3308 = vunpack.c.l.b16 %v475
    %v3309 = vunpack.c.l.b16 %v476
    %v3310 = vunpack.c.l.b16 %v477
    %v3311 = vunpack.c.l.b16 %v478
    %v3312 = vunpack.c.l.b16 %v479
    %v3313 = vunpack.c.l.b16 %v480
    %v3314 = vunpack.c.l.b16 %v481
    %v3315 = vunpack.c.l.b16 %v482
    %v3316 = vunpack.c.l.b16 %v483
    %v3317 = vunpack.c.l.b16 %v484
    %v3318 = vunpack.c.l.b16 %v485
    %v3319 = vunpack.c.l.b16 %v486
    %v3320 = vunpack.c.l.b16 %v487
    %v3321 = vunpack.c.l.b16 %v488
    %v3322 = vunpack.c.l.b16 %v489
    %v3323 = vunpack.c.l.b16 %v490
    %v3324 = vunpack.c.l.b16 %v491
    %v3325 = vunpack.c.l.b16 %v492
    %v3326 = vunpack.c.l.b16 %v493
    %v3327 = vunpack.c.l.b16 %v494
    %v3328 = vunpack.c.l.b16 %v495
    %v3329 = vunpack.c.l.b16 %v496
    %v3330 = vunpack.c.l.b16 %v497
    %v3331 = vunpack.c.l.b16 %v498
    %v3332 = vunpack.c.l.b16 %v499
    %v3333 = vunpack.c.l.b16 %v500
    %v3334 = vunpack.c.l.b16 %v501
    %v3335 = vunpack.c.l.b16 %v502
    %v3336 = vunpack.c.l.b16 %v503
    %v3337 = vunpack.c.l.b16 %v504
    %v3338 = vunpack.c.l.b16 %v505
    %v3339 = vunpack.c.l.b16 %v506
    %v3340 = vunpack.c.l.b16 %v507
    %v3341 = vunpack.c.l.b16 %v508
    %v3342 = vunpack.c.l.b16 %v509
    %v3343 = vunpack.c.l.b16 %v510
    %v3344 = vunpack.c.l.b16 %v511
    %v3345 = vunpack.c.l.b16 %v512
    %v3346 = vunpack.c.l.b16 %v513
    %v3347 = vunpack.c.l.b16 %v514
    %v3348 = vunpack.c.l.b16 %v515
    %v3349 = vunpack.c.l.b16 %v516
    %v3350 = vunpack.c.l.b16 %v517
    %v3351 = vunpack.c.l.b16 %v518
    %v3352 = vunpack.c.l.b16 %v519
    %v3353 = vunpack.c.l.b16 %v520
    %v3354 = vunpack.c.l.b16 %v521
    %v3355 = vunpack.c.l.b16 %v522
    %v3356 = vunpack.c.l.b16 %v523
    %v3357 = vunpack.c.l.b16 %v524
    %v3358 = vunpack.c.l.b16 %v525
    %v3359 = vunpack.c.l.b16 %v526
    %v3360 = vunpack.c.l.b16 %v527
    %v3361 = vunpack.c.l.b16 %v528
    %v3362 = vunpack.c.l.b16 %v529
    %v3363 = vunpack.c.l.b16 %v530
    %v3364 = vunpack.c.l.b16 %v531
    %v3365 = vunpack.c.l.b16 %v532
    %v3366 = vunpack.c.l.b16 %v533
    %v3367 = vunpack.c.l.b16 %v534
    %v3368 = vunpack.c.l.b16 %v535
    %v3369 = vunpack.c.l.b16 %v536
    %v3370 = vunpack.c.l.b16 %v537
    %v3371 = vunpack.c.l.b16 %v538
    %v3372 = vunpack.c.l.b16 %v539
    %v3373 = vunpack.c.l.b16 %v540
    %v3374 = vunpack.c.l.b16 %v541
    %v3375 = vunpack.c.l.b16 %v542
    %v3376 = vunpack.c.l.b16 %v543
    %v3377 = vunpack.c.l.b16 %v544
    %v3378 = vunpack.c.l.b16 %v545
    %v3379 = vunpack.c.l.b16 %v546
    %v3380 = vunpack.c.l.b16 %v547
    %v3381 = vunpack.c.l.b16 %v548
    %v3382 = vunpack.c.l.b16 %v549
    %v3383 = vunpack.c.l.b16 %v550
    %v3384 = vunpack.c.l.b16 %v551
    %v3385 = vunpack.c.l.b16 %v552
    %v3386 = vunpack.c.l.b16 %v553
    %v3387 = vunpack.c.l.b16 %v554
    %v3388 = vunpack.c.l.b16 %v555
    %v3389 = vunpack.c.l.b16 %v556
    %v3390 = vunpack.c.l.b16 %v557
    %v3391 = vunpack.c.l.b16 %v558
    %v3392 = vunpack.c.l.b16 %v559
    %v3393 = vunpack.c.l.b16 %v560
    %v3394 = vunpack.c.l.b16 %v561
    %v3395 = vunpack.c.l.b16 %v562
    %v3396 = vunpack.c.l.b16 %v563
    %v3397 = vunpack.c.l.b16 %v564
    %v3398 = vunpack.c.l.b16 %v565
    %v3399 = vunpack.c.l.b16 %v566
    %v3400 = vunpack.c.l.b16 %v567
    %v3401 = vunpack.c.l.b16 %v568
    %v3402 = vunpack.c.l.b16 %v569
    %v3403 = vunpack.c.l.b16 %v570
    %v3404 = vunpack.c.l.b16 %v571
    %v3405 = vunpack.c.l.b16 %v572
    %v3406 = vunpack.c.l.b16 %v573
    %v3407 = vunpack.c.l.b16 %v574
    %v3408 = vunpack.c.l.b16 %v575
    %v3409 = vunpack.c.l.b16 %v576
    %v3410 = vunpack.c.l.b16 %v577
    %v3411 = vunpack.c.l.b16 %v578
    %v3412 = vunpack.c.l.b16 %v579
    %v3413 = vunpack.c.l.b16 %v580
    %v3414 = vunpack.c.l.b16 %v581
    %v3415 = vunpack.c.l.b16 %v582
    %v3416 = vunpack.c.l.b16 %v583
    %v3417 = vunpack.c.l.b16 %v584
    %v3418 = vunpack.c.l.b16 %v585
    %v3419 = vunpack.c.l.b16 %v586
    %v3420 = vunpack.c.l.b16 %v587
    %v3421 = vunpack.c.l.b16 %v588
    %v3422 = vunpack.c.l.b16 %v589
    %v3423 = vunpack.c.l.b16 %v590
    %v3424 = vunpack.c.l.b16 %v591
    %v3425 = vunpack.c.l.b16 %v592
    %v3426 = vunpack.c.l.b16 %v593
    %v3427 = vunpack.c.l.b16 %v594
    %v3428 = vunpack.c.l.b16 %v595
    %v3429 = vunpack.c.l.b16 %v596
    %v3430 = vunpack.c.l.b16 %v597
    %v3431 = vunpack.c.l.b16 %v598
    %v3432 = vunpack.c.l.b16 %v599
    %v3433 = vunpack.c.l.b16 %v600
    %v3434 = vunpack.c.l.b16 %v601
    %v3435 = vunpack.c.l.b16 %v602
    %v3436 = vunpack.c.l.b16 %v603
    %v3437 = vunpack.c.l.b16 %v604
    %v3438 = vunpack.c.l.b16 %v605
    %v3439 = vunpack.c.l.b16 %v606
    %v3440 = vunpack.c.l.b16 %v607
    %v3441 = vunpack.c.l.b16 %v608
    %v3442 = vunpack.c.l.b16 %v609
    %v3443 = vunpack.c.l.b16 %v610
    %v3444 = vunpack.c.l.b16 %v611
    %v3445 = vunpack.c.l.b16 %v612
    %v3446 = vunpack.c.l.b16 %v613
    %v3447 = vunpack.c.l.b16 %v614
    %v3448 = vunpack.c.l.b16 %v615
    %v3449 = vunpack.c.l.b16 %v616
    %v3450 = vunpack.c.l.b16 %v617
    %v3451 = vunpack.c.l.b16 %v618
    %v3452 = vunpack.c.l.b16 %v619
    %v3453 = vunpack.c.l.b16 %v620
    %v3454 = vunpack.c.l.b16 %v621
    %v3455 = vunpack.c.l.b16 %v622
    %v3456 = vunpack.c.l.b16 %v623
    %v3457 = vunpack.c.l.b16 %v624
    %v3458 = vunpack.c.l.b16 %v625
    %v3459 = vunpack.c.l.b16 %v626
    %v3460 = vunpack.c.l.b16 %v627
    %v3461 = vunpack.c.l.b16 %v628
    %v3462 = vunpack.c.l.b16 %v629
    %v3463 = vunpack.c.l.b16 %v630
    %v3464 = vunpack.c.l.b16 %v631
    %v3465 = vunpack.c.l.b16 %v632
    %v3466 = vunpack.c.l.b16 %v633
    %v3467 = vunpack.c.l.b16 %v634
    %v3468 = vunpack.c.l.b16 %v635
    %v3469 = vunpack.c.l.b16 %v636
    %v3470 = vunpack.c.l.b16 %v637
    %v3471 = vunpack.c.l.b16 %v638
    %v3472 = vunpack.c.l.b16 %v639
    %v3473 = vunpack.c.l.b16 %v640
    %v3474 = vunpack.c.l.b16 %v641
    %v3475 = vunpack.c.l.b16 %v642
    %v3476 = vunpack.c.l.b16 %v643
    %v3477 = vunpack.c.l.b16 %v644
    %v3478 = vunpack.c.l.b16 %v645
    %v3479 = vunpack.c.l.b16 %v646
    %v3480 = vunpack.c.l.b16 %v647
    %v3481 = vunpack.c.l.b16 %v648
    %v3482 = vunpack.c.l.b16 %v649
    %v3483 = vunpack.c.l.b16 %v650
    %v3484 = vunpack.c.l.b16 %v651
    %v3485 = vunpack.c.l.b16 %v652
    %v3486 = vunpack.c.l.b16 %v653
    %v3487 = vunpack.c.l.b16 %v654
    %v3488 = vunpack.c.l.b16 %v655
    %v3489 = vunpack.c.l.b16 %v656
    %v3490 = vunpack.c.l.b16 %v657
    %v3491 = vunpack.c.l.b16 %v658
    %v3492 = vunpack.c.l.b16 %v659
    %v3493 = vunpack.c.l.b16 %v660
    %v3494 = vunpack.c.l.b16 %v661
    %v3495 = vunpack.c.l.b16 %v662
    %v3496 = vunpack.c.l.b16 %v663
    %v3497 = vunpack.c.l.b16 %v664
    %v3498 = vunpack.c.l.b16 %v665
    %v3499 = vunpack.c.l.b16 %v666
    %v3500 = vunpack.c.l.b16 %v667
    %v3501 = vunpack.c.l.b16 %v668
    %v3502 = vunpack.c.l.b16 %v669
    %v3503 = vunpack.c.l.b16 %v670
    %v3504 = vunpack.c.l.b16 %v671
    %v3505 = vunpack.c.l.b16 %v672
    %v3506 = vunpack.c.l.b16 %v673
    %v3507 = vunpack.c.l.b16 %v674
    %v3508 = vunpack.c.l.b16 %v675
    %v3509 = vunpack.c.l.b16 %v676
    %v3510 = vunpack.c.l.b16 %v677
    %v3511 = vunpack.c.l.b16 %v678
    %v3512 = vunpack.c.l.b16 %v679
    %v3513 = vunpack.c.l.b16 %v680
    %v3514 = vunpack.c.l.b16 %v681
    %v3515 = vunpack.c.l.b16 %v682
    %v3516 = vunpack.c.l.b16 %v683
    %v3517 = vunpack.c.l.b16 %v684
    %v3518 = vunpack.c.l.b16 %v685
    %v3519 = vunpack.c.l.b16 %v686
    %v3520 = vunpack.c.l.b16 %v687
    %v3521 = vunpack.c.l.b16 %v688
    %v3522 = vunpack.c.l.b16 %v689
    %v3523 = vunpack.c.l.b16 %v690
    %v3524 = vunpack.c.l.b16 %v691
    %v3525 = vunpack.c.l.b16 %v692
    %v3526 = vunpack.c.l.b16 %v693
    %v3527 = vunpack.c.l.b16 %v694
    %v3528 = vunpack.c.l.b16 %v695
    %v3529 = vunpack.c.l.b16 %v696
    %v3530 = vunpack.c.l.b16 %v697
    %v3531 = vunpack.c.l.b16 %v698
    %v3532 = vunpack.c.l.b16 %v699
    %v3533 = vunpack.c.l.b16 %v700
    %v3534 = vunpack.c.l.b16 %v701
    %v3535 = vunpack.c.l.b16 %v702
    %v3536 = vunpack.c.l.b16 %v703
    %v3537 = vunpack.c.l.b16 %v704
    %v3538 = vunpack.c.l.b16 %v705
    %v3539 = vunpack.c.l.b16 %v706
    %v3540 = vunpack.c.l.b16 %v707
    %v3541 = vunpack.c.l.b16 %v708
    %v3542 = vunpack.c.l.b16 %v709
    %v3543 = vunpack.c.l.b16 %v710
    %v3544 = vunpack.c.l.b16 %v711
    %v3545 = vunpack.c.l.b16 %v712
    %v3546 = vunpack.c.l.b16 %v713
    %v3547 = vunpack.c.l.b16 %v714
    %v3548 = vunpack.c.l.b16 %v715
    %v3549 = vunpack.c.l.b16 %v716
    %v3550 = vunpack.c.l.b16 %v717
    %v3551 = vunpack.c.l.b16 %v718
    %v3552 = vunpack.c.l.b16 %v719
    %v3553 = vunpack.c.l.b16 %v720
    %v3554 = vunpack.c.l.b16 %v721
    %v3555 = vunpack.c.l.b16 %v722
    %v3556 = vunpack.c.l.b16 %v723
    %v3557 = vunpack.c.l.b16 %v724
    %v3558 = vunpack.c.l.b16 %v725
    %v3559 = vunpack.c.l.b16 %v726
    %v3560 = vunpack.c.l.b16 %v727
    %v3561 = vunpack.c.l.b16 %v728
    %v3562 = vunpack.c.l.b16 %v729
    %v3563 = vunpack.c.l.b16 %v730
    %v3564 = vunpack.c.l.b16 %v731
    %v3565 = vunpack.c.l.b16 %v732
    %v3566 = vunpack.c.l.b16 %v733
    %v3567 = vunpack.c.l.b16 %v734
    %v3568 = vunpack.c.l.b16 %v735
    %v3569 = vunpack.c.l.b16 %v736
    %v3570 = vunpack.c.l.b16 %v737
    %v3571 = vunpack.c.l.b16 %v738
    %v3572 = vunpack.c.l.b16 %v739
    %v3573 = vunpack.c.l.b16 %v740
    %v3574 = vunpack.c.l.b16 %v741
    %v3575 = vunpack.c.l.b16 %v742
    %v3576 = vunpack.c.l.b16 %v743
    %v3577 = vunpack.c.l.b16 %v744
    %v3578 = vunpack.c.l.b16 %v745
    %v3579 = vunpack.c.l.b16 %v746
    %v3580 = vunpack.c.l.b16 %v747
    %v3581 = vunpack.c.l.b16 %v748
    %v3582 = vunpack.c.l.b16 %v749
    %v3583 = vunpack.c.l.b16 %v750
    %v3584 = vunpack.c.l.b16 %v751
    %v3585 = vunpack.c.l.b16 %v752
    %v3586 = vunpack.c.l.b16 %v753
    %v3587 = vunpack.c.l.b16 %v754
    %v3588 = vunpack.c.l.b16 %v755
    %v3589 = vunpack.c.l.b16 %v756
    %v3590 = vunpack.c.l.b16 %v757
    %v3591 = vunpack.c.l.b16 %v758
    %v3592 = vunpack.c.l.b16 %v759
    %v3593 = vunpack.c.l.b16 %v760
    %v3594 = vunpack.c.l.b16 %v761
    %v3595 = vunpack.c.l.b16 %v762
    %v3596 = vunpack.c.l.b16 %v763
    %v3597 = vunpack.c.l.b16 %v764
    %v3598 = vunpack.c.l.b16 %v765
    %v3599 = vunpack.c.l.b16 %v766
    %v3600 = vunpack.c.l.b16 %v767
    %v3601 = vunpack.c.l.b16 %v768
    %v3602 = vunpack.c.l.b16 %v769
    %v3603 = vunpack.c.l.b16 %v770
    %v3604 = vunpack.c.l.b16 %v771
    %v3605 = vunpack.c.l.b16 %v772
    %v3606 = vunpack.c.l.b16 %v773
    %v3607 = vunpack.c.l.b16 %v774
    %v3608 = vunpack.c.l.b16 %v775
    %v3609 = vunpack.c.l.b16 %v776
    %v3610 = vunpack.c.l.b16 %v777
    %v3611 = vunpack.c.l.b16 %v778
    %v3612 = vunpack.c.l.b16 %v779
    %v3613 = vunpack.c.l.b16 %v780
    %v3614 = vunpack.c.l.b16 %v781
    %v3615 = vunpack.c.l.b16 %v782
    %v3616 = vunpack.c.l.b16 %v783
    %v3617 = vunpack.c.l.b16 %v784
    %v3618 = vunpack.c.l.b16 %v785
    %v3619 = vunpack.c.l.b16 %v786
    %v3620 = vunpack.c.l.b16 %v787
    %v3621 = vunpack.c.l.b16 %v788
    %v3622 = vunpack.c.l.b16 %v789
    %v3623 = vunpack.c.l.b16 %v790
    %v3624 = vunpack.c.l.b16 %v791
    %v3625 = vunpack.c.l.b16 %v792
    %v3626 = vunpack.c.l.b16 %v793
    %v3627 = vunpack.c.l.b16 %v794
    %v3628 = vunpack.c.l.b16 %v795
    %v3629 = vunpack.c.l.b16 %v796
    %v3630 = vunpack.c.l.b16 %v797
    %v3631 = vunpack.c.l.b16 %v798
    %v3632 = vunpack.c.l.b16 %v799
    %v3633 = vunpack.c.l.b16 %v800
    %v3634 = vunpack.c.l.b16 %v801
    %v3635 = vunpack.c.l.b16 %v802
    %v3636 = vunpack.c.l.b16 %v803
    %v3637 = vunpack.c.l.b16 %v804
    %v3638 = vunpack.c.l.b16 %v805
    %v3639 = vunpack.c.l.b16 %v806
    %v3640 = vunpack.c.l.b16 %v807
    %v3641 = vunpack.c.l.b16 %v808
    %v3642 = vunpack.c.l.b16 %v809
    %v3643 = vunpack.c.l.b16 %v810
    %v3644 = vunpack.c.l.b16 %v811
    %v3645 = vunpack.c.l.b16 %v812
    %v3646 = vunpack.c.l.b16 %v813
    %v3647 = vunpack.c.l.b16 %v814
    %v3648 = vunpack.c.l.b16 %v815
    %v3649 = vunpack.c.l.b16 %v816
    %v3650 = vunpack.c.l.b16 %v817
    %v3651 = vunpack.c.l.b16 %v818
    %v3652 = vunpack.c.l.b16 %v819
    %v3653 = vunpack.c.l.b16 %v820
    %v3654 = vunpack.c.l.b16 %v821
    %v3655 = vunpack.c.l.b16 %v822
    %v3656 = vunpack.c.l.b16 %v823
    %v3657 = vunpack.c.l.b16 %v824
    %v3658 = vunpack.c.l.b16 %v825
    %v3659 = vunpack.c.l.b16 %v826
    %v3660 = vunpack.c.l.b16 %v827
    %v3661 = vunpack.c.l.b16 %v828
    %v3662 = vunpack.c.l.b16 %v829
    %v3663 = vunpack.c.l.b16 %v830
    %v3664 = vunpack.c.l.b16 %v831
    %v3665 = vunpack.c.l.b16 %v832
    %v3666 = vunpack.c.l.b16 %v833
    %v3667 = vunpack.c.l.b16 %v834
    %v3668 = vunpack.c.l.b16 %v835
    %v3669 = vunpack.c.l.b16 %v836
    %v3670 = vunpack.c.l.b16 %v837
    %v3671 = vunpack.c.l.b16 %v838
    %v3672 = vunpack.c.l.b16 %v839
    %v3673 = vunpack.c.l.b16 %v840
    %v3674 = vunpack.c.l.b16 %v841
    %v3675 = vunpack.c.l.b16 %v842
    %v3676 = vunpack.c.l.b16 %v843
    %v3677 = vunpack.c.l.b16 %v844
    %v3678 = vunpack.c.l.b16 %v845
    %v3679 = vunpack.c.l.b16 %v846
    %v3680 = vunpack.c.l.b16 %v847
    %v3681 = vunpack.c.l.b16 %v848
    %v3682 = vunpack.c.l.b16 %v849
    %v3683 = vunpack.c.l.b16 %v850
    %v3684 = vunpack.c.l.b16 %v851
    %v3685 = vunpack.c.l.b16 %v852
    %v3686 = vunpack.c.l.b16 %v853
    %v3687 = vunpack.c.l.b16 %v854
    %v3688 = vunpack.c.l.b16 %v855
    %v3689 = vunpack.c.l.b16 %v856
    %v3690 = vunpack.c.l.b16 %v857
    %v3691 = vunpack.c.l.b16 %v858
    %v3692 = vunpack.c.l.b16 %v859
    %v3693 = vunpack.c.l.b16 %v860
    %v3694 = vunpack.c.l.b16 %v861
    %v3695 = vunpack.c.l.b16 %v862
    %v3696 = vunpack.c.l.b16 %v863
    %v3697 = vunpack.c.l.b16 %v864
    %v3698 = vunpack.c.l.b16 %v865
    %v3699 = vunpack.c.l.b16 %v866
    %v3700 = vunpack.c.l.b16 %v867
    %v3701 = vunpack.c.l.b16 %v868
    %v3702 = vunpack.c.l.b16 %v869
    %v3703 = vunpack.c.l.b16 %v870
    %v3704 = vunpack.c.l.b16 %v871
    %v3705 = vunpack.c.l.b16 %v872
    %v3706 = vunpack.c.l.b16 %v873
    %v3707 = vunpack.c.l.b16 %v874
    %v3708 = vunpack.c.l.b16 %v875
    %v3709 = vunpack.c.l.b16 %v876
    %v3710 = vunpack.c.l.b16 %v877
    %v3711 = vunpack.c.l.b16 %v878
    %v3712 = vunpack.c.l.b16 %v879
    %v3713 = vunpack.c.l.b16 %v880
    %v3714 = vunpack.c.l.b16 %v881
    %v3715 = vunpack.c.l.b16 %v882
    %v3716 = vunpack.c.l.b16 %v883
    %v3717 = vunpack.c.l.b16 %v884
    %v3718 = vunpack.c.l.b16 %v885
    %v3719 = vunpack.c.l.b16 %v886
    %v3720 = vunpack.c.l.b16 %v887
    %v3721 = vunpack.c.l.b16 %v888
    %v3722 = vunpack.c.l.b16 %v889
    %v3723 = vunpack.c.l.b16 %v890
    %v3724 = vunpack.c.l.b16 %v891
    %v3725 = vunpack.c.l.b16 %v892
    %v3726 = vunpack.c.l.b16 %v893
    %v3727 = vunpack.c.l.b16 %v894
    %v3728 = vunpack.c.l.b16 %v895
    %v3729 = vunpack.c.l.b16 %v896
    %v3730 = vunpack.c.l.b16 %v897
    %v3731 = vunpack.c.l.b16 %v898
    %v3732 = vunpack.c.l.b16 %v899
    %v3733 = vunpack.c.l.b16 %v900
    %v3734 = vunpack.c.l.b16 %v901
    %v3735 = vunpack.c.l.b16 %v902
    %v3736 = vunpack.c.l.b16 %v903
    %v3737 = vunpack.c.l.b16 %v904
    %v3738 = vunpack.c.l.b16 %v905
    %v3739 = vunpack.c.l.b16 %v906
    %v3740 = vunpack.c.l.b16 %v907
    %v3741 = vunpack.c.l.b16 %v908
    %v3742 = vunpack.c.l.b16 %v909
    %v3743 = vunpack.c.l.b16 %v910
    %v3744 = vunpack.c.l.b16 %v911
    %v3745 = vunpack.c.l.b16 %v912
    %v3746 = vunpack.c.l.b16 %v913
    %v3747 = vunpack.c.l.b16 %v914
    %v3748 = vunpack.c.l.b16 %v915
    %v3749 = vunpack.c.l.b16 %v916
    %v3750 = vunpack.c.l.b16 %v917
    %v3751 = vunpack.c.l.b16 %v918
    %v3752 = vunpack.c.l.b16 %v919
    %v3753 = vunpack.c.l.b16 %v920
    %v3754 = vunpack.c.l.b16 %v921
    %v3755 = vunpack.c.l.b16 %v922
    %v3756 = vunpack.c.l.b16 %v923
    %v3757 = vunpack.c.l.b16 %v924
    %v3758 = vunpack.c.l.b16 %v925
    %v3759 = vunpack.c.l.b16 %v926
    %v3760 = vunpack.c.l.b16 %v927
    %v3761 = vunpack.c.l.b16 %v928
    %v3762 = vunpack.c.l.b16 %v929
    %v3763 = vunpack.c.l.b16 %v930
    %v3764 = vunpack.c.l.b16 %v931
    %v3765 = vunpack.c.l.b16 %v932
    %v3766 = vunpack.c.l.b16 %v933
    %v3767 = vunpack.c.l.b16 %v934
    %v3768 = vunpack.c.l.b16 %v935
    %v3769 = vunpack.c.l.b16 %v936
    %v3770 = vunpack.c.l.b16 %v937
    %v3771 = vunpack.c.l.b16 %v938
    %v3772 = vunpack.c.l.b16 %v939
    %v3773 = vunpack.c.l.b16 %v940
    %v3774 = vunpack.c.l.b16 %v941
    %v3775 = vunpack.c.l.b16 %v942
    %v3776 = vunpack.c.l.b16 %v943
    %v3777 = vunpack.c.l.b16 %v944
    %v3778 = vunpack.c.l.b16 %v945
    %v3779 = vunpack.c.l.b16 %v946
    %v3780 = vunpack.c.l.b16 %v947
    %v3781 = vunpack.c.l.b16 %v948
    %v3782 = vunpack.c.l.b16 %v949
    %v3783 = vunpack.c.l.b16 %v950
    %v3784 = vunpack.c.l.b16 %v951
    %v3785 = vunpack.c.l.b16 %v952
    %v3786 = vunpack.c.l.b16 %v953
    %v3787 = vunpack.c.l.b16 %v954
    %v3788 = vunpack.c.l.b16 %v955
    %v3789 = vunpack.c.l.b16 %v956
    %v3790 = vunpack.c.l.b16 %v957
    %v3791 = vunpack.c.l.b16 %v958
    %v3792 = vunpack.c.l.b16 %v959
    %v3793 = vunpack.c.l.b16 %v960
    %v3794 = vunpack.c.l.b16 %v961
    %v3795 = vunpack.c.l.b16 %v962
    %v3796 = vunpack.c.l.b16 %v963
    %v3797 = vunpack.c.l.b16 %v964
    %v3798 = vunpack.c.l.b16 %v965
    %v3799 = vunpack.c.l.b16 %v966
    %v3800 = vunpack.c.l.b16 %v967
    %v3801 = vunpack.c.l.b16 %v968
    %v3802 = vunpack.c.l.b16 %v969
    %v3803 = vunpack.c.l.b16 %v970
    %v3804 = vunpack.c.l.b16 %v971
    %v3805 = vunpack.c.l.b16 %v972
    %v3806 = vunpack.c.l.b16 %v973
    %v3807 = vunpack.c.l.b16 %v974
    %v3808 = vunpack.c.l.b16 %v975
    %v3809 = vunpack.c.l.b16 %v976
    %v3810 = vunpack.c.l.b16 %v977
    %v3811 = vunpack.c.l.b16 %v978
    %v3812 = vunpack.c.l.b16 %v979
    %v3813 = vunpack.c.l.b16 %v980
    %v3814 = vunpack.c.l.b16 %v981
    %v3815 = vunpack.c.l.b16 %v982
    %v3816 = vunpack.c.l.b16 %v983
    %v3817 = vunpack.c.l.b16 %v984
    %v3818 = vunpack.c.l.b16 %v985
    %v3819 = vunpack.c.l.b16 %v986
    %v3820 = vunpack.c.l.b16 %v987
    %v3821 = vunpack.c.l.b16 %v988
    %v3822 = vunpack.c.l.b16 %v989
    %v3823 = vunpack.c.l.b16 %v990
    %v3824 = vunpack.c.l.b16 %v991
    %v3825 = vunpack.c.l.b16 %v992
    %v3826 = vunpack.c.l.b16 %v993
    %v3827 = vunpack.c.l.b16 %v994
    %v3828 = vunpack.c.l.b16 %v995
    %v3829 = vunpack.c.l.b16 %v996
    %v3830 = vunpack.c.l.b16 %v997
    %v3831 = vunpack.c.l.b16 %v998
    %v3832 = vunpack.c.l.b16 %v999
    %v3833 = vunpack.c.l.b16 %v1000
    %v3834 = vunpack.c.l.b16 %v1001
    %v3835 = vunpack.c.l.b16 %v1002
    %v3836 = vunpack.c.l.b16 %v1003
    %v3837 = vunpack.c.l.b16 %v1004
    %v3838 = vunpack.c.l.b16 %v1005
    %v3839 = vunpack.c.l.b16 %v1006
    %v3840 = vunpack.c.l.b16 %v1007
    %v3841 = vunpack.c.l.b16 %v1008
    %v3842 = vunpack.c.l.b16 %v1009
    %v3843 = vunpack.c.l.b16 %v1010
    %v3844 = vunpack.c.l.b16 %v1011
    %v3845 = vunpack.c.l.b16 %v1012
    %v3846 = vunpack.c.l.b16 %v1013
    %v3847 = vunpack.c.l.b16 %v1014
    %v3848 = vunpack.c.l.b16 %v1015
    %v3849 = vunpack.c.l.b16 %v1016
    %v3850 = vunpack.c.l.b16 %v1017
    %v3851 = vunpack.c.l.b16 %v1018
    %v3852 = vunpack.c.l.b16 %v1019
    %v3853 = vunpack.c.l.b16 %v1020
    %v3854 = vunpack.c.l.b16 %v1021
    %v3855 = vunpack.c.l.b16 %v1022
    %v3856 = vunpack.c.l.b16 %v1023
    %v3857 = vunpack.c.l.b16 %v1024
    %v3858 = vunpack.c.l.b16 %v1025
    %v3859 = vunpack.c.l.b16 %v1026
    %v3860 = vunpack.c.l.b16 %v1027
    %v3861 = vunpack.c.l.b16 %v1028
    %v3862 = vunpack.c.l.b16 %v1029
    %v3863 = vunpack.c.l.b16 %v1030
    %v3864 = vunpack.c.l.b16 %v1031
    %v3865 = vunpack.c.l.b16 %v1032
    %v3866 = vunpack.c.l.b16 %v1033
    %v3867 = vunpack.c.l.b16 %v1034
    %v3868 = vunpack.c.l.b16 %v1035
    %v3869 = vunpack.c.l.b16 %v1036
    %v3870 = vunpack.c.l.b16 %v1037
    %v3871 = vunpack.c.l.b16 %v1038
    %v3872 = vunpack.c.l.b16 %v1039
    %v3873 = vunpack.c.l.b16 %v1040
    %v3874 = vunpack.c.l.b16 %v1041
    %v3875 = vunpack.c.l.b16 %v1042
    %v3876 = vunpack.c.l.b16 %v1043
    %v3877 = vunpack.c.l.b16 %v1044
    %v3878 = vunpack.c.l.b16 %v1045
    %v3879 = vunpack.c.l.b16 %v1046
    %v3880 = vunpack.c.l.b16 %v1047
    %v3881 = vunpack.c.l.b16 %v1048
    %v3882 = vunpack.c.l.b16 %v1049
    %v3883 = vunpack.c.l.b16 %v1050
    %v3884 = vunpack.c.l.b16 %v1051
    %v3885 = vunpack.c.l.b16 %v1052
    %v3886 = vunpack.c.l.b16 %v1053
    %v3887 = vunpack.c.l.b16 %v1054
    %v3888 = vunpack.c.l.b16 %v1055
    %v3889 = vunpack.c.l.b16 %v1056
    %v3890 = vunpack.c.l.b16 %v1057
    %v3891 = vunpack.c.l.b16 %v1058
    %v3892 = vunpack.c.l.b16 %v1059
    %v3893 = vunpack.c.l.b16 %v1060
    %v3894 = vunpack.c.l.b16 %v1061
    %v3895 = vunpack.c.l.b16 %v1062
    %v3896 = vunpack.c.l.b16 %v1063
    %v3897 = vunpack.c.l.b16 %v1064
    %v3898 = vunpack.c.l.b16 %v1065
    %v3899 = vunpack.c.l.b16 %v1066
    %v3900 = vunpack.c.l.b16 %v1067
    %v3901 = vunpack.c.l.b16 %v1068
    %v3902 = vunpack.c.l.b16 %v1069
    %v3903 = vunpack.c.l.b16 %v1070
    %v3904 = vunpack.c.l.b16 %v1071
    %v3905 = vunpack.c.l.b16 %v1072
    %v3906 = vunpack.c.l.b16 %v1073
    %v3907 = vunpack.c.l.b16 %v1074
    %v3908 = vunpack.c.l.b16 %v1075
    %v3909 = vunpack.c.l.b16 %v1076
    %v3910 = vunpack.c.l.b16 %v1077
    %v3911 = vunpack.c.l.b16 %v1078
    %v3912 = vunpack.c.l.b16 %v1079
    %v3913 = vunpack.c.l.b16 %v1080
    %v3914 = vunpack.c.l.b16 %v1081
    %v3915 = vunpack.c.l.b16 %v1082
    %v3916 = vunpack.c.l.b16 %v1083
    %v3917 = vunpack.c.l.b16 %v1084
    %v3918 = vunpack.c.l.b16 %v1085
    %v3919 = vunpack.c.l.b16 %v1086
    %v3920 = vunpack.c.l.b16 %v1087
    %v3921 = vunpack.c.l.b16 %v1088
    %v3922 = vunpack.c.l.b16 %v1089
    %v3923 = vunpack.c.l.b16 %v1090
    %v3924 = vunpack.c.l.b16 %v1091
    %v3925 = vunpack.c.l.b16 %v1092
    %v3926 = vunpack.c.l.b16 %v1093
    %v3927 = vunpack.c.l.b16 %v1094
    %v3928 = vunpack.c.l.b16 %v1095
    %v3929 = vunpack.c.l.b16 %v1096
    %v3930 = vunpack.c.l.b16 %v1097
    %v3931 = vunpack.c.l.b16 %v1098
    %v3932 = vunpack.c.l.b16 %v1099
    %v3933 = vunpack.c.l.b16 %v1100
    %v3934 = vunpack.c.l.b16 %v1101
    %v3935 = vunpack.c.l.b16 %v1102
    %v3936 = vunpack.c.l.b16 %v1103
    %v3937 = vunpack.c.l.b16 %v1104
    %v3938 = vunpack.c.l.b16 %v1105
    %v3939 = vunpack.c.l.b16 %v1106
    %v3940 = vunpack.c.l.b16 %v1107
    %v3941 = vunpack.c.l.b16 %v1108
    %v3942 = vunpack.c.l.b16 %v1109
    %v3943 = vunpack.c.l.b16 %v1110
    %v3944 = vunpack.c.l.b16 %v1111
    %v3945 = vunpack.c.l.b16 %v1112
    %v3946 = vunpack.c.l.b16 %v1113
    %v3947 = vunpack.c.l.b16 %v1114
    %v3948 = vunpack.c.l.b16 %v1115
    %v3949 = vunpack.c.l.b16 %v1116
    %v3950 = vunpack.c.l.b16 %v1117
    %v3951 = vunpack.c.l.b16 %v1118
    %v3952 = vunpack.c.l.b16 %v1119
    %v3953 = vunpack.c.l.b16 %v1120
    %v3954 = vunpack.c.l.b16 %v1121
    %v3955 = vunpack.c.l.b16 %v1122
    %v3956 = vunpack.c.l.b16 %v1123
    %v3957 = vunpack.c.l.b16 %v1124
    %v3958 = vunpack.c.l.b16 %v1125
    %v3959 = vunpack.c.l.b16 %v1126
    %v3960 = vunpack.c.l.b16 %v1127
    %v3961 = vunpack.c.l.b16 %v1128
    %v3962 = vunpack.c.l.b16 %v1129
    %v3963 = vunpack.c.l.b16 %v1130
    %v3964 = vunpack.c.l.b16 %v1131
    %v3965 = vunpack.c.l.b16 %v1132
    %v3966 = vunpack.c.l.b16 %v1133
    %v3967 = vunpack.c.l.b16 %v1134
    %v3968 = vunpack.c.l.b16 %v1135
    %v3969 = vunpack.c.l.b16 %v1136
    %v3970 = vunpack.c.l.b16 %v1137
    %v3971 = vunpack.c.l.b16 %v1138
    %v3972 = vunpack.c.l.b16 %v1139
    %v3973 = vunpack.c.l.b16 %v1140
    %v3974 = vunpack.c.l.b16 %v1141
    %v3975 = vunpack.c.l.b16 %v1142
    %v3976 = vunpack.c.l.b16 %v1143
    %v3977 = vunpack.c.l.b16 %v1144
    %v3978 = vunpack.c.l.b16 %v1145
    %v3979 = vunpack.c.l.b16 %v1146
    %v3980 = vunpack.c.l.b16 %v1147
    %v3981 = vunpack.c.l.b16 %v1148
    %v3982 = vunpack.c.l.b16 %v1149
    %v3983 = vunpack.c.l.b16 %v1150
    %v3984 = vunpack.c.l.b16 %v1151
    %v3985 = vunpack.c.l.b16 %v1152
    %v3986 = vunpack.c.l.b16 %v1153
    %v3987 = vunpack.c.l.b16 %v1154
    %v3988 = vunpack.c.l.b16 %v1155
    %v3989 = vunpack.c.l.b16 %v1156
    %v3990 = vunpack.c.l.b16 %v1157
    %v3991 = vunpack.c.l.b16 %v1158
    %v3992 = vunpack.c.l.b16 %v1159
    %v3993 = vunpack.c.l.b16 %v1160
    %v3994 = vunpack.c.l.b16 %v1161
    %v3995 = vunpack.c.l.b16 %v1162
    %v3996 = vunpack.c.l.b16 %v1163
    %v3997 = vunpack.c.l.b16 %v1164
    %v3998 = vunpack.c.l.b16 %v1165
    %v3999 = vunpack.c.l.b16 %v1166
    %v4000 = vunpack.c.l.b16 %v1167
    %v4001 = vunpack.c.l.b16 %v1168
    %v4002 = vunpack.c.l.b16 %v1169
    %v4003 = vunpack.c.l.b16 %v1170
    %v4004 = vunpack.c.l.b16 %v1171
    %v4005 = vunpack.c.l.b16 %v1172
    %v4006 = vunpack.c.l.b16 %v1173
    %v4007 = vunpack.c.l.b16 %v1174
    %v4008 = vunpack.c.l.b16 %v1175
    %v4009 = vunpack.c.l.b16 %v1176
    %v4010 = vunpack.c.l.b16 %v1177
    %v4011 = vunpack.c.l.b16 %v1178
    %v4012 = vunpack.c.l.b16 %v1179
    %v4013 = vunpack.c.l.b16 %v1180
    %v4014 = vunpack.c.l.b16 %v1181
    %v4015 = vunpack.c.l.b16 %v1182
    %v4016 = vpack.c.b16 %v2865, %v2864
    %v4017 = vpack.c.b16 %v2867, %v2866
    %v4018 = vpack.c.b16 %v2869, %v2868
    %v4019 = vpack.c.b16 %v2871, %v2870
    %v4020 = vpack.c.b16 %v2873, %v2872
    %v4021 = vpack.c.b16 %v2875, %v2874
    %v4022 = vpack.c.b16 %v2877, %v2876
    %v4023 = vpack.c.b16 %v2879, %v2878
    %v4024 = vpack.c.b16 %v2881, %v2880
    %v4025 = vpack.c.b16 %v2883, %v2882
    %v4026 = vpack.c.b16 %v2885, %v2884
    %v4027 = vpack.c.b16 %v2887, %v2886
    %v4028 = vpack.c.b16 %v2889, %v2888
    %v4029 = vpack.c.b16 %v2891, %v2890
    %v4030 = vpack.c.b16 %v2893, %v2892
    %v4031 = vpack.c.b16 %v2895, %v2894
    %v4032 = vpack.c.b16 %v2897, %v2896
    %v4033 = vpack.c.b16 %v2899, %v2898
    %v4034 = vpack.c.b16 %v2901, %v2900
    %v4035 = vpack.c.b16 %v2903, %v2902
    %v4036 = vpack.c.b16 %v2905, %v2904
    %v4037 = vpack.c.b16 %v2907, %v2906
    %v4038 = vpack.c.b16 %v2909, %v2908
    %v4039 = vpack.c.b16 %v2911, %v2910
    %v4040 = vpack.c.b16 %v2913, %v2912
    %v4041 = vpack.c.b16 %v2915, %v2914
    %v4042 = vpack.c.b16 %v2917, %v2916
    %v4043 = vpack.c.b16 %v2919, %v2918
    %v4044 = vpack.c.b16 %v2921, %v2920
    %v4045 = vpack.c.b16 %v2923, %v2922
    %v4046 = vpack.c.b16 %v2925, %v2924
    %v4047 = vpack.c.b16 %v2927, %v2926
    %v4048 = vpack.c.b16 %v2929, %v2928
    %v4049 = vpack.c.b16 %v2931, %v2930
    %v4050 = vpack.c.b16 %v2933, %v2932
    %v4051 = vpack.c.b16 %v2935, %v2934
    %v4052 = vpack.c.b16 %v2937, %v2936
    %v4053 = vpack.c.b16 %v2939, %v2938
    %v4054 = vpack.c.b16 %v2941, %v2940
    %v4055 = vpack.c.b16 %v2943, %v2942
    %v4056 = vpack.c.b16 %v2945, %v2944
    %v4057 = vpack.c.b16 %v2947, %v2946
    %v4058 = vpack.c.b16 %v2949, %v2948
    %v4059 = vpack.c.b16 %v2951, %v2950
    %v4060 = vpack.c.b16 %v2953, %v2952
    %v4061 = vpack.c.b16 %v2955, %v2954
    %v4062 = vpack.c.b16 %v2957, %v2956
    %v4063 = vpack.c.b16 %v2959, %v2958
    %v4064 = vpack.c.b16 %v2961, %v2960
    %v4065 = vpack.c.b16 %v2963, %v2962
    %v4066 = vpack.c.b16 %v2965, %v2964
    %v4067 = vpack.c.b16 %v2967, %v2966
    %v4068 = vpack.c.b16 %v2969, %v2968
    %v4069 = vpack.c.b16 %v2971, %v2970
    %v4070 = vpack.c.b16 %v2973, %v2972
    %v4071 = vpack.c.b16 %v2975, %v2974
    %v4072 = vpack.c.b16 %v2977, %v2976
    %v4073 = vpack.c.b16 %v2979, %v2978
    %v4074 = vpack.c.b16 %v2981, %v2980
    %v4075 = vpack.c.b16 %v2983, %v2982
    %v4076 = vpack.c.b16 %v2985, %v2984
    %v4077 = vpack.c.b16 %v2987, %v2986
    %v4078 = vpack.c.b16 %v2989, %v2988
    %v4079 = vpack.c.b16 %v2991, %v2990
    %v4080 = vpack.c.b16 %v2993, %v2992
    %v4081 = vpack.c.b16 %v2995, %v2994
    %v4082 = vpack.c.b16 %v2997, %v2996
    %v4083 = vpack.c.b16 %v2999, %v2998
    %v4084 = vpack.c.b16 %v3001, %v3000
    %v4085 = vpack.c.b16 %v3003, %v3002
    %v4086 = vpack.c.b16 %v3005, %v3004
    %v4087 = vpack.c.b16 %v3007, %v3006
    %v4088 = vpack.c.b16 %v3009, %v3008
    %v4089 = vpack.c.b16 %v3011, %v3010
    %v4090 = vpack.c.b16 %v3013, %v3012
    %v4091 = vpack.c.b16 %v3015, %v3014
    %v4092 = vpack.c.b16 %v3017, %v3016
    %v4093 = vpack.c.b16 %v3019, %v3018
    %v4094 = vpack.c.b16 %v3021, %v3020
    %v4095 = vpack.c.b16 %v3023, %v3022
    %v4096 = vpack.c.b16 %v3025, %v3024
    %v4097 = vpack.c.b16 %v3027, %v3026
    %v4098 = vpack.c.b16 %v3029, %v3028
    %v4099 = vpack.c.b16 %v3031, %v3030
    %v4100 = vpack.c.b16 %v3033, %v3032
    %v4101 = vpack.c.b16 %v3035, %v3034
    %v4102 = vpack.c.b16 %v3037, %v3036
    %v4103 = vpack.c.b16 %v3039, %v3038
    %v4104 = vpack.c.b16 %v3041, %v3040
    %v4105 = vpack.c.b16 %v3043, %v3042
    %v4106 = vpack.c.b16 %v3045, %v3044
    %v4107 = vpack.c.b16 %v3047, %v3046
    %v4108 = vpack.c.b16 %v3049, %v3048
    %v4109 = vpack.c.b16 %v3051, %v3050
    %v4110 = vpack.c.b16 %v3053, %v3052
    %v4111 = vpack.c.b16 %v3055, %v3054
    %v4112 = vpack.c.b16 %v3057, %v3056
    %v4113 = vpack.c.b16 %v3059, %v3058
    %v4114 = vpack.c.b16 %v3061, %v3060
    %v4115 = vpack.c.b16 %v3063, %v3062
    %v4116 = vpack.c.b16 %v3065, %v3064
    %v4117 = vpack.c.b16 %v3067, %v3066
    %v4118 = vpack.c.b16 %v3069, %v3068
    %v4119 = vpack.c.b16 %v3071, %v3070
    %v4120 = vpack.c.b16 %v3073, %v3072
    %v4121 = vpack.c.b16 %v3075, %v3074
    %v4122 = vpack.c.b16 %v3077, %v3076
    %v4123 = vpack.c.b16 %v3079, %v3078
    %v4124 = vpack.c.b16 %v3081, %v3080
    %v4125 = vpack.c.b16 %v3083, %v3082
    %v4126 = vpack.c.b16 %v3085, %v3084
    %v4127 = vpack.c.b16 %v3087, %v3086
    %v4128 = vpack.c.b16 %v3089, %v3088
    %v4129 = vpack.c.b16 %v3091, %v3090
    %v4130 = vpack.c.b16 %v3093, %v3092
    %v4131 = vpack.c.b16 %v3095, %v3094
    %v4132 = vpack.c.b16 %v3097, %v3096
    %v4133 = vpack.c.b16 %v3099, %v3098
    %v4134 = vpack.c.b16 %v3101, %v3100
    %v4135 = vpack.c.b16 %v3103, %v3102
    %v4136 = vpack.c.b16 %v3105, %v3104
    %v4137 = vpack.c.b16 %v3107, %v3106
    %v4138 = vpack.c.b16 %v3109, %v3108
    %v4139 = vpack.c.b16 %v3111, %v3110
    %v4140 = vpack.c.b16 %v3113, %v3112
    %v4141 = vpack.c.b16 %v3115, %v3114
    %v4142 = vpack.c.b16 %v3117, %v3116
    %v4143 = vpack.c.b16 %v3119, %v3118
    %v4144 = vpack.c.b16 %v3121, %v3120
    %v4145 = vpack.c.b16 %v3123, %v3122
    %v4146 = vpack.c.b16 %v3125, %v3124
    %v4147 = vpack.c.b16 %v3127, %v3126
    %v4148 = vpack.c.b16 %v3129, %v3128
    %v4149 = vpack.c.b16 %v3131, %v3130
    %v4150 = vpack.c.b16 %v3133, %v3132
    %v4151 = vpack.c.b16 %v3135, %v3134
    %v4152 = vpack.c.b16 %v3137, %v3136
    %v4153 = vpack.c.b16 %v3139, %v3138
    %v4154 = vpack.c.b16 %v3141, %v3140
    %v4155 = vpack.c.b16 %v3143, %v3142
    %v4156 = vpack.c.b16 %v3145, %v3144
    %v4157 = vpack.c.b16 %v3147, %v3146
    %v4158 = vpack.c.b16 %v3149, %v3148
    %v4159 = vpack.c.b16 %v3151, %v3150
    %v4160 = vpack.c.b16 %v3153, %v3152
    %v4161 = vpack.c.b16 %v3155, %v3154
    %v4162 = vpack.c.b16 %v3157, %v3156
    %v4163 = vpack.c.b16 %v3159, %v3158
    %v4164 = vpack.c.b16 %v3161, %v3160
    %v4165 = vpack.c.b16 %v3163, %v3162
    %v4166 = vpack.c.b16 %v3165, %v3164
    %v4167 = vpack.c.b16 %v3167, %v3166
    %v4168 = vpack.c.b16 %v3169, %v3168
    %v4169 = vpack.c.b16 %v3171, %v3170
    %v4170 = vpack.c.b16 %v3173, %v3172
    %v4171 = vpack.c.b16 %v3175, %v3174
    %v4172 = vpack.c.b16 %v3177, %v3176
    %v4173 = vpack.c.b16 %v3179, %v3178
    %v4174 = vpack.c.b16 %v3181, %v3180
    %v4175 = vpack.c.b16 %v3183, %v3182
    %v4176 = vpack.c.b16 %v3185, %v3184
    %v4177 = vpack.c.b16 %v3187, %v3186
    %v4178 = vpack.c.b16 %v3189, %v3188
    %v4179 = vpack.c.b16 %v3191, %v3190
    %v4180 = vpack.c.b16 %v3193, %v3192
    %v4181 = vpack.c.b16 %v3195, %v3194
    %v4182 = vpack.c.b16 %v3197, %v3196
    %v4183 = vpack.c.b16 %v3199, %v3198
    %v4184 = vpack.c.b16 %v3201, %v3200
    %v4185 = vpack.c.b16 %v3203, %v3202
    %v4186 = vpack.c.b16 %v3205, %v3204
    %v4187 = vpack.c.b16 %v3207, %v3206
    %v4188 = vpack.c.b16 %v3209, %v3208
    %v4189 = vpack.c.b16 %v3211, %v3210
    %v4190 = vpack.c.b16 %v3213, %v3212
    %v4191 = vpack.c.b16 %v3215, %v3214
    %v4192 = vpack.c.b16 %v3217, %v3216
    %v4193 = vpack.c.b16 %v3219, %v3218
    %v4194 = vpack.c.b16 %v3221, %v3220
    %v4195 = vpack.c.b16 %v3223, %v3222
    %v4196 = vpack.c.b16 %v3225, %v3224
    %v4197 = vpack.c.b16 %v3227, %v3226
    %v4198 = vpack.c.b16 %v3229, %v3228
    %v4199 = vpack.c.b16 %v3231, %v3230
    %v4200 = vpack.c.b16 %v3233, %v3232
    %v4201 = vpack.c.b16 %v3235, %v3234
    %v4202 = vpack.c.b16 %v3237, %v3236
    %v4203 = vpack.c.b16 %v3239, %v3238
    %v4204 = vpack.c.b16 %v3241, %v3240
    %v4205 = vpack.c.b16 %v3243, %v3242
    %v4206 = vpack.c.b16 %v3245, %v3244
    %v4207 = vpack.c.b16 %v3247, %v3246
    %v4208 = vpack.c.b16 %v3249, %v3248
    %v4209 = vpack.c.b16 %v3251, %v3250
    %v4210 = vpack.c.b16 %v3253, %v3252
    %v4211 = vpack.c.b16 %v3255, %v3254
    %v4212 = vpack.c.b16 %v3257, %v3256
    %v4213 = vpack.c.b16 %v3259, %v3258
    %v4214 = vpack.c.b16 %v3261, %v3260
    %v4215 = vpack.c.b16 %v3263, %v3262
    %v4216 = vpack.c.b16 %v3265, %v3264
    %v4217 = vpack.c.b16 %v3267, %v3266
    %v4218 = vpack.c.b16 %v3269, %v3268
    %v4219 = vpack.c.b16 %v3271, %v3270
    %v4220 = vpack.c.b16 %v3273, %v3272
    %v4221 = vpack.c.b16 %v3275, %v3274
    %v4222 = vpack.c.b16 %v3277, %v3276
    %v4223 = vpack.c.b16 %v3279, %v3278
    %v4224 = vpack.c.b16 %v3281, %v3280
    %v4225 = vpack.c.b16 %v3283, %v3282
    %v4226 = vpack.c.b16 %v3285, %v3284
    %v4227 = vpack.c.b16 %v3287, %v3286
    %v4228 = vpack.c.b16 %v3289, %v3288
    %v4229 = vpack.c.b16 %v3291, %v3290
    %v4230 = vpack.c.b16 %v3293, %v3292
    %v4231 = vpack.c.b16 %v3295, %v3294
    %v4232 = vpack.c.b16 %v3297, %v3296
    %v4233 = vpack.c.b16 %v3299, %v3298
    %v4234 = vpack.c.b16 %v3301, %v3300
    %v4235 = vpack.c.b16 %v3303, %v3302
    %v4236 = vpack.c.b16 %v3305, %v3304
    %v4237 = vpack.c.b16 %v3307, %v3306
    %v4238 = vpack.c.b16 %v3309, %v3308
    %v4239 = vpack.c.b16 %v3311, %v3310
    %v4240 = vpack.c.b16 %v3313, %v3312
    %v4241 = vpack.c.b16 %v3315, %v3314
    %v4242 = vpack.c.b16 %v3317, %v3316
    %v4243 = vpack.c.b16 %v3319, %v3318
    %v4244 = vpack.c.b16 %v3321, %v3320
    %v4245 = vpack.c.b16 %v3323, %v3322
    %v4246 = vpack.c.b16 %v3325, %v3324
    %v4247 = vpack.c.b16 %v3327, %v3326
    %v4248 = vpack.c.b16 %v3329, %v3328
    %v4249 = vpack.c.b16 %v3331, %v3330
    %v4250 = vpack.c.b16 %v3333, %v3332
    %v4251 = vpack.c.b16 %v3335, %v3334
    %v4252 = vpack.c.b16 %v3337, %v3336
    %v4253 = vpack.c.b16 %v3339, %v3338
    %v4254 = vpack.c.b16 %v3341, %v3340
    %v4255 = vpack.c.b16 %v3343, %v3342
    %v4256 = vpack.c.b16 %v3345, %v3344
    %v4257 = vpack.c.b16 %v3347, %v3346
    %v4258 = vpack.c.b16 %v3349, %v3348
    %v4259 = vpack.c.b16 %v3351, %v3350
    %v4260 = vpack.c.b16 %v3353, %v3352
    %v4261 = vpack.c.b16 %v3355, %v3354
    %v4262 = vpack.c.b16 %v3357, %v3356
    %v4263 = vpack.c.b16 %v3359, %v3358
    %v4264 = vpack.c.b16 %v3361, %v3360
    %v4265 = vpack.c.b16 %v3363, %v3362
    %v4266 = vpack.c.b16 %v3365, %v3364
    %v4267 = vpack.c.b16 %v3367, %v3366
    %v4268 = vpack.c.b16 %v3369, %v3368
    %v4269 = vpack.c.b16 %v3371, %v3370
    %v4270 = vpack.c.b16 %v3373, %v3372
    %v4271 = vpack.c.b16 %v3375, %v3374
    %v4272 = vpack.c.b16 %v3377, %v3376
    %v4273 = vpack.c.b16 %v3379, %v3378
    %v4274 = vpack.c.b16 %v3381, %v3380
    %v4275 = vpack.c.b16 %v3383, %v3382
    %v4276 = vpack.c.b16 %v3385, %v3384
    %v4277 = vpack.c.b16 %v3387, %v3386
    %v4278 = vpack.c.b16 %v3389, %v3388
    %v4279 = vpack.c.b16 %v3391, %v3390
    %v4280 = vpack.c.b16 %v3393, %v3392
    %v4281 = vpack.c.b16 %v3395, %v3394
    %v4282 = vpack.c.b16 %v3397, %v3396
    %v4283 = vpack.c.b16 %v3399, %v3398
    %v4284 = vpack.c.b16 %v3401, %v3400
    %v4285 = vpack.c.b16 %v3403, %v3402
    %v4286 = vpack.c.b16 %v3405, %v3404
    %v4287 = vpack.c.b16 %v3407, %v3406
    %v4288 = vpack.c.b16 %v3409, %v3408
    %v4289 = vpack.c.b16 %v3411, %v3410
    %v4290 = vpack.c.b16 %v3413, %v3412
    %v4291 = vpack.c.b16 %v3415, %v3414
    %v4292 = vpack.c.b16 %v3417, %v3416
    %v4293 = vpack.c.b16 %v3419, %v3418
    %v4294 = vpack.c.b16 %v3421, %v3420
    %v4295 = vpack.c.b16 %v3423, %v3422
    %v4296 = vpack.c.b16 %v3425, %v3424
    %v4297 = vpack.c.b16 %v3427, %v3426
    %v4298 = vpack.c.b16 %v3429, %v3428
    %v4299 = vpack.c.b16 %v3431, %v3430
    %v4300 = vpack.c.b16 %v3433, %v3432
    %v4301 = vpack.c.b16 %v3435, %v3434
    %v4302 = vpack.c.b16 %v3437, %v3436
    %v4303 = vpack.c.b16 %v3439, %v3438
    %v4304 = vpack.c.b16 %v3441, %v3440
    %v4305 = vpack.c.b16 %v3443, %v3442
    %v4306 = vpack.c.b16 %v3445, %v3444
    %v4307 = vpack.c.b16 %v3447, %v3446
    %v4308 = vpack.c.b16 %v3449, %v3448
    %v4309 = vpack.c.b16 %v3451, %v3450
    %v4310 = vpack.c.b16 %v3453, %v3452
    %v4311 = vpack.c.b16 %v3455, %v3454
    %v4312 = vpack.c.b16 %v3457, %v3456
    %v4313 = vpack.c.b16 %v3459, %v3458
    %v4314 = vpack.c.b16 %v3461, %v3460
    %v4315 = vpack.c.b16 %v3463, %v3462
    %v4316 = vpack.c.b16 %v3465, %v3464
    %v4317 = vpack.c.b16 %v3467, %v3466
    %v4318 = vpack.c.b16 %v3469, %v3468
    %v4319 = vpack.c.b16 %v3471, %v3470
    %v4320 = vpack.c.b16 %v3473, %v3472
    %v4321 = vpack.c.b16 %v3475, %v3474
    %v4322 = vpack.c.b16 %v3477, %v3476
    %v4323 = vpack.c.b16 %v3479, %v3478
    %v4324 = vpack.c.b16 %v3481, %v3480
    %v4325 = vpack.c.b16 %v3483, %v3482
    %v4326 = vpack.c.b16 %v3485, %v3484
    %v4327 = vpack.c.b16 %v3487, %v3486
    %v4328 = vpack.c.b16 %v3489, %v3488
    %v4329 = vpack.c.b16 %v3491, %v3490
    %v4330 = vpack.c.b16 %v3493, %v3492
    %v4331 = vpack.c.b16 %v3495, %v3494
    %v4332 = vpack.c.b16 %v3497, %v3496
    %v4333 = vpack.c.b16 %v3499, %v3498
    %v4334 = vpack.c.b16 %v3501, %v3500
    %v4335 = vpack.c.b16 %v3503, %v3502
    %v4336 = vpack.c.b16 %v3505, %v3504
    %v4337 = vpack.c.b16 %v3507, %v3506
    %v4338 = vpack.c.b16 %v3509, %v3508
    %v4339 = vpack.c.b16 %v3511, %v3510
    %v4340 = vpack.c.b16 %v3513, %v3512
    %v4341 = vpack.c.b16 %v3515, %v3514
    %v4342 = vpack.c.b16 %v3517, %v3516
    %v4343 = vpack.c.b16 %v3519, %v3518
    %v4344 = vpack.c.b16 %v3521, %v3520
    %v4345 = vpack.c.b16 %v3523, %v3522
    %v4346 = vpack.c.b16 %v3525, %v3524
    %v4347 = vpack.c.b16 %v3527, %v3526
    %v4348 = vpack.c.b16 %v3529, %v3528
    %v4349 = vpack.c.b16 %v3531, %v3530
    %v4350 = vpack.c.b16 %v3533, %v3532
    %v4351 = vpack.c.b16 %v3535, %v3534
    %v4352 = vpack.c.b16 %v3537, %v3536
    %v4353 = vpack.c.b16 %v3539, %v3538
    %v4354 = vpack.c.b16 %v3541, %v3540
    %v4355 = vpack.c.b16 %v3543, %v3542
    %v4356 = vpack.c.b16 %v3545, %v3544
    %v4357 = vpack.c.b16 %v3547, %v3546
    %v4358 = vpack.c.b16 %v3549, %v3548
    %v4359 = vpack.c.b16 %v3551, %v3550
    %v4360 = vpack.c.b16 %v3553, %v3552
    %v4361 = vpack.c.b16 %v3555, %v3554
    %v4362 = vpack.c.b16 %v3557, %v3556
    %v4363 = vpack.c.b16 %v3559, %v3558
    %v4364 = vpack.c.b16 %v3561, %v3560
    %v4365 = vpack.c.b16 %v3563, %v3562
    %v4366 = vpack.c.b16 %v3565, %v3564
    %v4367 = vpack.c.b16 %v3567, %v3566
    %v4368 = vpack.c.b16 %v3569, %v3568
    %v4369 = vpack.c.b16 %v3571, %v3570
    %v4370 = vpack.c.b16 %v3573, %v3572
    %v4371 = vpack.c.b16 %v3575, %v3574
    %v4372 = vpack.c.b16 %v3577, %v3576
    %v4373 = vpack.c.b16 %v3579, %v3578
    %v4374 = vpack.c.b16 %v3581, %v3580
    %v4375 = vpack.c.b16 %v3583, %v3582
    %v4376 = vpack.c.b16 %v3585, %v3584
    %v4377 = vpack.c.b16 %v3587, %v3586
    %v4378 = vpack.c.b16 %v3589, %v3588
    %v4379 = vpack.c.b16 %v3591, %v3590
    %v4380 = vpack.c.b16 %v3593, %v3592
    %v4381 = vpack.c.b16 %v3595, %v3594
    %v4382 = vpack.c.b16 %v3597, %v3596
    %v4383 = vpack.c.b16 %v3599, %v3598
    %v4384 = vpack.c.b16 %v3601, %v3600
    %v4385 = vpack.c.b16 %v3603, %v3602
    %v4386 = vpack.c.b16 %v3605, %v3604
    %v4387 = vpack.c.b16 %v3607, %v3606
    %v4388 = vpack.c.b16 %v3609, %v3608
    %v4389 = vpack.c.b16 %v3611, %v3610
    %v4390 = vpack.c.b16 %v3613, %v3612
    %v4391 = vpack.c.b16 %v3615, %v3614
    %v4392 = vpack.c.b16 %v3617, %v3616
    %v4393 = vpack.c.b16 %v3619, %v3618
    %v4394 = vpack.c.b16 %v3621, %v3620
    %v4395 = vpack.c.b16 %v3623, %v3622
    %v4396 = vpack.c.b16 %v3625, %v3624
    %v4397 = vpack.c.b16 %v3627, %v3626
    %v4398 = vpack.c.b16 %v3629, %v3628
    %v4399 = vpack.c.b16 %v3631, %v3630
    %v4400 = vpack.c.b16 %v3633, %v3632
    %v4401 = vpack.c.b16 %v3635, %v3634
    %v4402 = vpack.c.b16 %v3637, %v3636
    %v4403 = vpack.c.b16 %v3639, %v3638
    %v4404 = vpack.c.b16 %v3641, %v3640
    %v4405 = vpack.c.b16 %v3643, %v3642
    %v4406 = vpack.c.b16 %v3645, %v3644
    %v4407 = vpack.c.b16 %v3647, %v3646
    %v4408 = vpack.c.b16 %v3649, %v3648
    %v4409 = vpack.c.b16 %v3651, %v3650
    %v4410 = vpack.c.b16 %v3653, %v3652
    %v4411 = vpack.c.b16 %v3655, %v3654
    %v4412 = vpack.c.b16 %v3657, %v3656
    %v4413 = vpack.c.b16 %v3659, %v3658
    %v4414 = vpack.c.b16 %v3661, %v3660
    %v4415 = vpack.c.b16 %v3663, %v3662
    %v4416 = vpack.c.b16 %v3665, %v3664
    %v4417 = vpack.c.b16 %v3667, %v3666
    %v4418 = vpack.c.b16 %v3669, %v3668
    %v4419 = vpack.c.b16 %v3671, %v3670
    %v4420 = vpack.c.b16 %v3673, %v3672
    %v4421 = vpack.c.b16 %v3675, %v3674
    %v4422 = vpack.c.b16 %v3677, %v3676
    %v4423 = vpack.c.b16 %v3679, %v3678
    %v4424 = vpack.c.b16 %v3681, %v3680
    %v4425 = vpack.c.b16 %v3683, %v3682
    %v4426 = vpack.c.b16 %v3685, %v3684
    %v4427 = vpack.c.b16 %v3687, %v3686
    %v4428 = vpack.c.b16 %v3689, %v3688
    %v4429 = vpack.c.b16 %v3691, %v3690
    %v4430 = vpack.c.b16 %v3693, %v3692
    %v4431 = vpack.c.b16 %v3695, %v3694
    %v4432 = vpack.c.b16 %v3697, %v3696
    %v4433 = vpack.c.b16 %v3699, %v3698
    %v4434 = vpack.c.b16 %v3701, %v3700
    %v4435 = vpack.c.b16 %v3703, %v3702
    %v4436 = vpack.c.b16 %v3705, %v3704
    %v4437 = vpack.c.b16 %v3707, %v3706
    %v4438 = vpack.c.b16 %v3709, %v3708
    %v4439 = vpack.c.b16 %v3711, %v3710
    %v4440 = vpack.c.b16 %v3713, %v3712
    %v4441 = vpack.c.b16 %v3715, %v3714
    %v4442 = vpack.c.b16 %v3717, %v3716
    %v4443 = vpack.c.b16 %v3719, %v3718
    %v4444 = vpack.c.b16 %v3721, %v3720
    %v4445 = vpack.c.b16 %v3723, %v3722
    %v4446 = vpack.c.b16 %v3725, %v3724
    %v4447 = vpack.c.b16 %v3727, %v3726
    %v4448 = vpack.c.b16 %v3729, %v3728
    %v4449 = vpack.c.b16 %v3731, %v3730
    %v4450 = vpack.c.b16 %v3733, %v3732
    %v4451 = vpack.c.b16 %v3735, %v3734
    %v4452 = vpack.c.b16 %v3737, %v3736
    %v4453 = vpack.c.b16 %v3739, %v3738
    %v4454 = vpack.c.b16 %v3741, %v3740
    %v4455 = vpack.c.b16 %v3743, %v3742
    %v4456 = vpack.c.b16 %v3745, %v3744
    %v4457 = vpack.c.b16 %v3747, %v3746
    %v4458 = vpack.c.b16 %v3749, %v3748
    %v4459 = vpack.c.b16 %v3751, %v3750
    %v4460 = vpack.c.b16 %v3753, %v3752
    %v4461 = vpack.c.b16 %v3755, %v3754
    %v4462 = vpack.c.b16 %v3757, %v3756
    %v4463 = vpack.c.b16 %v3759, %v3758
    %v4464 = vpack.c.b16 %v3761, %v3760
    %v4465 = vpack.c.b16 %v3763, %v3762
    %v4466 = vpack.c.b16 %v3765, %v3764
    %v4467 = vpack.c.b16 %v3767, %v3766
    %v4468 = vpack.c.b16 %v3769, %v3768
    %v4469 = vpack.c.b16 %v3771, %v3770
    %v4470 = vpack.c.b16 %v3773, %v3772
    %v4471 = vpack.c.b16 %v3775, %v3774
    %v4472 = vpack.c.b16 %v3777, %v3776
    %v4473 = vpack.c.b16 %v3779, %v3778
    %v4474 = vpack.c.b16 %v3781, %v3780
    %v4475 = vpack.c.b16 %v3783, %v3782
    %v4476 = vpack.c.b16 %v3785, %v3784
    %v4477 = vpack.c.b16 %v3787, %v3786
    %v4478 = vpack.c.b16 %v3789, %v3788
    %v4479 = vpack.c.b16 %v3791, %v3790
    %v4480 = vpack.c.b16 %v3793, %v3792
    %v4481 = vpack.c.b16 %v3795, %v3794
    %v4482 = vpack.c.b16 %v3797, %v3796
    %v4483 = vpack.c.b16 %v3799, %v3798
    %v4484 = vpack.c.b16 %v3801, %v3800
    %v4485 = vpack.c.b16 %v3803, %v3802
    %v4486 = vpack.c.b16 %v3805, %v3804
    %v4487 = vpack.c.b16 %v3807, %v3806
    %v4488 = vpack.c.b16 %v3809, %v3808
    %v4489 = vpack.c.b16 %v3811, %v3810
    %v4490 = vpack.c.b16 %v3813, %v3812
    %v4491 = vpack.c.b16 %v3815, %v3814
    %v4492 = vpack.c.b16 %v3817, %v3816
    %v4493 = vpack.c.b16 %v3819, %v3818
    %v4494 = vpack.c.b16 %v3821, %v3820
    %v4495 = vpack.c.b16 %v3823, %v3822
    %v4496 = vpack.c.b16 %v3825, %v3824
    %v4497 = vpack.c.b16 %v3827, %v3826
    %v4498 = vpack.c.b16 %v3829, %v3828
    %v4499 = vpack.c.b16 %v3831, %v3830
    %v4500 = vpack.c.b16 %v3833, %v3832
    %v4501 = vpack.c.b16 %v3835, %v3834
    %v4502 = vpack.c.b16 %v3837, %v3836
    %v4503 = vpack.c.b16 %v3839, %v3838
    %v4504 = vpack.c.b16 %v3841, %v3840
    %v4505 = vpack.c.b16 %v3843, %v3842
    %v4506 = vpack.c.b16 %v3845, %v3844
    %v4507 = vpack.c.b16 %v3847, %v3846
    %v4508 = vpack.c.b16 %v3849, %v3848
    %v4509 = vpack.c.b16 %v3851, %v3850
    %v4510 = vpack.c.b16 %v3853, %v3852
    %v4511 = vpack.c.b16 %v3855, %v3854
    %v4512 = vpack.c.b16 %v3857, %v3856
    %v4513 = vpack.c.b16 %v3859, %v3858
    %v4514 = vpack.c.b16 %v3861, %v3860
    %v4515 = vpack.c.b16 %v3863, %v3862
    %v4516 = vpack.c.b16 %v3865, %v3864
    %v4517 = vpack.c.b16 %v3867, %v3866
    %v4518 = vpack.c.b16 %v3869, %v3868
    %v4519 = vpack.c.b16 %v3871, %v3870
    %v4520 = vpack.c.b16 %v3873, %v3872
    %v4521 = vpack.c.b16 %v3875, %v3874
    %v4522 = vpack.c.b16 %v3877, %v3876
    %v4523 = vpack.c.b16 %v3879, %v3878
    %v4524 = vpack.c.b16 %v3881, %v3880
    %v4525 = vpack.c.b16 %v3883, %v3882
    %v4526 = vpack.c.b16 %v3885, %v3884
    %v4527 = vpack.c.b16 %v3887, %v3886
    %v4528 = vpack.c.b16 %v3889, %v3888
    %v4529 = vpack.c.b16 %v3891, %v3890
    %v4530 = vpack.c.b16 %v3893, %v3892
    %v4531 = vpack.c.b16 %v3895, %v3894
    %v4532 = vpack.c.b16 %v3897, %v3896
    %v4533 = vpack.c.b16 %v3899, %v3898
    %v4534 = vpack.c.b16 %v3901, %v3900
    %v4535 = vpack.c.b16 %v3903, %v3902
    %v4536 = vpack.c.b16 %v3905, %v3904
    %v4537 = vpack.c.b16 %v3907, %v3906
    %v4538 = vpack.c.b16 %v3909, %v3908
    %v4539 = vpack.c.b16 %v3911, %v3910
    %v4540 = vpack.c.b16 %v3913, %v3912
    %v4541 = vpack.c.b16 %v3915, %v3914
    %v4542 = vpack.c.b16 %v3917, %v3916
    %v4543 = vpack.c.b16 %v3919, %v3918
    %v4544 = vpack.c.b16 %v3921, %v3920
    %v4545 = vpack.c.b16 %v3923, %v3922
    %v4546 = vpack.c.b16 %v3925, %v3924
    %v4547 = vpack.c.b16 %v3927, %v3926
    %v4548 = vpack.c.b16 %v3929, %v3928
    %v4549 = vpack.c.b16 %v3931, %v3930
    %v4550 = vpack.c.b16 %v3933, %v3932
    %v4551 = vpack.c.b16 %v3935, %v3934
    %v4552 = vpack.c.b16 %v3937, %v3936
    %v4553 = vpack.c.b16 %v3939, %v3938
    %v4554 = vpack.c.b16 %v3941, %v3940
    %v4555 = vpack.c.b16 %v3943, %v3942
    %v4556 = vpack.c.b16 %v3945, %v3944
    %v4557 = vpack.c.b16 %v3947, %v3946
    %v4558 = vpack.c.b16 %v3949, %v3948
    %v4559 = vpack.c.b16 %v3951, %v3950
    %v4560 = vpack.c.b16 %v3953, %v3952
    %v4561 = vpack.c.b16 %v3955, %v3954
    %v4562 = vpack.c.b16 %v3957, %v3956
    %v4563 = vpack.c.b16 %v3959, %v3958
    %v4564 = vpack.c.b16 %v3961, %v3960
    %v4565 = vpack.c.b16 %v3963, %v3962
    %v4566 = vpack.c.b16 %v3965, %v3964
    %v4567 = vpack.c.b16 %v3967, %v3966
    %v4568 = vpack.c.b16 %v3969, %v3968
    %v4569 = vpack.c.b16 %v3971, %v3970
    %v4570 = vpack.c.b16 %v3973, %v3972
    %v4571 = vpack.c.b16 %v3975, %v3974
    %v4572 = vpack.c.b16 %v3977, %v3976
    %v4573 = vpack.c.b16 %v3979, %v3978
    %v4574 = vpack.c.b16 %v3981, %v3980
    %v4575 = vpack.c.b16 %v3983, %v3982
    %v4576 = vpack.c.b16 %v3985, %v3984
    %v4577 = vpack.c.b16 %v3987, %v3986
    %v4578 = vpack.c.b16 %v3989, %v3988
    %v4579 = vpack.c.b16 %v3991, %v3990
    %v4580 = vpack.c.b16 %v3993, %v3992
    %v4581 = vpack.c.b16 %v3995, %v3994
    %v4582 = vpack.c.b16 %v3997, %v3996
    %v4583 = vpack.c.b16 %v3999, %v3998
    %v4584 = vpack.c.b16 %v4001, %v4000
    %v4585 = vpack.c.b16 %v4003, %v4002
    %v4586 = vpack.c.b16 %v4005, %v4004
    %v4587 = vpack.c.b16 %v4007, %v4006
    %v4588 = vpack.c.b16 %v4009, %v4008
    %v4589 = vpack.c.b16 %v4011, %v4010
    %v4590 = vpack.c.b16 %v4013, %v4012
    %v4591 = vpack.c.b16 %v4015, %v4014
    %5168 = vmatprep.subr.bf16.mxu0 0
    %5169 = vmatpush1.bf16.msra.mxu0 %v4016
    %5170 = vmatprep.subr.bf16.mxu0 0
    %5171 = vmatpush1.bf16.msra.mxu0 %v4017
    %5172 = vmatprep.subr.bf16.mxu0 0
    %5173 = vmatpush1.bf16.msra.mxu0 %v4018
    %5174 = vmatprep.subr.bf16.mxu0 0
    %5175 = vmatpush1.bf16.msra.mxu0 %v4019
    %5176 = vmatprep.subr.bf16.mxu0 0
    %5177 = vmatpush1.bf16.msra.mxu0 %v4020
    %5178 = vmatprep.subr.bf16.mxu0 0
    %5179 = vmatpush1.bf16.msra.mxu0 %v4021
    %5180 = vmatprep.subr.bf16.mxu0 0
    %5181 = vmatpush1.bf16.msra.mxu0 %v4022
    %5182 = vmatprep.subr.bf16.mxu0 0
    %5183 = vmatpush1.bf16.msra.mxu0 %v4023
    %5184 = vmatprep.subr.bf16.mxu0 0
    %5185 = vmatpush1.bf16.msra.mxu0 %v4024
    %5186 = vmatprep.subr.bf16.mxu0 0
    %5187 = vmatpush1.bf16.msra.mxu0 %v4025
    %5188 = vmatprep.subr.bf16.mxu0 0
    %5189 = vmatpush1.bf16.msra.mxu0 %v4026
    %5190 = vmatprep.subr.bf16.mxu0 0
    %5191 = vmatpush1.bf16.msra.mxu0 %v4027
    %5192 = vmatprep.subr.bf16.mxu0 0
    %5193 = vmatpush1.bf16.msra.mxu0 %v4028
    %5194 = vmatprep.subr.bf16.mxu0 0
    %5195 = vmatpush1.bf16.msra.mxu0 %v4029
    %5196 = vmatprep.subr.bf16.mxu0 0
    %5197 = vmatpush1.bf16.msra.mxu0 %v4030
    %5198 = vmatprep.subr.bf16.mxu0 0
    %5199 = vmatpush1.bf16.msra.mxu0 %v4031
    %5200 = vmatprep.mubr.bf16.mxu0 %v1236
    %5201 = vmatmul.mubr.bf16.gmra.mrb[0].mxu0 %v1222
    %v5202 = vpop.f32.mrb[0].mxu0
    %v5203 = vadd.f32 %v1188, %v5202
    %v5204 = vpop.f32.mrb[0].mxu0
    %v5205 = vpop.f32.mrb[0].mxu0
    %v5206 = vpop.f32.mrb[0].mxu0
    %5207 = vdwg.mxu0
    %5208 = vmatprep.subr.bf16.mxu0 0
    %5209 = vmatpush1.bf16.msra.mxu0 %v4032
    %5210 = vmatprep.subr.bf16.mxu0 0
    %5211 = vmatpush1.bf16.msra.mxu0 %v4033
    %5212 = vmatprep.subr.bf16.mxu0 0
    %5213 = vmatpush1.bf16.msra.mxu0 %v4034
    %5214 = vmatprep.subr.bf16.mxu0 0
    %5215 = vmatpush1.bf16.msra.mxu0 %v4035
    %5216 = vmatprep.subr.bf16.mxu0 0
    %5217 = vmatpush1.bf16.msra.mxu0 %v4036
    %5218 = vmatprep.subr.bf16.mxu0 0
    %5219 = vmatpush1.bf16.msra.mxu0 %v4037
    %5220 = vmatprep.subr.bf16.mxu0 0
    %5221 = vmatpush1.bf16.msra.mxu0 %v4038
    %5222 = vmatprep.subr.bf16.mxu0 0
    %5223 = vmatpush1.bf16.msra.mxu0 %v4039
    %5224 = vmatprep.subr.bf16.mxu0 0
    %5225 = vmatpush1.bf16.msra.mxu0 %v4040
    %5226 = vmatprep.subr.bf16.mxu0 0
    %5227 = vmatpush1.bf16.msra.mxu0 %v4041
    %5228 = vmatprep.subr.bf16.mxu0 0
    %5229 = vmatpush1.bf16.msra.mxu0 %v4042
    %5230 = vmatprep.subr.bf16.mxu0 0
    %5231 = vmatpush1.bf16.msra.mxu0 %v4043
    %5232 = vmatprep.subr.bf16.mxu0 0
    %5233 = vmatpush1.bf16.msra.mxu0 %v4044
    %5234 = vmatprep.subr.bf16.mxu0 0
    %5235 = vmatpush1.bf16.msra.mxu0 %v4045
    %5236 = vmatprep.subr.bf16.mxu0 0
    %5237 = vmatpush1.bf16.msra.mxu0 %v4046
    %5238 = vmatprep.subr.bf16.mxu0 0
    %5239 = vmatpush1.bf16.msra.mxu0 %v4047
    %5240 = vmatprep.mubr.bf16.mxu0 %v1246
    %5241 = vmatmul.mubr.bf16.gmra.mrb[0].mxu0 %v1244
    %v5242 = vpop.f32.mrb[0].mxu0
    %v5243 = vadd.f32 %v5203, %v5242
    %v5244 = vpop.f32.mrb[0].mxu0
    %v5245 = vpop.f32.mrb[0].mxu0
    %v5246 = vpop.f32.mrb[0].mxu0
    %5247 = vdwg.mxu0
    %5248 = vmatprep.subr.bf16.mxu0 0
    %5249 = vmatpush1.bf16.msra.mxu0 %v4048
    %5250 = vmatprep.subr.bf16.mxu0 0
    %5251 = vmatpush1.bf16.msra.mxu0 %v4049
    %5252 = vmatprep.subr.bf16.mxu0 0
    %5253 = vmatpush1.bf16.msra.mxu0 %v4050
    %5254 = vmatprep.subr.bf16.mxu0 0
    %5255 = vmatpush1.bf16.msra.mxu0 %v4051
    %5256 = vmatprep.subr.bf16.mxu0 0
    %5257 = vmatpush1.bf16.msra.mxu0 %v4052
    %5258 = vmatprep.subr.bf16.mxu0 0
    %5259 = vmatpush1.bf16.msra.mxu0 %v4053
    %5260 = vmatprep.subr.bf16.mxu0 0
    %5261 = vmatpush1.bf16.msra.mxu0 %v4054
    %5262 = vmatprep.subr.bf16.mxu0 0
    %5263 = vmatpush1.bf16.msra.mxu0 %v4055
    %5264 = vmatprep.subr.bf16.mxu0 0
    %5265 = vmatpush1.bf16.msra.mxu0 %v4056
    %5266 = vmatprep.subr.bf16.mxu0 0
    %5267 = vmatpush1.bf16.msra.mxu0 %v4057
    %5268 = vmatprep.subr.bf16.mxu0 0
    %5269 = vmatpush1.bf16.msra.mxu0 %v4058
    %5270 = vmatprep.subr.bf16.mxu0 0
    %5271 = vmatpush1.bf16.msra.mxu0 %v4059
    %5272 = vmatprep.subr.bf16.mxu0 0
    %5273 = vmatpush1.bf16.msra.mxu0 %v4060
    %5274 = vmatprep.subr.bf16.mxu0 0
    %5275 = vmatpush1.bf16.msra.mxu0 %v4061
    %5276 = vmatprep.subr.bf16.mxu0 0
    %5277 = vmatpush1.bf16.msra.mxu0 %v4062
    %5278 = vmatprep.subr.bf16.mxu0 0
    %5279 = vmatpush1.bf16.msra.mxu0 %v4063
    %5280 = vmatprep.mubr.bf16.mxu0 %v1243
    %5281 = vmatmul.mubr.bf16.gmra.mrb[0].mxu0 %v1229
    %v5282 = vpop.f32.mrb[0].mxu0
    %v5283 = vadd.f32 %v5243, %v5282
    %v5284 = vpop.f32.mrb[0].mxu0
    %v5285 = vpop.f32.mrb[0].mxu0
    %v5286 = vpop.f32.mrb[0].mxu0
    %5287 = vdwg.mxu0
    %5288 = vmatprep.subr.bf16.mxu0 0
    %5289 = vmatpush1.bf16.msra.mxu0 %v4064
    %5290 = vmatprep.subr.bf16.mxu0 0
    %5291 = vmatpush1.bf16.msra.mxu0 %v4065
    %5292 = vmatprep.subr.bf16.mxu0 0
    %5293 = vmatpush1.bf16.msra.mxu0 %v4066
    %5294 = vmatprep.subr.bf16.mxu0 0
    %5295 = vmatpush1.bf16.msra.mxu0 %v4067
    %5296 = vmatprep.subr.bf16.mxu0 0
    %5297 = vmatpush1.bf16.msra.mxu0 %v4068
    %5298 = vmatprep.subr.bf16.mxu0 0
    %5299 = vmatpush1.bf16.msra.mxu0 %v4069
    %5300 = vmatprep.subr.bf16.mxu0 0
    %5301 = vmatpush1.bf16.msra.mxu0 %v4070
    %5302 = vmatprep.subr.bf16.mxu0 0
    %5303 = vmatpush1.bf16.msra.mxu0 %v4071
    %5304 = vmatprep.subr.bf16.mxu0 0
    %5305 = vmatpush1.bf16.msra.mxu0 %v4072
    %5306 = vmatprep.subr.bf16.mxu0 0
    %5307 = vmatpush1.bf16.msra.mxu0 %v4073
    %5308 = vmatprep.subr.bf16.mxu0 0
    %5309 = vmatpush1.bf16.msra.mxu0 %v4074
    %5310 = vmatprep.subr.bf16.mxu0 0
    %5311 = vmatpush1.bf16.msra.mxu0 %v4075
    %5312 = vmatprep.subr.bf16.mxu0 0
    %5313 = vmatpush1.bf16.msra.mxu0 %v4076
    %5314 = vmatprep.subr.bf16.mxu0 0
    %5315 = vmatpush1.bf16.msra.mxu0 %v4077
    %5316 = vmatprep.subr.bf16.mxu0 0
    %5317 = vmatpush1.bf16.msra.mxu0 %v4078
    %5318 = vmatprep.subr.bf16.mxu0 0
    %5319 = vmatpush1.bf16.msra.mxu0 %v4079
    %5320 = vmatprep.mubr.bf16.mxu0 %v1247
    %5321 = vmatmul.mubr.bf16.gmra.mrb[0].mxu0 %v1245
    %v5322 = vpop.f32.mrb[0].mxu0
    %v5323 = vadd.f32 %v5283, %v5322
    %v5324 = vpop.f32.mrb[0].mxu0
    %v5325 = vpop.f32.mrb[0].mxu0
    %v5326 = vpop.f32.mrb[0].mxu0
    %5327 = vdwg.mxu0
    %5328 = vmatprep.subr.bf16.mxu0 0
    %5329 = vmatpush1.bf16.msra.mxu0 %v4080
    %5330 = vmatprep.subr.bf16.mxu0 0
    %5331 = vmatpush1.bf16.msra.mxu0 %v4081
    %5332 = vmatprep.subr.bf16.mxu0 0
    %5333 = vmatpush1.bf16.msra.mxu0 %v4082
    %5334 = vmatprep.subr.bf16.mxu0 0
    %5335 = vmatpush1.bf16.msra.mxu0 %v4083
    %5336 = vmatprep.subr.bf16.mxu0 0
    %5337 = vmatpush1.bf16.msra.mxu0 %v4084
    %5338 = vmatprep.subr.bf16.mxu0 0
    %5339 = vmatpush1.bf16.msra.mxu0 %v4085
    %5340 = vmatprep.subr.bf16.mxu0 0
    %5341 = vmatpush1.bf16.msra.mxu0 %v4086
    %5342 = vmatprep.subr.bf16.mxu0 0
    %5343 = vmatpush1.bf16.msra.mxu0 %v4087
    %5344 = vmatprep.subr.bf16.mxu0 0
    %5345 = vmatpush1.bf16.msra.mxu0 %v4088
    %5346 = vmatprep.subr.bf16.mxu0 0
    %5347 = vmatpush1.bf16.msra.mxu0 %v4089
    %5348 = vmatprep.subr.bf16.mxu0 0
    %5349 = vmatpush1.bf16.msra.mxu0 %v4090
    %5350 = vmatprep.subr.bf16.mxu0 0
    %5351 = vmatpush1.bf16.msra.mxu0 %v4091
    %5352 = vmatprep.subr.bf16.mxu0 0
    %5353 = vmatpush1.bf16.msra.mxu0 %v4092
    %5354 = vmatprep.subr.bf16.mxu0 0
    %5355 = vmatpush1.bf16.msra.mxu0 %v4093
    %5356 = vmatprep.subr.bf16.mxu0 0
    %5357 = vmatpush1.bf16.msra.mxu0 %v4094
    %5358 = vmatprep.subr.bf16.mxu0 0
    %5359 = vmatpush1.bf16.msra.mxu0 %v4095
    %5360 = vmatprep.mubr.bf16.mxu0 %v1285
    %5361 = vmatmul.mubr.bf16.gmra.mrb[0].mxu0 %v1271
    %v5362 = vpop.f32.mrb[0].mxu0
    %v5363 = vadd.f32 %v5323, %v5362
    %v5364 = vpop.f32.mrb[0].mxu0
    %v5365 = vpop.f32.mrb[0].mxu0
    %v5366 = vpop.f32.mrb[0].mxu0
    %5367 = vdwg.mxu0
    %5368 = vmatprep.subr.bf16.mxu0 0
    %5369 = vmatpush1.bf16.msra.mxu0 %v4096
    %5370 = vmatprep.subr.bf16.mxu0 0
    %5371 = vmatpush1.bf16.msra.mxu0 %v4097
    %5372 = vmatprep.subr.bf16.mxu0 0
    %5373 = vmatpush1.bf16.msra.mxu0 %v4098
    %5374 = vmatprep.subr.bf16.mxu0 0
    %5375 = vmatpush1.bf16.msra.mxu0 %v4099
    %5376 = vmatprep.subr.bf16.mxu0 0
    %5377 = vmatpush1.bf16.msra.mxu0 %v4100
    %5378 = vmatprep.subr.bf16.mxu0 0
    %5379 = vmatpush1.bf16.msra.mxu0 %v4101
    %5380 = vmatprep.subr.bf16.mxu0 0
    %5381 = vmatpush1.bf16.msra.mxu0 %v4102
    %5382 = vmatprep.subr.bf16.mxu0 0
    %5383 = vmatpush1.bf16.msra.mxu0 %v4103
    %5384 = vmatprep.subr.bf16.mxu0 0
    %5385 = vmatpush1.bf16.msra.mxu0 %v4104
    %5386 = vmatprep.subr.bf16.mxu0 0
    %5387 = vmatpush1.bf16.msra.mxu0 %v4105
    %5388 = vmatprep.subr.bf16.mxu0 0
    %5389 = vmatpush1.bf16.msra.mxu0 %v4106
    %5390 = vmatprep.subr.bf16.mxu0 0
    %5391 = vmatpush1.bf16.msra.mxu0 %v4107
    %5392 = vmatprep.subr.bf16.mxu0 0
    %5393 = vmatpush1.bf16.msra.mxu0 %v4108
    %5394 = vmatprep.subr.bf16.mxu0 0
    %5395 = vmatpush1.bf16.msra.mxu0 %v4109
    %5396 = vmatprep.subr.bf16.mxu0 0
    %5397 = vmatpush1.bf16.msra.mxu0 %v4110
    %5398 = vmatprep.subr.bf16.mxu0 0
    %5399 = vmatpush1.bf16.msra.mxu0 %v4111
    %5400 = vmatprep.mubr.bf16.mxu0 %v1295
    %5401 = vmatmul.mubr.bf16.gmra.mrb[0].mxu0 %v1293
    %v5402 = vpop.f32.mrb[0].mxu0
    %v5403 = vadd.f32 %v5363, %v5402
    %v5404 = vpop.f32.mrb[0].mxu0
    %v5405 = vpop.f32.mrb[0].mxu0
    %v5406 = vpop.f32.mrb[0].mxu0
    %5407 = vdwg.mxu0
    %5408 = vmatprep.subr.bf16.mxu0 0
    %5409 = vmatpush1.bf16.msra.mxu0 %v4112
    %5410 = vmatprep.subr.bf16.mxu0 0
    %5411 = vmatpush1.bf16.msra.mxu0 %v4113
    %5412 = vmatprep.subr.bf16.mxu0 0
    %5413 = vmatpush1.bf16.msra.mxu0 %v4114
    %5414 = vmatprep.subr.bf16.mxu0 0
    %5415 = vmatpush1.bf16.msra.mxu0 %v4115
    %5416 = vmatprep.subr.bf16.mxu0 0
    %5417 = vmatpush1.bf16.msra.mxu0 %v4116
    %5418 = vmatprep.subr.bf16.mxu0 0
    %5419 = vmatpush1.bf16.msra.mxu0 %v4117
    %5420 = vmatprep.subr.bf16.mxu0 0
    %5421 = vmatpush1.bf16.msra.mxu0 %v4118
    %5422 = vmatprep.subr.bf16.mxu0 0
    %5423 = vmatpush1.bf16.msra.mxu0 %v4119
    %5424 = vmatprep.subr.bf16.mxu0 0
    %5425 = vmatpush1.bf16.msra.mxu0 %v4120
    %5426 = vmatprep.subr.bf16.mxu0 0
    %5427 = vmatpush1.bf16.msra.mxu0 %v4121
    %5428 = vmatprep.subr.bf16.mxu0 0
    %5429 = vmatpush1.bf16.msra.mxu0 %v4122
    %5430 = vmatprep.subr.bf16.mxu0 0
    %5431 = vmatpush1.bf16.msra.mxu0 %v4123
    %5432 = vmatprep.subr.bf16.mxu0 0
    %5433 = vmatpush1.bf16.msra.mxu0 %v4124
    %5434 = vmatprep.subr.bf16.mxu0 0
    %5435 = vmatpush1.bf16.msra.mxu0 %v4125
    %5436 = vmatprep.subr.bf16.mxu0 0
    %5437 = vmatpush1.bf16.msra.mxu0 %v4126
    %5438 = vmatprep.subr.bf16.mxu0 0
    %5439 = vmatpush1.bf16.msra.mxu0 %v4127
    %5440 = vmatprep.mubr.bf16.mxu0 %v1292
    %5441 = vmatmul.mubr.bf16.gmra.mrb[0].mxu0 %v1278
    %v5442 = vpop.f32.mrb[0].mxu0
    %v5443 = vadd.f32 %v5403, %v5442
    %v5444 = vpop.f32.mrb[0].mxu0
    %v5445 = vpop.f32.mrb[0].mxu0
    %v5446 = vpop.f32.mrb[0].mxu0
    %5447 = vdwg.mxu0
    %5448 = vmatprep.subr.bf16.mxu0 0
    %5449 = vmatpush1.bf16.msra.mxu0 %v4128
    %5450 = vmatprep.subr.bf16.mxu0 0
    %5451 = vmatpush1.bf16.msra.mxu0 %v4129
    %5452 = vmatprep.subr.bf16.mxu0 0
    %5453 = vmatpush1.bf16.msra.mxu0 %v4130
    %5454 = vmatprep.subr.bf16.mxu0 0
    %5455 = vmatpush1.bf16.msra.mxu0 %v4131
    %5456 = vmatprep.subr.bf16.mxu0 0
    %5457 = vmatpush1.bf16.msra.mxu0 %v4132
    %5458 = vmatprep.subr.bf16.mxu0 0
    %5459 = vmatpush1.bf16.msra.mxu0 %v4133
    %5460 = vmatprep.subr.bf16.mxu0 0
    %5461 = vmatpush1.bf16.msra.mxu0 %v4134
    %5462 = vmatprep.subr.bf16.mxu0 0
    %5463 = vmatpush1.bf16.msra.mxu0 %v4135
    %5464 = vmatprep.subr.bf16.mxu0 0
    %5465 = vmatpush1.bf16.msra.mxu0 %v4136
    %5466 = vmatprep.subr.bf16.mxu0 0
    %5467 = vmatpush1.bf16.msra.mxu0 %v4137
    %5468 = vmatprep.subr.bf16.mxu0 0
    %5469 = vmatpush1.bf16.msra.mxu0 %v4138
    %5470 = vmatprep.subr.bf16.mxu0 0
    %5471 = vmatpush1.bf16.msra.mxu0 %v4139
    %5472 = vmatprep.subr.bf16.mxu0 0
    %5473 = vmatpush1.bf16.msra.mxu0 %v4140
    %5474 = vmatprep.subr.bf16.mxu0 0
    %5475 = vmatpush1.bf16.msra.mxu0 %v4141
    %5476 = vmatprep.subr.bf16.mxu0 0
    %5477 = vmatpush1.bf16.msra.mxu0 %v4142
    %5478 = vmatprep.subr.bf16.mxu0 0
    %5479 = vmatpush1.bf16.msra.mxu0 %v4143
    %5480 = vmatprep.mubr.bf16.mxu0 %v1296
    %5481 = vmatmul.mubr.bf16.gmra.mrb[0].mxu0 %v1294
    %v5482 = vpop.f32.mrb[0].mxu0
    %v5483 = vadd.f32 %v5443, %v5482
    %v5484 = vpop.f32.mrb[0].mxu0
    %v5485 = vpop.f32.mrb[0].mxu0
    %v5486 = vpop.f32.mrb[0].mxu0
    %5487 = vdwg.mxu0
    %5488 = vmatprep.subr.bf16.mxu0 0
    %5489 = vmatpush1.bf16.msra.mxu0 %v4144
    %5490 = vmatprep.subr.bf16.mxu0 0
    %5491 = vmatpush1.bf16.msra.mxu0 %v4145
    %5492 = vmatprep.subr.bf16.mxu0 0
    %5493 = vmatpush1.bf16.msra.mxu0 %v4146
    %5494 = vmatprep.subr.bf16.mxu0 0
    %5495 = vmatpush1.bf16.msra.mxu0 %v4147
    %5496 = vmatprep.subr.bf16.mxu0 0
    %5497 = vmatpush1.bf16.msra.mxu0 %v4148
    %5498 = vmatprep.subr.bf16.mxu0 0
    %5499 = vmatpush1.bf16.msra.mxu0 %v4149
    %5500 = vmatprep.subr.bf16.mxu0 0
    %5501 = vmatpush1.bf16.msra.mxu0 %v4150
    %5502 = vmatprep.subr.bf16.mxu0 0
    %5503 = vmatpush1.bf16.msra.mxu0 %v4151
    %5504 = vmatprep.subr.bf16.mxu0 0
    %5505 = vmatpush1.bf16.msra.mxu0 %v4152
    %5506 = vmatprep.subr.bf16.mxu0 0
    %5507 = vmatpush1.bf16.msra.mxu0 %v4153
    %5508 = vmatprep.subr.bf16.mxu0 0
    %5509 = vmatpush1.bf16.msra.mxu0 %v4154
    %5510 = vmatprep.subr.bf16.mxu0 0
    %5511 = vmatpush1.bf16.msra.mxu0 %v4155
    %5512 = vmatprep.subr.bf16.mxu0 0
    %5513 = vmatpush1.bf16.msra.mxu0 %v4156
    %5514 = vmatprep.subr.bf16.mxu0 0
    %5515 = vmatpush1.bf16.msra.mxu0 %v4157
    %5516 = vmatprep.subr.bf16.mxu0 0
    %5517 = vmatpush1.bf16.msra.mxu0 %v4158
    %5518 = vmatprep.subr.bf16.mxu0 0
    %5519 = vmatpush1.bf16.msra.mxu0 %v4159
    %5520 = vmatprep.mubr.bf16.mxu0 %v1334
    %5521 = vmatmul.mubr.bf16.gmra.mrb[0].mxu0 %v1320
    %v5522 = vpop.f32.mrb[0].mxu0
    %v5523 = vadd.f32 %v5483, %v5522
    %v5524 = vpop.f32.mrb[0].mxu0
    %v5525 = vpop.f32.mrb[0].mxu0
    %v5526 = vpop.f32.mrb[0].mxu0
    %5527 = vdwg.mxu0
    %5528 = vmatprep.subr.bf16.mxu0 0
    %5529 = vmatpush1.bf16.msra.mxu0 %v4160
    %5530 = vmatprep.subr.bf16.mxu0 0
    %5531 = vmatpush1.bf16.msra.mxu0 %v4161
    %5532 = vmatprep.subr.bf16.mxu0 0
    %5533 = vmatpush1.bf16.msra.mxu0 %v4162
    %5534 = vmatprep.subr.bf16.mxu0 0
    %5535 = vmatpush1.bf16.msra.mxu0 %v4163
    %5536 = vmatprep.subr.bf16.mxu0 0
    %5537 = vmatpush1.bf16.msra.mxu0 %v4164
    %5538 = vmatprep.subr.bf16.mxu0 0
    %5539 = vmatpush1.bf16.msra.mxu0 %v4165
    %5540 = vmatprep.subr.bf16.mxu0 0
    %5541 = vmatpush1.bf16.msra.mxu0 %v4166
    %5542 = vmatprep.subr.bf16.mxu0 0
    %5543 = vmatpush1.bf16.msra.mxu0 %v4167
    %5544 = vmatprep.subr.bf16.mxu0 0
    %5545 = vmatpush1.bf16.msra.mxu0 %v4168
    %5546 = vmatprep.subr.bf16.mxu0 0
    %5547 = vmatpush1.bf16.msra.mxu0 %v4169
    %5548 = vmatprep.subr.bf16.mxu0 0
    %5549 = vmatpush1.bf16.msra.mxu0 %v4170
    %5550 = vmatprep.subr.bf16.mxu0 0
    %5551 = vmatpush1.bf16.msra.mxu0 %v4171
    %5552 = vmatprep.subr.bf16.mxu0 0
    %5553 = vmatpush1.bf16.msra.mxu0 %v4172
    %5554 = vmatprep.subr.bf16.mxu0 0
    %5555 = vmatpush1.bf16.msra.mxu0 %v4173
    %5556 = vmatprep.subr.bf16.mxu0 0
    %5557 = vmatpush1.bf16.msra.mxu0 %v4174
    %5558 = vmatprep.subr.bf16.mxu0 0
    %5559 = vmatpush1.bf16.msra.mxu0 %v4175
    %5560 = vmatprep.mubr.bf16.mxu0 %v1344
    %5561 = vmatmul.mubr.bf16.gmra.mrb[0].mxu0 %v1342
    %v5562 = vpop.f32.mrb[0].mxu0
    %v5563 = vadd.f32 %v5523, %v5562
    %v5564 = vpop.f32.mrb[0].mxu0
    %v5565 = vpop.f32.mrb[0].mxu0
    %v5566 = vpop.f32.mrb[0].mxu0
    %5567 = vdwg.mxu0
    %5568 = vmatprep.subr.bf16.mxu0 0
    %5569 = vmatpush1.bf16.msra.mxu0 %v4176
    %5570 = vmatprep.subr.bf16.mxu0 0
    %5571 = vmatpush1.bf16.msra.mxu0 %v4177
    %5572 = vmatprep.subr.bf16.mxu0 0
    %5573 = vmatpush1.bf16.msra.mxu0 %v4178
    %5574 = vmatprep.subr.bf16.mxu0 0
    %5575 = vmatpush1.bf16.msra.mxu0 %v4179
    %5576 = vmatprep.subr.bf16.mxu0 0
    %5577 = vmatpush1.bf16.msra.mxu0 %v4180
    %5578 = vmatprep.subr.bf16.mxu0 0
    %5579 = vmatpush1.bf16.msra.mxu0 %v4181
    %5580 = vmatprep.subr.bf16.mxu0 0
    %5581 = vmatpush1.bf16.msra.mxu0 %v4182
    %5582 = vmatprep.subr.bf16.mxu0 0
    %5583 = vmatpush1.bf16.msra.mxu0 %v4183
    %5584 = vmatprep.subr.bf16.mxu0 0
    %5585 = vmatpush1.bf16.msra.mxu0 %v4184
    %5586 = vmatprep.subr.bf16.mxu0 0
    %5587 = vmatpush1.bf16.msra.mxu0 %v4185
    %5588 = vmatprep.subr.bf16.mxu0 0
    %5589 = vmatpush1.bf16.msra.mxu0 %v4186
    %5590 = vmatprep.subr.bf16.mxu0 0
    %5591 = vmatpush1.bf16.msra.mxu0 %v4187
    %5592 = vmatprep.subr.bf16.mxu0 0
    %5593 = vmatpush1.bf16.msra.mxu0 %v4188
    %5594 = vmatprep.subr.bf16.mxu0 0
    %5595 = vmatpush1.bf16.msra.mxu0 %v4189
    %5596 = vmatprep.subr.bf16.mxu0 0
    %5597 = vmatpush1.bf16.msra.mxu0 %v4190
    %5598 = vmatprep.subr.bf16.mxu0 0
    %5599 = vmatpush1.bf16.msra.mxu0 %v4191
    %5600 = vmatprep.mubr.bf16.mxu0 %v1341
    %5601 = vmatmul.mubr.bf16.gmra.mrb[0].mxu0 %v1327
    %v5602 = vpop.f32.mrb[0].mxu0
    %v5603 = vadd.f32 %v5563, %v5602
    %v5604 = vpop.f32.mrb[0].mxu0
    %v5605 = vpop.f32.mrb[0].mxu0
    %v5606 = vpop.f32.mrb[0].mxu0
    %5607 = vdwg.mxu0
    %5608 = vmatprep.subr.bf16.mxu0 0
    %5609 = vmatpush1.bf16.msra.mxu0 %v4192
    %5610 = vmatprep.subr.bf16.mxu0 0
    %5611 = vmatpush1.bf16.msra.mxu0 %v4193
    %5612 = vmatprep.subr.bf16.mxu0 0
    %5613 = vmatpush1.bf16.msra.mxu0 %v4194
    %5614 = vmatprep.subr.bf16.mxu0 0
    %5615 = vmatpush1.bf16.msra.mxu0 %v4195
    %5616 = vmatprep.subr.bf16.mxu0 0
    %5617 = vmatpush1.bf16.msra.mxu0 %v4196
    %5618 = vmatprep.subr.bf16.mxu0 0
    %5619 = vmatpush1.bf16.msra.mxu0 %v4197
    %5620 = vmatprep.subr.bf16.mxu0 0
    %5621 = vmatpush1.bf16.msra.mxu0 %v4198
    %5622 = vmatprep.subr.bf16.mxu0 0
    %5623 = vmatpush1.bf16.msra.mxu0 %v4199
    %5624 = vmatprep.subr.bf16.mxu0 0
    %5625 = vmatpush1.bf16.msra.mxu0 %v4200
    %5626 = vmatprep.subr.bf16.mxu0 0
    %5627 = vmatpush1.bf16.msra.mxu0 %v4201
    %5628 = vmatprep.subr.bf16.mxu0 0
    %5629 = vmatpush1.bf16.msra.mxu0 %v4202
    %5630 = vmatprep.subr.bf16.mxu0 0
    %5631 = vmatpush1.bf16.msra.mxu0 %v4203
    %5632 = vmatprep.subr.bf16.mxu0 0
    %5633 = vmatpush1.bf16.msra.mxu0 %v4204
    %5634 = vmatprep.subr.bf16.mxu0 0
    %5635 = vmatpush1.bf16.msra.mxu0 %v4205
    %5636 = vmatprep.subr.bf16.mxu0 0
    %5637 = vmatpush1.bf16.msra.mxu0 %v4206
    %5638 = vmatprep.subr.bf16.mxu0 0
    %5639 = vmatpush1.bf16.msra.mxu0 %v4207
    %5640 = vmatprep.mubr.bf16.mxu0 %v1345
    %5641 = vmatmul.mubr.bf16.gmra.mrb[0].mxu0 %v1343
    %v5642 = vpop.f32.mrb[0].mxu0
    %v5643 = vadd.f32 %v5603, %v5642
    %v5644 = vpop.f32.mrb[0].mxu0
    %v5645 = vpop.f32.mrb[0].mxu0
    %v5646 = vpop.f32.mrb[0].mxu0
    %5647 = vdwg.mxu0
    %5648 = vmatprep.subr.bf16.mxu0 0
    %5649 = vmatpush1.bf16.msra.mxu0 %v4208
    %5650 = vmatprep.subr.bf16.mxu0 0
    %5651 = vmatpush1.bf16.msra.mxu0 %v4209
    %5652 = vmatprep.subr.bf16.mxu0 0
    %5653 = vmatpush1.bf16.msra.mxu0 %v4210
    %5654 = vmatprep.subr.bf16.mxu0 0
    %5655 = vmatpush1.bf16.msra.mxu0 %v4211
    %5656 = vmatprep.subr.bf16.mxu0 0
    %5657 = vmatpush1.bf16.msra.mxu0 %v4212
    %5658 = vmatprep.subr.bf16.mxu0 0
    %5659 = vmatpush1.bf16.msra.mxu0 %v4213
    %5660 = vmatprep.subr.bf16.mxu0 0
    %5661 = vmatpush1.bf16.msra.mxu0 %v4214
    %5662 = vmatprep.subr.bf16.mxu0 0
    %5663 = vmatpush1.bf16.msra.mxu0 %v4215
    %5664 = vmatprep.subr.bf16.mxu0 0
    %5665 = vmatpush1.bf16.msra.mxu0 %v4216
    %5666 = vmatprep.subr.bf16.mxu0 0
    %5667 = vmatpush1.bf16.msra.mxu0 %v4217
    %5668 = vmatprep.subr.bf16.mxu0 0
    %5669 = vmatpush1.bf16.msra.mxu0 %v4218
    %5670 = vmatprep.subr.bf16.mxu0 0
    %5671 = vmatpush1.bf16.msra.mxu0 %v4219
    %5672 = vmatprep.subr.bf16.mxu0 0
    %5673 = vmatpush1.bf16.msra.mxu0 %v4220
    %5674 = vmatprep.subr.bf16.mxu0 0
    %5675 = vmatpush1.bf16.msra.mxu0 %v4221
    %5676 = vmatprep.subr.bf16.mxu0 0
    %5677 = vmatpush1.bf16.msra.mxu0 %v4222
    %5678 = vmatprep.subr.bf16.mxu0 0
    %5679 = vmatpush1.bf16.msra.mxu0 %v4223
    %5680 = vmatprep.mubr.bf16.mxu0 %v1383
    %5681 = vmatmul.mubr.bf16.gmra.mrb[0].mxu0 %v1369
    %v5682 = vpop.f32.mrb[0].mxu0
    %v5683 = vadd.f32 %v5643, %v5682
    %v5684 = vpop.f32.mrb[0].mxu0
    %v5685 = vpop.f32.mrb[0].mxu0
    %v5686 = vpop.f32.mrb[0].mxu0
    %5687 = vdwg.mxu0
    %5688 = vmatprep.subr.bf16.mxu0 0
    %5689 = vmatpush1.bf16.msra.mxu0 %v4224
    %5690 = vmatprep.subr.bf16.mxu0 0
    %5691 = vmatpush1.bf16.msra.mxu0 %v4225
    %5692 = vmatprep.subr.bf16.mxu0 0
    %5693 = vmatpush1.bf16.msra.mxu0 %v4226
    %5694 = vmatprep.subr.bf16.mxu0 0
    %5695 = vmatpush1.bf16.msra.mxu0 %v4227
    %5696 = vmatprep.subr.bf16.mxu0 0
    %5697 = vmatpush1.bf16.msra.mxu0 %v4228
    %5698 = vmatprep.subr.bf16.mxu0 0
    %5699 = vmatpush1.bf16.msra.mxu0 %v4229
    %5700 = vmatprep.subr.bf16.mxu0 0
    %5701 = vmatpush1.bf16.msra.mxu0 %v4230
    %5702 = vmatprep.subr.bf16.mxu0 0
    %5703 = vmatpush1.bf16.msra.mxu0 %v4231
    %5704 = vmatprep.subr.bf16.mxu0 0
    %5705 = vmatpush1.bf16.msra.mxu0 %v4232
    %5706 = vmatprep.subr.bf16.mxu0 0
    %5707 = vmatpush1.bf16.msra.mxu0 %v4233
    %5708 = vmatprep.subr.bf16.mxu0 0
    %5709 = vmatpush1.bf16.msra.mxu0 %v4234
    %5710 = vmatprep.subr.bf16.mxu0 0
    %5711 = vmatpush1.bf16.msra.mxu0 %v4235
    %5712 = vmatprep.subr.bf16.mxu0 0
    %5713 = vmatpush1.bf16.msra.mxu0 %v4236
    %5714 = vmatprep.subr.bf16.mxu0 0
    %5715 = vmatpush1.bf16.msra.mxu0 %v4237
    %5716 = vmatprep.subr.bf16.mxu0 0
    %5717 = vmatpush1.bf16.msra.mxu0 %v4238
    %5718 = vmatprep.subr.bf16.mxu0 0
    %5719 = vmatpush1.bf16.msra.mxu0 %v4239
    %5720 = vmatprep.mubr.bf16.mxu0 %v1393
    %5721 = vmatmul.mubr.bf16.gmra.mrb[0].mxu0 %v1391
    %v5722 = vpop.f32.mrb[0].mxu0
    %v5723 = vadd.f32 %v5683, %v5722
    %v5724 = vpop.f32.mrb[0].mxu0
    %v5725 = vpop.f32.mrb[0].mxu0
    %v5726 = vpop.f32.mrb[0].mxu0
    %5727 = vdwg.mxu0
    %5728 = vmatprep.subr.bf16.mxu0 0
    %5729 = vmatpush1.bf16.msra.mxu0 %v4240
    %5730 = vmatprep.subr.bf16.mxu0 0
    %5731 = vmatpush1.bf16.msra.mxu0 %v4241
    %5732 = vmatprep.subr.bf16.mxu0 0
    %5733 = vmatpush1.bf16.msra.mxu0 %v4242
    %5734 = vmatprep.subr.bf16.mxu0 0
    %5735 = vmatpush1.bf16.msra.mxu0 %v4243
    %5736 = vmatprep.subr.bf16.mxu0 0
    %5737 = vmatpush1.bf16.msra.mxu0 %v4244
    %5738 = vmatprep.subr.bf16.mxu0 0
    %5739 = vmatpush1.bf16.msra.mxu0 %v4245
    %5740 = vmatprep.subr.bf16.mxu0 0
    %5741 = vmatpush1.bf16.msra.mxu0 %v4246
    %5742 = vmatprep.subr.bf16.mxu0 0
    %5743 = vmatpush1.bf16.msra.mxu0 %v4247
    %5744 = vmatprep.subr.bf16.mxu0 0
    %5745 = vmatpush1.bf16.msra.mxu0 %v4248
    %5746 = vmatprep.subr.bf16.mxu0 0
    %5747 = vmatpush1.bf16.msra.mxu0 %v4249
    %5748 = vmatprep.subr.bf16.mxu0 0
    %5749 = vmatpush1.bf16.msra.mxu0 %v4250
    %5750 = vmatprep.subr.bf16.mxu0 0
    %5751 = vmatpush1.bf16.msra.mxu0 %v4251
    %5752 = vmatprep.subr.bf16.mxu0 0
    %5753 = vmatpush1.bf16.msra.mxu0 %v4252
    %5754 = vmatprep.subr.bf16.mxu0 0
    %5755 = vmatpush1.bf16.msra.mxu0 %v4253
    %5756 = vmatprep.subr.bf16.mxu0 0
    %5757 = vmatpush1.bf16.msra.mxu0 %v4254
    %5758 = vmatprep.subr.bf16.mxu0 0
    %5759 = vmatpush1.bf16.msra.mxu0 %v4255
    %5760 = vmatprep.mubr.bf16.mxu0 %v1390
    %5761 = vmatmul.mubr.bf16.gmra.mrb[0].mxu0 %v1376
    %v5762 = vpop.f32.mrb[0].mxu0
    %v5763 = vadd.f32 %v5723, %v5762
    %v5764 = vpop.f32.mrb[0].mxu0
    %v5765 = vpop.f32.mrb[0].mxu0
    %v5766 = vpop.f32.mrb[0].mxu0
    %5767 = vdwg.mxu0
    %5768 = vmatprep.subr.bf16.mxu0 0
    %5769 = vmatpush1.bf16.msra.mxu0 %v4256
    %5770 = vmatprep.subr.bf16.mxu0 0
    %5771 = vmatpush1.bf16.msra.mxu0 %v4257
    %5772 = vmatprep.subr.bf16.mxu0 0
    %5773 = vmatpush1.bf16.msra.mxu0 %v4258
    %5774 = vmatprep.subr.bf16.mxu0 0
    %5775 = vmatpush1.bf16.msra.mxu0 %v4259
    %5776 = vmatprep.subr.bf16.mxu0 0
    %5777 = vmatpush1.bf16.msra.mxu0 %v4260
    %5778 = vmatprep.subr.bf16.mxu0 0
    %5779 = vmatpush1.bf16.msra.mxu0 %v4261
    %5780 = vmatprep.subr.bf16.mxu0 0
    %5781 = vmatpush1.bf16.msra.mxu0 %v4262
    %5782 = vmatprep.subr.bf16.mxu0 0
    %5783 = vmatpush1.bf16.msra.mxu0 %v4263
    %5784 = vmatprep.subr.bf16.mxu0 0
    %5785 = vmatpush1.bf16.msra.mxu0 %v4264
    %5786 = vmatprep.subr.bf16.mxu0 0
    %5787 = vmatpush1.bf16.msra.mxu0 %v4265
    %5788 = vmatprep.subr.bf16.mxu0 0
    %5789 = vmatpush1.bf16.msra.mxu0 %v4266
    %5790 = vmatprep.subr.bf16.mxu0 0
    %5791 = vmatpush1.bf16.msra.mxu0 %v4267
    %5792 = vmatprep.subr.bf16.mxu0 0
    %5793 = vmatpush1.bf16.msra.mxu0 %v4268
    %5794 = vmatprep.subr.bf16.mxu0 0
    %5795 = vmatpush1.bf16.msra.mxu0 %v4269
    %5796 = vmatprep.subr.bf16.mxu0 0
    %5797 = vmatpush1.bf16.msra.mxu0 %v4270
    %5798 = vmatprep.subr.bf16.mxu0 0
    %5799 = vmatpush1.bf16.msra.mxu0 %v4271
    %5800 = vmatprep.mubr.bf16.mxu0 %v1394
    %5801 = vmatmul.mubr.bf16.gmra.mrb[0].mxu0 %v1392
    %v5802 = vpop.f32.mrb[0].mxu0
    %v5803 = vadd.f32 %v5763, %v5802
    %v5804 = vpop.f32.mrb[0].mxu0
    %v5805 = vpop.f32.mrb[0].mxu0
    %v5806 = vpop.f32.mrb[0].mxu0
    %5807 = vdwg.mxu0
    %5808 = vmatprep.subr.bf16.mxu0 0
    %5809 = vmatpush1.bf16.msra.mxu0 %v4272
    %5810 = vmatprep.subr.bf16.mxu0 0
    %5811 = vmatpush1.bf16.msra.mxu0 %v4273
    %5812 = vmatprep.subr.bf16.mxu0 0
    %5813 = vmatpush1.bf16.msra.mxu0 %v4274
    %5814 = vmatprep.subr.bf16.mxu0 0
    %5815 = vmatpush1.bf16.msra.mxu0 %v4275
    %5816 = vmatprep.subr.bf16.mxu0 0
    %5817 = vmatpush1.bf16.msra.mxu0 %v4276
    %5818 = vmatprep.subr.bf16.mxu0 0
    %5819 = vmatpush1.bf16.msra.mxu0 %v4277
    %5820 = vmatprep.subr.bf16.mxu0 0
    %5821 = vmatpush1.bf16.msra.mxu0 %v4278
    %5822 = vmatprep.subr.bf16.mxu0 0
    %5823 = vmatpush1.bf16.msra.mxu0 %v4279
    %5824 = vmatprep.subr.bf16.mxu0 0
    %5825 = vmatpush1.bf16.msra.mxu0 %v4280
    %5826 = vmatprep.subr.bf16.mxu0 0
    %5827 = vmatpush1.bf16.msra.mxu0 %v4281
    %5828 = vmatprep.subr.bf16.mxu0 0
    %5829 = vmatpush1.bf16.msra.mxu0 %v4282
    %5830 = vmatprep.subr.bf16.mxu0 0
    %5831 = vmatpush1.bf16.msra.mxu0 %v4283
    %5832 = vmatprep.subr.bf16.mxu0 0
    %5833 = vmatpush1.bf16.msra.mxu0 %v4284
    %5834 = vmatprep.subr.bf16.mxu0 0
    %5835 = vmatpush1.bf16.msra.mxu0 %v4285
    %5836 = vmatprep.subr.bf16.mxu0 0
    %5837 = vmatpush1.bf16.msra.mxu0 %v4286
    %5838 = vmatprep.subr.bf16.mxu0 0
    %5839 = vmatpush1.bf16.msra.mxu0 %v4287
    %5840 = vmatprep.mubr.bf16.mxu0 %v1432
    %5841 = vmatmul.mubr.bf16.gmra.mrb[0].mxu0 %v1418
    %v5842 = vpop.f32.mrb[0].mxu0
    %v5843 = vadd.f32 %v5803, %v5842
    %v5844 = vpop.f32.mrb[0].mxu0
    %v5845 = vpop.f32.mrb[0].mxu0
    %v5846 = vpop.f32.mrb[0].mxu0
    %5847 = vdwg.mxu0
    %5848 = vmatprep.subr.bf16.mxu0 0
    %5849 = vmatpush1.bf16.msra.mxu0 %v4288
    %5850 = vmatprep.subr.bf16.mxu0 0
    %5851 = vmatpush1.bf16.msra.mxu0 %v4289
    %5852 = vmatprep.subr.bf16.mxu0 0
    %5853 = vmatpush1.bf16.msra.mxu0 %v4290
    %5854 = vmatprep.subr.bf16.mxu0 0
    %5855 = vmatpush1.bf16.msra.mxu0 %v4291
    %5856 = vmatprep.subr.bf16.mxu0 0
    %5857 = vmatpush1.bf16.msra.mxu0 %v4292
    %5858 = vmatprep.subr.bf16.mxu0 0
    %5859 = vmatpush1.bf16.msra.mxu0 %v4293
    %5860 = vmatprep.subr.bf16.mxu0 0
    %5861 = vmatpush1.bf16.msra.mxu0 %v4294
    %5862 = vmatprep.subr.bf16.mxu0 0
    %5863 = vmatpush1.bf16.msra.mxu0 %v4295
    %5864 = vmatprep.subr.bf16.mxu0 0
    %5865 = vmatpush1.bf16.msra.mxu0 %v4296
    %5866 = vmatprep.subr.bf16.mxu0 0
    %5867 = vmatpush1.bf16.msra.mxu0 %v4297
    %5868 = vmatprep.subr.bf16.mxu0 0
    %5869 = vmatpush1.bf16.msra.mxu0 %v4298
    %5870 = vmatprep.subr.bf16.mxu0 0
    %5871 = vmatpush1.bf16.msra.mxu0 %v4299
    %5872 = vmatprep.subr.bf16.mxu0 0
    %5873 = vmatpush1.bf16.msra.mxu0 %v4300
    %5874 = vmatprep.subr.bf16.mxu0 0
    %5875 = vmatpush1.bf16.msra.mxu0 %v4301
    %5876 = vmatprep.subr.bf16.mxu0 0
    %5877 = vmatpush1.bf16.msra.mxu0 %v4302
    %5878 = vmatprep.subr.bf16.mxu0 0
    %5879 = vmatpush1.bf16.msra.mxu0 %v4303
    %5880 = vmatprep.mubr.bf16.mxu0 %v1442
    %5881 = vmatmul.mubr.bf16.gmra.mrb[0].mxu0 %v1440
    %v5882 = vpop.f32.mrb[0].mxu0
    %v5883 = vadd.f32 %v5843, %v5882
    %v5884 = vpop.f32.mrb[0].mxu0
    %v5885 = vpop.f32.mrb[0].mxu0
    %v5886 = vpop.f32.mrb[0].mxu0
    %5887 = vdwg.mxu0
    %5888 = vmatprep.subr.bf16.mxu0 0
    %5889 = vmatpush1.bf16.msra.mxu0 %v4304
    %5890 = vmatprep.subr.bf16.mxu0 0
    %5891 = vmatpush1.bf16.msra.mxu0 %v4305
    %5892 = vmatprep.subr.bf16.mxu0 0
    %5893 = vmatpush1.bf16.msra.mxu0 %v4306
    %5894 = vmatprep.subr.bf16.mxu0 0
    %5895 = vmatpush1.bf16.msra.mxu0 %v4307
    %5896 = vmatprep.subr.bf16.mxu0 0
    %5897 = vmatpush1.bf16.msra.mxu0 %v4308
    %5898 = vmatprep.subr.bf16.mxu0 0
    %5899 = vmatpush1.bf16.msra.mxu0 %v4309
    %5900 = vmatprep.subr.bf16.mxu0 0
    %5901 = vmatpush1.bf16.msra.mxu0 %v4310
    %5902 = vmatprep.subr.bf16.mxu0 0
    %5903 = vmatpush1.bf16.msra.mxu0 %v4311
    %5904 = vmatprep.subr.bf16.mxu0 0
    %5905 = vmatpush1.bf16.msra.mxu0 %v4312
    %5906 = vmatprep.subr.bf16.mxu0 0
    %5907 = vmatpush1.bf16.msra.mxu0 %v4313
    %5908 = vmatprep.subr.bf16.mxu0 0
    %5909 = vmatpush1.bf16.msra.mxu0 %v4314
    %5910 = vmatprep.subr.bf16.mxu0 0
    %5911 = vmatpush1.bf16.msra.mxu0 %v4315
    %5912 = vmatprep.subr.bf16.mxu0 0
    %5913 = vmatpush1.bf16.msra.mxu0 %v4316
    %5914 = vmatprep.subr.bf16.mxu0 0
    %5915 = vmatpush1.bf16.msra.mxu0 %v4317
    %5916 = vmatprep.subr.bf16.mxu0 0
    %5917 = vmatpush1.bf16.msra.mxu0 %v4318
    %5918 = vmatprep.subr.bf16.mxu0 0
    %5919 = vmatpush1.bf16.msra.mxu0 %v4319
    %5920 = vmatprep.mubr.bf16.mxu0 %v1439
    %5921 = vmatmul.mubr.bf16.gmra.mrb[0].mxu0 %v1425
    %v5922 = vpop.f32.mrb[0].mxu0
    %v5923 = vadd.f32 %v5883, %v5922
    %v5924 = vpop.f32.mrb[0].mxu0
    %v5925 = vpop.f32.mrb[0].mxu0
    %v5926 = vpop.f32.mrb[0].mxu0
    %5927 = vdwg.mxu0
    %5928 = vmatprep.subr.bf16.mxu0 0
    %5929 = vmatpush1.bf16.msra.mxu0 %v4320
    %5930 = vmatprep.subr.bf16.mxu0 0
    %5931 = vmatpush1.bf16.msra.mxu0 %v4321
    %5932 = vmatprep.subr.bf16.mxu0 0
    %5933 = vmatpush1.bf16.msra.mxu0 %v4322
    %5934 = vmatprep.subr.bf16.mxu0 0
    %5935 = vmatpush1.bf16.msra.mxu0 %v4323
    %5936 = vmatprep.subr.bf16.mxu0 0
    %5937 = vmatpush1.bf16.msra.mxu0 %v4324
    %5938 = vmatprep.subr.bf16.mxu0 0
    %5939 = vmatpush1.bf16.msra.mxu0 %v4325
    %5940 = vmatprep.subr.bf16.mxu0 0
    %5941 = vmatpush1.bf16.msra.mxu0 %v4326
    %5942 = vmatprep.subr.bf16.mxu0 0
    %5943 = vmatpush1.bf16.msra.mxu0 %v4327
    %5944 = vmatprep.subr.bf16.mxu0 0
    %5945 = vmatpush1.bf16.msra.mxu0 %v4328
    %5946 = vmatprep.subr.bf16.mxu0 0
    %5947 = vmatpush1.bf16.msra.mxu0 %v4329
    %5948 = vmatprep.subr.bf16.mxu0 0
    %5949 = vmatpush1.bf16.msra.mxu0 %v4330
    %5950 = vmatprep.subr.bf16.mxu0 0
    %5951 = vmatpush1.bf16.msra.mxu0 %v4331
    %5952 = vmatprep.subr.bf16.mxu0 0
    %5953 = vmatpush1.bf16.msra.mxu0 %v4332
    %5954 = vmatprep.subr.bf16.mxu0 0
    %5955 = vmatpush1.bf16.msra.mxu0 %v4333
    %5956 = vmatprep.subr.bf16.mxu0 0
    %5957 = vmatpush1.bf16.msra.mxu0 %v4334
    %5958 = vmatprep.subr.bf16.mxu0 0
    %5959 = vmatpush1.bf16.msra.mxu0 %v4335
    %5960 = vmatprep.mubr.bf16.mxu0 %v1443
    %5961 = vmatmul.mubr.bf16.gmra.mrb[0].mxu0 %v1441
    %v5962 = vpop.f32.mrb[0].mxu0
    %v5963 = vadd.f32 %v5923, %v5962
    %v5964 = vpop.f32.mrb[0].mxu0
    %v5965 = vpop.f32.mrb[0].mxu0
    %v5966 = vpop.f32.mrb[0].mxu0
    %5967 = vdwg.mxu0
    %5968 = vmatprep.subr.bf16.mxu0 0
    %5969 = vmatpush1.bf16.msra.mxu0 %v4336
    %5970 = vmatprep.subr.bf16.mxu0 0
    %5971 = vmatpush1.bf16.msra.mxu0 %v4337
    %5972 = vmatprep.subr.bf16.mxu0 0
    %5973 = vmatpush1.bf16.msra.mxu0 %v4338
    %5974 = vmatprep.subr.bf16.mxu0 0
    %5975 = vmatpush1.bf16.msra.mxu0 %v4339
    %5976 = vmatprep.subr.bf16.mxu0 0
    %5977 = vmatpush1.bf16.msra.mxu0 %v4340
    %5978 = vmatprep.subr.bf16.mxu0 0
    %5979 = vmatpush1.bf16.msra.mxu0 %v4341
    %5980 = vmatprep.subr.bf16.mxu0 0
    %5981 = vmatpush1.bf16.msra.mxu0 %v4342
    %5982 = vmatprep.subr.bf16.mxu0 0
    %5983 = vmatpush1.bf16.msra.mxu0 %v4343
    %5984 = vmatprep.subr.bf16.mxu0 0
    %5985 = vmatpush1.bf16.msra.mxu0 %v4344
    %5986 = vmatprep.subr.bf16.mxu0 0
    %5987 = vmatpush1.bf16.msra.mxu0 %v4345
    %5988 = vmatprep.subr.bf16.mxu0 0
    %5989 = vmatpush1.bf16.msra.mxu0 %v4346
    %5990 = vmatprep.subr.bf16.mxu0 0
    %5991 = vmatpush1.bf16.msra.mxu0 %v4347
    %5992 = vmatprep.subr.bf16.mxu0 0
    %5993 = vmatpush1.bf16.msra.mxu0 %v4348
    %5994 = vmatprep.subr.bf16.mxu0 0
    %5995 = vmatpush1.bf16.msra.mxu0 %v4349
    %5996 = vmatprep.subr.bf16.mxu0 0
    %5997 = vmatpush1.bf16.msra.mxu0 %v4350
    %5998 = vmatprep.subr.bf16.mxu0 0
    %5999 = vmatpush1.bf16.msra.mxu0 %v4351
    %6000 = vmatprep.mubr.bf16.mxu0 %v1481
    %6001 = vmatmul.mubr.bf16.gmra.mrb[0].mxu0 %v1467
    %v6002 = vpop.f32.mrb[0].mxu0
    %v6003 = vadd.f32 %v5963, %v6002
    %v6004 = vpop.f32.mrb[0].mxu0
    %v6005 = vpop.f32.mrb[0].mxu0
    %v6006 = vpop.f32.mrb[0].mxu0
    %6007 = vdwg.mxu0
    %6008 = vmatprep.subr.bf16.mxu0 0
    %6009 = vmatpush1.bf16.msra.mxu0 %v4352
    %6010 = vmatprep.subr.bf16.mxu0 0
    %6011 = vmatpush1.bf16.msra.mxu0 %v4353
    %6012 = vmatprep.subr.bf16.mxu0 0
    %6013 = vmatpush1.bf16.msra.mxu0 %v4354
    %6014 = vmatprep.subr.bf16.mxu0 0
    %6015 = vmatpush1.bf16.msra.mxu0 %v4355
    %6016 = vmatprep.subr.bf16.mxu0 0
    %6017 = vmatpush1.bf16.msra.mxu0 %v4356
    %6018 = vmatprep.subr.bf16.mxu0 0
    %6019 = vmatpush1.bf16.msra.mxu0 %v4357
    %6020 = vmatprep.subr.bf16.mxu0 0
    %6021 = vmatpush1.bf16.msra.mxu0 %v4358
    %6022 = vmatprep.subr.bf16.mxu0 0
    %6023 = vmatpush1.bf16.msra.mxu0 %v4359
    %6024 = vmatprep.subr.bf16.mxu0 0
    %6025 = vmatpush1.bf16.msra.mxu0 %v4360
    %6026 = vmatprep.subr.bf16.mxu0 0
    %6027 = vmatpush1.bf16.msra.mxu0 %v4361
    %6028 = vmatprep.subr.bf16.mxu0 0
    %6029 = vmatpush1.bf16.msra.mxu0 %v4362
    %6030 = vmatprep.subr.bf16.mxu0 0
    %6031 = vmatpush1.bf16.msra.mxu0 %v4363
    %6032 = vmatprep.subr.bf16.mxu0 0
    %6033 = vmatpush1.bf16.msra.mxu0 %v4364
    %6034 = vmatprep.subr.bf16.mxu0 0
    %6035 = vmatpush1.bf16.msra.mxu0 %v4365
    %6036 = vmatprep.subr.bf16.mxu0 0
    %6037 = vmatpush1.bf16.msra.mxu0 %v4366
    %6038 = vmatprep.subr.bf16.mxu0 0
    %6039 = vmatpush1.bf16.msra.mxu0 %v4367
    %6040 = vmatprep.mubr.bf16.mxu0 %v1491
    %6041 = vmatmul.mubr.bf16.gmra.mrb[0].mxu0 %v1489
    %v6042 = vpop.f32.mrb[0].mxu0
    %v6043 = vadd.f32 %v6003, %v6042
    %v6044 = vpop.f32.mrb[0].mxu0
    %v6045 = vpop.f32.mrb[0].mxu0
    %v6046 = vpop.f32.mrb[0].mxu0
    %6047 = vdwg.mxu0
    %6048 = vmatprep.subr.bf16.mxu0 0
    %6049 = vmatpush1.bf16.msra.mxu0 %v4368
    %6050 = vmatprep.subr.bf16.mxu0 0
    %6051 = vmatpush1.bf16.msra.mxu0 %v4369
    %6052 = vmatprep.subr.bf16.mxu0 0
    %6053 = vmatpush1.bf16.msra.mxu0 %v4370
    %6054 = vmatprep.subr.bf16.mxu0 0
    %6055 = vmatpush1.bf16.msra.mxu0 %v4371
    %6056 = vmatprep.subr.bf16.mxu0 0
    %6057 = vmatpush1.bf16.msra.mxu0 %v4372
    %6058 = vmatprep.subr.bf16.mxu0 0
    %6059 = vmatpush1.bf16.msra.mxu0 %v4373
    %6060 = vmatprep.subr.bf16.mxu0 0
    %6061 = vmatpush1.bf16.msra.mxu0 %v4374
    %6062 = vmatprep.subr.bf16.mxu0 0
    %6063 = vmatpush1.bf16.msra.mxu0 %v4375
    %6064 = vmatprep.subr.bf16.mxu0 0
    %6065 = vmatpush1.bf16.msra.mxu0 %v4376
    %6066 = vmatprep.subr.bf16.mxu0 0
    %6067 = vmatpush1.bf16.msra.mxu0 %v4377
    %6068 = vmatprep.subr.bf16.mxu0 0
    %6069 = vmatpush1.bf16.msra.mxu0 %v4378
    %6070 = vmatprep.subr.bf16.mxu0 0
    %6071 = vmatpush1.bf16.msra.mxu0 %v4379
    %6072 = vmatprep.subr.bf16.mxu0 0
    %6073 = vmatpush1.bf16.msra.mxu0 %v4380
    %6074 = vmatprep.subr.bf16.mxu0 0
    %6075 = vmatpush1.bf16.msra.mxu0 %v4381
    %6076 = vmatprep.subr.bf16.mxu0 0
    %6077 = vmatpush1.bf16.msra.mxu0 %v4382
    %6078 = vmatprep.subr.bf16.mxu0 0
    %6079 = vmatpush1.bf16.msra.mxu0 %v4383
    %6080 = vmatprep.mubr.bf16.mxu0 %v1488
    %6081 = vmatmul.mubr.bf16.gmra.mrb[0].mxu0 %v1474
    %v6082 = vpop.f32.mrb[0].mxu0
    %v6083 = vadd.f32 %v6043, %v6082
    %v6084 = vpop.f32.mrb[0].mxu0
    %v6085 = vpop.f32.mrb[0].mxu0
    %v6086 = vpop.f32.mrb[0].mxu0
    %6087 = vdwg.mxu0
    %6088 = vmatprep.subr.bf16.mxu0 0
    %6089 = vmatpush1.bf16.msra.mxu0 %v4384
    %6090 = vmatprep.subr.bf16.mxu0 0
    %6091 = vmatpush1.bf16.msra.mxu0 %v4385
    %6092 = vmatprep.subr.bf16.mxu0 0
    %6093 = vmatpush1.bf16.msra.mxu0 %v4386
    %6094 = vmatprep.subr.bf16.mxu0 0
    %6095 = vmatpush1.bf16.msra.mxu0 %v4387
    %6096 = vmatprep.subr.bf16.mxu0 0
    %6097 = vmatpush1.bf16.msra.mxu0 %v4388
    %6098 = vmatprep.subr.bf16.mxu0 0
    %6099 = vmatpush1.bf16.msra.mxu0 %v4389
    %6100 = vmatprep.subr.bf16.mxu0 0
    %6101 = vmatpush1.bf16.msra.mxu0 %v4390
    %6102 = vmatprep.subr.bf16.mxu0 0
    %6103 = vmatpush1.bf16.msra.mxu0 %v4391
    %6104 = vmatprep.subr.bf16.mxu0 0
    %6105 = vmatpush1.bf16.msra.mxu0 %v4392
    %6106 = vmatprep.subr.bf16.mxu0 0
    %6107 = vmatpush1.bf16.msra.mxu0 %v4393
    %6108 = vmatprep.subr.bf16.mxu0 0
    %6109 = vmatpush1.bf16.msra.mxu0 %v4394
    %6110 = vmatprep.subr.bf16.mxu0 0
    %6111 = vmatpush1.bf16.msra.mxu0 %v4395
    %6112 = vmatprep.subr.bf16.mxu0 0
    %6113 = vmatpush1.bf16.msra.mxu0 %v4396
    %6114 = vmatprep.subr.bf16.mxu0 0
    %6115 = vmatpush1.bf16.msra.mxu0 %v4397
    %6116 = vmatprep.subr.bf16.mxu0 0
    %6117 = vmatpush1.bf16.msra.mxu0 %v4398
    %6118 = vmatprep.subr.bf16.mxu0 0
    %6119 = vmatpush1.bf16.msra.mxu0 %v4399
    %6120 = vmatprep.mubr.bf16.mxu0 %v1492
    %6121 = vmatmul.mubr.bf16.gmra.mrb[0].mxu0 %v1490
    %v6122 = vpop.f32.mrb[0].mxu0
    %v6123 = vadd.f32 %v6083, %v6122
    %v6124 = vpop.f32.mrb[0].mxu0
    %v6125 = vpop.f32.mrb[0].mxu0
    %v6126 = vpop.f32.mrb[0].mxu0
    %6127 = vdwg.mxu0
    %6128 = vmatprep.subr.bf16.mxu0 0
    %6129 = vmatpush1.bf16.msra.mxu0 %v4400
    %6130 = vmatprep.subr.bf16.mxu0 0
    %6131 = vmatpush1.bf16.msra.mxu0 %v4401
    %6132 = vmatprep.subr.bf16.mxu0 0
    %6133 = vmatpush1.bf16.msra.mxu0 %v4402
    %6134 = vmatprep.subr.bf16.mxu0 0
    %6135 = vmatpush1.bf16.msra.mxu0 %v4403
    %6136 = vmatprep.subr.bf16.mxu0 0
    %6137 = vmatpush1.bf16.msra.mxu0 %v4404
    %6138 = vmatprep.subr.bf16.mxu0 0
    %6139 = vmatpush1.bf16.msra.mxu0 %v4405
    %6140 = vmatprep.subr.bf16.mxu0 0
    %6141 = vmatpush1.bf16.msra.mxu0 %v4406
    %6142 = vmatprep.subr.bf16.mxu0 0
    %6143 = vmatpush1.bf16.msra.mxu0 %v4407
    %6144 = vmatprep.subr.bf16.mxu0 0
    %6145 = vmatpush1.bf16.msra.mxu0 %v4408
    %6146 = vmatprep.subr.bf16.mxu0 0
    %6147 = vmatpush1.bf16.msra.mxu0 %v4409
    %6148 = vmatprep.subr.bf16.mxu0 0
    %6149 = vmatpush1.bf16.msra.mxu0 %v4410
    %6150 = vmatprep.subr.bf16.mxu0 0
    %6151 = vmatpush1.bf16.msra.mxu0 %v4411
    %6152 = vmatprep.subr.bf16.mxu0 0
    %6153 = vmatpush1.bf16.msra.mxu0 %v4412
    %6154 = vmatprep.subr.bf16.mxu0 0
    %6155 = vmatpush1.bf16.msra.mxu0 %v4413
    %6156 = vmatprep.subr.bf16.mxu0 0
    %6157 = vmatpush1.bf16.msra.mxu0 %v4414
    %6158 = vmatprep.subr.bf16.mxu0 0
    %6159 = vmatpush1.bf16.msra.mxu0 %v4415
    %6160 = vmatprep.mubr.bf16.mxu0 %v1530
    %6161 = vmatmul.mubr.bf16.gmra.mrb[0].mxu0 %v1516
    %v6162 = vpop.f32.mrb[0].mxu0
    %v6163 = vadd.f32 %v6123, %v6162
    %v6164 = vpop.f32.mrb[0].mxu0
    %v6165 = vpop.f32.mrb[0].mxu0
    %v6166 = vpop.f32.mrb[0].mxu0
    %6167 = vdwg.mxu0
    %6168 = vmatprep.subr.bf16.mxu0 0
    %6169 = vmatpush1.bf16.msra.mxu0 %v4416
    %6170 = vmatprep.subr.bf16.mxu0 0
    %6171 = vmatpush1.bf16.msra.mxu0 %v4417
    %6172 = vmatprep.subr.bf16.mxu0 0
    %6173 = vmatpush1.bf16.msra.mxu0 %v4418
    %6174 = vmatprep.subr.bf16.mxu0 0
    %6175 = vmatpush1.bf16.msra.mxu0 %v4419
    %6176 = vmatprep.subr.bf16.mxu0 0
    %6177 = vmatpush1.bf16.msra.mxu0 %v4420
    %6178 = vmatprep.subr.bf16.mxu0 0
    %6179 = vmatpush1.bf16.msra.mxu0 %v4421
    %6180 = vmatprep.subr.bf16.mxu0 0
    %6181 = vmatpush1.bf16.msra.mxu0 %v4422
    %6182 = vmatprep.subr.bf16.mxu0 0
    %6183 = vmatpush1.bf16.msra.mxu0 %v4423
    %6184 = vmatprep.subr.bf16.mxu0 0
    %6185 = vmatpush1.bf16.msra.mxu0 %v4424
    %6186 = vmatprep.subr.bf16.mxu0 0
    %6187 = vmatpush1.bf16.msra.mxu0 %v4425
    %6188 = vmatprep.subr.bf16.mxu0 0
    %6189 = vmatpush1.bf16.msra.mxu0 %v4426
    %6190 = vmatprep.subr.bf16.mxu0 0
    %6191 = vmatpush1.bf16.msra.mxu0 %v4427
    %6192 = vmatprep.subr.bf16.mxu0 0
    %6193 = vmatpush1.bf16.msra.mxu0 %v4428
    %6194 = vmatprep.subr.bf16.mxu0 0
    %6195 = vmatpush1.bf16.msra.mxu0 %v4429
    %6196 = vmatprep.subr.bf16.mxu0 0
    %6197 = vmatpush1.bf16.msra.mxu0 %v4430
    %6198 = vmatprep.subr.bf16.mxu0 0
    %6199 = vmatpush1.bf16.msra.mxu0 %v4431
    %6200 = vmatprep.mubr.bf16.mxu0 %v1540
    %6201 = vmatmul.mubr.bf16.gmra.mrb[0].mxu0 %v1538
    %v6202 = vpop.f32.mrb[0].mxu0
    %v6203 = vadd.f32 %v6163, %v6202
    %v6204 = vpop.f32.mrb[0].mxu0
    %v6205 = vpop.f32.mrb[0].mxu0
    %v6206 = vpop.f32.mrb[0].mxu0
    %6207 = vdwg.mxu0
    %6208 = vmatprep.subr.bf16.mxu0 0
    %6209 = vmatpush1.bf16.msra.mxu0 %v4432
    %6210 = vmatprep.subr.bf16.mxu0 0
    %6211 = vmatpush1.bf16.msra.mxu0 %v4433
    %6212 = vmatprep.subr.bf16.mxu0 0
    %6213 = vmatpush1.bf16.msra.mxu0 %v4434
    %6214 = vmatprep.subr.bf16.mxu0 0
    %6215 = vmatpush1.bf16.msra.mxu0 %v4435
    %6216 = vmatprep.subr.bf16.mxu0 0
    %6217 = vmatpush1.bf16.msra.mxu0 %v4436
    %6218 = vmatprep.subr.bf16.mxu0 0
    %6219 = vmatpush1.bf16.msra.mxu0 %v4437
    %6220 = vmatprep.subr.bf16.mxu0 0
    %6221 = vmatpush1.bf16.msra.mxu0 %v4438
    %6222 = vmatprep.subr.bf16.mxu0 0
    %6223 = vmatpush1.bf16.msra.mxu0 %v4439
    %6224 = vmatprep.subr.bf16.mxu0 0
    %6225 = vmatpush1.bf16.msra.mxu0 %v4440
    %6226 = vmatprep.subr.bf16.mxu0 0
    %6227 = vmatpush1.bf16.msra.mxu0 %v4441
    %6228 = vmatprep.subr.bf16.mxu0 0
    %6229 = vmatpush1.bf16.msra.mxu0 %v4442
    %6230 = vmatprep.subr.bf16.mxu0 0
    %6231 = vmatpush1.bf16.msra.mxu0 %v4443
    %6232 = vmatprep.subr.bf16.mxu0 0
    %6233 = vmatpush1.bf16.msra.mxu0 %v4444
    %6234 = vmatprep.subr.bf16.mxu0 0
    %6235 = vmatpush1.bf16.msra.mxu0 %v4445
    %6236 = vmatprep.subr.bf16.mxu0 0
    %6237 = vmatpush1.bf16.msra.mxu0 %v4446
    %6238 = vmatprep.subr.bf16.mxu0 0
    %6239 = vmatpush1.bf16.msra.mxu0 %v4447
    %6240 = vmatprep.mubr.bf16.mxu0 %v1537
    %6241 = vmatmul.mubr.bf16.gmra.mrb[0].mxu0 %v1523
    %v6242 = vpop.f32.mrb[0].mxu0
    %v6243 = vadd.f32 %v6203, %v6242
    %v6244 = vpop.f32.mrb[0].mxu0
    %v6245 = vpop.f32.mrb[0].mxu0
    %v6246 = vpop.f32.mrb[0].mxu0
    %6247 = vdwg.mxu0
    %6248 = vmatprep.subr.bf16.mxu0 0
    %6249 = vmatpush1.bf16.msra.mxu0 %v4448
    %6250 = vmatprep.subr.bf16.mxu0 0
    %6251 = vmatpush1.bf16.msra.mxu0 %v4449
    %6252 = vmatprep.subr.bf16.mxu0 0
    %6253 = vmatpush1.bf16.msra.mxu0 %v4450
    %6254 = vmatprep.subr.bf16.mxu0 0
    %6255 = vmatpush1.bf16.msra.mxu0 %v4451
    %6256 = vmatprep.subr.bf16.mxu0 0
    %6257 = vmatpush1.bf16.msra.mxu0 %v4452
    %6258 = vmatprep.subr.bf16.mxu0 0
    %6259 = vmatpush1.bf16.msra.mxu0 %v4453
    %6260 = vmatprep.subr.bf16.mxu0 0
    %6261 = vmatpush1.bf16.msra.mxu0 %v4454
    %6262 = vmatprep.subr.bf16.mxu0 0
    %6263 = vmatpush1.bf16.msra.mxu0 %v4455
    %6264 = vmatprep.subr.bf16.mxu0 0
    %6265 = vmatpush1.bf16.msra.mxu0 %v4456
    %6266 = vmatprep.subr.bf16.mxu0 0
    %6267 = vmatpush1.bf16.msra.mxu0 %v4457
    %6268 = vmatprep.subr.bf16.mxu0 0
    %6269 = vmatpush1.bf16.msra.mxu0 %v4458
    %6270 = vmatprep.subr.bf16.mxu0 0
    %6271 = vmatpush1.bf16.msra.mxu0 %v4459
    %6272 = vmatprep.subr.bf16.mxu0 0
    %6273 = vmatpush1.bf16.msra.mxu0 %v4460
    %6274 = vmatprep.subr.bf16.mxu0 0
    %6275 = vmatpush1.bf16.msra.mxu0 %v4461
    %6276 = vmatprep.subr.bf16.mxu0 0
    %6277 = vmatpush1.bf16.msra.mxu0 %v4462
    %6278 = vmatprep.subr.bf16.mxu0 0
    %6279 = vmatpush1.bf16.msra.mxu0 %v4463
    %6280 = vmatprep.mubr.bf16.mxu0 %v1541
    %6281 = vmatmul.mubr.bf16.gmra.mrb[0].mxu0 %v1539
    %v6282 = vpop.f32.mrb[0].mxu0
    %v6283 = vadd.f32 %v6243, %v6282
    %v6284 = vpop.f32.mrb[0].mxu0
    %v6285 = vpop.f32.mrb[0].mxu0
    %v6286 = vpop.f32.mrb[0].mxu0
    %6287 = vdwg.mxu0
    %6288 = vmatprep.subr.bf16.mxu0 0
    %6289 = vmatpush1.bf16.msra.mxu0 %v4464
    %6290 = vmatprep.subr.bf16.mxu0 0
    %6291 = vmatpush1.bf16.msra.mxu0 %v4465
    %6292 = vmatprep.subr.bf16.mxu0 0
    %6293 = vmatpush1.bf16.msra.mxu0 %v4466
    %6294 = vmatprep.subr.bf16.mxu0 0
    %6295 = vmatpush1.bf16.msra.mxu0 %v4467
    %6296 = vmatprep.subr.bf16.mxu0 0
    %6297 = vmatpush1.bf16.msra.mxu0 %v4468
    %6298 = vmatprep.subr.bf16.mxu0 0
    %6299 = vmatpush1.bf16.msra.mxu0 %v4469
    %6300 = vmatprep.subr.bf16.mxu0 0
    %6301 = vmatpush1.bf16.msra.mxu0 %v4470
    %6302 = vmatprep.subr.bf16.mxu0 0
    %6303 = vmatpush1.bf16.msra.mxu0 %v4471
    %6304 = vmatprep.subr.bf16.mxu0 0
    %6305 = vmatpush1.bf16.msra.mxu0 %v4472
    %6306 = vmatprep.subr.bf16.mxu0 0
    %6307 = vmatpush1.bf16.msra.mxu0 %v4473
    %6308 = vmatprep.subr.bf16.mxu0 0
    %6309 = vmatpush1.bf16.msra.mxu0 %v4474
    %6310 = vmatprep.subr.bf16.mxu0 0
    %6311 = vmatpush1.bf16.msra.mxu0 %v4475
    %6312 = vmatprep.subr.bf16.mxu0 0
    %6313 = vmatpush1.bf16.msra.mxu0 %v4476
    %6314 = vmatprep.subr.bf16.mxu0 0
    %6315 = vmatpush1.bf16.msra.mxu0 %v4477
    %6316 = vmatprep.subr.bf16.mxu0 0
    %6317 = vmatpush1.bf16.msra.mxu0 %v4478
    %6318 = vmatprep.subr.bf16.mxu0 0
    %6319 = vmatpush1.bf16.msra.mxu0 %v4479
    %6320 = vmatprep.mubr.bf16.mxu0 %v1579
    %6321 = vmatmul.mubr.bf16.gmra.mrb[0].mxu0 %v1565
    %v6322 = vpop.f32.mrb[0].mxu0
    %v6323 = vadd.f32 %v6283, %v6322
    %v6324 = vpop.f32.mrb[0].mxu0
    %v6325 = vpop.f32.mrb[0].mxu0
    %v6326 = vpop.f32.mrb[0].mxu0
    %6327 = vdwg.mxu0
    %6328 = vmatprep.subr.bf16.mxu0 0
    %6329 = vmatpush1.bf16.msra.mxu0 %v4480
    %6330 = vmatprep.subr.bf16.mxu0 0
    %6331 = vmatpush1.bf16.msra.mxu0 %v4481
    %6332 = vmatprep.subr.bf16.mxu0 0
    %6333 = vmatpush1.bf16.msra.mxu0 %v4482
    %6334 = vmatprep.subr.bf16.mxu0 0
    %6335 = vmatpush1.bf16.msra.mxu0 %v4483
    %6336 = vmatprep.subr.bf16.mxu0 0
    %6337 = vmatpush1.bf16.msra.mxu0 %v4484
    %6338 = vmatprep.subr.bf16.mxu0 0
    %6339 = vmatpush1.bf16.msra.mxu0 %v4485
    %6340 = vmatprep.subr.bf16.mxu0 0
    %6341 = vmatpush1.bf16.msra.mxu0 %v4486
    %6342 = vmatprep.subr.bf16.mxu0 0
    %6343 = vmatpush1.bf16.msra.mxu0 %v4487
    %6344 = vmatprep.subr.bf16.mxu0 0
    %6345 = vmatpush1.bf16.msra.mxu0 %v4488
    %6346 = vmatprep.subr.bf16.mxu0 0
    %6347 = vmatpush1.bf16.msra.mxu0 %v4489
    %6348 = vmatprep.subr.bf16.mxu0 0
    %6349 = vmatpush1.bf16.msra.mxu0 %v4490
    %6350 = vmatprep.subr.bf16.mxu0 0
    %6351 = vmatpush1.bf16.msra.mxu0 %v4491
    %6352 = vmatprep.subr.bf16.mxu0 0
    %6353 = vmatpush1.bf16.msra.mxu0 %v4492
    %6354 = vmatprep.subr.bf16.mxu0 0
    %6355 = vmatpush1.bf16.msra.mxu0 %v4493
    %6356 = vmatprep.subr.bf16.mxu0 0
    %6357 = vmatpush1.bf16.msra.mxu0 %v4494
    %6358 = vmatprep.subr.bf16.mxu0 0
    %6359 = vmatpush1.bf16.msra.mxu0 %v4495
    %6360 = vmatprep.mubr.bf16.mxu0 %v1589
    %6361 = vmatmul.mubr.bf16.gmra.mrb[0].mxu0 %v1587
    %v6362 = vpop.f32.mrb[0].mxu0
    %v6363 = vadd.f32 %v6323, %v6362
    %v6364 = vpop.f32.mrb[0].mxu0
    %v6365 = vpop.f32.mrb[0].mxu0
    %v6366 = vpop.f32.mrb[0].mxu0
    %6367 = vdwg.mxu0
    %6368 = vmatprep.subr.bf16.mxu0 0
    %6369 = vmatpush1.bf16.msra.mxu0 %v4496
    %6370 = vmatprep.subr.bf16.mxu0 0
    %6371 = vmatpush1.bf16.msra.mxu0 %v4497
    %6372 = vmatprep.subr.bf16.mxu0 0
    %6373 = vmatpush1.bf16.msra.mxu0 %v4498
    %6374 = vmatprep.subr.bf16.mxu0 0
    %6375 = vmatpush1.bf16.msra.mxu0 %v4499
    %6376 = vmatprep.subr.bf16.mxu0 0
    %6377 = vmatpush1.bf16.msra.mxu0 %v4500
    %6378 = vmatprep.subr.bf16.mxu0 0
    %6379 = vmatpush1.bf16.msra.mxu0 %v4501
    %6380 = vmatprep.subr.bf16.mxu0 0
    %6381 = vmatpush1.bf16.msra.mxu0 %v4502
    %6382 = vmatprep.subr.bf16.mxu0 0
    %6383 = vmatpush1.bf16.msra.mxu0 %v4503
    %6384 = vmatprep.subr.bf16.mxu0 0
    %6385 = vmatpush1.bf16.msra.mxu0 %v4504
    %6386 = vmatprep.subr.bf16.mxu0 0
    %6387 = vmatpush1.bf16.msra.mxu0 %v4505
    %6388 = vmatprep.subr.bf16.mxu0 0
    %6389 = vmatpush1.bf16.msra.mxu0 %v4506
    %6390 = vmatprep.subr.bf16.mxu0 0
    %6391 = vmatpush1.bf16.msra.mxu0 %v4507
    %6392 = vmatprep.subr.bf16.mxu0 0
    %6393 = vmatpush1.bf16.msra.mxu0 %v4508
    %6394 = vmatprep.subr.bf16.mxu0 0
    %6395 = vmatpush1.bf16.msra.mxu0 %v4509
    %6396 = vmatprep.subr.bf16.mxu0 0
    %6397 = vmatpush1.bf16.msra.mxu0 %v4510
    %6398 = vmatprep.subr.bf16.mxu0 0
    %6399 = vmatpush1.bf16.msra.mxu0 %v4511
    %6400 = vmatprep.mubr.bf16.mxu0 %v1586
    %6401 = vmatmul.mubr.bf16.gmra.mrb[0].mxu0 %v1572
    %v6402 = vpop.f32.mrb[0].mxu0
    %v6403 = vadd.f32 %v6363, %v6402
    %v6404 = vpop.f32.mrb[0].mxu0
    %v6405 = vpop.f32.mrb[0].mxu0
    %v6406 = vpop.f32.mrb[0].mxu0
    %6407 = vdwg.mxu0
    %6408 = vmatprep.subr.bf16.mxu0 0
    %6409 = vmatpush1.bf16.msra.mxu0 %v4512
    %6410 = vmatprep.subr.bf16.mxu0 0
    %6411 = vmatpush1.bf16.msra.mxu0 %v4513
    %6412 = vmatprep.subr.bf16.mxu0 0
    %6413 = vmatpush1.bf16.msra.mxu0 %v4514
    %6414 = vmatprep.subr.bf16.mxu0 0
    %6415 = vmatpush1.bf16.msra.mxu0 %v4515
    %6416 = vmatprep.subr.bf16.mxu0 0
    %6417 = vmatpush1.bf16.msra.mxu0 %v4516
    %6418 = vmatprep.subr.bf16.mxu0 0
    %6419 = vmatpush1.bf16.msra.mxu0 %v4517
    %6420 = vmatprep.subr.bf16.mxu0 0
    %6421 = vmatpush1.bf16.msra.mxu0 %v4518
    %6422 = vmatprep.subr.bf16.mxu0 0
    %6423 = vmatpush1.bf16.msra.mxu0 %v4519
    %6424 = vmatprep.subr.bf16.mxu0 0
    %6425 = vmatpush1.bf16.msra.mxu0 %v4520
    %6426 = vmatprep.subr.bf16.mxu0 0
    %6427 = vmatpush1.bf16.msra.mxu0 %v4521
    %6428 = vmatprep.subr.bf16.mxu0 0
    %6429 = vmatpush1.bf16.msra.mxu0 %v4522
    %6430 = vmatprep.subr.bf16.mxu0 0
    %6431 = vmatpush1.bf16.msra.mxu0 %v4523
    %6432 = vmatprep.subr.bf16.mxu0 0
    %6433 = vmatpush1.bf16.msra.mxu0 %v4524
    %6434 = vmatprep.subr.bf16.mxu0 0
    %6435 = vmatpush1.bf16.msra.mxu0 %v4525
    %6436 = vmatprep.subr.bf16.mxu0 0
    %6437 = vmatpush1.bf16.msra.mxu0 %v4526
    %6438 = vmatprep.subr.bf16.mxu0 0
    %6439 = vmatpush1.bf16.msra.mxu0 %v4527
    %6440 = vmatprep.mubr.bf16.mxu0 %v1590
    %6441 = vmatmul.mubr.bf16.gmra.mrb[0].mxu0 %v1588
    %v6442 = vpop.f32.mrb[0].mxu0
    %v6443 = vadd.f32 %v6403, %v6442
    %v6444 = vpop.f32.mrb[0].mxu0
    %v6445 = vpop.f32.mrb[0].mxu0
    %v6446 = vpop.f32.mrb[0].mxu0
    %6447 = vdwg.mxu0
    %6448 = vmatprep.subr.bf16.mxu0 0
    %6449 = vmatpush1.bf16.msra.mxu0 %v4528
    %6450 = vmatprep.subr.bf16.mxu0 0
    %6451 = vmatpush1.bf16.msra.mxu0 %v4529
    %6452 = vmatprep.subr.bf16.mxu0 0
    %6453 = vmatpush1.bf16.msra.mxu0 %v4530
    %6454 = vmatprep.subr.bf16.mxu0 0
    %6455 = vmatpush1.bf16.msra.mxu0 %v4531
    %6456 = vmatprep.subr.bf16.mxu0 0
    %6457 = vmatpush1.bf16.msra.mxu0 %v4532
    %6458 = vmatprep.subr.bf16.mxu0 0
    %6459 = vmatpush1.bf16.msra.mxu0 %v4533
    %6460 = vmatprep.subr.bf16.mxu0 0
    %6461 = vmatpush1.bf16.msra.mxu0 %v4534
    %6462 = vmatprep.subr.bf16.mxu0 0
    %6463 = vmatpush1.bf16.msra.mxu0 %v4535
    %6464 = vmatprep.subr.bf16.mxu0 0
    %6465 = vmatpush1.bf16.msra.mxu0 %v4536
    %6466 = vmatprep.subr.bf16.mxu0 0
    %6467 = vmatpush1.bf16.msra.mxu0 %v4537
    %6468 = vmatprep.subr.bf16.mxu0 0
    %6469 = vmatpush1.bf16.msra.mxu0 %v4538
    %6470 = vmatprep.subr.bf16.mxu0 0
    %6471 = vmatpush1.bf16.msra.mxu0 %v4539
    %6472 = vmatprep.subr.bf16.mxu0 0
    %6473 = vmatpush1.bf16.msra.mxu0 %v4540
    %6474 = vmatprep.subr.bf16.mxu0 0
    %6475 = vmatpush1.bf16.msra.mxu0 %v4541
    %6476 = vmatprep.subr.bf16.mxu0 0
    %6477 = vmatpush1.bf16.msra.mxu0 %v4542
    %6478 = vmatprep.subr.bf16.mxu0 0
    %6479 = vmatpush1.bf16.msra.mxu0 %v4543
    %6480 = vmatprep.mubr.bf16.mxu0 %v1628
    %6481 = vmatmul.mubr.bf16.gmra.mrb[0].mxu0 %v1614
    %v6482 = vpop.f32.mrb[0].mxu0
    %v6483 = vadd.f32 %v6443, %v6482
    %v6484 = vpop.f32.mrb[0].mxu0
    %v6485 = vpop.f32.mrb[0].mxu0
    %v6486 = vpop.f32.mrb[0].mxu0
    %6487 = vdwg.mxu0
    %6488 = vmatprep.subr.bf16.mxu0 0
    %6489 = vmatpush1.bf16.msra.mxu0 %v4544
    %6490 = vmatprep.subr.bf16.mxu0 0
    %6491 = vmatpush1.bf16.msra.mxu0 %v4545
    %6492 = vmatprep.subr.bf16.mxu0 0
    %6493 = vmatpush1.bf16.msra.mxu0 %v4546
    %6494 = vmatprep.subr.bf16.mxu0 0
    %6495 = vmatpush1.bf16.msra.mxu0 %v4547
    %6496 = vmatprep.subr.bf16.mxu0 0
    %6497 = vmatpush1.bf16.msra.mxu0 %v4548
    %6498 = vmatprep.subr.bf16.mxu0 0
    %6499 = vmatpush1.bf16.msra.mxu0 %v4549
    %6500 = vmatprep.subr.bf16.mxu0 0
    %6501 = vmatpush1.bf16.msra.mxu0 %v4550
    %6502 = vmatprep.subr.bf16.mxu0 0
    %6503 = vmatpush1.bf16.msra.mxu0 %v4551
    %6504 = vmatprep.subr.bf16.mxu0 0
    %6505 = vmatpush1.bf16.msra.mxu0 %v4552
    %6506 = vmatprep.subr.bf16.mxu0 0
    %6507 = vmatpush1.bf16.msra.mxu0 %v4553
    %6508 = vmatprep.subr.bf16.mxu0 0
    %6509 = vmatpush1.bf16.msra.mxu0 %v4554
    %6510 = vmatprep.subr.bf16.mxu0 0
    %6511 = vmatpush1.bf16.msra.mxu0 %v4555
    %6512 = vmatprep.subr.bf16.mxu0 0
    %6513 = vmatpush1.bf16.msra.mxu0 %v4556
    %6514 = vmatprep.subr.bf16.mxu0 0
    %6515 = vmatpush1.bf16.msra.mxu0 %v4557
    %6516 = vmatprep.subr.bf16.mxu0 0
    %6517 = vmatpush1.bf16.msra.mxu0 %v4558
    %6518 = vmatprep.subr.bf16.mxu0 0
    %6519 = vmatpush1.bf16.msra.mxu0 %v4559
    %6520 = vmatprep.mubr.bf16.mxu0 %v1638
    %6521 = vmatmul.mubr.bf16.gmra.mrb[0].mxu0 %v1636
    %v6522 = vpop.f32.mrb[0].mxu0
    %v6523 = vadd.f32 %v6483, %v6522
    %v6524 = vpop.f32.mrb[0].mxu0
    %v6525 = vpop.f32.mrb[0].mxu0
    %v6526 = vpop.f32.mrb[0].mxu0
    %6527 = vdwg.mxu0
    %6528 = vmatprep.subr.bf16.mxu0 0
    %6529 = vmatpush1.bf16.msra.mxu0 %v4560
    %6530 = vmatprep.subr.bf16.mxu0 0
    %6531 = vmatpush1.bf16.msra.mxu0 %v4561
    %6532 = vmatprep.subr.bf16.mxu0 0
    %6533 = vmatpush1.bf16.msra.mxu0 %v4562
    %6534 = vmatprep.subr.bf16.mxu0 0
    %6535 = vmatpush1.bf16.msra.mxu0 %v4563
    %6536 = vmatprep.subr.bf16.mxu0 0
    %6537 = vmatpush1.bf16.msra.mxu0 %v4564
    %6538 = vmatprep.subr.bf16.mxu0 0
    %6539 = vmatpush1.bf16.msra.mxu0 %v4565
    %6540 = vmatprep.subr.bf16.mxu0 0
    %6541 = vmatpush1.bf16.msra.mxu0 %v4566
    %6542 = vmatprep.subr.bf16.mxu0 0
    %6543 = vmatpush1.bf16.msra.mxu0 %v4567
    %6544 = vmatprep.subr.bf16.mxu0 0
    %6545 = vmatpush1.bf16.msra.mxu0 %v4568
    %6546 = vmatprep.subr.bf16.mxu0 0
    %6547 = vmatpush1.bf16.msra.mxu0 %v4569
    %6548 = vmatprep.subr.bf16.mxu0 0
    %6549 = vmatpush1.bf16.msra.mxu0 %v4570
    %6550 = vmatprep.subr.bf16.mxu0 0
    %6551 = vmatpush1.bf16.msra.mxu0 %v4571
    %6552 = vmatprep.subr.bf16.mxu0 0
    %6553 = vmatpush1.bf16.msra.mxu0 %v4572
    %6554 = vmatprep.subr.bf16.mxu0 0
    %6555 = vmatpush1.bf16.msra.mxu0 %v4573
    %6556 = vmatprep.subr.bf16.mxu0 0
    %6557 = vmatpush1.bf16.msra.mxu0 %v4574
    %6558 = vmatprep.subr.bf16.mxu0 0
    %6559 = vmatpush1.bf16.msra.mxu0 %v4575
    %6560 = vmatprep.mubr.bf16.mxu0 %v1635
    %6561 = vmatmul.mubr.bf16.gmra.mrb[0].mxu0 %v1621
    %v6562 = vpop.f32.mrb[0].mxu0
    %v6563 = vadd.f32 %v6523, %v6562
    %v6564 = vpop.f32.mrb[0].mxu0
    %v6565 = vpop.f32.mrb[0].mxu0
    %v6566 = vpop.f32.mrb[0].mxu0
    %6567 = vdwg.mxu0
    %6568 = vmatprep.subr.bf16.mxu0 0
    %6569 = vmatpush1.bf16.msra.mxu0 %v4576
    %6570 = vmatprep.subr.bf16.mxu0 0
    %6571 = vmatpush1.bf16.msra.mxu0 %v4577
    %6572 = vmatprep.subr.bf16.mxu0 0
    %6573 = vmatpush1.bf16.msra.mxu0 %v4578
    %6574 = vmatprep.subr.bf16.mxu0 0
    %6575 = vmatpush1.bf16.msra.mxu0 %v4579
    %6576 = vmatprep.subr.bf16.mxu0 0
    %6577 = vmatpush1.bf16.msra.mxu0 %v4580
    %6578 = vmatprep.subr.bf16.mxu0 0
    %6579 = vmatpush1.bf16.msra.mxu0 %v4581
    %6580 = vmatprep.subr.bf16.mxu0 0
    %6581 = vmatpush1.bf16.msra.mxu0 %v4582
    %6582 = vmatprep.subr.bf16.mxu0 0
    %6583 = vmatpush1.bf16.msra.mxu0 %v4583
    %6584 = vmatprep.subr.bf16.mxu0 0
    %6585 = vmatpush1.bf16.msra.mxu0 %v4584
    %6586 = vmatprep.subr.bf16.mxu0 0
    %6587 = vmatpush1.bf16.msra.mxu0 %v4585
    %6588 = vmatprep.subr.bf16.mxu0 0
    %6589 = vmatpush1.bf16.msra.mxu0 %v4586
    %6590 = vmatprep.subr.bf16.mxu0 0
    %6591 = vmatpush1.bf16.msra.mxu0 %v4587
    %6592 = vmatprep.subr.bf16.mxu0 0
    %6593 = vmatpush1.bf16.msra.mxu0 %v4588
    %6594 = vmatprep.subr.bf16.mxu0 0
    %6595 = vmatpush1.bf16.msra.mxu0 %v4589
    %6596 = vmatprep.subr.bf16.mxu0 0
    %6597 = vmatpush1.bf16.msra.mxu0 %v4590
    %6598 = vmatprep.subr.bf16.mxu0 0
    %6599 = vmatpush1.bf16.msra.mxu0 %v4591
    %6600 = vmatprep.mubr.bf16.mxu0 %v1639
    %6601 = vmatmul.mubr.bf16.gmra.mrb[0].mxu0 %v1637
    %v6602 = vpop.f32.mrb[0].mxu0
    %v6603 = vadd.f32 %v6563, %v6602
    %v6604 = vpop.f32.mrb[0].mxu0
    %v6605 = vpop.f32.mrb[0].mxu0
    %v6606 = vpop.f32.mrb[0].mxu0
    %6607 = vdwg.mxu0
    %v6608 = vmax.f32 %v6603, 0.0
    %v6609 = vpack.c.bf16 %v6608, %v6608
    %v6610 = vld [vmem:[%s3] sm:$0xf]
    %v6611 = vld [vmem:[%s3 + $0x4] sm:$0xf]
    %v6612 = vld [vmem:[%s3 + $0x8] sm:$0xf]
    %v6613 = vld [vmem:[%s3 + $0xc] sm:$0xf]
    %v6614 = vld [vmem:[%s3 + $0x10] sm:$0xf]
    %v6615 = vld [vmem:[%s3 + $0x14] sm:$0xf]
    %v6616 = vld [vmem:[%s3 + $0x18] sm:$0xf]
    %v6617 = vld [vmem:[%s3 + $0x1c] sm:$0xf]
    %v6618 = vld [vmem:[%s3 + $0x20] sm:$0xf]
    %v6619 = vld [vmem:[%s3 + $0x24] sm:$0xf]
    %v6620 = vld [vmem:[%s3 + $0x28] sm:$0xf]
    %v6621 = vld [vmem:[%s3 + $0x2c] sm:$0xf]
    %v6622 = vld [vmem:[%s3 + $0x30] sm:$0xf]
    %v6623 = vld [vmem:[%s3 + $0x34] sm:$0xf]
    %v6624 = vld [vmem:[%s3 + $0x38] sm:$0xf]
    %v6625 = vld [vmem:[%s3 + $0x3c] sm:$0xf]
    %v6626 = vld [vmem:[%s4] sm:$0x1]
    %v6628 = vlaneseq
    %v6629 = vshrl.u32 %v6628, 7
    %v6630 = vsub.s32 0, %v6629
    %v6631 = vrot.slane %v6626, %v6630
    %v6649 = vunpack.c.l.b16 %v6610
    %v6650 = vunpack.c.l.b16 %v6611
    %v6651 = vunpack.c.l.b16 %v6612
    %v6652 = vunpack.c.l.b16 %v6613
    %v6653 = vunpack.c.l.b16 %v6614
    %v6654 = vunpack.c.l.b16 %v6615
    %v6655 = vunpack.c.l.b16 %v6616
    %v6656 = vunpack.c.l.b16 %v6617
    %v6657 = vunpack.c.l.b16 %v6618
    %v6658 = vunpack.c.l.b16 %v6619
    %v6659 = vunpack.c.l.b16 %v6620
    %v6660 = vunpack.c.l.b16 %v6621
    %v6661 = vunpack.c.l.b16 %v6622
    %v6662 = vunpack.c.l.b16 %v6623
    %v6663 = vunpack.c.l.b16 %v6624
    %v6664 = vunpack.c.l.b16 %v6625
    %v6665 = vpack.c.b16 %v6650, %v6649
    %v6666 = vpack.c.b16 %v6652, %v6651
    %v6667 = vpack.c.b16 %v6654, %v6653
    %v6668 = vpack.c.b16 %v6656, %v6655
    %v6669 = vpack.c.b16 %v6658, %v6657
    %v6670 = vpack.c.b16 %v6660, %v6659
    %v6671 = vpack.c.b16 %v6662, %v6661
    %v6672 = vpack.c.b16 %v6664, %v6663
    %6681 = vmatprep.subr.bf16.mxu0 0
    %6682 = vmatpush1.bf16.msra.mxu0 %v6665
    %6683 = vmatprep.subr.bf16.mxu0 0
    %6684 = vmatpush1.bf16.msra.mxu0 %v6666
    %6685 = vmatprep.subr.bf16.mxu0 0
    %6686 = vmatpush1.bf16.msra.mxu0 %v6667
    %6687 = vmatprep.subr.bf16.mxu0 0
    %6688 = vmatpush1.bf16.msra.mxu0 %v6668
    %6689 = vmatprep.subr.bf16.mxu0 0
    %6690 = vmatpush1.bf16.msra.mxu0 %v6669
    %6691 = vmatprep.subr.bf16.mxu0 0
    %6692 = vmatpush1.bf16.msra.mxu0 %v6670
    %6693 = vmatprep.subr.bf16.mxu0 0
    %6694 = vmatpush1.bf16.msra.mxu0 %v6671
    %6695 = vmatprep.subr.bf16.mxu0 0
    %6696 = vmatpush1.bf16.msra.mxu0 %v6672
    %6697 = vmatprep.subr.bf16.mxu0 0
    %6698 = vmatpush1.bf16.msra.mxu0 0
    %6699 = vmatprep.subr.bf16.mxu0 0
    %6700 = vmatpush1.bf16.msra.mxu0 0
    %6701 = vmatprep.subr.bf16.mxu0 0
    %6702 = vmatpush1.bf16.msra.mxu0 0
    %6703 = vmatprep.subr.bf16.mxu0 0
    %6704 = vmatpush1.bf16.msra.mxu0 0
    %6705 = vmatprep.subr.bf16.mxu0 0
    %6706 = vmatpush1.bf16.msra.mxu0 0
    %6707 = vmatprep.subr.bf16.mxu0 0
    %6708 = vmatpush1.bf16.msra.mxu0 0
    %6709 = vmatprep.subr.bf16.mxu0 0
    %6710 = vmatpush1.bf16.msra.mxu0 0
    %6711 = vmatprep.subr.bf16.mxu0 0
    %6712 = vmatpush1.bf16.msra.mxu0 0
    %6713 = vmatprep.mubr.bf16.mxu0 0
    %6714 = vmatmul.mubr.bf16.gmra.mrb[0].mxu0 %v6609
    %v6715 = vpop.f32.mrb[0].mxu0
    %v6716 = vadd.f32 %v6631, %v6715
    %v6717 = vpop.f32.mrb[0].mxu0
    %v6718 = vpop.f32.mrb[0].mxu0
    %v6719 = vpop.f32.mrb[0].mxu0
    %6720 = vdwg.mxu0
    %vm6721 = vcmask 74752
    %6722 = vst.msk [vmem:[#allocation2] sm:$0x3] %vm6721, %v6716
    // Predicated region
    $region22: #{lnsnet_forward.5} parent=1 // pred_check
      _
    $region23: #{lnsnet_forward.5} parent=1 // pred_check_branch
      %6724 = sbr.rel (0) target = $region25
    $region24: #{lnsnet_forward.5} parent=1 // pred_region
      %s6726 = ssub.s32 32, 32
      %6727 = vsyncadd [#allocation3], %s6726
      %s6729 = sshll.u32 [#allocation2], 4
      %s6730 = int_to_ptr.vmem [resolvable:$true] %s6729
      %6732 = dma.vmem_to_hbm [thread:$0]  %s6730, 32, %s5, [#allocation3]
    $region25: #{lnsnet_forward.5} parent=1 // pred_fallthru
      _
    // Predicated region
    $region26: #{lnsnet_forward.5} parent=1 // pred_check
      _
    $region27: #{lnsnet_forward.5} parent=1 // pred_check_branch
      %6734 = sbr.rel (0) target = $region29
    $region28: #{lnsnet_forward.5} parent=1 // pred_region
      %6735 = dma.done [#allocation3], 32
    $region29: #{lnsnet_forward.5} parent=1 // pred_fallthru
      _
    %6736 = vsyncpa [#allocation3], 1

</llo_original>
